<compile_context>
chip_gen: v7x
topology: tpu7x:2x2x1
jax: 0.10.0
libtpu: 0.0.40
codegen_flags: <defaults>
</compile_context>

<pallas_src>
import functools

import jax
import jax.numpy as jnp
from jax import lax
from jax.experimental import pallas as pl
from jax.experimental.pallas import tpu as pltpu


def _round_up(x, m):
  return ((x + m - 1) // m) * m


def _padded_vmem_bytes(shape, dtype):
  """Conservative VMEM footprint of one array (last dim -> 128 lanes, 2nd-last -> 8)."""
  s = list(shape) if shape else [1]
  s[-1] = _round_up(s[-1], 128)
  if len(s) >= 2:
    s[-2] = _round_up(s[-2], 8)
  n = 1
  for v in s:
    n *= v
  return n * jnp.dtype(dtype).itemsize


def done_process_kernel(x_ref, m_ref,
                        w_in_ref, b_in_ref, wtap_ref, bd_ref, w1_ref, b1_ref,
                        head_w_ref, head_b_ref,
                        whh_ref, bhh_ref,
                        wa_ref, ba_ref, wf_ref, bfu_ref,
                        wdn_ref, bdn_ref, wdo_ref, bdo_ref,
                        out_ref, slab_scr, gout_scr,
                        *, dilations, channels, hidden, num_classes, chunk):
  B, Tp, _ = x_ref.shape
  C = channels
  H = hidden
  NC = num_classes
  bf16 = jnp.bfloat16
  f32 = jnp.float32

  row = lax.broadcasted_iota(jnp.int32, (Tp, 1), 0)
  w_in = w_in_ref[...]
  b_in = b_in_ref[...]
  head_w = head_w_ref[...]
  head_b = head_b_ref[...]

  # ---- Part 1: conv_1x1 + causal dilated residual stack + merged [wih | conv_out] head.
  # B is tiny & static -> straight-line Python loop (no grid-step overhead).
  for b in range(B):
    m = m_ref[b]                                    # (Tp, 1) f32
    mC = jnp.broadcast_to(m, (Tp, C))               # hoisted mask broadcast (reused / layer)
    feat = jnp.dot(x_ref[b], w_in, preferred_element_type=f32) + b_in   # (Tp, C)

    for li, d in enumerate(dilations):
      # One matmul for all 3 taps: cols [0:C]=tap@t-2d, [C:2C]=tap@t-d, [2C:3C]=tap@t.
      taps = jnp.dot(feat.astype(bf16), wtap_ref[li], preferred_element_type=f32)
      p0 = taps[:, 0:C]
      p1 = taps[:, C:2 * C]
      p2 = taps[:, 2 * C:3 * C]
      # Causal time shift applied to the matmul results (shift commutes with a per-row
      # matmul); the first `shift` rows replicate row 0 ('replicate' left padding).
      p0 = jnp.where(row < 2 * d, p0[0:1, :], pltpu.roll(p0, 2 * d, axis=0))
      p1 = jnp.where(row < d, p1[0:1, :], pltpu.roll(p1, d, axis=0))
      conv = jnp.maximum(p0 + p1 + p2 + bd_ref[li], 0.0)          # ReLU
      y = jnp.dot(conv.astype(bf16), w1_ref[li], preferred_element_type=f32) + b1_ref[li]
      # dropout == identity (eval)
      feat = (feat + y) * mC

    # Merged head: [GRU input proj (3H) | conv_out logits (NC) | pad] -> one lane-dense
    # 128-wide store.  No masking here: GRU input is unmasked in the reference and the
    # class logits receive the single final output mask.
    slab_scr[b] = (jnp.dot(feat.astype(bf16), head_w, preferred_element_type=f32)
                   + head_b)

  # ---- Part 2: GRU recurrence (PyTorch gate order r, z, n), batched over B.
  # bf16 recurrence matmul on the serial h->h critical path; f32 state and gate math.
  whh = whh_ref[...]                                # (H, 3H) bf16
  bhh = bhh_ref[...]                                # (1, 3H) f32

  def gru_chunk(c, h):
    t0 = pl.multiple_of(c * chunk, chunk)
    xch = slab_scr[:, pl.ds(t0, chunk), :]          # (B, chunk, 128) aligned load
    hs = []
    for j in range(chunk):                          # static unroll
      xt = xch[:, j, 0:3 * H]                       # (B, 3H) = feat @ wih + bih
      hh = jnp.dot(h.astype(bf16), whh, preferred_element_type=f32) + bhh
      r = jax.nn.sigmoid(xt[:, 0:H] + hh[:, 0:H])
      z = jax.nn.sigmoid(xt[:, H:2 * H] + hh[:, H:2 * H])
      n = jnp.tanh(xt[:, 2 * H:3 * H] + r * hh[:, 2 * H:3 * H])
      h = (1.0 - z) * n + z * h
      hs.append(h)
    gout_scr[:, pl.ds(t0, chunk), :] = jnp.stack(hs, axis=1)   # aligned (B, chunk, H) store
    return h

  lax.fori_loop(0, Tp // chunk, gru_chunk, jnp.zeros((B, H), f32))

  # ---- Part 3: heads, flattened over B*Tp (one matmul chain instead of B tiny ones).
  BT = B * Tp
  prob = slab_scr[:, :, 3 * H:3 * H + NC].reshape(BT, NC)      # conv_out logits
  gout = gout_scr[...].reshape(BT, H)

  prog = jnp.dot(gout.astype(bf16), wa_ref[...], preferred_element_type=f32) + ba_ref[...]
  cat = jnp.concatenate([prob, prog], axis=-1)                 # channel concat [cls | prg]
  fused = jnp.dot(cat.astype(bf16), wf_ref[...], preferred_element_type=f32) + bfu_ref[...]
  done = jnp.maximum(
      jnp.dot(fused.astype(bf16), wdn_ref[...], preferred_element_type=f32) + bdn_ref[...],
      0.0)
  done_out = (jnp.dot(done.astype(bf16), wdo_ref[...], preferred_element_type=f32)
              + bdo_ref[...])

  # Single mask multiply on the packed, lane-dense output slab.
  slab_o = out_ref.shape[-1]
  pad = slab_o - 3 * NC
  parts = [fused, prog, done_out]
  if pad:
    parts.append(jnp.zeros((BT, pad), f32))
  packed = jnp.concatenate(parts, axis=-1).reshape(B, Tp, slab_o)
  out_ref[...] = packed * m_ref[...]


def done_process_forward(x, mask, params, *, num_layers, gru_chunk=16):
  """DoneProcessModel.forward (causal=True), channel-last.

  x: (B, T, dim), mask: (B, T, 1) -> (out, progress_out, done_out), each (B, T, NC).
  """
  B, T, _ = x.shape
  C = params["w_in"].shape[1]
  H = C
  NC = params["wo"].shape[1]
  dilations = tuple(2 ** i for i in range(num_layers))
  bf16 = jnp.bfloat16

  # Pad time so all chunked GRU loads/stores are sublane aligned (padded rows are masked,
  # sit after T, and causal convs / the forward GRU never feed them back into rows < T).
  Tp = _round_up(T, max(gru_chunk, 8))
  if Tp != T:
    x = jnp.pad(x, ((0, 0), (0, Tp - T), (0, 0)))
    mask = jnp.pad(mask, ((0, 0), (0, Tp - T), (0, 0)))

  # Pack weights (bf16 matmul operands; biases stay f32).
  wtap = jnp.concatenate(
      [params["wd"][:, 0], params["wd"][:, 1], params["wd"][:, 2]],
      axis=-1).astype(bf16)                                   # (L, C, 3C)
  slab_a = _round_up(3 * H + NC, 128)
  head_w = jnp.concatenate([params["wih"], params["wo"]], axis=1)   # (C, 3H+NC)
  head_b = jnp.concatenate([params["bih"], params["bo"]], axis=1)   # (1, 3H+NC)
  if slab_a > 3 * H + NC:
    head_w = jnp.pad(head_w, ((0, 0), (0, slab_a - 3 * H - NC)))
    head_b = jnp.pad(head_b, ((0, 0), (0, slab_a - 3 * H - NC)))
  head_w = head_w.astype(bf16)
  slab_o = _round_up(3 * NC, 128)

  weights = [
      params["w_in"].astype(bf16), params["b_in"],
      wtap, params["bd"], params["w1"].astype(bf16), params["b1"],
      head_w, head_b,
      params["whh"].astype(bf16), params["bhh"],        # bf16 recurrence matmul
      params["wa"].astype(bf16), params["ba"],
      params["wf"].astype(bf16), params["bf"],
      params["wdn"].astype(bf16), params["bdn"],
      params["wdo"].astype(bf16), params["bdo"],
  ]

  x = x.astype(bf16)
  mask = mask.astype(jnp.float32)
  inputs = [x, mask] + weights

  # Derive the VMEM limit from actual (padded) block sizes instead of a flat cap;
  # cap at 40 MiB so it stays well inside v7x's 64 MiB physical VMEM.
  # TODO(synk): tile the time axis (with a 2*d_max replicate halo) before scaling T.
  in_bytes = sum(_padded_vmem_bytes(a.shape, a.dtype) for a in inputs)
  out_bytes = _padded_vmem_bytes((B, Tp, slab_o), jnp.float32)
  scratch_bytes = (_padded_vmem_bytes((B, Tp, slab_a), jnp.float32)
                   + _padded_vmem_bytes((B, Tp, H), jnp.float32))
  est = 2 * (in_bytes + out_bytes) + scratch_bytes + (4 << 20)
  vmem_limit = int(min(max(est, 16 << 20), 40 << 20))

  def full_spec(a):
    nd = a.ndim
    return pl.BlockSpec(a.shape, lambda i, _nd=nd: (0,) * _nd)

  kernel = functools.partial(
      done_process_kernel, dilations=dilations, channels=C, hidden=H,
      num_classes=NC, chunk=gru_chunk)

  out_slab = pl.pallas_call(
      kernel,
      grid=(1,),
      in_specs=[full_spec(a) for a in inputs],
      out_specs=pl.BlockSpec((B, Tp, slab_o), lambda i: (0, 0, 0)),
      out_shape=jax.ShapeDtypeStruct((B, Tp, slab_o), jnp.float32),
      scratch_shapes=[pltpu.VMEM((B, Tp, slab_a), jnp.float32),   # [wih-proj | logits] slab
                      pltpu.VMEM((B, Tp, H), jnp.float32)],       # GRU hidden states
      compiler_params=pltpu.CompilerParams(
          dimension_semantics=("arbitrary",),
          vmem_limit_bytes=vmem_limit),
  )(*inputs)

  out = out_slab[:, :T, 0:NC]
  progress_out = out_slab[:, :T, NC:2 * NC]
  done_out = out_slab[:, :T, 2 * NC:3 * NC]
  return out, progress_out, done_out


def init_params(key, dim, C, NC, L):
  """Random parameters in channel-last 'math' layout.

  PyTorch mapping: conv weight (out, in, k) -> our (in, out) per tap; wd[l, k] is the
  (Cin, Cout) matrix for tap k where k=0 hits x[t-2d], k=1 hits x[t-d], k=2 hits x[t].
  GRU gate order along the 3H axis is (r, z, n), PyTorch convention.
  """
  H = C
  ks = jax.random.split(key, 20)

  def w(k, shape, scale=0.1):
    return scale * jax.random.normal(k, shape, jnp.float32)

  return {
      "w_in": w(ks[0], (dim, C)),       "b_in": w(ks[1], (1, C)),
      "wd":   w(ks[2], (L, 3, C, C)),   "bd":   w(ks[3], (L, 1, C)),
      "w1":   w(ks[4], (L, C, C)),      "b1":   w(ks[5], (L, 1, C)),
      "wo":   w(ks[6], (C, NC)),        "bo":   w(ks[7], (1, NC)),
      "wih":  w(ks[8], (C, 3 * H)),     "bih":  w(ks[9], (1, 3 * H)),
      "whh":  w(ks[10], (H, 3 * H)),    "bhh":  w(ks[11], (1, 3 * H)),
      "wa":   w(ks[12], (H, NC)),       "ba":   w(ks[13], (1, NC)),
      "wf":   w(ks[14], (2 * NC, NC)),  "bf":   w(ks[15], (1, NC)),
      # conv_done / conv_done_out: the forward feeds conv_done a num_classes-channel
      # tensor, so these are NC -> NC (exact PyTorch match when num_f_maps == num_classes).
      "wdn":  w(ks[16], (NC, NC)),      "bdn":  w(ks[17], (1, NC)),
      "wdo":  w(ks[18], (NC, NC)),      "bdo":  w(ks[19], (1, NC)),
  }


if __name__ == "__main__":
  # Small, deterministic configuration.  DoneProcessModel's conv_done is declared with
  # num_f_maps input channels but applied to num_classes channels, so the module is only
  # self-consistent when num_classes == num_f_maps.
  num_layers = 3
  num_f_maps = 32
  num_classes = 32
  dim = 16
  B, T = 2, 64

  key = jax.random.PRNGKey(0)
  kx, km, kp = jax.random.split(key, 3)

  x = jax.random.normal(kx, (B, T, dim), jnp.float32)                   # (B, T, dim)
  mask = (jax.random.uniform(km, (B, T, 1)) > 0.2).astype(jnp.float32)  # (B, T, 1)
  params = init_params(kp, dim, num_f_maps, num_classes, num_layers)

  out, progress_out, done_out = done_process_forward(
      x, mask, params, num_layers=num_layers)
  out = jax.block_until_ready(out)
  progress_out = jax.block_until_ready(progress_out)
  done_out = jax.block_until_ready(done_out)

  assert out.shape == (B, T, num_classes)
  assert progress_out.shape == (B, T, num_classes)
  assert done_out.shape == (B, T, num_classes)
  for a in (out, progress_out, done_out):
    assert bool(jnp.all(jnp.isfinite(a)))
  print("KERNEL_OK")
</pallas_src>

<mosaic_0001>
module attributes {stable_mosaic.version = 11 : i64} {
  func.func @done_process_kernel(%arg0: i32, %arg1: memref<2x64x16xbf16, #tpu.memory_space<vmem>>, %arg2: memref<2x64x1xf32, #tpu.memory_space<vmem>>, %arg3: memref<16x32xbf16, #tpu.memory_space<vmem>>, %arg4: memref<1x32xf32, #tpu.memory_space<vmem>>, %arg5: memref<3x32x96xbf16, #tpu.memory_space<vmem>>, %arg6: memref<3x1x32xf32, #tpu.memory_space<vmem>>, %arg7: memref<3x32x32xbf16, #tpu.memory_space<vmem>>, %arg8: memref<3x1x32xf32, #tpu.memory_space<vmem>>, %arg9: memref<32x128xbf16, #tpu.memory_space<vmem>>, %arg10: memref<1x128xf32, #tpu.memory_space<vmem>>, %arg11: memref<32x96xbf16, #tpu.memory_space<vmem>>, %arg12: memref<1x96xf32, #tpu.memory_space<vmem>>, %arg13: memref<32x32xbf16, #tpu.memory_space<vmem>>, %arg14: memref<1x32xf32, #tpu.memory_space<vmem>>, %arg15: memref<64x32xbf16, #tpu.memory_space<vmem>>, %arg16: memref<1x32xf32, #tpu.memory_space<vmem>>, %arg17: memref<32x32xbf16, #tpu.memory_space<vmem>>, %arg18: memref<1x32xf32, #tpu.memory_space<vmem>>, %arg19: memref<32x32xbf16, #tpu.memory_space<vmem>>, %arg20: memref<1x32xf32, #tpu.memory_space<vmem>>, %arg21: memref<2x64x128xf32, #tpu.memory_space<vmem>>, %arg22: memref<2x64x128xf32, #tpu.memory_space<vmem>>, %arg23: memref<2x64x32xf32, #tpu.memory_space<vmem>>) attributes {dimension_semantics = [#tpu.dimension_semantics<arbitrary>], iteration_bounds = array<i64: 1>, scalar_prefetch = 0 : i64, scratch_operands = 2 : i64, tpu.core_type = #tpu.core_type<tc>, window_params = [{pipeline_mode = #tpu.pipeline_mode<synchronous>, transform_indices = @transform_0, window_bounds = array<i64: 2, 64, 16>}, {pipeline_mode = #tpu.pipeline_mode<synchronous>, transform_indices = @transform_1, window_bounds = array<i64: 2, 64, 1>}, {pipeline_mode = #tpu.pipeline_mode<synchronous>, transform_indices = @transform_2, window_bounds = array<i64: 16, 32>}, {pipeline_mode = #tpu.pipeline_mode<synchronous>, transform_indices = @transform_3, window_bounds = array<i64: 1, 32>}, {pipeline_mode = #tpu.pipeline_mode<synchronous>, transform_indices = @transform_4, window_bounds = array<i64: 3, 32, 96>}, {pipeline_mode = #tpu.pipeline_mode<synchronous>, transform_indices = @transform_5, window_bounds = array<i64: 3, 1, 32>}, {pipeline_mode = #tpu.pipeline_mode<synchronous>, transform_indices = @transform_6, window_bounds = array<i64: 3, 32, 32>}, {pipeline_mode = #tpu.pipeline_mode<synchronous>, transform_indices = @transform_7, window_bounds = array<i64: 3, 1, 32>}, {pipeline_mode = #tpu.pipeline_mode<synchronous>, transform_indices = @transform_8, window_bounds = array<i64: 32, 128>}, {pipeline_mode = #tpu.pipeline_mode<synchronous>, transform_indices = @transform_9, window_bounds = array<i64: 1, 128>}, {pipeline_mode = #tpu.pipeline_mode<synchronous>, transform_indices = @transform_10, window_bounds = array<i64: 32, 96>}, {pipeline_mode = #tpu.pipeline_mode<synchronous>, transform_indices = @transform_11, window_bounds = array<i64: 1, 96>}, {pipeline_mode = #tpu.pipeline_mode<synchronous>, transform_indices = @transform_12, window_bounds = array<i64: 32, 32>}, {pipeline_mode = #tpu.pipeline_mode<synchronous>, transform_indices = @transform_13, window_bounds = array<i64: 1, 32>}, {pipeline_mode = #tpu.pipeline_mode<synchronous>, transform_indices = @transform_14, window_bounds = array<i64: 64, 32>}, {pipeline_mode = #tpu.pipeline_mode<synchronous>, transform_indices = @transform_15, window_bounds = array<i64: 1, 32>}, {pipeline_mode = #tpu.pipeline_mode<synchronous>, transform_indices = @transform_16, window_bounds = array<i64: 32, 32>}, {pipeline_mode = #tpu.pipeline_mode<synchronous>, transform_indices = @transform_17, window_bounds = array<i64: 1, 32>}, {pipeline_mode = #tpu.pipeline_mode<synchronous>, transform_indices = @transform_18, window_bounds = array<i64: 32, 32>}, {pipeline_mode = #tpu.pipeline_mode<synchronous>, transform_indices = @transform_19, window_bounds = array<i64: 1, 32>}, {pipeline_mode = #tpu.pipeline_mode<synchronous>, transform_indices = @transform_20, window_bounds = array<i64: 2, 64, 128>}]} {
    %0 = tpu.iota {dimensions = array<i32: 0>} : vector<64x1xi32>
    %c0 = arith.constant 0 : index
    %c0_0 = arith.constant 0 : index
    %1 = vector.load %arg3[%c0, %c0_0] : memref<16x32xbf16, #tpu.memory_space<vmem>>, vector<16x32xbf16>
    %c0_1 = arith.constant 0 : index
    %c0_2 = arith.constant 0 : index
    %2 = vector.load %arg4[%c0_1, %c0_2] : memref<1x32xf32, #tpu.memory_space<vmem>>, vector<1x32xf32>
    %c0_3 = arith.constant 0 : index
    %c0_4 = arith.constant 0 : index
    %3 = vector.load %arg9[%c0_3, %c0_4] : memref<32x128xbf16, #tpu.memory_space<vmem>>, vector<32x128xbf16>
    %c0_5 = arith.constant 0 : index
    %c0_6 = arith.constant 0 : index
    %4 = vector.load %arg10[%c0_5, %c0_6] : memref<1x128xf32, #tpu.memory_space<vmem>>, vector<1x128xf32>
    %c0_7 = arith.constant 0 : index
    %c0_8 = arith.constant 0 : index
    %c0_9 = arith.constant 0 : index
    %5 = vector.load %arg2[%c0_7, %c0_8, %c0_9] : memref<2x64x1xf32, #tpu.memory_space<vmem>>, vector<1x64x1xf32>
    %6 = vector.shape_cast %5 : vector<1x64x1xf32> to vector<64x1xf32>
    %7 = vector.shape_cast %6 : vector<64x1xf32> to vector<64x1xf32>
    %8 = vector.broadcast %7 : vector<64x1xf32> to vector<64x32xf32>
    %c0_10 = arith.constant 0 : index
    %c0_11 = arith.constant 0 : index
    %c0_12 = arith.constant 0 : index
    %9 = vector.load %arg1[%c0_10, %c0_11, %c0_12] : memref<2x64x16xbf16, #tpu.memory_space<vmem>>, vector<1x64x16xbf16>
    %10 = vector.shape_cast %9 : vector<1x64x16xbf16> to vector<64x16xbf16>
    %cst = arith.constant dense<0.000000e+00> : vector<64x32xf32>
    %11 = tpu.matmul %10, %1, %cst {dimension_numbers = #tpu.dot_dimension_numbers<[1], [0], [0], [1], [0, 0, 1, 1], [], []>} : vector<64x16xbf16>, vector<16x32xbf16>, vector<64x32xf32> -> vector<64x32xf32>
    %12 = vector.broadcast %2 : vector<1x32xf32> to vector<64x32xf32>
    %13 = arith.addf %11, %12 : vector<64x32xf32>
    %14 = arith.truncf %13 : vector<64x32xf32> to vector<64x32xbf16>
    %c0_13 = arith.constant 0 : index
    %c0_14 = arith.constant 0 : index
    %c0_15 = arith.constant 0 : index
    %15 = vector.load %arg5[%c0_13, %c0_14, %c0_15] : memref<3x32x96xbf16, #tpu.memory_space<vmem>>, vector<1x32x96xbf16>
    %16 = vector.shape_cast %15 : vector<1x32x96xbf16> to vector<32x96xbf16>
    %cst_16 = arith.constant dense<0.000000e+00> : vector<64x96xf32>
    %17 = tpu.matmul %14, %16, %cst_16 {dimension_numbers = #tpu.dot_dimension_numbers<[1], [0], [0], [1], [0, 0, 1, 1], [], []>} : vector<64x32xbf16>, vector<32x96xbf16>, vector<64x96xf32> -> vector<64x96xf32>
    %18 = vector.extract_strided_slice %17 {offsets = [0, 0], sizes = [64, 32], strides = [1, 1]} : vector<64x96xf32> to vector<64x32xf32>
    %19 = vector.extract_strided_slice %17 {offsets = [0, 32], sizes = [64, 32], strides = [1, 1]} : vector<64x96xf32> to vector<64x32xf32>
    %20 = vector.extract_strided_slice %17 {offsets = [0, 64], sizes = [64, 32], strides = [1, 1]} : vector<64x96xf32> to vector<64x32xf32>
    %c2_i32 = arith.constant 2 : i32
    %21 = vector.broadcast %c2_i32 : i32 to vector<64x1xi32>
    %22 = arith.cmpi slt, %0, %21 : vector<64x1xi32>
    %23 = vector.extract_strided_slice %18 {offsets = [0, 0], sizes = [1, 32], strides = [1, 1]} : vector<64x32xf32> to vector<1x32xf32>
    %c2_i32_17 = arith.constant 2 : i32
    %24 = tpu.dynamic_rotate %18 by %c2_i32_17 dim 0 : vector<64x32xf32>, i32 -> vector<64x32xf32>
    %25 = vector.shape_cast %22 : vector<64x1xi1> to vector<64x1xi1>
    %26 = vector.broadcast %25 : vector<64x1xi1> to vector<64x32xi1>
    %27 = vector.shape_cast %23 : vector<1x32xf32> to vector<1x32xf32>
    %28 = vector.broadcast %27 : vector<1x32xf32> to vector<64x32xf32>
    %29 = arith.select %26, %28, %24 : vector<64x32xi1>, vector<64x32xf32>
    %c1_i32 = arith.constant 1 : i32
    %30 = vector.broadcast %c1_i32 : i32 to vector<64x1xi32>
    %31 = arith.cmpi slt, %0, %30 : vector<64x1xi32>
    %32 = vector.extract_strided_slice %19 {offsets = [0, 0], sizes = [1, 32], strides = [1, 1]} : vector<64x32xf32> to vector<1x32xf32>
    %c1_i32_18 = arith.constant 1 : i32
    %33 = tpu.dynamic_rotate %19 by %c1_i32_18 dim 0 : vector<64x32xf32>, i32 -> vector<64x32xf32>
    %34 = vector.shape_cast %31 : vector<64x1xi1> to vector<64x1xi1>
    %35 = vector.broadcast %34 : vector<64x1xi1> to vector<64x32xi1>
    %36 = vector.shape_cast %32 : vector<1x32xf32> to vector<1x32xf32>
    %37 = vector.broadcast %36 : vector<1x32xf32> to vector<64x32xf32>
    %38 = arith.select %35, %37, %33 : vector<64x32xi1>, vector<64x32xf32>
    %39 = arith.addf %29, %38 : vector<64x32xf32>
    %40 = arith.addf %39, %20 : vector<64x32xf32>
    %c0_19 = arith.constant 0 : index
    %c0_20 = arith.constant 0 : index
    %c0_21 = arith.constant 0 : index
    %41 = vector.load %arg6[%c0_19, %c0_20, %c0_21] : memref<3x1x32xf32, #tpu.memory_space<vmem>>, vector<1x1x32xf32>
    %42 = vector.shape_cast %41 : vector<1x1x32xf32> to vector<1x32xf32>
    %43 = vector.broadcast %42 : vector<1x32xf32> to vector<64x32xf32>
    %44 = arith.addf %40, %43 : vector<64x32xf32>
    %cst_22 = arith.constant 0.000000e+00 : f32
    %45 = vector.broadcast %cst_22 : f32 to vector<64x32xf32>
    %46 = arith.maximumf %44, %45 : vector<64x32xf32>
    %47 = arith.truncf %46 : vector<64x32xf32> to vector<64x32xbf16>
    %c0_23 = arith.constant 0 : index
    %c0_24 = arith.constant 0 : index
    %c0_25 = arith.constant 0 : index
    %48 = vector.load %arg7[%c0_23, %c0_24, %c0_25] : memref<3x32x32xbf16, #tpu.memory_space<vmem>>, vector<1x32x32xbf16>
    %49 = vector.shape_cast %48 : vector<1x32x32xbf16> to vector<32x32xbf16>
    %cst_26 = arith.constant dense<0.000000e+00> : vector<64x32xf32>
    %50 = tpu.matmul %47, %49, %cst_26 {dimension_numbers = #tpu.dot_dimension_numbers<[1], [0], [0], [1], [0, 0, 1, 1], [], []>} : vector<64x32xbf16>, vector<32x32xbf16>, vector<64x32xf32> -> vector<64x32xf32>
    %c0_27 = arith.constant 0 : index
    %c0_28 = arith.constant 0 : index
    %c0_29 = arith.constant 0 : index
    %51 = vector.load %arg8[%c0_27, %c0_28, %c0_29] : memref<3x1x32xf32, #tpu.memory_space<vmem>>, vector<1x1x32xf32>
    %52 = vector.shape_cast %51 : vector<1x1x32xf32> to vector<1x32xf32>
    %53 = vector.broadcast %52 : vector<1x32xf32> to vector<64x32xf32>
    %54 = arith.addf %50, %53 : vector<64x32xf32>
    %55 = arith.addf %13, %54 : vector<64x32xf32>
    %56 = arith.mulf %55, %8 : vector<64x32xf32>
    %57 = arith.truncf %56 : vector<64x32xf32> to vector<64x32xbf16>
    %c1 = arith.constant 1 : index
    %c0_30 = arith.constant 0 : index
    %c0_31 = arith.constant 0 : index
    %58 = vector.load %arg5[%c1, %c0_30, %c0_31] : memref<3x32x96xbf16, #tpu.memory_space<vmem>>, vector<1x32x96xbf16>
    %59 = vector.shape_cast %58 : vector<1x32x96xbf16> to vector<32x96xbf16>
    %cst_32 = arith.constant dense<0.000000e+00> : vector<64x96xf32>
    %60 = tpu.matmul %57, %59, %cst_32 {dimension_numbers = #tpu.dot_dimension_numbers<[1], [0], [0], [1], [0, 0, 1, 1], [], []>} : vector<64x32xbf16>, vector<32x96xbf16>, vector<64x96xf32> -> vector<64x96xf32>
    %61 = vector.extract_strided_slice %60 {offsets = [0, 0], sizes = [64, 32], strides = [1, 1]} : vector<64x96xf32> to vector<64x32xf32>
    %62 = vector.extract_strided_slice %60 {offsets = [0, 32], sizes = [64, 32], strides = [1, 1]} : vector<64x96xf32> to vector<64x32xf32>
    %63 = vector.extract_strided_slice %60 {offsets = [0, 64], sizes = [64, 32], strides = [1, 1]} : vector<64x96xf32> to vector<64x32xf32>
    %c4_i32 = arith.constant 4 : i32
    %64 = vector.broadcast %c4_i32 : i32 to vector<64x1xi32>
    %65 = arith.cmpi slt, %0, %64 : vector<64x1xi32>
    %66 = vector.extract_strided_slice %61 {offsets = [0, 0], sizes = [1, 32], strides = [1, 1]} : vector<64x32xf32> to vector<1x32xf32>
    %c4_i32_33 = arith.constant 4 : i32
    %67 = tpu.dynamic_rotate %61 by %c4_i32_33 dim 0 : vector<64x32xf32>, i32 -> vector<64x32xf32>
    %68 = vector.shape_cast %65 : vector<64x1xi1> to vector<64x1xi1>
    %69 = vector.broadcast %68 : vector<64x1xi1> to vector<64x32xi1>
    %70 = vector.shape_cast %66 : vector<1x32xf32> to vector<1x32xf32>
    %71 = vector.broadcast %70 : vector<1x32xf32> to vector<64x32xf32>
    %72 = arith.select %69, %71, %67 : vector<64x32xi1>, vector<64x32xf32>
    %c2_i32_34 = arith.constant 2 : i32
    %73 = vector.broadcast %c2_i32_34 : i32 to vector<64x1xi32>
    %74 = arith.cmpi slt, %0, %73 : vector<64x1xi32>
    %75 = vector.extract_strided_slice %62 {offsets = [0, 0], sizes = [1, 32], strides = [1, 1]} : vector<64x32xf32> to vector<1x32xf32>
    %c2_i32_35 = arith.constant 2 : i32
    %76 = tpu.dynamic_rotate %62 by %c2_i32_35 dim 0 : vector<64x32xf32>, i32 -> vector<64x32xf32>
    %77 = vector.shape_cast %74 : vector<64x1xi1> to vector<64x1xi1>
    %78 = vector.broadcast %77 : vector<64x1xi1> to vector<64x32xi1>
    %79 = vector.shape_cast %75 : vector<1x32xf32> to vector<1x32xf32>
    %80 = vector.broadcast %79 : vector<1x32xf32> to vector<64x32xf32>
    %81 = arith.select %78, %80, %76 : vector<64x32xi1>, vector<64x32xf32>
    %82 = arith.addf %72, %81 : vector<64x32xf32>
    %83 = arith.addf %82, %63 : vector<64x32xf32>
    %c1_36 = arith.constant 1 : index
    %c0_37 = arith.constant 0 : index
    %c0_38 = arith.constant 0 : index
    %84 = vector.load %arg6[%c1_36, %c0_37, %c0_38] : memref<3x1x32xf32, #tpu.memory_space<vmem>>, vector<1x1x32xf32>
    %85 = vector.shape_cast %84 : vector<1x1x32xf32> to vector<1x32xf32>
    %86 = vector.broadcast %85 : vector<1x32xf32> to vector<64x32xf32>
    %87 = arith.addf %83, %86 : vector<64x32xf32>
    %cst_39 = arith.constant 0.000000e+00 : f32
    %88 = vector.broadcast %cst_39 : f32 to vector<64x32xf32>
    %89 = arith.maximumf %87, %88 : vector<64x32xf32>
    %90 = arith.truncf %89 : vector<64x32xf32> to vector<64x32xbf16>
    %c1_40 = arith.constant 1 : index
    %c0_41 = arith.constant 0 : index
    %c0_42 = arith.constant 0 : index
    %91 = vector.load %arg7[%c1_40, %c0_41, %c0_42] : memref<3x32x32xbf16, #tpu.memory_space<vmem>>, vector<1x32x32xbf16>
    %92 = vector.shape_cast %91 : vector<1x32x32xbf16> to vector<32x32xbf16>
    %cst_43 = arith.constant dense<0.000000e+00> : vector<64x32xf32>
    %93 = tpu.matmul %90, %92, %cst_43 {dimension_numbers = #tpu.dot_dimension_numbers<[1], [0], [0], [1], [0, 0, 1, 1], [], []>} : vector<64x32xbf16>, vector<32x32xbf16>, vector<64x32xf32> -> vector<64x32xf32>
    %c1_44 = arith.constant 1 : index
    %c0_45 = arith.constant 0 : index
    %c0_46 = arith.constant 0 : index
    %94 = vector.load %arg8[%c1_44, %c0_45, %c0_46] : memref<3x1x32xf32, #tpu.memory_space<vmem>>, vector<1x1x32xf32>
    %95 = vector.shape_cast %94 : vector<1x1x32xf32> to vector<1x32xf32>
    %96 = vector.broadcast %95 : vector<1x32xf32> to vector<64x32xf32>
    %97 = arith.addf %93, %96 : vector<64x32xf32>
    %98 = arith.addf %56, %97 : vector<64x32xf32>
    %99 = arith.mulf %98, %8 : vector<64x32xf32>
    %100 = arith.truncf %99 : vector<64x32xf32> to vector<64x32xbf16>
    %c2 = arith.constant 2 : index
    %c0_47 = arith.constant 0 : index
    %c0_48 = arith.constant 0 : index
    %101 = vector.load %arg5[%c2, %c0_47, %c0_48] : memref<3x32x96xbf16, #tpu.memory_space<vmem>>, vector<1x32x96xbf16>
    %102 = vector.shape_cast %101 : vector<1x32x96xbf16> to vector<32x96xbf16>
    %cst_49 = arith.constant dense<0.000000e+00> : vector<64x96xf32>
    %103 = tpu.matmul %100, %102, %cst_49 {dimension_numbers = #tpu.dot_dimension_numbers<[1], [0], [0], [1], [0, 0, 1, 1], [], []>} : vector<64x32xbf16>, vector<32x96xbf16>, vector<64x96xf32> -> vector<64x96xf32>
    %104 = vector.extract_strided_slice %103 {offsets = [0, 0], sizes = [64, 32], strides = [1, 1]} : vector<64x96xf32> to vector<64x32xf32>
    %105 = vector.extract_strided_slice %103 {offsets = [0, 32], sizes = [64, 32], strides = [1, 1]} : vector<64x96xf32> to vector<64x32xf32>
    %106 = vector.extract_strided_slice %103 {offsets = [0, 64], sizes = [64, 32], strides = [1, 1]} : vector<64x96xf32> to vector<64x32xf32>
    %c8_i32 = arith.constant 8 : i32
    %107 = vector.broadcast %c8_i32 : i32 to vector<64x1xi32>
    %108 = arith.cmpi slt, %0, %107 : vector<64x1xi32>
    %109 = vector.extract_strided_slice %104 {offsets = [0, 0], sizes = [1, 32], strides = [1, 1]} : vector<64x32xf32> to vector<1x32xf32>
    %c8_i32_50 = arith.constant 8 : i32
    %110 = tpu.dynamic_rotate %104 by %c8_i32_50 dim 0 : vector<64x32xf32>, i32 -> vector<64x32xf32>
    %111 = vector.shape_cast %108 : vector<64x1xi1> to vector<64x1xi1>
    %112 = vector.broadcast %111 : vector<64x1xi1> to vector<64x32xi1>
    %113 = vector.shape_cast %109 : vector<1x32xf32> to vector<1x32xf32>
    %114 = vector.broadcast %113 : vector<1x32xf32> to vector<64x32xf32>
    %115 = arith.select %112, %114, %110 : vector<64x32xi1>, vector<64x32xf32>
    %c4_i32_51 = arith.constant 4 : i32
    %116 = vector.broadcast %c4_i32_51 : i32 to vector<64x1xi32>
    %117 = arith.cmpi slt, %0, %116 : vector<64x1xi32>
    %118 = vector.extract_strided_slice %105 {offsets = [0, 0], sizes = [1, 32], strides = [1, 1]} : vector<64x32xf32> to vector<1x32xf32>
    %c4_i32_52 = arith.constant 4 : i32
    %119 = tpu.dynamic_rotate %105 by %c4_i32_52 dim 0 : vector<64x32xf32>, i32 -> vector<64x32xf32>
    %120 = vector.shape_cast %117 : vector<64x1xi1> to vector<64x1xi1>
    %121 = vector.broadcast %120 : vector<64x1xi1> to vector<64x32xi1>
    %122 = vector.shape_cast %118 : vector<1x32xf32> to vector<1x32xf32>
    %123 = vector.broadcast %122 : vector<1x32xf32> to vector<64x32xf32>
    %124 = arith.select %121, %123, %119 : vector<64x32xi1>, vector<64x32xf32>
    %125 = arith.addf %115, %124 : vector<64x32xf32>
    %126 = arith.addf %125, %106 : vector<64x32xf32>
    %c2_53 = arith.constant 2 : index
    %c0_54 = arith.constant 0 : index
    %c0_55 = arith.constant 0 : index
    %127 = vector.load %arg6[%c2_53, %c0_54, %c0_55] : memref<3x1x32xf32, #tpu.memory_space<vmem>>, vector<1x1x32xf32>
    %128 = vector.shape_cast %127 : vector<1x1x32xf32> to vector<1x32xf32>
    %129 = vector.broadcast %128 : vector<1x32xf32> to vector<64x32xf32>
    %130 = arith.addf %126, %129 : vector<64x32xf32>
    %cst_56 = arith.constant 0.000000e+00 : f32
    %131 = vector.broadcast %cst_56 : f32 to vector<64x32xf32>
    %132 = arith.maximumf %130, %131 : vector<64x32xf32>
    %133 = arith.truncf %132 : vector<64x32xf32> to vector<64x32xbf16>
    %c2_57 = arith.constant 2 : index
    %c0_58 = arith.constant 0 : index
    %c0_59 = arith.constant 0 : index
    %134 = vector.load %arg7[%c2_57, %c0_58, %c0_59] : memref<3x32x32xbf16, #tpu.memory_space<vmem>>, vector<1x32x32xbf16>
    %135 = vector.shape_cast %134 : vector<1x32x32xbf16> to vector<32x32xbf16>
    %cst_60 = arith.constant dense<0.000000e+00> : vector<64x32xf32>
    %136 = tpu.matmul %133, %135, %cst_60 {dimension_numbers = #tpu.dot_dimension_numbers<[1], [0], [0], [1], [0, 0, 1, 1], [], []>} : vector<64x32xbf16>, vector<32x32xbf16>, vector<64x32xf32> -> vector<64x32xf32>
    %c2_61 = arith.constant 2 : index
    %c0_62 = arith.constant 0 : index
    %c0_63 = arith.constant 0 : index
    %137 = vector.load %arg8[%c2_61, %c0_62, %c0_63] : memref<3x1x32xf32, #tpu.memory_space<vmem>>, vector<1x1x32xf32>
    %138 = vector.shape_cast %137 : vector<1x1x32xf32> to vector<1x32xf32>
    %139 = vector.broadcast %138 : vector<1x32xf32> to vector<64x32xf32>
    %140 = arith.addf %136, %139 : vector<64x32xf32>
    %141 = arith.addf %99, %140 : vector<64x32xf32>
    %142 = arith.mulf %141, %8 : vector<64x32xf32>
    %143 = arith.truncf %142 : vector<64x32xf32> to vector<64x32xbf16>
    %cst_64 = arith.constant dense<0.000000e+00> : vector<64x128xf32>
    %144 = tpu.matmul %143, %3, %cst_64 {dimension_numbers = #tpu.dot_dimension_numbers<[1], [0], [0], [1], [0, 0, 1, 1], [], []>} : vector<64x32xbf16>, vector<32x128xbf16>, vector<64x128xf32> -> vector<64x128xf32>
    %145 = vector.broadcast %4 : vector<1x128xf32> to vector<64x128xf32>
    %146 = arith.addf %144, %145 : vector<64x128xf32>
    %c0_65 = arith.constant 0 : index
    %c0_66 = arith.constant 0 : index
    %c0_67 = arith.constant 0 : index
    %147 = vector.load %arg22[%c0_65, %c0_66, %c0_67] : memref<2x64x128xf32, #tpu.memory_space<vmem>>, vector<1x64x128xf32>
    %148 = vector.shape_cast %147 : vector<1x64x128xf32> to vector<64x128xf32>
    %149 = vector.shape_cast %146 : vector<64x128xf32> to vector<1x64x128xf32>
    tpu.vector_store %arg22[%c0_65, %c0_66, %c0_67], %149 {strides = array<i32>} : memref<2x64x128xf32, #tpu.memory_space<vmem>>, vector<1x64x128xf32>,
    %c1_68 = arith.constant 1 : index
    %c0_69 = arith.constant 0 : index
    %c0_70 = arith.constant 0 : index
    %150 = vector.load %arg2[%c1_68, %c0_69, %c0_70] : memref<2x64x1xf32, #tpu.memory_space<vmem>>, vector<1x64x1xf32>
    %151 = vector.shape_cast %150 : vector<1x64x1xf32> to vector<64x1xf32>
    %152 = vector.shape_cast %151 : vector<64x1xf32> to vector<64x1xf32>
    %153 = vector.broadcast %152 : vector<64x1xf32> to vector<64x32xf32>
    %c1_71 = arith.constant 1 : index
    %c0_72 = arith.constant 0 : index
    %c0_73 = arith.constant 0 : index
    %154 = vector.load %arg1[%c1_71, %c0_72, %c0_73] : memref<2x64x16xbf16, #tpu.memory_space<vmem>>, vector<1x64x16xbf16>
    %155 = vector.shape_cast %154 : vector<1x64x16xbf16> to vector<64x16xbf16>
    %cst_74 = arith.constant dense<0.000000e+00> : vector<64x32xf32>
    %156 = tpu.matmul %155, %1, %cst_74 {dimension_numbers = #tpu.dot_dimension_numbers<[1], [0], [0], [1], [0, 0, 1, 1], [], []>} : vector<64x16xbf16>, vector<16x32xbf16>, vector<64x32xf32> -> vector<64x32xf32>
    %157 = vector.broadcast %2 : vector<1x32xf32> to vector<64x32xf32>
    %158 = arith.addf %156, %157 : vector<64x32xf32>
    %159 = arith.truncf %158 : vector<64x32xf32> to vector<64x32xbf16>
    %c0_75 = arith.constant 0 : index
    %c0_76 = arith.constant 0 : index
    %c0_77 = arith.constant 0 : index
    %160 = vector.load %arg5[%c0_75, %c0_76, %c0_77] : memref<3x32x96xbf16, #tpu.memory_space<vmem>>, vector<1x32x96xbf16>
    %161 = vector.shape_cast %160 : vector<1x32x96xbf16> to vector<32x96xbf16>
    %cst_78 = arith.constant dense<0.000000e+00> : vector<64x96xf32>
    %162 = tpu.matmul %159, %161, %cst_78 {dimension_numbers = #tpu.dot_dimension_numbers<[1], [0], [0], [1], [0, 0, 1, 1], [], []>} : vector<64x32xbf16>, vector<32x96xbf16>, vector<64x96xf32> -> vector<64x96xf32>
    %163 = vector.extract_strided_slice %162 {offsets = [0, 0], sizes = [64, 32], strides = [1, 1]} : vector<64x96xf32> to vector<64x32xf32>
    %164 = vector.extract_strided_slice %162 {offsets = [0, 32], sizes = [64, 32], strides = [1, 1]} : vector<64x96xf32> to vector<64x32xf32>
    %165 = vector.extract_strided_slice %162 {offsets = [0, 64], sizes = [64, 32], strides = [1, 1]} : vector<64x96xf32> to vector<64x32xf32>
    %c2_i32_79 = arith.constant 2 : i32
    %166 = vector.broadcast %c2_i32_79 : i32 to vector<64x1xi32>
    %167 = arith.cmpi slt, %0, %166 : vector<64x1xi32>
    %168 = vector.extract_strided_slice %163 {offsets = [0, 0], sizes = [1, 32], strides = [1, 1]} : vector<64x32xf32> to vector<1x32xf32>
    %c2_i32_80 = arith.constant 2 : i32
    %169 = tpu.dynamic_rotate %163 by %c2_i32_80 dim 0 : vector<64x32xf32>, i32 -> vector<64x32xf32>
    %170 = vector.shape_cast %167 : vector<64x1xi1> to vector<64x1xi1>
    %171 = vector.broadcast %170 : vector<64x1xi1> to vector<64x32xi1>
    %172 = vector.shape_cast %168 : vector<1x32xf32> to vector<1x32xf32>
    %173 = vector.broadcast %172 : vector<1x32xf32> to vector<64x32xf32>
    %174 = arith.select %171, %173, %169 : vector<64x32xi1>, vector<64x32xf32>
    %c1_i32_81 = arith.constant 1 : i32
    %175 = vector.broadcast %c1_i32_81 : i32 to vector<64x1xi32>
    %176 = arith.cmpi slt, %0, %175 : vector<64x1xi32>
    %177 = vector.extract_strided_slice %164 {offsets = [0, 0], sizes = [1, 32], strides = [1, 1]} : vector<64x32xf32> to vector<1x32xf32>
    %c1_i32_82 = arith.constant 1 : i32
    %178 = tpu.dynamic_rotate %164 by %c1_i32_82 dim 0 : vector<64x32xf32>, i32 -> vector<64x32xf32>
    %179 = vector.shape_cast %176 : vector<64x1xi1> to vector<64x1xi1>
    %180 = vector.broadcast %179 : vector<64x1xi1> to vector<64x32xi1>
    %181 = vector.shape_cast %177 : vector<1x32xf32> to vector<1x32xf32>
    %182 = vector.broadcast %181 : vector<1x32xf32> to vector<64x32xf32>
    %183 = arith.select %180, %182, %178 : vector<64x32xi1>, vector<64x32xf32>
    %184 = arith.addf %174, %183 : vector<64x32xf32>
    %185 = arith.addf %184, %165 : vector<64x32xf32>
    %c0_83 = arith.constant 0 : index
    %c0_84 = arith.constant 0 : index
    %c0_85 = arith.constant 0 : index
    %186 = vector.load %arg6[%c0_83, %c0_84, %c0_85] : memref<3x1x32xf32, #tpu.memory_space<vmem>>, vector<1x1x32xf32>
    %187 = vector.shape_cast %186 : vector<1x1x32xf32> to vector<1x32xf32>
    %188 = vector.broadcast %187 : vector<1x32xf32> to vector<64x32xf32>
    %189 = arith.addf %185, %188 : vector<64x32xf32>
    %cst_86 = arith.constant 0.000000e+00 : f32
    %190 = vector.broadcast %cst_86 : f32 to vector<64x32xf32>
    %191 = arith.maximumf %189, %190 : vector<64x32xf32>
    %192 = arith.truncf %191 : vector<64x32xf32> to vector<64x32xbf16>
    %c0_87 = arith.constant 0 : index
    %c0_88 = arith.constant 0 : index
    %c0_89 = arith.constant 0 : index
    %193 = vector.load %arg7[%c0_87, %c0_88, %c0_89] : memref<3x32x32xbf16, #tpu.memory_space<vmem>>, vector<1x32x32xbf16>
    %194 = vector.shape_cast %193 : vector<1x32x32xbf16> to vector<32x32xbf16>
    %cst_90 = arith.constant dense<0.000000e+00> : vector<64x32xf32>
    %195 = tpu.matmul %192, %194, %cst_90 {dimension_numbers = #tpu.dot_dimension_numbers<[1], [0], [0], [1], [0, 0, 1, 1], [], []>} : vector<64x32xbf16>, vector<32x32xbf16>, vector<64x32xf32> -> vector<64x32xf32>
    %c0_91 = arith.constant 0 : index
    %c0_92 = arith.constant 0 : index
    %c0_93 = arith.constant 0 : index
    %196 = vector.load %arg8[%c0_91, %c0_92, %c0_93] : memref<3x1x32xf32, #tpu.memory_space<vmem>>, vector<1x1x32xf32>
    %197 = vector.shape_cast %196 : vector<1x1x32xf32> to vector<1x32xf32>
    %198 = vector.broadcast %197 : vector<1x32xf32> to vector<64x32xf32>
    %199 = arith.addf %195, %198 : vector<64x32xf32>
    %200 = arith.addf %158, %199 : vector<64x32xf32>
    %201 = arith.mulf %200, %153 : vector<64x32xf32>
    %202 = arith.truncf %201 : vector<64x32xf32> to vector<64x32xbf16>
    %c1_94 = arith.constant 1 : index
    %c0_95 = arith.constant 0 : index
    %c0_96 = arith.constant 0 : index
    %203 = vector.load %arg5[%c1_94, %c0_95, %c0_96] : memref<3x32x96xbf16, #tpu.memory_space<vmem>>, vector<1x32x96xbf16>
    %204 = vector.shape_cast %203 : vector<1x32x96xbf16> to vector<32x96xbf16>
    %cst_97 = arith.constant dense<0.000000e+00> : vector<64x96xf32>
    %205 = tpu.matmul %202, %204, %cst_97 {dimension_numbers = #tpu.dot_dimension_numbers<[1], [0], [0], [1], [0, 0, 1, 1], [], []>} : vector<64x32xbf16>, vector<32x96xbf16>, vector<64x96xf32> -> vector<64x96xf32>
    %206 = vector.extract_strided_slice %205 {offsets = [0, 0], sizes = [64, 32], strides = [1, 1]} : vector<64x96xf32> to vector<64x32xf32>
    %207 = vector.extract_strided_slice %205 {offsets = [0, 32], sizes = [64, 32], strides = [1, 1]} : vector<64x96xf32> to vector<64x32xf32>
    %208 = vector.extract_strided_slice %205 {offsets = [0, 64], sizes = [64, 32], strides = [1, 1]} : vector<64x96xf32> to vector<64x32xf32>
    %c4_i32_98 = arith.constant 4 : i32
    %209 = vector.broadcast %c4_i32_98 : i32 to vector<64x1xi32>
    %210 = arith.cmpi slt, %0, %209 : vector<64x1xi32>
    %211 = vector.extract_strided_slice %206 {offsets = [0, 0], sizes = [1, 32], strides = [1, 1]} : vector<64x32xf32> to vector<1x32xf32>
    %c4_i32_99 = arith.constant 4 : i32
    %212 = tpu.dynamic_rotate %206 by %c4_i32_99 dim 0 : vector<64x32xf32>, i32 -> vector<64x32xf32>
    %213 = vector.shape_cast %210 : vector<64x1xi1> to vector<64x1xi1>
    %214 = vector.broadcast %213 : vector<64x1xi1> to vector<64x32xi1>
    %215 = vector.shape_cast %211 : vector<1x32xf32> to vector<1x32xf32>
    %216 = vector.broadcast %215 : vector<1x32xf32> to vector<64x32xf32>
    %217 = arith.select %214, %216, %212 : vector<64x32xi1>, vector<64x32xf32>
    %c2_i32_100 = arith.constant 2 : i32
    %218 = vector.broadcast %c2_i32_100 : i32 to vector<64x1xi32>
    %219 = arith.cmpi slt, %0, %218 : vector<64x1xi32>
    %220 = vector.extract_strided_slice %207 {offsets = [0, 0], sizes = [1, 32], strides = [1, 1]} : vector<64x32xf32> to vector<1x32xf32>
    %c2_i32_101 = arith.constant 2 : i32
    %221 = tpu.dynamic_rotate %207 by %c2_i32_101 dim 0 : vector<64x32xf32>, i32 -> vector<64x32xf32>
    %222 = vector.shape_cast %219 : vector<64x1xi1> to vector<64x1xi1>
    %223 = vector.broadcast %222 : vector<64x1xi1> to vector<64x32xi1>
    %224 = vector.shape_cast %220 : vector<1x32xf32> to vector<1x32xf32>
    %225 = vector.broadcast %224 : vector<1x32xf32> to vector<64x32xf32>
    %226 = arith.select %223, %225, %221 : vector<64x32xi1>, vector<64x32xf32>
    %227 = arith.addf %217, %226 : vector<64x32xf32>
    %228 = arith.addf %227, %208 : vector<64x32xf32>
    %c1_102 = arith.constant 1 : index
    %c0_103 = arith.constant 0 : index
    %c0_104 = arith.constant 0 : index
    %229 = vector.load %arg6[%c1_102, %c0_103, %c0_104] : memref<3x1x32xf32, #tpu.memory_space<vmem>>, vector<1x1x32xf32>
    %230 = vector.shape_cast %229 : vector<1x1x32xf32> to vector<1x32xf32>
    %231 = vector.broadcast %230 : vector<1x32xf32> to vector<64x32xf32>
    %232 = arith.addf %228, %231 : vector<64x32xf32>
    %cst_105 = arith.constant 0.000000e+00 : f32
    %233 = vector.broadcast %cst_105 : f32 to vector<64x32xf32>
    %234 = arith.maximumf %232, %233 : vector<64x32xf32>
    %235 = arith.truncf %234 : vector<64x32xf32> to vector<64x32xbf16>
    %c1_106 = arith.constant 1 : index
    %c0_107 = arith.constant 0 : index
    %c0_108 = arith.constant 0 : index
    %236 = vector.load %arg7[%c1_106, %c0_107, %c0_108] : memref<3x32x32xbf16, #tpu.memory_space<vmem>>, vector<1x32x32xbf16>
    %237 = vector.shape_cast %236 : vector<1x32x32xbf16> to vector<32x32xbf16>
    %cst_109 = arith.constant dense<0.000000e+00> : vector<64x32xf32>
    %238 = tpu.matmul %235, %237, %cst_109 {dimension_numbers = #tpu.dot_dimension_numbers<[1], [0], [0], [1], [0, 0, 1, 1], [], []>} : vector<64x32xbf16>, vector<32x32xbf16>, vector<64x32xf32> -> vector<64x32xf32>
    %c1_110 = arith.constant 1 : index
    %c0_111 = arith.constant 0 : index
    %c0_112 = arith.constant 0 : index
    %239 = vector.load %arg8[%c1_110, %c0_111, %c0_112] : memref<3x1x32xf32, #tpu.memory_space<vmem>>, vector<1x1x32xf32>
    %240 = vector.shape_cast %239 : vector<1x1x32xf32> to vector<1x32xf32>
    %241 = vector.broadcast %240 : vector<1x32xf32> to vector<64x32xf32>
    %242 = arith.addf %238, %241 : vector<64x32xf32>
    %243 = arith.addf %201, %242 : vector<64x32xf32>
    %244 = arith.mulf %243, %153 : vector<64x32xf32>
    %245 = arith.truncf %244 : vector<64x32xf32> to vector<64x32xbf16>
    %c2_113 = arith.constant 2 : index
    %c0_114 = arith.constant 0 : index
    %c0_115 = arith.constant 0 : index
    %246 = vector.load %arg5[%c2_113, %c0_114, %c0_115] : memref<3x32x96xbf16, #tpu.memory_space<vmem>>, vector<1x32x96xbf16>
    %247 = vector.shape_cast %246 : vector<1x32x96xbf16> to vector<32x96xbf16>
    %cst_116 = arith.constant dense<0.000000e+00> : vector<64x96xf32>
    %248 = tpu.matmul %245, %247, %cst_116 {dimension_numbers = #tpu.dot_dimension_numbers<[1], [0], [0], [1], [0, 0, 1, 1], [], []>} : vector<64x32xbf16>, vector<32x96xbf16>, vector<64x96xf32> -> vector<64x96xf32>
    %249 = vector.extract_strided_slice %248 {offsets = [0, 0], sizes = [64, 32], strides = [1, 1]} : vector<64x96xf32> to vector<64x32xf32>
    %250 = vector.extract_strided_slice %248 {offsets = [0, 32], sizes = [64, 32], strides = [1, 1]} : vector<64x96xf32> to vector<64x32xf32>
    %251 = vector.extract_strided_slice %248 {offsets = [0, 64], sizes = [64, 32], strides = [1, 1]} : vector<64x96xf32> to vector<64x32xf32>
    %c8_i32_117 = arith.constant 8 : i32
    %252 = vector.broadcast %c8_i32_117 : i32 to vector<64x1xi32>
    %253 = arith.cmpi slt, %0, %252 : vector<64x1xi32>
    %254 = vector.extract_strided_slice %249 {offsets = [0, 0], sizes = [1, 32], strides = [1, 1]} : vector<64x32xf32> to vector<1x32xf32>
    %c8_i32_118 = arith.constant 8 : i32
    %255 = tpu.dynamic_rotate %249 by %c8_i32_118 dim 0 : vector<64x32xf32>, i32 -> vector<64x32xf32>
    %256 = vector.shape_cast %253 : vector<64x1xi1> to vector<64x1xi1>
    %257 = vector.broadcast %256 : vector<64x1xi1> to vector<64x32xi1>
    %258 = vector.shape_cast %254 : vector<1x32xf32> to vector<1x32xf32>
    %259 = vector.broadcast %258 : vector<1x32xf32> to vector<64x32xf32>
    %260 = arith.select %257, %259, %255 : vector<64x32xi1>, vector<64x32xf32>
    %c4_i32_119 = arith.constant 4 : i32
    %261 = vector.broadcast %c4_i32_119 : i32 to vector<64x1xi32>
    %262 = arith.cmpi slt, %0, %261 : vector<64x1xi32>
    %263 = vector.extract_strided_slice %250 {offsets = [0, 0], sizes = [1, 32], strides = [1, 1]} : vector<64x32xf32> to vector<1x32xf32>
    %c4_i32_120 = arith.constant 4 : i32
    %264 = tpu.dynamic_rotate %250 by %c4_i32_120 dim 0 : vector<64x32xf32>, i32 -> vector<64x32xf32>
    %265 = vector.shape_cast %262 : vector<64x1xi1> to vector<64x1xi1>
    %266 = vector.broadcast %265 : vector<64x1xi1> to vector<64x32xi1>
    %267 = vector.shape_cast %263 : vector<1x32xf32> to vector<1x32xf32>
    %268 = vector.broadcast %267 : vector<1x32xf32> to vector<64x32xf32>
    %269 = arith.select %266, %268, %264 : vector<64x32xi1>, vector<64x32xf32>
    %270 = arith.addf %260, %269 : vector<64x32xf32>
    %271 = arith.addf %270, %251 : vector<64x32xf32>
    %c2_121 = arith.constant 2 : index
    %c0_122 = arith.constant 0 : index
    %c0_123 = arith.constant 0 : index
    %272 = vector.load %arg6[%c2_121, %c0_122, %c0_123] : memref<3x1x32xf32, #tpu.memory_space<vmem>>, vector<1x1x32xf32>
    %273 = vector.shape_cast %272 : vector<1x1x32xf32> to vector<1x32xf32>
    %274 = vector.broadcast %273 : vector<1x32xf32> to vector<64x32xf32>
    %275 = arith.addf %271, %274 : vector<64x32xf32>
    %cst_124 = arith.constant 0.000000e+00 : f32
    %276 = vector.broadcast %cst_124 : f32 to vector<64x32xf32>
    %277 = arith.maximumf %275, %276 : vector<64x32xf32>
    %278 = arith.truncf %277 : vector<64x32xf32> to vector<64x32xbf16>
    %c2_125 = arith.constant 2 : index
    %c0_126 = arith.constant 0 : index
    %c0_127 = arith.constant 0 : index
    %279 = vector.load %arg7[%c2_125, %c0_126, %c0_127] : memref<3x32x32xbf16, #tpu.memory_space<vmem>>, vector<1x32x32xbf16>
    %280 = vector.shape_cast %279 : vector<1x32x32xbf16> to vector<32x32xbf16>
    %cst_128 = arith.constant dense<0.000000e+00> : vector<64x32xf32>
    %281 = tpu.matmul %278, %280, %cst_128 {dimension_numbers = #tpu.dot_dimension_numbers<[1], [0], [0], [1], [0, 0, 1, 1], [], []>} : vector<64x32xbf16>, vector<32x32xbf16>, vector<64x32xf32> -> vector<64x32xf32>
    %c2_129 = arith.constant 2 : index
    %c0_130 = arith.constant 0 : index
    %c0_131 = arith.constant 0 : index
    %282 = vector.load %arg8[%c2_129, %c0_130, %c0_131] : memref<3x1x32xf32, #tpu.memory_space<vmem>>, vector<1x1x32xf32>
    %283 = vector.shape_cast %282 : vector<1x1x32xf32> to vector<1x32xf32>
    %284 = vector.broadcast %283 : vector<1x32xf32> to vector<64x32xf32>
    %285 = arith.addf %281, %284 : vector<64x32xf32>
    %286 = arith.addf %244, %285 : vector<64x32xf32>
    %287 = arith.mulf %286, %153 : vector<64x32xf32>
    %288 = arith.truncf %287 : vector<64x32xf32> to vector<64x32xbf16>
    %cst_132 = arith.constant dense<0.000000e+00> : vector<64x128xf32>
    %289 = tpu.matmul %288, %3, %cst_132 {dimension_numbers = #tpu.dot_dimension_numbers<[1], [0], [0], [1], [0, 0, 1, 1], [], []>} : vector<64x32xbf16>, vector<32x128xbf16>, vector<64x128xf32> -> vector<64x128xf32>
    %290 = vector.broadcast %4 : vector<1x128xf32> to vector<64x128xf32>
    %291 = arith.addf %289, %290 : vector<64x128xf32>
    %c1_133 = arith.constant 1 : index
    %c0_134 = arith.constant 0 : index
    %c0_135 = arith.constant 0 : index
    %292 = vector.load %arg22[%c1_133, %c0_134, %c0_135] : memref<2x64x128xf32, #tpu.memory_space<vmem>>, vector<1x64x128xf32>
    %293 = vector.shape_cast %292 : vector<1x64x128xf32> to vector<64x128xf32>
    %294 = vector.shape_cast %291 : vector<64x128xf32> to vector<1x64x128xf32>
    tpu.vector_store %arg22[%c1_133, %c0_134, %c0_135], %294 {strides = array<i32>} : memref<2x64x128xf32, #tpu.memory_space<vmem>>, vector<1x64x128xf32>,
    %c0_136 = arith.constant 0 : index
    %c0_137 = arith.constant 0 : index
    %295 = vector.load %arg11[%c0_136, %c0_137] : memref<32x96xbf16, #tpu.memory_space<vmem>>, vector<32x96xbf16>
    %c0_138 = arith.constant 0 : index
    %c0_139 = arith.constant 0 : index
    %296 = vector.load %arg12[%c0_138, %c0_139] : memref<1x96xf32, #tpu.memory_space<vmem>>, vector<1x96xf32>
    %cst_140 = arith.constant 0.000000e+00 : f32
    %297 = vector.broadcast %cst_140 : f32 to vector<2x32xf32>
    %c0_i32 = arith.constant 0 : i32
    %c4_i32_141 = arith.constant 4 : i32
    %298 = arith.addi %c0_i32, %c4_i32_141 : i32
    %c1_i32_142 = arith.constant 1 : i32
    %299 = scf.for %arg24 = %c0_i32 to %298 step %c1_i32_142 iter_args(%arg25 = %297) -> (vector<2x32xf32>)  : i32 {
      %c16_i32 = arith.constant 16 : i32
      %338 = arith.muli %arg24, %c16_i32 : i32
      %339 = tpu.assume_multiple %338, 16 : i32
      %c0_177 = arith.constant 0 : index
      %340 = arith.index_cast %339 : i32 to index
      %c0_178 = arith.constant 0 : index
      %341 = vector.load %arg22[%c0_177, %340, %c0_178] : memref<2x64x128xf32, #tpu.memory_space<vmem>>, vector<2x16x128xf32>
      %342 = vector.extract_strided_slice %341 {offsets = [0, 0, 0], sizes = [2, 1, 96], strides = [1, 1, 1]} : vector<2x16x128xf32> to vector<2x1x96xf32>
      %343 = vector.shape_cast %342 : vector<2x1x96xf32> to vector<2x96xf32>
      %344 = arith.truncf %arg25 : vector<2x32xf32> to vector<2x32xbf16>
      %cst_179 = arith.constant dense<0.000000e+00> : vector<2x96xf32>
      %345 = tpu.matmul %344, %295, %cst_179 {dimension_numbers = #tpu.dot_dimension_numbers<[1], [0], [0], [1], [0, 0, 1, 1], [], []>} : vector<2x32xbf16>, vector<32x96xbf16>, vector<2x96xf32> -> vector<2x96xf32>
      %346 = vector.broadcast %296 : vector<1x96xf32> to vector<2x96xf32>
      %347 = arith.addf %345, %346 : vector<2x96xf32>
      %348 = vector.extract_strided_slice %343 {offsets = [0, 0], sizes = [2, 32], strides = [1, 1]} : vector<2x96xf32> to vector<2x32xf32>
      %349 = vector.extract_strided_slice %347 {offsets = [0, 0], sizes = [2, 32], strides = [1, 1]} : vector<2x96xf32> to vector<2x32xf32>
      %350 = arith.addf %348, %349 : vector<2x32xf32>
      %351 = arith.negf %350 : vector<2x32xf32>
      %352 = math.exp %351 : vector<2x32xf32>
      %cst_180 = arith.constant 1.000000e+00 : f32
      %353 = vector.broadcast %cst_180 : f32 to vector<2x32xf32>
      %354 = arith.addf %353, %352 : vector<2x32xf32>
      %355 = arith.divf %353, %354 : vector<2x32xf32>
      %356 = vector.extract_strided_slice %343 {offsets = [0, 32], sizes = [2, 32], strides = [1, 1]} : vector<2x96xf32> to vector<2x32xf32>
      %357 = vector.extract_strided_slice %347 {offsets = [0, 32], sizes = [2, 32], strides = [1, 1]} : vector<2x96xf32> to vector<2x32xf32>
      %358 = arith.addf %356, %357 : vector<2x32xf32>
      %359 = arith.negf %358 : vector<2x32xf32>
      %360 = math.exp %359 : vector<2x32xf32>
      %cst_181 = arith.constant 1.000000e+00 : f32
      %361 = vector.broadcast %cst_181 : f32 to vector<2x32xf32>
      %362 = arith.addf %361, %360 : vector<2x32xf32>
      %363 = arith.divf %361, %362 : vector<2x32xf32>
      %364 = vector.extract_strided_slice %343 {offsets = [0, 64], sizes = [2, 32], strides = [1, 1]} : vector<2x96xf32> to vector<2x32xf32>
      %365 = vector.extract_strided_slice %347 {offsets = [0, 64], sizes = [2, 32], strides = [1, 1]} : vector<2x96xf32> to vector<2x32xf32>
      %366 = arith.mulf %355, %365 : vector<2x32xf32>
      %367 = arith.addf %364, %366 : vector<2x32xf32>
      %368 = math.tanh %367 : vector<2x32xf32>
      %cst_182 = arith.constant 1.000000e+00 : f32
      %369 = vector.broadcast %cst_182 : f32 to vector<2x32xf32>
      %370 = arith.subf %369, %363 : vector<2x32xf32>
      %371 = arith.mulf %370, %368 : vector<2x32xf32>
      %372 = arith.mulf %363, %arg25 : vector<2x32xf32>
      %373 = arith.addf %371, %372 : vector<2x32xf32>
      %374 = vector.extract_strided_slice %341 {offsets = [0, 1, 0], sizes = [2, 1, 96], strides = [1, 1, 1]} : vector<2x16x128xf32> to vector<2x1x96xf32>
      %375 = vector.shape_cast %374 : vector<2x1x96xf32> to vector<2x96xf32>
      %376 = arith.truncf %373 : vector<2x32xf32> to vector<2x32xbf16>
      %cst_183 = arith.constant dense<0.000000e+00> : vector<2x96xf32>
      %377 = tpu.matmul %376, %295, %cst_183 {dimension_numbers = #tpu.dot_dimension_numbers<[1], [0], [0], [1], [0, 0, 1, 1], [], []>} : vector<2x32xbf16>, vector<32x96xbf16>, vector<2x96xf32> -> vector<2x96xf32>
      %378 = vector.broadcast %296 : vector<1x96xf32> to vector<2x96xf32>
      %379 = arith.addf %377, %378 : vector<2x96xf32>
      %380 = vector.extract_strided_slice %375 {offsets = [0, 0], sizes = [2, 32], strides = [1, 1]} : vector<2x96xf32> to vector<2x32xf32>
      %381 = vector.extract_strided_slice %379 {offsets = [0, 0], sizes = [2, 32], strides = [1, 1]} : vector<2x96xf32> to vector<2x32xf32>
      %382 = arith.addf %380, %381 : vector<2x32xf32>
      %383 = arith.negf %382 : vector<2x32xf32>
      %384 = math.exp %383 : vector<2x32xf32>
      %cst_184 = arith.constant 1.000000e+00 : f32
      %385 = vector.broadcast %cst_184 : f32 to vector<2x32xf32>
      %386 = arith.addf %385, %384 : vector<2x32xf32>
      %387 = arith.divf %385, %386 : vector<2x32xf32>
      %388 = vector.extract_strided_slice %375 {offsets = [0, 32], sizes = [2, 32], strides = [1, 1]} : vector<2x96xf32> to vector<2x32xf32>
      %389 = vector.extract_strided_slice %379 {offsets = [0, 32], sizes = [2, 32], strides = [1, 1]} : vector<2x96xf32> to vector<2x32xf32>
      %390 = arith.addf %388, %389 : vector<2x32xf32>
      %391 = arith.negf %390 : vector<2x32xf32>
      %392 = math.exp %391 : vector<2x32xf32>
      %cst_185 = arith.constant 1.000000e+00 : f32
      %393 = vector.broadcast %cst_185 : f32 to vector<2x32xf32>
      %394 = arith.addf %393, %392 : vector<2x32xf32>
      %395 = arith.divf %393, %394 : vector<2x32xf32>
      %396 = vector.extract_strided_slice %375 {offsets = [0, 64], sizes = [2, 32], strides = [1, 1]} : vector<2x96xf32> to vector<2x32xf32>
      %397 = vector.extract_strided_slice %379 {offsets = [0, 64], sizes = [2, 32], strides = [1, 1]} : vector<2x96xf32> to vector<2x32xf32>
      %398 = arith.mulf %387, %397 : vector<2x32xf32>
      %399 = arith.addf %396, %398 : vector<2x32xf32>
      %400 = math.tanh %399 : vector<2x32xf32>
      %cst_186 = arith.constant 1.000000e+00 : f32
      %401 = vector.broadcast %cst_186 : f32 to vector<2x32xf32>
      %402 = arith.subf %401, %395 : vector<2x32xf32>
      %403 = arith.mulf %402, %400 : vector<2x32xf32>
      %404 = arith.mulf %395, %373 : vector<2x32xf32>
      %405 = arith.addf %403, %404 : vector<2x32xf32>
      %406 = vector.extract_strided_slice %341 {offsets = [0, 2, 0], sizes = [2, 1, 96], strides = [1, 1, 1]} : vector<2x16x128xf32> to vector<2x1x96xf32>
      %407 = vector.shape_cast %406 : vector<2x1x96xf32> to vector<2x96xf32>
      %408 = arith.truncf %405 : vector<2x32xf32> to vector<2x32xbf16>
      %cst_187 = arith.constant dense<0.000000e+00> : vector<2x96xf32>
      %409 = tpu.matmul %408, %295, %cst_187 {dimension_numbers = #tpu.dot_dimension_numbers<[1], [0], [0], [1], [0, 0, 1, 1], [], []>} : vector<2x32xbf16>, vector<32x96xbf16>, vector<2x96xf32> -> vector<2x96xf32>
      %410 = vector.broadcast %296 : vector<1x96xf32> to vector<2x96xf32>
      %411 = arith.addf %409, %410 : vector<2x96xf32>
      %412 = vector.extract_strided_slice %407 {offsets = [0, 0], sizes = [2, 32], strides = [1, 1]} : vector<2x96xf32> to vector<2x32xf32>
      %413 = vector.extract_strided_slice %411 {offsets = [0, 0], sizes = [2, 32], strides = [1, 1]} : vector<2x96xf32> to vector<2x32xf32>
      %414 = arith.addf %412, %413 : vector<2x32xf32>
      %415 = arith.negf %414 : vector<2x32xf32>
      %416 = math.exp %415 : vector<2x32xf32>
      %cst_188 = arith.constant 1.000000e+00 : f32
      %417 = vector.broadcast %cst_188 : f32 to vector<2x32xf32>
      %418 = arith.addf %417, %416 : vector<2x32xf32>
      %419 = arith.divf %417, %418 : vector<2x32xf32>
      %420 = vector.extract_strided_slice %407 {offsets = [0, 32], sizes = [2, 32], strides = [1, 1]} : vector<2x96xf32> to vector<2x32xf32>
      %421 = vector.extract_strided_slice %411 {offsets = [0, 32], sizes = [2, 32], strides = [1, 1]} : vector<2x96xf32> to vector<2x32xf32>
      %422 = arith.addf %420, %421 : vector<2x32xf32>
      %423 = arith.negf %422 : vector<2x32xf32>
      %424 = math.exp %423 : vector<2x32xf32>
      %cst_189 = arith.constant 1.000000e+00 : f32
      %425 = vector.broadcast %cst_189 : f32 to vector<2x32xf32>
      %426 = arith.addf %425, %424 : vector<2x32xf32>
      %427 = arith.divf %425, %426 : vector<2x32xf32>
      %428 = vector.extract_strided_slice %407 {offsets = [0, 64], sizes = [2, 32], strides = [1, 1]} : vector<2x96xf32> to vector<2x32xf32>
      %429 = vector.extract_strided_slice %411 {offsets = [0, 64], sizes = [2, 32], strides = [1, 1]} : vector<2x96xf32> to vector<2x32xf32>
      %430 = arith.mulf %419, %429 : vector<2x32xf32>
      %431 = arith.addf %428, %430 : vector<2x32xf32>
      %432 = math.tanh %431 : vector<2x32xf32>
      %cst_190 = arith.constant 1.000000e+00 : f32
      %433 = vector.broadcast %cst_190 : f32 to vector<2x32xf32>
      %434 = arith.subf %433, %427 : vector<2x32xf32>
      %435 = arith.mulf %434, %432 : vector<2x32xf32>
      %436 = arith.mulf %427, %405 : vector<2x32xf32>
      %437 = arith.addf %435, %436 : vector<2x32xf32>
      %438 = vector.extract_strided_slice %341 {offsets = [0, 3, 0], sizes = [2, 1, 96], strides = [1, 1, 1]} : vector<2x16x128xf32> to vector<2x1x96xf32>
      %439 = vector.shape_cast %438 : vector<2x1x96xf32> to vector<2x96xf32>
      %440 = arith.truncf %437 : vector<2x32xf32> to vector<2x32xbf16>
      %cst_191 = arith.constant dense<0.000000e+00> : vector<2x96xf32>
      %441 = tpu.matmul %440, %295, %cst_191 {dimension_numbers = #tpu.dot_dimension_numbers<[1], [0], [0], [1], [0, 0, 1, 1], [], []>} : vector<2x32xbf16>, vector<32x96xbf16>, vector<2x96xf32> -> vector<2x96xf32>
      %442 = vector.broadcast %296 : vector<1x96xf32> to vector<2x96xf32>
      %443 = arith.addf %441, %442 : vector<2x96xf32>
      %444 = vector.extract_strided_slice %439 {offsets = [0, 0], sizes = [2, 32], strides = [1, 1]} : vector<2x96xf32> to vector<2x32xf32>
      %445 = vector.extract_strided_slice %443 {offsets = [0, 0], sizes = [2, 32], strides = [1, 1]} : vector<2x96xf32> to vector<2x32xf32>
      %446 = arith.addf %444, %445 : vector<2x32xf32>
      %447 = arith.negf %446 : vector<2x32xf32>
      %448 = math.exp %447 : vector<2x32xf32>
      %cst_192 = arith.constant 1.000000e+00 : f32
      %449 = vector.broadcast %cst_192 : f32 to vector<2x32xf32>
      %450 = arith.addf %449, %448 : vector<2x32xf32>
      %451 = arith.divf %449, %450 : vector<2x32xf32>
      %452 = vector.extract_strided_slice %439 {offsets = [0, 32], sizes = [2, 32], strides = [1, 1]} : vector<2x96xf32> to vector<2x32xf32>
      %453 = vector.extract_strided_slice %443 {offsets = [0, 32], sizes = [2, 32], strides = [1, 1]} : vector<2x96xf32> to vector<2x32xf32>
      %454 = arith.addf %452, %453 : vector<2x32xf32>
      %455 = arith.negf %454 : vector<2x32xf32>
      %456 = math.exp %455 : vector<2x32xf32>
      %cst_193 = arith.constant 1.000000e+00 : f32
      %457 = vector.broadcast %cst_193 : f32 to vector<2x32xf32>
      %458 = arith.addf %457, %456 : vector<2x32xf32>
      %459 = arith.divf %457, %458 : vector<2x32xf32>
      %460 = vector.extract_strided_slice %439 {offsets = [0, 64], sizes = [2, 32], strides = [1, 1]} : vector<2x96xf32> to vector<2x32xf32>
      %461 = vector.extract_strided_slice %443 {offsets = [0, 64], sizes = [2, 32], strides = [1, 1]} : vector<2x96xf32> to vector<2x32xf32>
      %462 = arith.mulf %451, %461 : vector<2x32xf32>
      %463 = arith.addf %460, %462 : vector<2x32xf32>
      %464 = math.tanh %463 : vector<2x32xf32>
      %cst_194 = arith.constant 1.000000e+00 : f32
      %465 = vector.broadcast %cst_194 : f32 to vector<2x32xf32>
      %466 = arith.subf %465, %459 : vector<2x32xf32>
      %467 = arith.mulf %466, %464 : vector<2x32xf32>
      %468 = arith.mulf %459, %437 : vector<2x32xf32>
      %469 = arith.addf %467, %468 : vector<2x32xf32>
      %470 = vector.extract_strided_slice %341 {offsets = [0, 4, 0], sizes = [2, 1, 96], strides = [1, 1, 1]} : vector<2x16x128xf32> to vector<2x1x96xf32>
      %471 = vector.shape_cast %470 : vector<2x1x96xf32> to vector<2x96xf32>
      %472 = arith.truncf %469 : vector<2x32xf32> to vector<2x32xbf16>
      %cst_195 = arith.constant dense<0.000000e+00> : vector<2x96xf32>
      %473 = tpu.matmul %472, %295, %cst_195 {dimension_numbers = #tpu.dot_dimension_numbers<[1], [0], [0], [1], [0, 0, 1, 1], [], []>} : vector<2x32xbf16>, vector<32x96xbf16>, vector<2x96xf32> -> vector<2x96xf32>
      %474 = vector.broadcast %296 : vector<1x96xf32> to vector<2x96xf32>
      %475 = arith.addf %473, %474 : vector<2x96xf32>
      %476 = vector.extract_strided_slice %471 {offsets = [0, 0], sizes = [2, 32], strides = [1, 1]} : vector<2x96xf32> to vector<2x32xf32>
      %477 = vector.extract_strided_slice %475 {offsets = [0, 0], sizes = [2, 32], strides = [1, 1]} : vector<2x96xf32> to vector<2x32xf32>
      %478 = arith.addf %476, %477 : vector<2x32xf32>
      %479 = arith.negf %478 : vector<2x32xf32>
      %480 = math.exp %479 : vector<2x32xf32>
      %cst_196 = arith.constant 1.000000e+00 : f32
      %481 = vector.broadcast %cst_196 : f32 to vector<2x32xf32>
      %482 = arith.addf %481, %480 : vector<2x32xf32>
      %483 = arith.divf %481, %482 : vector<2x32xf32>
      %484 = vector.extract_strided_slice %471 {offsets = [0, 32], sizes = [2, 32], strides = [1, 1]} : vector<2x96xf32> to vector<2x32xf32>
      %485 = vector.extract_strided_slice %475 {offsets = [0, 32], sizes = [2, 32], strides = [1, 1]} : vector<2x96xf32> to vector<2x32xf32>
      %486 = arith.addf %484, %485 : vector<2x32xf32>
      %487 = arith.negf %486 : vector<2x32xf32>
      %488 = math.exp %487 : vector<2x32xf32>
      %cst_197 = arith.constant 1.000000e+00 : f32
      %489 = vector.broadcast %cst_197 : f32 to vector<2x32xf32>
      %490 = arith.addf %489, %488 : vector<2x32xf32>
      %491 = arith.divf %489, %490 : vector<2x32xf32>
      %492 = vector.extract_strided_slice %471 {offsets = [0, 64], sizes = [2, 32], strides = [1, 1]} : vector<2x96xf32> to vector<2x32xf32>
      %493 = vector.extract_strided_slice %475 {offsets = [0, 64], sizes = [2, 32], strides = [1, 1]} : vector<2x96xf32> to vector<2x32xf32>
      %494 = arith.mulf %483, %493 : vector<2x32xf32>
      %495 = arith.addf %492, %494 : vector<2x32xf32>
      %496 = math.tanh %495 : vector<2x32xf32>
      %cst_198 = arith.constant 1.000000e+00 : f32
      %497 = vector.broadcast %cst_198 : f32 to vector<2x32xf32>
      %498 = arith.subf %497, %491 : vector<2x32xf32>
      %499 = arith.mulf %498, %496 : vector<2x32xf32>
      %500 = arith.mulf %491, %469 : vector<2x32xf32>
      %501 = arith.addf %499, %500 : vector<2x32xf32>
      %502 = vector.extract_strided_slice %341 {offsets = [0, 5, 0], sizes = [2, 1, 96], strides = [1, 1, 1]} : vector<2x16x128xf32> to vector<2x1x96xf32>
      %503 = vector.shape_cast %502 : vector<2x1x96xf32> to vector<2x96xf32>
      %504 = arith.truncf %501 : vector<2x32xf32> to vector<2x32xbf16>
      %cst_199 = arith.constant dense<0.000000e+00> : vector<2x96xf32>
      %505 = tpu.matmul %504, %295, %cst_199 {dimension_numbers = #tpu.dot_dimension_numbers<[1], [0], [0], [1], [0, 0, 1, 1], [], []>} : vector<2x32xbf16>, vector<32x96xbf16>, vector<2x96xf32> -> vector<2x96xf32>
      %506 = vector.broadcast %296 : vector<1x96xf32> to vector<2x96xf32>
      %507 = arith.addf %505, %506 : vector<2x96xf32>
      %508 = vector.extract_strided_slice %503 {offsets = [0, 0], sizes = [2, 32], strides = [1, 1]} : vector<2x96xf32> to vector<2x32xf32>
      %509 = vector.extract_strided_slice %507 {offsets = [0, 0], sizes = [2, 32], strides = [1, 1]} : vector<2x96xf32> to vector<2x32xf32>
      %510 = arith.addf %508, %509 : vector<2x32xf32>
      %511 = arith.negf %510 : vector<2x32xf32>
      %512 = math.exp %511 : vector<2x32xf32>
      %cst_200 = arith.constant 1.000000e+00 : f32
      %513 = vector.broadcast %cst_200 : f32 to vector<2x32xf32>
      %514 = arith.addf %513, %512 : vector<2x32xf32>
      %515 = arith.divf %513, %514 : vector<2x32xf32>
      %516 = vector.extract_strided_slice %503 {offsets = [0, 32], sizes = [2, 32], strides = [1, 1]} : vector<2x96xf32> to vector<2x32xf32>
      %517 = vector.extract_strided_slice %507 {offsets = [0, 32], sizes = [2, 32], strides = [1, 1]} : vector<2x96xf32> to vector<2x32xf32>
      %518 = arith.addf %516, %517 : vector<2x32xf32>
      %519 = arith.negf %518 : vector<2x32xf32>
      %520 = math.exp %519 : vector<2x32xf32>
      %cst_201 = arith.constant 1.000000e+00 : f32
      %521 = vector.broadcast %cst_201 : f32 to vector<2x32xf32>
      %522 = arith.addf %521, %520 : vector<2x32xf32>
      %523 = arith.divf %521, %522 : vector<2x32xf32>
      %524 = vector.extract_strided_slice %503 {offsets = [0, 64], sizes = [2, 32], strides = [1, 1]} : vector<2x96xf32> to vector<2x32xf32>
      %525 = vector.extract_strided_slice %507 {offsets = [0, 64], sizes = [2, 32], strides = [1, 1]} : vector<2x96xf32> to vector<2x32xf32>
      %526 = arith.mulf %515, %525 : vector<2x32xf32>
      %527 = arith.addf %524, %526 : vector<2x32xf32>
      %528 = math.tanh %527 : vector<2x32xf32>
      %cst_202 = arith.constant 1.000000e+00 : f32
      %529 = vector.broadcast %cst_202 : f32 to vector<2x32xf32>
      %530 = arith.subf %529, %523 : vector<2x32xf32>
      %531 = arith.mulf %530, %528 : vector<2x32xf32>
      %532 = arith.mulf %523, %501 : vector<2x32xf32>
      %533 = arith.addf %531, %532 : vector<2x32xf32>
      %534 = vector.extract_strided_slice %341 {offsets = [0, 6, 0], sizes = [2, 1, 96], strides = [1, 1, 1]} : vector<2x16x128xf32> to vector<2x1x96xf32>
      %535 = vector.shape_cast %534 : vector<2x1x96xf32> to vector<2x96xf32>
      %536 = arith.truncf %533 : vector<2x32xf32> to vector<2x32xbf16>
      %cst_203 = arith.constant dense<0.000000e+00> : vector<2x96xf32>
      %537 = tpu.matmul %536, %295, %cst_203 {dimension_numbers = #tpu.dot_dimension_numbers<[1], [0], [0], [1], [0, 0, 1, 1], [], []>} : vector<2x32xbf16>, vector<32x96xbf16>, vector<2x96xf32> -> vector<2x96xf32>
      %538 = vector.broadcast %296 : vector<1x96xf32> to vector<2x96xf32>
      %539 = arith.addf %537, %538 : vector<2x96xf32>
      %540 = vector.extract_strided_slice %535 {offsets = [0, 0], sizes = [2, 32], strides = [1, 1]} : vector<2x96xf32> to vector<2x32xf32>
      %541 = vector.extract_strided_slice %539 {offsets = [0, 0], sizes = [2, 32], strides = [1, 1]} : vector<2x96xf32> to vector<2x32xf32>
      %542 = arith.addf %540, %541 : vector<2x32xf32>
      %543 = arith.negf %542 : vector<2x32xf32>
      %544 = math.exp %543 : vector<2x32xf32>
      %cst_204 = arith.constant 1.000000e+00 : f32
      %545 = vector.broadcast %cst_204 : f32 to vector<2x32xf32>
      %546 = arith.addf %545, %544 : vector<2x32xf32>
      %547 = arith.divf %545, %546 : vector<2x32xf32>
      %548 = vector.extract_strided_slice %535 {offsets = [0, 32], sizes = [2, 32], strides = [1, 1]} : vector<2x96xf32> to vector<2x32xf32>
      %549 = vector.extract_strided_slice %539 {offsets = [0, 32], sizes = [2, 32], strides = [1, 1]} : vector<2x96xf32> to vector<2x32xf32>
      %550 = arith.addf %548, %549 : vector<2x32xf32>
      %551 = arith.negf %550 : vector<2x32xf32>
      %552 = math.exp %551 : vector<2x32xf32>
      %cst_205 = arith.constant 1.000000e+00 : f32
      %553 = vector.broadcast %cst_205 : f32 to vector<2x32xf32>
      %554 = arith.addf %553, %552 : vector<2x32xf32>
      %555 = arith.divf %553, %554 : vector<2x32xf32>
      %556 = vector.extract_strided_slice %535 {offsets = [0, 64], sizes = [2, 32], strides = [1, 1]} : vector<2x96xf32> to vector<2x32xf32>
      %557 = vector.extract_strided_slice %539 {offsets = [0, 64], sizes = [2, 32], strides = [1, 1]} : vector<2x96xf32> to vector<2x32xf32>
      %558 = arith.mulf %547, %557 : vector<2x32xf32>
      %559 = arith.addf %556, %558 : vector<2x32xf32>
      %560 = math.tanh %559 : vector<2x32xf32>
      %cst_206 = arith.constant 1.000000e+00 : f32
      %561 = vector.broadcast %cst_206 : f32 to vector<2x32xf32>
      %562 = arith.subf %561, %555 : vector<2x32xf32>
      %563 = arith.mulf %562, %560 : vector<2x32xf32>
      %564 = arith.mulf %555, %533 : vector<2x32xf32>
      %565 = arith.addf %563, %564 : vector<2x32xf32>
      %566 = vector.extract_strided_slice %341 {offsets = [0, 7, 0], sizes = [2, 1, 96], strides = [1, 1, 1]} : vector<2x16x128xf32> to vector<2x1x96xf32>
      %567 = vector.shape_cast %566 : vector<2x1x96xf32> to vector<2x96xf32>
      %568 = arith.truncf %565 : vector<2x32xf32> to vector<2x32xbf16>
      %cst_207 = arith.constant dense<0.000000e+00> : vector<2x96xf32>
      %569 = tpu.matmul %568, %295, %cst_207 {dimension_numbers = #tpu.dot_dimension_numbers<[1], [0], [0], [1], [0, 0, 1, 1], [], []>} : vector<2x32xbf16>, vector<32x96xbf16>, vector<2x96xf32> -> vector<2x96xf32>
      %570 = vector.broadcast %296 : vector<1x96xf32> to vector<2x96xf32>
      %571 = arith.addf %569, %570 : vector<2x96xf32>
      %572 = vector.extract_strided_slice %567 {offsets = [0, 0], sizes = [2, 32], strides = [1, 1]} : vector<2x96xf32> to vector<2x32xf32>
      %573 = vector.extract_strided_slice %571 {offsets = [0, 0], sizes = [2, 32], strides = [1, 1]} : vector<2x96xf32> to vector<2x32xf32>
      %574 = arith.addf %572, %573 : vector<2x32xf32>
      %575 = arith.negf %574 : vector<2x32xf32>
      %576 = math.exp %575 : vector<2x32xf32>
      %cst_208 = arith.constant 1.000000e+00 : f32
      %577 = vector.broadcast %cst_208 : f32 to vector<2x32xf32>
      %578 = arith.addf %577, %576 : vector<2x32xf32>
      %579 = arith.divf %577, %578 : vector<2x32xf32>
      %580 = vector.extract_strided_slice %567 {offsets = [0, 32], sizes = [2, 32], strides = [1, 1]} : vector<2x96xf32> to vector<2x32xf32>
      %581 = vector.extract_strided_slice %571 {offsets = [0, 32], sizes = [2, 32], strides = [1, 1]} : vector<2x96xf32> to vector<2x32xf32>
      %582 = arith.addf %580, %581 : vector<2x32xf32>
      %583 = arith.negf %582 : vector<2x32xf32>
      %584 = math.exp %583 : vector<2x32xf32>
      %cst_209 = arith.constant 1.000000e+00 : f32
      %585 = vector.broadcast %cst_209 : f32 to vector<2x32xf32>
      %586 = arith.addf %585, %584 : vector<2x32xf32>
      %587 = arith.divf %585, %586 : vector<2x32xf32>
      %588 = vector.extract_strided_slice %567 {offsets = [0, 64], sizes = [2, 32], strides = [1, 1]} : vector<2x96xf32> to vector<2x32xf32>
      %589 = vector.extract_strided_slice %571 {offsets = [0, 64], sizes = [2, 32], strides = [1, 1]} : vector<2x96xf32> to vector<2x32xf32>
      %590 = arith.mulf %579, %589 : vector<2x32xf32>
      %591 = arith.addf %588, %590 : vector<2x32xf32>
      %592 = math.tanh %591 : vector<2x32xf32>
      %cst_210 = arith.constant 1.000000e+00 : f32
      %593 = vector.broadcast %cst_210 : f32 to vector<2x32xf32>
      %594 = arith.subf %593, %587 : vector<2x32xf32>
      %595 = arith.mulf %594, %592 : vector<2x32xf32>
      %596 = arith.mulf %587, %565 : vector<2x32xf32>
      %597 = arith.addf %595, %596 : vector<2x32xf32>
      %598 = vector.extract_strided_slice %341 {offsets = [0, 8, 0], sizes = [2, 1, 96], strides = [1, 1, 1]} : vector<2x16x128xf32> to vector<2x1x96xf32>
      %599 = vector.shape_cast %598 : vector<2x1x96xf32> to vector<2x96xf32>
      %600 = arith.truncf %597 : vector<2x32xf32> to vector<2x32xbf16>
      %cst_211 = arith.constant dense<0.000000e+00> : vector<2x96xf32>
      %601 = tpu.matmul %600, %295, %cst_211 {dimension_numbers = #tpu.dot_dimension_numbers<[1], [0], [0], [1], [0, 0, 1, 1], [], []>} : vector<2x32xbf16>, vector<32x96xbf16>, vector<2x96xf32> -> vector<2x96xf32>
      %602 = vector.broadcast %296 : vector<1x96xf32> to vector<2x96xf32>
      %603 = arith.addf %601, %602 : vector<2x96xf32>
      %604 = vector.extract_strided_slice %599 {offsets = [0, 0], sizes = [2, 32], strides = [1, 1]} : vector<2x96xf32> to vector<2x32xf32>
      %605 = vector.extract_strided_slice %603 {offsets = [0, 0], sizes = [2, 32], strides = [1, 1]} : vector<2x96xf32> to vector<2x32xf32>
      %606 = arith.addf %604, %605 : vector<2x32xf32>
      %607 = arith.negf %606 : vector<2x32xf32>
      %608 = math.exp %607 : vector<2x32xf32>
      %cst_212 = arith.constant 1.000000e+00 : f32
      %609 = vector.broadcast %cst_212 : f32 to vector<2x32xf32>
      %610 = arith.addf %609, %608 : vector<2x32xf32>
      %611 = arith.divf %609, %610 : vector<2x32xf32>
      %612 = vector.extract_strided_slice %599 {offsets = [0, 32], sizes = [2, 32], strides = [1, 1]} : vector<2x96xf32> to vector<2x32xf32>
      %613 = vector.extract_strided_slice %603 {offsets = [0, 32], sizes = [2, 32], strides = [1, 1]} : vector<2x96xf32> to vector<2x32xf32>
      %614 = arith.addf %612, %613 : vector<2x32xf32>
      %615 = arith.negf %614 : vector<2x32xf32>
      %616 = math.exp %615 : vector<2x32xf32>
      %cst_213 = arith.constant 1.000000e+00 : f32
      %617 = vector.broadcast %cst_213 : f32 to vector<2x32xf32>
      %618 = arith.addf %617, %616 : vector<2x32xf32>
      %619 = arith.divf %617, %618 : vector<2x32xf32>
      %620 = vector.extract_strided_slice %599 {offsets = [0, 64], sizes = [2, 32], strides = [1, 1]} : vector<2x96xf32> to vector<2x32xf32>
      %621 = vector.extract_strided_slice %603 {offsets = [0, 64], sizes = [2, 32], strides = [1, 1]} : vector<2x96xf32> to vector<2x32xf32>
      %622 = arith.mulf %611, %621 : vector<2x32xf32>
      %623 = arith.addf %620, %622 : vector<2x32xf32>
      %624 = math.tanh %623 : vector<2x32xf32>
      %cst_214 = arith.constant 1.000000e+00 : f32
      %625 = vector.broadcast %cst_214 : f32 to vector<2x32xf32>
      %626 = arith.subf %625, %619 : vector<2x32xf32>
      %627 = arith.mulf %626, %624 : vector<2x32xf32>
      %628 = arith.mulf %619, %597 : vector<2x32xf32>
      %629 = arith.addf %627, %628 : vector<2x32xf32>
      %630 = vector.extract_strided_slice %341 {offsets = [0, 9, 0], sizes = [2, 1, 96], strides = [1, 1, 1]} : vector<2x16x128xf32> to vector<2x1x96xf32>
      %631 = vector.shape_cast %630 : vector<2x1x96xf32> to vector<2x96xf32>
      %632 = arith.truncf %629 : vector<2x32xf32> to vector<2x32xbf16>
      %cst_215 = arith.constant dense<0.000000e+00> : vector<2x96xf32>
      %633 = tpu.matmul %632, %295, %cst_215 {dimension_numbers = #tpu.dot_dimension_numbers<[1], [0], [0], [1], [0, 0, 1, 1], [], []>} : vector<2x32xbf16>, vector<32x96xbf16>, vector<2x96xf32> -> vector<2x96xf32>
      %634 = vector.broadcast %296 : vector<1x96xf32> to vector<2x96xf32>
      %635 = arith.addf %633, %634 : vector<2x96xf32>
      %636 = vector.extract_strided_slice %631 {offsets = [0, 0], sizes = [2, 32], strides = [1, 1]} : vector<2x96xf32> to vector<2x32xf32>
      %637 = vector.extract_strided_slice %635 {offsets = [0, 0], sizes = [2, 32], strides = [1, 1]} : vector<2x96xf32> to vector<2x32xf32>
      %638 = arith.addf %636, %637 : vector<2x32xf32>
      %639 = arith.negf %638 : vector<2x32xf32>
      %640 = math.exp %639 : vector<2x32xf32>
      %cst_216 = arith.constant 1.000000e+00 : f32
      %641 = vector.broadcast %cst_216 : f32 to vector<2x32xf32>
      %642 = arith.addf %641, %640 : vector<2x32xf32>
      %643 = arith.divf %641, %642 : vector<2x32xf32>
      %644 = vector.extract_strided_slice %631 {offsets = [0, 32], sizes = [2, 32], strides = [1, 1]} : vector<2x96xf32> to vector<2x32xf32>
      %645 = vector.extract_strided_slice %635 {offsets = [0, 32], sizes = [2, 32], strides = [1, 1]} : vector<2x96xf32> to vector<2x32xf32>
      %646 = arith.addf %644, %645 : vector<2x32xf32>
      %647 = arith.negf %646 : vector<2x32xf32>
      %648 = math.exp %647 : vector<2x32xf32>
      %cst_217 = arith.constant 1.000000e+00 : f32
      %649 = vector.broadcast %cst_217 : f32 to vector<2x32xf32>
      %650 = arith.addf %649, %648 : vector<2x32xf32>
      %651 = arith.divf %649, %650 : vector<2x32xf32>
      %652 = vector.extract_strided_slice %631 {offsets = [0, 64], sizes = [2, 32], strides = [1, 1]} : vector<2x96xf32> to vector<2x32xf32>
      %653 = vector.extract_strided_slice %635 {offsets = [0, 64], sizes = [2, 32], strides = [1, 1]} : vector<2x96xf32> to vector<2x32xf32>
      %654 = arith.mulf %643, %653 : vector<2x32xf32>
      %655 = arith.addf %652, %654 : vector<2x32xf32>
      %656 = math.tanh %655 : vector<2x32xf32>
      %cst_218 = arith.constant 1.000000e+00 : f32
      %657 = vector.broadcast %cst_218 : f32 to vector<2x32xf32>
      %658 = arith.subf %657, %651 : vector<2x32xf32>
      %659 = arith.mulf %658, %656 : vector<2x32xf32>
      %660 = arith.mulf %651, %629 : vector<2x32xf32>
      %661 = arith.addf %659, %660 : vector<2x32xf32>
      %662 = vector.extract_strided_slice %341 {offsets = [0, 10, 0], sizes = [2, 1, 96], strides = [1, 1, 1]} : vector<2x16x128xf32> to vector<2x1x96xf32>
      %663 = vector.shape_cast %662 : vector<2x1x96xf32> to vector<2x96xf32>
      %664 = arith.truncf %661 : vector<2x32xf32> to vector<2x32xbf16>
      %cst_219 = arith.constant dense<0.000000e+00> : vector<2x96xf32>
      %665 = tpu.matmul %664, %295, %cst_219 {dimension_numbers = #tpu.dot_dimension_numbers<[1], [0], [0], [1], [0, 0, 1, 1], [], []>} : vector<2x32xbf16>, vector<32x96xbf16>, vector<2x96xf32> -> vector<2x96xf32>
      %666 = vector.broadcast %296 : vector<1x96xf32> to vector<2x96xf32>
      %667 = arith.addf %665, %666 : vector<2x96xf32>
      %668 = vector.extract_strided_slice %663 {offsets = [0, 0], sizes = [2, 32], strides = [1, 1]} : vector<2x96xf32> to vector<2x32xf32>
      %669 = vector.extract_strided_slice %667 {offsets = [0, 0], sizes = [2, 32], strides = [1, 1]} : vector<2x96xf32> to vector<2x32xf32>
      %670 = arith.addf %668, %669 : vector<2x32xf32>
      %671 = arith.negf %670 : vector<2x32xf32>
      %672 = math.exp %671 : vector<2x32xf32>
      %cst_220 = arith.constant 1.000000e+00 : f32
      %673 = vector.broadcast %cst_220 : f32 to vector<2x32xf32>
      %674 = arith.addf %673, %672 : vector<2x32xf32>
      %675 = arith.divf %673, %674 : vector<2x32xf32>
      %676 = vector.extract_strided_slice %663 {offsets = [0, 32], sizes = [2, 32], strides = [1, 1]} : vector<2x96xf32> to vector<2x32xf32>
      %677 = vector.extract_strided_slice %667 {offsets = [0, 32], sizes = [2, 32], strides = [1, 1]} : vector<2x96xf32> to vector<2x32xf32>
      %678 = arith.addf %676, %677 : vector<2x32xf32>
      %679 = arith.negf %678 : vector<2x32xf32>
      %680 = math.exp %679 : vector<2x32xf32>
      %cst_221 = arith.constant 1.000000e+00 : f32
      %681 = vector.broadcast %cst_221 : f32 to vector<2x32xf32>
      %682 = arith.addf %681, %680 : vector<2x32xf32>
      %683 = arith.divf %681, %682 : vector<2x32xf32>
      %684 = vector.extract_strided_slice %663 {offsets = [0, 64], sizes = [2, 32], strides = [1, 1]} : vector<2x96xf32> to vector<2x32xf32>
      %685 = vector.extract_strided_slice %667 {offsets = [0, 64], sizes = [2, 32], strides = [1, 1]} : vector<2x96xf32> to vector<2x32xf32>
      %686 = arith.mulf %675, %685 : vector<2x32xf32>
      %687 = arith.addf %684, %686 : vector<2x32xf32>
      %688 = math.tanh %687 : vector<2x32xf32>
      %cst_222 = arith.constant 1.000000e+00 : f32
      %689 = vector.broadcast %cst_222 : f32 to vector<2x32xf32>
      %690 = arith.subf %689, %683 : vector<2x32xf32>
      %691 = arith.mulf %690, %688 : vector<2x32xf32>
      %692 = arith.mulf %683, %661 : vector<2x32xf32>
      %693 = arith.addf %691, %692 : vector<2x32xf32>
      %694 = vector.extract_strided_slice %341 {offsets = [0, 11, 0], sizes = [2, 1, 96], strides = [1, 1, 1]} : vector<2x16x128xf32> to vector<2x1x96xf32>
      %695 = vector.shape_cast %694 : vector<2x1x96xf32> to vector<2x96xf32>
      %696 = arith.truncf %693 : vector<2x32xf32> to vector<2x32xbf16>
      %cst_223 = arith.constant dense<0.000000e+00> : vector<2x96xf32>
      %697 = tpu.matmul %696, %295, %cst_223 {dimension_numbers = #tpu.dot_dimension_numbers<[1], [0], [0], [1], [0, 0, 1, 1], [], []>} : vector<2x32xbf16>, vector<32x96xbf16>, vector<2x96xf32> -> vector<2x96xf32>
      %698 = vector.broadcast %296 : vector<1x96xf32> to vector<2x96xf32>
      %699 = arith.addf %697, %698 : vector<2x96xf32>
      %700 = vector.extract_strided_slice %695 {offsets = [0, 0], sizes = [2, 32], strides = [1, 1]} : vector<2x96xf32> to vector<2x32xf32>
      %701 = vector.extract_strided_slice %699 {offsets = [0, 0], sizes = [2, 32], strides = [1, 1]} : vector<2x96xf32> to vector<2x32xf32>
      %702 = arith.addf %700, %701 : vector<2x32xf32>
      %703 = arith.negf %702 : vector<2x32xf32>
      %704 = math.exp %703 : vector<2x32xf32>
      %cst_224 = arith.constant 1.000000e+00 : f32
      %705 = vector.broadcast %cst_224 : f32 to vector<2x32xf32>
      %706 = arith.addf %705, %704 : vector<2x32xf32>
      %707 = arith.divf %705, %706 : vector<2x32xf32>
      %708 = vector.extract_strided_slice %695 {offsets = [0, 32], sizes = [2, 32], strides = [1, 1]} : vector<2x96xf32> to vector<2x32xf32>
      %709 = vector.extract_strided_slice %699 {offsets = [0, 32], sizes = [2, 32], strides = [1, 1]} : vector<2x96xf32> to vector<2x32xf32>
      %710 = arith.addf %708, %709 : vector<2x32xf32>
      %711 = arith.negf %710 : vector<2x32xf32>
      %712 = math.exp %711 : vector<2x32xf32>
      %cst_225 = arith.constant 1.000000e+00 : f32
      %713 = vector.broadcast %cst_225 : f32 to vector<2x32xf32>
      %714 = arith.addf %713, %712 : vector<2x32xf32>
      %715 = arith.divf %713, %714 : vector<2x32xf32>
      %716 = vector.extract_strided_slice %695 {offsets = [0, 64], sizes = [2, 32], strides = [1, 1]} : vector<2x96xf32> to vector<2x32xf32>
      %717 = vector.extract_strided_slice %699 {offsets = [0, 64], sizes = [2, 32], strides = [1, 1]} : vector<2x96xf32> to vector<2x32xf32>
      %718 = arith.mulf %707, %717 : vector<2x32xf32>
      %719 = arith.addf %716, %718 : vector<2x32xf32>
      %720 = math.tanh %719 : vector<2x32xf32>
      %cst_226 = arith.constant 1.000000e+00 : f32
      %721 = vector.broadcast %cst_226 : f32 to vector<2x32xf32>
      %722 = arith.subf %721, %715 : vector<2x32xf32>
      %723 = arith.mulf %722, %720 : vector<2x32xf32>
      %724 = arith.mulf %715, %693 : vector<2x32xf32>
      %725 = arith.addf %723, %724 : vector<2x32xf32>
      %726 = vector.extract_strided_slice %341 {offsets = [0, 12, 0], sizes = [2, 1, 96], strides = [1, 1, 1]} : vector<2x16x128xf32> to vector<2x1x96xf32>
      %727 = vector.shape_cast %726 : vector<2x1x96xf32> to vector<2x96xf32>
      %728 = arith.truncf %725 : vector<2x32xf32> to vector<2x32xbf16>
      %cst_227 = arith.constant dense<0.000000e+00> : vector<2x96xf32>
      %729 = tpu.matmul %728, %295, %cst_227 {dimension_numbers = #tpu.dot_dimension_numbers<[1], [0], [0], [1], [0, 0, 1, 1], [], []>} : vector<2x32xbf16>, vector<32x96xbf16>, vector<2x96xf32> -> vector<2x96xf32>
      %730 = vector.broadcast %296 : vector<1x96xf32> to vector<2x96xf32>
      %731 = arith.addf %729, %730 : vector<2x96xf32>
      %732 = vector.extract_strided_slice %727 {offsets = [0, 0], sizes = [2, 32], strides = [1, 1]} : vector<2x96xf32> to vector<2x32xf32>
      %733 = vector.extract_strided_slice %731 {offsets = [0, 0], sizes = [2, 32], strides = [1, 1]} : vector<2x96xf32> to vector<2x32xf32>
      %734 = arith.addf %732, %733 : vector<2x32xf32>
      %735 = arith.negf %734 : vector<2x32xf32>
      %736 = math.exp %735 : vector<2x32xf32>
      %cst_228 = arith.constant 1.000000e+00 : f32
      %737 = vector.broadcast %cst_228 : f32 to vector<2x32xf32>
      %738 = arith.addf %737, %736 : vector<2x32xf32>
      %739 = arith.divf %737, %738 : vector<2x32xf32>
      %740 = vector.extract_strided_slice %727 {offsets = [0, 32], sizes = [2, 32], strides = [1, 1]} : vector<2x96xf32> to vector<2x32xf32>
      %741 = vector.extract_strided_slice %731 {offsets = [0, 32], sizes = [2, 32], strides = [1, 1]} : vector<2x96xf32> to vector<2x32xf32>
      %742 = arith.addf %740, %741 : vector<2x32xf32>
      %743 = arith.negf %742 : vector<2x32xf32>
      %744 = math.exp %743 : vector<2x32xf32>
      %cst_229 = arith.constant 1.000000e+00 : f32
      %745 = vector.broadcast %cst_229 : f32 to vector<2x32xf32>
      %746 = arith.addf %745, %744 : vector<2x32xf32>
      %747 = arith.divf %745, %746 : vector<2x32xf32>
      %748 = vector.extract_strided_slice %727 {offsets = [0, 64], sizes = [2, 32], strides = [1, 1]} : vector<2x96xf32> to vector<2x32xf32>
      %749 = vector.extract_strided_slice %731 {offsets = [0, 64], sizes = [2, 32], strides = [1, 1]} : vector<2x96xf32> to vector<2x32xf32>
      %750 = arith.mulf %739, %749 : vector<2x32xf32>
      %751 = arith.addf %748, %750 : vector<2x32xf32>
      %752 = math.tanh %751 : vector<2x32xf32>
      %cst_230 = arith.constant 1.000000e+00 : f32
      %753 = vector.broadcast %cst_230 : f32 to vector<2x32xf32>
      %754 = arith.subf %753, %747 : vector<2x32xf32>
      %755 = arith.mulf %754, %752 : vector<2x32xf32>
      %756 = arith.mulf %747, %725 : vector<2x32xf32>
      %757 = arith.addf %755, %756 : vector<2x32xf32>
      %758 = vector.extract_strided_slice %341 {offsets = [0, 13, 0], sizes = [2, 1, 96], strides = [1, 1, 1]} : vector<2x16x128xf32> to vector<2x1x96xf32>
      %759 = vector.shape_cast %758 : vector<2x1x96xf32> to vector<2x96xf32>
      %760 = arith.truncf %757 : vector<2x32xf32> to vector<2x32xbf16>
      %cst_231 = arith.constant dense<0.000000e+00> : vector<2x96xf32>
      %761 = tpu.matmul %760, %295, %cst_231 {dimension_numbers = #tpu.dot_dimension_numbers<[1], [0], [0], [1], [0, 0, 1, 1], [], []>} : vector<2x32xbf16>, vector<32x96xbf16>, vector<2x96xf32> -> vector<2x96xf32>
      %762 = vector.broadcast %296 : vector<1x96xf32> to vector<2x96xf32>
      %763 = arith.addf %761, %762 : vector<2x96xf32>
      %764 = vector.extract_strided_slice %759 {offsets = [0, 0], sizes = [2, 32], strides = [1, 1]} : vector<2x96xf32> to vector<2x32xf32>
      %765 = vector.extract_strided_slice %763 {offsets = [0, 0], sizes = [2, 32], strides = [1, 1]} : vector<2x96xf32> to vector<2x32xf32>
      %766 = arith.addf %764, %765 : vector<2x32xf32>
      %767 = arith.negf %766 : vector<2x32xf32>
      %768 = math.exp %767 : vector<2x32xf32>
      %cst_232 = arith.constant 1.000000e+00 : f32
      %769 = vector.broadcast %cst_232 : f32 to vector<2x32xf32>
      %770 = arith.addf %769, %768 : vector<2x32xf32>
      %771 = arith.divf %769, %770 : vector<2x32xf32>
      %772 = vector.extract_strided_slice %759 {offsets = [0, 32], sizes = [2, 32], strides = [1, 1]} : vector<2x96xf32> to vector<2x32xf32>
      %773 = vector.extract_strided_slice %763 {offsets = [0, 32], sizes = [2, 32], strides = [1, 1]} : vector<2x96xf32> to vector<2x32xf32>
      %774 = arith.addf %772, %773 : vector<2x32xf32>
      %775 = arith.negf %774 : vector<2x32xf32>
      %776 = math.exp %775 : vector<2x32xf32>
      %cst_233 = arith.constant 1.000000e+00 : f32
      %777 = vector.broadcast %cst_233 : f32 to vector<2x32xf32>
      %778 = arith.addf %777, %776 : vector<2x32xf32>
      %779 = arith.divf %777, %778 : vector<2x32xf32>
      %780 = vector.extract_strided_slice %759 {offsets = [0, 64], sizes = [2, 32], strides = [1, 1]} : vector<2x96xf32> to vector<2x32xf32>
      %781 = vector.extract_strided_slice %763 {offsets = [0, 64], sizes = [2, 32], strides = [1, 1]} : vector<2x96xf32> to vector<2x32xf32>
      %782 = arith.mulf %771, %781 : vector<2x32xf32>
      %783 = arith.addf %780, %782 : vector<2x32xf32>
      %784 = math.tanh %783 : vector<2x32xf32>
      %cst_234 = arith.constant 1.000000e+00 : f32
      %785 = vector.broadcast %cst_234 : f32 to vector<2x32xf32>
      %786 = arith.subf %785, %779 : vector<2x32xf32>
      %787 = arith.mulf %786, %784 : vector<2x32xf32>
      %788 = arith.mulf %779, %757 : vector<2x32xf32>
      %789 = arith.addf %787, %788 : vector<2x32xf32>
      %790 = vector.extract_strided_slice %341 {offsets = [0, 14, 0], sizes = [2, 1, 96], strides = [1, 1, 1]} : vector<2x16x128xf32> to vector<2x1x96xf32>
      %791 = vector.shape_cast %790 : vector<2x1x96xf32> to vector<2x96xf32>
      %792 = arith.truncf %789 : vector<2x32xf32> to vector<2x32xbf16>
      %cst_235 = arith.constant dense<0.000000e+00> : vector<2x96xf32>
      %793 = tpu.matmul %792, %295, %cst_235 {dimension_numbers = #tpu.dot_dimension_numbers<[1], [0], [0], [1], [0, 0, 1, 1], [], []>} : vector<2x32xbf16>, vector<32x96xbf16>, vector<2x96xf32> -> vector<2x96xf32>
      %794 = vector.broadcast %296 : vector<1x96xf32> to vector<2x96xf32>
      %795 = arith.addf %793, %794 : vector<2x96xf32>
      %796 = vector.extract_strided_slice %791 {offsets = [0, 0], sizes = [2, 32], strides = [1, 1]} : vector<2x96xf32> to vector<2x32xf32>
      %797 = vector.extract_strided_slice %795 {offsets = [0, 0], sizes = [2, 32], strides = [1, 1]} : vector<2x96xf32> to vector<2x32xf32>
      %798 = arith.addf %796, %797 : vector<2x32xf32>
      %799 = arith.negf %798 : vector<2x32xf32>
      %800 = math.exp %799 : vector<2x32xf32>
      %cst_236 = arith.constant 1.000000e+00 : f32
      %801 = vector.broadcast %cst_236 : f32 to vector<2x32xf32>
      %802 = arith.addf %801, %800 : vector<2x32xf32>
      %803 = arith.divf %801, %802 : vector<2x32xf32>
      %804 = vector.extract_strided_slice %791 {offsets = [0, 32], sizes = [2, 32], strides = [1, 1]} : vector<2x96xf32> to vector<2x32xf32>
      %805 = vector.extract_strided_slice %795 {offsets = [0, 32], sizes = [2, 32], strides = [1, 1]} : vector<2x96xf32> to vector<2x32xf32>
      %806 = arith.addf %804, %805 : vector<2x32xf32>
      %807 = arith.negf %806 : vector<2x32xf32>
      %808 = math.exp %807 : vector<2x32xf32>
      %cst_237 = arith.constant 1.000000e+00 : f32
      %809 = vector.broadcast %cst_237 : f32 to vector<2x32xf32>
      %810 = arith.addf %809, %808 : vector<2x32xf32>
      %811 = arith.divf %809, %810 : vector<2x32xf32>
      %812 = vector.extract_strided_slice %791 {offsets = [0, 64], sizes = [2, 32], strides = [1, 1]} : vector<2x96xf32> to vector<2x32xf32>
      %813 = vector.extract_strided_slice %795 {offsets = [0, 64], sizes = [2, 32], strides = [1, 1]} : vector<2x96xf32> to vector<2x32xf32>
      %814 = arith.mulf %803, %813 : vector<2x32xf32>
      %815 = arith.addf %812, %814 : vector<2x32xf32>
      %816 = math.tanh %815 : vector<2x32xf32>
      %cst_238 = arith.constant 1.000000e+00 : f32
      %817 = vector.broadcast %cst_238 : f32 to vector<2x32xf32>
      %818 = arith.subf %817, %811 : vector<2x32xf32>
      %819 = arith.mulf %818, %816 : vector<2x32xf32>
      %820 = arith.mulf %811, %789 : vector<2x32xf32>
      %821 = arith.addf %819, %820 : vector<2x32xf32>
      %822 = vector.extract_strided_slice %341 {offsets = [0, 15, 0], sizes = [2, 1, 96], strides = [1, 1, 1]} : vector<2x16x128xf32> to vector<2x1x96xf32>
      %823 = vector.shape_cast %822 : vector<2x1x96xf32> to vector<2x96xf32>
      %824 = arith.truncf %821 : vector<2x32xf32> to vector<2x32xbf16>
      %cst_239 = arith.constant dense<0.000000e+00> : vector<2x96xf32>
      %825 = tpu.matmul %824, %295, %cst_239 {dimension_numbers = #tpu.dot_dimension_numbers<[1], [0], [0], [1], [0, 0, 1, 1], [], []>} : vector<2x32xbf16>, vector<32x96xbf16>, vector<2x96xf32> -> vector<2x96xf32>
      %826 = vector.broadcast %296 : vector<1x96xf32> to vector<2x96xf32>
      %827 = arith.addf %825, %826 : vector<2x96xf32>
      %828 = vector.extract_strided_slice %823 {offsets = [0, 0], sizes = [2, 32], strides = [1, 1]} : vector<2x96xf32> to vector<2x32xf32>
      %829 = vector.extract_strided_slice %827 {offsets = [0, 0], sizes = [2, 32], strides = [1, 1]} : vector<2x96xf32> to vector<2x32xf32>
      %830 = arith.addf %828, %829 : vector<2x32xf32>
      %831 = arith.negf %830 : vector<2x32xf32>
      %832 = math.exp %831 : vector<2x32xf32>
      %cst_240 = arith.constant 1.000000e+00 : f32
      %833 = vector.broadcast %cst_240 : f32 to vector<2x32xf32>
      %834 = arith.addf %833, %832 : vector<2x32xf32>
      %835 = arith.divf %833, %834 : vector<2x32xf32>
      %836 = vector.extract_strided_slice %823 {offsets = [0, 32], sizes = [2, 32], strides = [1, 1]} : vector<2x96xf32> to vector<2x32xf32>
      %837 = vector.extract_strided_slice %827 {offsets = [0, 32], sizes = [2, 32], strides = [1, 1]} : vector<2x96xf32> to vector<2x32xf32>
      %838 = arith.addf %836, %837 : vector<2x32xf32>
      %839 = arith.negf %838 : vector<2x32xf32>
      %840 = math.exp %839 : vector<2x32xf32>
      %cst_241 = arith.constant 1.000000e+00 : f32
      %841 = vector.broadcast %cst_241 : f32 to vector<2x32xf32>
      %842 = arith.addf %841, %840 : vector<2x32xf32>
      %843 = arith.divf %841, %842 : vector<2x32xf32>
      %844 = vector.extract_strided_slice %823 {offsets = [0, 64], sizes = [2, 32], strides = [1, 1]} : vector<2x96xf32> to vector<2x32xf32>
      %845 = vector.extract_strided_slice %827 {offsets = [0, 64], sizes = [2, 32], strides = [1, 1]} : vector<2x96xf32> to vector<2x32xf32>
      %846 = arith.mulf %835, %845 : vector<2x32xf32>
      %847 = arith.addf %844, %846 : vector<2x32xf32>
      %848 = math.tanh %847 : vector<2x32xf32>
      %cst_242 = arith.constant 1.000000e+00 : f32
      %849 = vector.broadcast %cst_242 : f32 to vector<2x32xf32>
      %850 = arith.subf %849, %843 : vector<2x32xf32>
      %851 = arith.mulf %850, %848 : vector<2x32xf32>
      %852 = arith.mulf %843, %821 : vector<2x32xf32>
      %853 = arith.addf %851, %852 : vector<2x32xf32>
      %854 = vector.shape_cast %373 : vector<2x32xf32> to vector<2x1x32xf32>
      %855 = vector.shape_cast %405 : vector<2x32xf32> to vector<2x1x32xf32>
      %856 = vector.shape_cast %437 : vector<2x32xf32> to vector<2x1x32xf32>
      %857 = vector.shape_cast %469 : vector<2x32xf32> to vector<2x1x32xf32>
      %858 = vector.shape_cast %501 : vector<2x32xf32> to vector<2x1x32xf32>
      %859 = vector.shape_cast %533 : vector<2x32xf32> to vector<2x1x32xf32>
      %860 = vector.shape_cast %565 : vector<2x32xf32> to vector<2x1x32xf32>
      %861 = vector.shape_cast %597 : vector<2x32xf32> to vector<2x1x32xf32>
      %862 = vector.shape_cast %629 : vector<2x32xf32> to vector<2x1x32xf32>
      %863 = vector.shape_cast %661 : vector<2x32xf32> to vector<2x1x32xf32>
      %864 = vector.shape_cast %693 : vector<2x32xf32> to vector<2x1x32xf32>
      %865 = vector.shape_cast %725 : vector<2x32xf32> to vector<2x1x32xf32>
      %866 = vector.shape_cast %757 : vector<2x32xf32> to vector<2x1x32xf32>
      %867 = vector.shape_cast %789 : vector<2x32xf32> to vector<2x1x32xf32>
      %868 = vector.shape_cast %821 : vector<2x32xf32> to vector<2x1x32xf32>
      %869 = vector.shape_cast %853 : vector<2x32xf32> to vector<2x1x32xf32>
      %870 = tpu.concatenate %854, %855, %856, %857, %858, %859, %860, %861, %862, %863, %864, %865, %866, %867, %868, %869 in 1 : vector<2x1x32xf32>, vector<2x1x32xf32>, vector<2x1x32xf32>, vector<2x1x32xf32>, vector<2x1x32xf32>, vector<2x1x32xf32>, vector<2x1x32xf32>, vector<2x1x32xf32>, vector<2x1x32xf32>, vector<2x1x32xf32>, vector<2x1x32xf32>, vector<2x1x32xf32>, vector<2x1x32xf32>, vector<2x1x32xf32>, vector<2x1x32xf32>, vector<2x1x32xf32> -> vector<2x16x32xf32>
      %c0_243 = arith.constant 0 : index
      %871 = arith.index_cast %339 : i32 to index
      %c0_244 = arith.constant 0 : index
      %872 = vector.load %arg23[%c0_243, %871, %c0_244] : memref<2x64x32xf32, #tpu.memory_space<vmem>>, vector<2x16x32xf32>
      tpu.vector_store %arg23[%c0_243, %871, %c0_244], %870 {strides = array<i32>} : memref<2x64x32xf32, #tpu.memory_space<vmem>>, vector<2x16x32xf32>,
      scf.yield %853 : vector<2x32xf32>
    }
    %c4_i32_143 = arith.constant 4 : i32
    %c0_144 = arith.constant 0 : index
    %c0_145 = arith.constant 0 : index
    %c96 = arith.constant 96 : index
    %300 = vector.load %arg22[%c0_144, %c0_145, %c96] : memref<2x64x128xf32, #tpu.memory_space<vmem>>, vector<2x64x32xf32>
    %301 = vector.shape_cast %300 : vector<2x64x32xf32> to vector<128x32xf32>
    %c0_146 = arith.constant 0 : index
    %c0_147 = arith.constant 0 : index
    %c0_148 = arith.constant 0 : index
    %302 = vector.load %arg23[%c0_146, %c0_147, %c0_148] : memref<2x64x32xf32, #tpu.memory_space<vmem>>, vector<2x64x32xf32>
    %303 = vector.shape_cast %302 : vector<2x64x32xf32> to vector<128x32xf32>
    %304 = arith.truncf %303 : vector<128x32xf32> to vector<128x32xbf16>
    %c0_149 = arith.constant 0 : index
    %c0_150 = arith.constant 0 : index
    %305 = vector.load %arg13[%c0_149, %c0_150] : memref<32x32xbf16, #tpu.memory_space<vmem>>, vector<32x32xbf16>
    %cst_151 = arith.constant dense<0.000000e+00> : vector<128x32xf32>
    %306 = tpu.matmul %304, %305, %cst_151 {dimension_numbers = #tpu.dot_dimension_numbers<[1], [0], [0], [1], [0, 0, 1, 1], [], []>} : vector<128x32xbf16>, vector<32x32xbf16>, vector<128x32xf32> -> vector<128x32xf32>
    %c0_152 = arith.constant 0 : index
    %c0_153 = arith.constant 0 : index
    %307 = vector.load %arg14[%c0_152, %c0_153] : memref<1x32xf32, #tpu.memory_space<vmem>>, vector<1x32xf32>
    %308 = vector.broadcast %307 : vector<1x32xf32> to vector<128x32xf32>
    %309 = arith.addf %306, %308 : vector<128x32xf32>
    %310 = tpu.concatenate %301, %309 in 1 : vector<128x32xf32>, vector<128x32xf32> -> vector<128x64xf32>
    %311 = arith.truncf %310 : vector<128x64xf32> to vector<128x64xbf16>
    %c0_154 = arith.constant 0 : index
    %c0_155 = arith.constant 0 : index
    %312 = vector.load %arg15[%c0_154, %c0_155] : memref<64x32xbf16, #tpu.memory_space<vmem>>, vector<64x32xbf16>
    %cst_156 = arith.constant dense<0.000000e+00> : vector<128x32xf32>
    %313 = tpu.matmul %311, %312, %cst_156 {dimension_numbers = #tpu.dot_dimension_numbers<[1], [0], [0], [1], [0, 0, 1, 1], [], []>} : vector<128x64xbf16>, vector<64x32xbf16>, vector<128x32xf32> -> vector<128x32xf32>
    %c0_157 = arith.constant 0 : index
    %c0_158 = arith.constant 0 : index
    %314 = vector.load %arg16[%c0_157, %c0_158] : memref<1x32xf32, #tpu.memory_space<vmem>>, vector<1x32xf32>
    %315 = vector.broadcast %314 : vector<1x32xf32> to vector<128x32xf32>
    %316 = arith.addf %313, %315 : vector<128x32xf32>
    %317 = arith.truncf %316 : vector<128x32xf32> to vector<128x32xbf16>
    %c0_159 = arith.constant 0 : index
    %c0_160 = arith.constant 0 : index
    %318 = vector.load %arg17[%c0_159, %c0_160] : memref<32x32xbf16, #tpu.memory_space<vmem>>, vector<32x32xbf16>
    %cst_161 = arith.constant dense<0.000000e+00> : vector<128x32xf32>
    %319 = tpu.matmul %317, %318, %cst_161 {dimension_numbers = #tpu.dot_dimension_numbers<[1], [0], [0], [1], [0, 0, 1, 1], [], []>} : vector<128x32xbf16>, vector<32x32xbf16>, vector<128x32xf32> -> vector<128x32xf32>
    %c0_162 = arith.constant 0 : index
    %c0_163 = arith.constant 0 : index
    %320 = vector.load %arg18[%c0_162, %c0_163] : memref<1x32xf32, #tpu.memory_space<vmem>>, vector<1x32xf32>
    %321 = vector.broadcast %320 : vector<1x32xf32> to vector<128x32xf32>
    %322 = arith.addf %319, %321 : vector<128x32xf32>
    %cst_164 = arith.constant 0.000000e+00 : f32
    %323 = vector.broadcast %cst_164 : f32 to vector<128x32xf32>
    %324 = arith.maximumf %322, %323 : vector<128x32xf32>
    %325 = arith.truncf %324 : vector<128x32xf32> to vector<128x32xbf16>
    %c0_165 = arith.constant 0 : index
    %c0_166 = arith.constant 0 : index
    %326 = vector.load %arg19[%c0_165, %c0_166] : memref<32x32xbf16, #tpu.memory_space<vmem>>, vector<32x32xbf16>
    %cst_167 = arith.constant dense<0.000000e+00> : vector<128x32xf32>
    %327 = tpu.matmul %325, %326, %cst_167 {dimension_numbers = #tpu.dot_dimension_numbers<[1], [0], [0], [1], [0, 0, 1, 1], [], []>} : vector<128x32xbf16>, vector<32x32xbf16>, vector<128x32xf32> -> vector<128x32xf32>
    %c0_168 = arith.constant 0 : index
    %c0_169 = arith.constant 0 : index
    %328 = vector.load %arg20[%c0_168, %c0_169] : memref<1x32xf32, #tpu.memory_space<vmem>>, vector<1x32xf32>
    %329 = vector.broadcast %328 : vector<1x32xf32> to vector<128x32xf32>
    %330 = arith.addf %327, %329 : vector<128x32xf32>
    %cst_170 = arith.constant 0.000000e+00 : f32
    %331 = vector.broadcast %cst_170 : f32 to vector<128x32xf32>
    %332 = tpu.concatenate %316, %309, %330, %331 in 1 : vector<128x32xf32>, vector<128x32xf32>, vector<128x32xf32>, vector<128x32xf32> -> vector<128x128xf32>
    %333 = vector.shape_cast %332 : vector<128x128xf32> to vector<2x64x128xf32>
    %c0_171 = arith.constant 0 : index
    %c0_172 = arith.constant 0 : index
    %c0_173 = arith.constant 0 : index
    %334 = vector.load %arg2[%c0_171, %c0_172, %c0_173] : memref<2x64x1xf32, #tpu.memory_space<vmem>>, vector<2x64x1xf32>
    %335 = vector.broadcast %334 : vector<2x64x1xf32> to vector<2x64x128xf32>
    %336 = arith.mulf %333, %335 : vector<2x64x128xf32>
    %c0_174 = arith.constant 0 : index
    %c0_175 = arith.constant 0 : index
    %c0_176 = arith.constant 0 : index
    %337 = vector.load %arg21[%c0_174, %c0_175, %c0_176] : memref<2x64x128xf32, #tpu.memory_space<vmem>>, vector<2x64x128xf32>
    tpu.vector_store %arg21[%c0_174, %c0_175, %c0_176], %336 {strides = array<i32>} : memref<2x64x128xf32, #tpu.memory_space<vmem>>, vector<2x64x128xf32>,
    return
  }
  func.func @transform_0(%arg0: i32) -> (i32, i32, i32) {
    %c0_i32 = arith.constant 0 : i32
    %c0_i32_0 = arith.constant 0 : i32
    %c0_i32_1 = arith.constant 0 : i32
    %c0_i32_2 = arith.constant 0 : i32
    return %c0_i32, %c0_i32_0, %c0_i32_1 : i32, i32, i32
  }
  func.func @transform_1(%arg0: i32) -> (i32, i32, i32) {
    %c0_i32 = arith.constant 0 : i32
    %c0_i32_0 = arith.constant 0 : i32
    %c0_i32_1 = arith.constant 0 : i32
    %c0_i32_2 = arith.constant 0 : i32
    return %c0_i32, %c0_i32_0, %c0_i32_1 : i32, i32, i32
  }
  func.func @transform_2(%arg0: i32) -> (i32, i32) {
    %c0_i32 = arith.constant 0 : i32
    %c0_i32_0 = arith.constant 0 : i32
    %c0_i32_1 = arith.constant 0 : i32
    return %c0_i32, %c0_i32_0 : i32, i32
  }
  func.func @transform_3(%arg0: i32) -> (i32, i32) {
    %c0_i32 = arith.constant 0 : i32
    %c0_i32_0 = arith.constant 0 : i32
    %c0_i32_1 = arith.constant 0 : i32
    return %c0_i32, %c0_i32_0 : i32, i32
  }
  func.func @transform_4(%arg0: i32) -> (i32, i32, i32) {
    %c0_i32 = arith.constant 0 : i32
    %c0_i32_0 = arith.constant 0 : i32
    %c0_i32_1 = arith.constant 0 : i32
    %c0_i32_2 = arith.constant 0 : i32
    return %c0_i32, %c0_i32_0, %c0_i32_1 : i32, i32, i32
  }
  func.func @transform_5(%arg0: i32) -> (i32, i32, i32) {
    %c0_i32 = arith.constant 0 : i32
    %c0_i32_0 = arith.constant 0 : i32
    %c0_i32_1 = arith.constant 0 : i32
    %c0_i32_2 = arith.constant 0 : i32
    return %c0_i32, %c0_i32_0, %c0_i32_1 : i32, i32, i32
  }
  func.func @transform_6(%arg0: i32) -> (i32, i32, i32) {
    %c0_i32 = arith.constant 0 : i32
    %c0_i32_0 = arith.constant 0 : i32
    %c0_i32_1 = arith.constant 0 : i32
    %c0_i32_2 = arith.constant 0 : i32
    return %c0_i32, %c0_i32_0, %c0_i32_1 : i32, i32, i32
  }
  func.func @transform_7(%arg0: i32) -> (i32, i32, i32) {
    %c0_i32 = arith.constant 0 : i32
    %c0_i32_0 = arith.constant 0 : i32
    %c0_i32_1 = arith.constant 0 : i32
    %c0_i32_2 = arith.constant 0 : i32
    return %c0_i32, %c0_i32_0, %c0_i32_1 : i32, i32, i32
  }
  func.func @transform_8(%arg0: i32) -> (i32, i32) {
    %c0_i32 = arith.constant 0 : i32
    %c0_i32_0 = arith.constant 0 : i32
    %c0_i32_1 = arith.constant 0 : i32
    return %c0_i32, %c0_i32_0 : i32, i32
  }
  func.func @transform_9(%arg0: i32) -> (i32, i32) {
    %c0_i32 = arith.constant 0 : i32
    %c0_i32_0 = arith.constant 0 : i32
    %c0_i32_1 = arith.constant 0 : i32
    return %c0_i32, %c0_i32_0 : i32, i32
  }
  func.func @transform_10(%arg0: i32) -> (i32, i32) {
    %c0_i32 = arith.constant 0 : i32
    %c0_i32_0 = arith.constant 0 : i32
    %c0_i32_1 = arith.constant 0 : i32
    return %c0_i32, %c0_i32_0 : i32, i32
  }
  func.func @transform_11(%arg0: i32) -> (i32, i32) {
    %c0_i32 = arith.constant 0 : i32
    %c0_i32_0 = arith.constant 0 : i32
    %c0_i32_1 = arith.constant 0 : i32
    return %c0_i32, %c0_i32_0 : i32, i32
  }
  func.func @transform_12(%arg0: i32) -> (i32, i32) {
    %c0_i32 = arith.constant 0 : i32
    %c0_i32_0 = arith.constant 0 : i32
    %c0_i32_1 = arith.constant 0 : i32
    return %c0_i32, %c0_i32_0 : i32, i32
  }
  func.func @transform_13(%arg0: i32) -> (i32, i32) {
    %c0_i32 = arith.constant 0 : i32
    %c0_i32_0 = arith.constant 0 : i32
    %c0_i32_1 = arith.constant 0 : i32
    return %c0_i32, %c0_i32_0 : i32, i32
  }
  func.func @transform_14(%arg0: i32) -> (i32, i32) {
    %c0_i32 = arith.constant 0 : i32
    %c0_i32_0 = arith.constant 0 : i32
    %c0_i32_1 = arith.constant 0 : i32
    return %c0_i32, %c0_i32_0 : i32, i32
  }
  func.func @transform_15(%arg0: i32) -> (i32, i32) {
    %c0_i32 = arith.constant 0 : i32
    %c0_i32_0 = arith.constant 0 : i32
    %c0_i32_1 = arith.constant 0 : i32
    return %c0_i32, %c0_i32_0 : i32, i32
  }
  func.func @transform_16(%arg0: i32) -> (i32, i32) {
    %c0_i32 = arith.constant 0 : i32
    %c0_i32_0 = arith.constant 0 : i32
    %c0_i32_1 = arith.constant 0 : i32
    return %c0_i32, %c0_i32_0 : i32, i32
  }
  func.func @transform_17(%arg0: i32) -> (i32, i32) {
    %c0_i32 = arith.constant 0 : i32
    %c0_i32_0 = arith.constant 0 : i32
    %c0_i32_1 = arith.constant 0 : i32
    return %c0_i32, %c0_i32_0 : i32, i32
  }
  func.func @transform_18(%arg0: i32) -> (i32, i32) {
    %c0_i32 = arith.constant 0 : i32
    %c0_i32_0 = arith.constant 0 : i32
    %c0_i32_1 = arith.constant 0 : i32
    return %c0_i32, %c0_i32_0 : i32, i32
  }
  func.func @transform_19(%arg0: i32) -> (i32, i32) {
    %c0_i32 = arith.constant 0 : i32
    %c0_i32_0 = arith.constant 0 : i32
    %c0_i32_1 = arith.constant 0 : i32
    return %c0_i32, %c0_i32_0 : i32, i32
  }
  func.func @transform_20(%arg0: i32) -> (i32, i32, i32) {
    %c0_i32 = arith.constant 0 : i32
    %c0_i32_0 = arith.constant 0 : i32
    %c0_i32_1 = arith.constant 0 : i32
    %c0_i32_2 = arith.constant 0 : i32
    return %c0_i32, %c0_i32_0, %c0_i32_1 : i32, i32, i32
  }
}

</mosaic_0001>

<llo_original>
// kernel: tpu_custom_call.1
$region0: #{tpu_custom_call.1}
  #allocation0 [shape = 'u32[]', space=smem, size = 0x4, offset = 0x4, fixed_abs, tag = 'smem constant byte address 0x4 - core index']
  #allocation1 [shape = 'u32[144,128]{1,0:T(1,128)}', space=vmem, size = 0x12000, scoped, tag = 'internal scratch']
  #allocation2 [shape = 'f32[2,64,128]{2,1,0:T(8,128)}', space=vmem, size = 0x10000, scoped, tag = 'scratch operand']
  #allocation3 [shape = 'f32[2,64,32]{2,1,0:T(8,128)}', space=vmem, size = 0x10000, scoped, tag = 'scratch operand']
  %s0 = inlined_call_operand.vmem [shape: bf16[2,64,16], index: 0, kind: input, shape index: {}]
  %s1 = inlined_call_operand.vmem [shape: f32[2,64,1], index: 1, kind: input, shape index: {}]
  %s2 = inlined_call_operand.vmem [shape: bf16[16,32], index: 2, kind: input, shape index: {}]
  %s3 = inlined_call_operand.vmem [shape: f32[1,32], index: 3, kind: input, shape index: {}]
  %s4 = inlined_call_operand.vmem [shape: bf16[3,32,96], index: 4, kind: input, shape index: {}]
  %s5 = inlined_call_operand.vmem [shape: f32[3,1,32], index: 5, kind: input, shape index: {}]
  %s6 = inlined_call_operand.vmem [shape: bf16[3,32,32], index: 6, kind: input, shape index: {}]
  %s7 = inlined_call_operand.vmem [shape: f32[3,1,32], index: 7, kind: input, shape index: {}]
  %s8 = inlined_call_operand.vmem [shape: bf16[32,128], index: 8, kind: input, shape index: {}]
  %s9 = inlined_call_operand.vmem [shape: f32[1,128], index: 9, kind: input, shape index: {}]
  %s10 = inlined_call_operand.vmem [shape: bf16[32,96], index: 10, kind: input, shape index: {}]
  %s11 = inlined_call_operand.vmem [shape: f32[1,96], index: 11, kind: input, shape index: {}]
  %s12 = inlined_call_operand.vmem [shape: bf16[32,32], index: 12, kind: input, shape index: {}]
  %s13 = inlined_call_operand.vmem [shape: f32[1,32], index: 13, kind: input, shape index: {}]
  %s14 = inlined_call_operand.vmem [shape: bf16[64,32], index: 14, kind: input, shape index: {}]
  %s15 = inlined_call_operand.vmem [shape: f32[1,32], index: 15, kind: input, shape index: {}]
  %s16 = inlined_call_operand.vmem [shape: bf16[32,32], index: 16, kind: input, shape index: {}]
  %s17 = inlined_call_operand.vmem [shape: f32[1,32], index: 17, kind: input, shape index: {}]
  %s18 = inlined_call_operand.vmem [shape: bf16[32,32], index: 18, kind: input, shape index: {}]
  %s19 = inlined_call_operand.vmem [shape: f32[1,32], index: 19, kind: input, shape index: {}]
  %s20 = inlined_call_operand.hbm [shape: f32[2,64,128], index: 20, kind: output, shape index: {}]
  %s21 = sld [smem:[#allocation0]]
  $region97: #{tpu_custom_call.1} parent=0
    _
  %s23 = ssub.s32 1, %s21
  %s24 = scalar_select 0, %s23, %s21
  $region1: #{tpu_custom_call.1} parent=0
    #allocation4 [shape = 'u8[65536]{0}', space=vmem, size = 0x10000, scoped, tag = 'output window, operand 0, single buffered']
    #allocation5 [shape = 's32[1]{0}', space=sflag, size = 0x4, scoped, tag = 'scoped memory for tpu_custom_call.1']
    %25 = vsyncpa [#allocation5], 0
    // Predicated region
    $region2: #{tpu_custom_call.1} parent=1 // pred_check
      _
    $region3: #{tpu_custom_call.1} parent=1 // pred_check_branch
      %27 = sbr.rel (0) target = $region5
    $region4: #{tpu_custom_call.1} parent=1 // pred_region
      _
    $region5: #{tpu_custom_call.1} parent=1 // pred_fallthru
      _
    // Predicated region
    $region6: #{tpu_custom_call.1} parent=1 // pred_check
      _
    $region7: #{tpu_custom_call.1} parent=1 // pred_check_branch
      %29 = sbr.rel (0) target = $region9
    $region8: #{tpu_custom_call.1} parent=1 // pred_region
      _
    $region9: #{tpu_custom_call.1} parent=1 // pred_fallthru
      _
    // Predicated region
    $region10: #{tpu_custom_call.1} parent=1 // pred_check
      _
    $region11: #{tpu_custom_call.1} parent=1 // pred_check_branch
      %31 = sbr.rel (0) target = $region13
    $region12: #{tpu_custom_call.1} parent=1 // pred_region
      _
    $region13: #{tpu_custom_call.1} parent=1 // pred_fallthru
      _
    // Predicated region
    $region14: #{tpu_custom_call.1} parent=1 // pred_check
      _
    $region15: #{tpu_custom_call.1} parent=1 // pred_check_branch
      %33 = sbr.rel (0) target = $region17
    $region16: #{tpu_custom_call.1} parent=1 // pred_region
      _
    $region17: #{tpu_custom_call.1} parent=1 // pred_fallthru
      _
    // Predicated region
    $region18: #{tpu_custom_call.1} parent=1 // pred_check
      _
    $region19: #{tpu_custom_call.1} parent=1 // pred_check_branch
      %35 = sbr.rel (0) target = $region21
    $region20: #{tpu_custom_call.1} parent=1 // pred_region
      _
    $region21: #{tpu_custom_call.1} parent=1 // pred_fallthru
      _
    // Predicated region
    $region22: #{tpu_custom_call.1} parent=1 // pred_check
      _
    $region23: #{tpu_custom_call.1} parent=1 // pred_check_branch
      %37 = sbr.rel (0) target = $region25
    $region24: #{tpu_custom_call.1} parent=1 // pred_region
      _
    $region25: #{tpu_custom_call.1} parent=1 // pred_fallthru
      _
    // Predicated region
    $region26: #{tpu_custom_call.1} parent=1 // pred_check
      _
    $region27: #{tpu_custom_call.1} parent=1 // pred_check_branch
      %39 = sbr.rel (0) target = $region29
    $region28: #{tpu_custom_call.1} parent=1 // pred_region
      _
    $region29: #{tpu_custom_call.1} parent=1 // pred_fallthru
      _
    // Predicated region
    $region30: #{tpu_custom_call.1} parent=1 // pred_check
      _
    $region31: #{tpu_custom_call.1} parent=1 // pred_check_branch
      %41 = sbr.rel (0) target = $region33
    $region32: #{tpu_custom_call.1} parent=1 // pred_region
      _
    $region33: #{tpu_custom_call.1} parent=1 // pred_fallthru
      _
    // Predicated region
    $region34: #{tpu_custom_call.1} parent=1 // pred_check
      _
    $region35: #{tpu_custom_call.1} parent=1 // pred_check_branch
      %43 = sbr.rel (0) target = $region37
    $region36: #{tpu_custom_call.1} parent=1 // pred_region
      _
    $region37: #{tpu_custom_call.1} parent=1 // pred_fallthru
      _
    // Predicated region
    $region38: #{tpu_custom_call.1} parent=1 // pred_check
      _
    $region39: #{tpu_custom_call.1} parent=1 // pred_check_branch
      %45 = sbr.rel (0) target = $region41
    $region40: #{tpu_custom_call.1} parent=1 // pred_region
      _
    $region41: #{tpu_custom_call.1} parent=1 // pred_fallthru
      _
    // Predicated region
    $region42: #{tpu_custom_call.1} parent=1 // pred_check
      _
    $region43: #{tpu_custom_call.1} parent=1 // pred_check_branch
      %47 = sbr.rel (0) target = $region45
    $region44: #{tpu_custom_call.1} parent=1 // pred_region
      _
    $region45: #{tpu_custom_call.1} parent=1 // pred_fallthru
      _
    // Predicated region
    $region46: #{tpu_custom_call.1} parent=1 // pred_check
      _
    $region47: #{tpu_custom_call.1} parent=1 // pred_check_branch
      %49 = sbr.rel (0) target = $region49
    $region48: #{tpu_custom_call.1} parent=1 // pred_region
      _
    $region49: #{tpu_custom_call.1} parent=1 // pred_fallthru
      _
    // Predicated region
    $region50: #{tpu_custom_call.1} parent=1 // pred_check
      _
    $region51: #{tpu_custom_call.1} parent=1 // pred_check_branch
      %51 = sbr.rel (0) target = $region53
    $region52: #{tpu_custom_call.1} parent=1 // pred_region
      _
    $region53: #{tpu_custom_call.1} parent=1 // pred_fallthru
      _
    // Predicated region
    $region54: #{tpu_custom_call.1} parent=1 // pred_check
      _
    $region55: #{tpu_custom_call.1} parent=1 // pred_check_branch
      %53 = sbr.rel (0) target = $region57
    $region56: #{tpu_custom_call.1} parent=1 // pred_region
      _
    $region57: #{tpu_custom_call.1} parent=1 // pred_fallthru
      _
    // Predicated region
    $region58: #{tpu_custom_call.1} parent=1 // pred_check
      _
    $region59: #{tpu_custom_call.1} parent=1 // pred_check_branch
      %55 = sbr.rel (0) target = $region61
    $region60: #{tpu_custom_call.1} parent=1 // pred_region
      _
    $region61: #{tpu_custom_call.1} parent=1 // pred_fallthru
      _
    // Predicated region
    $region62: #{tpu_custom_call.1} parent=1 // pred_check
      _
    $region63: #{tpu_custom_call.1} parent=1 // pred_check_branch
      %57 = sbr.rel (0) target = $region65
    $region64: #{tpu_custom_call.1} parent=1 // pred_region
      _
    $region65: #{tpu_custom_call.1} parent=1 // pred_fallthru
      _
    // Predicated region
    $region66: #{tpu_custom_call.1} parent=1 // pred_check
      _
    $region67: #{tpu_custom_call.1} parent=1 // pred_check_branch
      %59 = sbr.rel (0) target = $region69
    $region68: #{tpu_custom_call.1} parent=1 // pred_region
      _
    $region69: #{tpu_custom_call.1} parent=1 // pred_fallthru
      _
    // Predicated region
    $region70: #{tpu_custom_call.1} parent=1 // pred_check
      _
    $region71: #{tpu_custom_call.1} parent=1 // pred_check_branch
      %61 = sbr.rel (0) target = $region73
    $region72: #{tpu_custom_call.1} parent=1 // pred_region
      _
    $region73: #{tpu_custom_call.1} parent=1 // pred_fallthru
      _
    // Predicated region
    $region74: #{tpu_custom_call.1} parent=1 // pred_check
      _
    $region75: #{tpu_custom_call.1} parent=1 // pred_check_branch
      %63 = sbr.rel (0) target = $region77
    $region76: #{tpu_custom_call.1} parent=1 // pred_region
      _
    $region77: #{tpu_custom_call.1} parent=1 // pred_fallthru
      _
    // Predicated region
    $region78: #{tpu_custom_call.1} parent=1 // pred_check
      _
    $region79: #{tpu_custom_call.1} parent=1 // pred_check_branch
      %65 = sbr.rel (0) target = $region81
    $region80: #{tpu_custom_call.1} parent=1 // pred_region
      _
    $region81: #{tpu_custom_call.1} parent=1 // pred_fallthru
      _
    %v67 = vlaneseq
    %v68 = vshrl.u32 %v67, 7
    %v69 = vadd.s32 %v68, 8
    %v70 = vadd.s32 %v68, 16
    %v71 = vadd.s32 %v68, 24
    %v72 = vadd.s32 %v68, 32
    %v73 = vadd.s32 %v68, 40
    %v74 = vadd.s32 %v68, 48
    %v75 = vadd.s32 %v68, 56
    %v76 = vld [vmem:[%s2] sm:$0xf]
    %v77 = vld [vmem:[%s2 + $0x4] sm:$0xf]
    %v78 = vld [vmem:[%s3] sm:$0x1]
    %v79 = vld [vmem:[%s8] sm:$0xf]
    %v80 = vld [vmem:[%s8 + $0x4] sm:$0xf]
    %v81 = vld [vmem:[%s8 + $0x8] sm:$0xf]
    %v82 = vld [vmem:[%s8 + $0xc] sm:$0xf]
    %v83 = vld [vmem:[%s9] sm:$0x1]
    %v84 = vld [vmem:[%s1] sm:$0xff]
    %v85 = vld [vmem:[%s1 + $0x8] sm:$0xff]
    %v86 = vld [vmem:[%s1 + $0x10] sm:$0xff]
    %v87 = vld [vmem:[%s1 + $0x18] sm:$0xff]
    %v88 = vld [vmem:[%s1 + $0x20] sm:$0xff]
    %v89 = vld [vmem:[%s1 + $0x28] sm:$0xff]
    %v90 = vld [vmem:[%s1 + $0x30] sm:$0xff]
    %v91 = vld [vmem:[%s1 + $0x38] sm:$0xff]
    %93 = vset.pattern.permute.xlu0 0
    %94 = vperm.xlu0 %93, %v84
    %v95 = vpop.permute.xlu0 %94
    %98 = vset.pattern.permute.xlu0 0
    %99 = vperm.xlu0 %98, %v85
    %v100 = vpop.permute.xlu0 %99
    %103 = vset.pattern.permute.xlu0 0
    %104 = vperm.xlu0 %103, %v86
    %v105 = vpop.permute.xlu0 %104
    %108 = vset.pattern.permute.xlu0 0
    %109 = vperm.xlu0 %108, %v87
    %v110 = vpop.permute.xlu0 %109
    %113 = vset.pattern.permute.xlu0 0
    %114 = vperm.xlu0 %113, %v88
    %v115 = vpop.permute.xlu0 %114
    %118 = vset.pattern.permute.xlu0 0
    %119 = vperm.xlu0 %118, %v89
    %v120 = vpop.permute.xlu0 %119
    %123 = vset.pattern.permute.xlu0 0
    %124 = vperm.xlu0 %123, %v90
    %v125 = vpop.permute.xlu0 %124
    %128 = vset.pattern.permute.xlu0 0
    %129 = vperm.xlu0 %128, %v91
    %v130 = vpop.permute.xlu0 %129
    %v132 = vld [vmem:[%s0] sm:$0xf]
    %v133 = vld [vmem:[%s0 + $0x4] sm:$0xf]
    %v134 = vld [vmem:[%s0 + $0x8] sm:$0xf]
    %v135 = vld [vmem:[%s0 + $0xc] sm:$0xf]
    %v136 = vld [vmem:[%s0 + $0x10] sm:$0xf]
    %v137 = vld [vmem:[%s0 + $0x14] sm:$0xf]
    %v138 = vld [vmem:[%s0 + $0x18] sm:$0xf]
    %v139 = vld [vmem:[%s0 + $0x1c] sm:$0xf]
    %v141 = vlaneseq
    %v142 = vshrl.u32 %v141, 7
    %v143 = vsub.s32 0, %v142
    %v144 = vrot.slane %v78, %v143
    %v154 = vunpack.c.l.b16 %v132
    %v155 = vunpack.c.l.b16 %v133
    %v156 = vunpack.c.l.b16 %v134
    %v157 = vunpack.c.l.b16 %v135
    %v158 = vunpack.c.l.b16 %v136
    %v159 = vunpack.c.l.b16 %v137
    %v160 = vunpack.c.l.b16 %v138
    %v161 = vunpack.c.l.b16 %v139
    %v162 = vpack.c.b16 %v155, %v154
    %v163 = vpack.c.b16 %v157, %v156
    %v164 = vpack.c.b16 %v159, %v158
    %v165 = vpack.c.b16 %v161, %v160
    %v168 = vunpack.c.l.b16 %v76
    %v169 = vunpack.c.l.b16 %v77
    %v170 = vpack.c.b16 %v169, %v168
    %vm172 = vcmask 130048
    %v174 = vsel %vm172, %v162, 0
    %v177 = vsel %vm172, %v163, 0
    %v180 = vsel %vm172, %v164, 0
    %v183 = vsel %vm172, %v165, 0
    %185 = vmatprep.subr.bf16.mxu0 0
    %186 = vmatpush1.bf16.msra.mxu0 %v170
    %187 = vmatprep.subr.bf16.mxu0 0
    %188 = vmatpush1.bf16.msra.mxu0 0
    %189 = vmatprep.subr.bf16.mxu0 0
    %190 = vmatpush1.bf16.msra.mxu0 0
    %191 = vmatprep.subr.bf16.mxu0 0
    %192 = vmatpush1.bf16.msra.mxu0 0
    %193 = vmatprep.subr.bf16.mxu0 0
    %194 = vmatpush1.bf16.msra.mxu0 0
    %195 = vmatprep.subr.bf16.mxu0 0
    %196 = vmatpush1.bf16.msra.mxu0 0
    %197 = vmatprep.subr.bf16.mxu0 0
    %198 = vmatpush1.bf16.msra.mxu0 0
    %199 = vmatprep.subr.bf16.mxu0 0
    %200 = vmatpush1.bf16.msra.mxu0 0
    %201 = vmatprep.subr.bf16.mxu0 0
    %202 = vmatpush1.bf16.msra.mxu0 0
    %203 = vmatprep.subr.bf16.mxu0 0
    %204 = vmatpush1.bf16.msra.mxu0 0
    %205 = vmatprep.subr.bf16.mxu0 0
    %206 = vmatpush1.bf16.msra.mxu0 0
    %207 = vmatprep.subr.bf16.mxu0 0
    %208 = vmatpush1.bf16.msra.mxu0 0
    %209 = vmatprep.subr.bf16.mxu0 0
    %210 = vmatpush1.bf16.msra.mxu0 0
    %211 = vmatprep.subr.bf16.mxu0 0
    %212 = vmatpush1.bf16.msra.mxu0 0
    %213 = vmatprep.subr.bf16.mxu0 0
    %214 = vmatpush1.bf16.msra.mxu0 0
    %215 = vmatprep.subr.bf16.mxu0 0
    %216 = vmatpush1.bf16.msra.mxu0 0
    %217 = vmatprep.mubr.bf16.mxu0 0
    %218 = vmatmul.mubr.bf16.gmra.mrb[0].mxu0 %v174
    %v219 = vpop.f32.mrb[0].mxu0
    %v220 = vadd.f32 %v144, %v219
    %v221 = vpop.f32.mrb[0].mxu0
    %v222 = vpop.f32.mrb[0].mxu0
    %v223 = vadd.f32 %v144, %v222
    %v224 = vpop.f32.mrb[0].mxu0
    %225 = vmatprep.mubr.bf16.mxu0 0
    %226 = vmatmul.mubr.bf16.gmra.mrb[0].mxu0 %v177
    %v227 = vpop.f32.mrb[0].mxu0
    %v228 = vadd.f32 %v144, %v227
    %v229 = vpop.f32.mrb[0].mxu0
    %v230 = vpop.f32.mrb[0].mxu0
    %v231 = vadd.f32 %v144, %v230
    %v232 = vpop.f32.mrb[0].mxu0
    %233 = vmatprep.mubr.bf16.mxu0 0
    %234 = vmatmul.mubr.bf16.gmra.mrb[0].mxu0 %v180
    %v235 = vpop.f32.mrb[0].mxu0
    %v236 = vadd.f32 %v144, %v235
    %v237 = vpop.f32.mrb[0].mxu0
    %v238 = vpop.f32.mrb[0].mxu0
    %v239 = vadd.f32 %v144, %v238
    %v240 = vpop.f32.mrb[0].mxu0
    %241 = vmatprep.mubr.bf16.mxu0 0
    %242 = vmatmul.mubr.bf16.gmra.mrb[0].mxu0 %v183
    %v243 = vpop.f32.mrb[0].mxu0
    %v244 = vadd.f32 %v144, %v243
    %v245 = vpop.f32.mrb[0].mxu0
    %v246 = vpop.f32.mrb[0].mxu0
    %v247 = vadd.f32 %v144, %v246
    %v248 = vpop.f32.mrb[0].mxu0
    %249 = vdwg.mxu0
    %v250 = vpack.c.bf16 %v223, %v220
    %v251 = vpack.c.bf16 %v231, %v228
    %v252 = vpack.c.bf16 %v239, %v236
    %v253 = vpack.c.bf16 %v247, %v244
    %v254 = vld [vmem:[%s4] sm:$0xf]
    %v255 = vld [vmem:[%s4 + $0x4] sm:$0xf]
    %v256 = vld [vmem:[%s4 + $0x8] sm:$0xf]
    %v257 = vld [vmem:[%s4 + $0xc] sm:$0xf]
    %v262 = vunpack.c.l.b16 %v254
    %v263 = vunpack.c.l.b16 %v255
    %v264 = vunpack.c.l.b16 %v256
    %v265 = vunpack.c.l.b16 %v257
    %v266 = vpack.c.b16 %v263, %v262
    %v267 = vpack.c.b16 %v265, %v264
    %vm270 = vcmask 261120
    %v272 = vsel %vm270, %v250, 0
    %v275 = vsel %vm270, %v251, 0
    %v278 = vsel %vm270, %v252, 0
    %v281 = vsel %vm270, %v253, 0
    %283 = vmatprep.subr.bf16.mxu0 0
    %284 = vmatpush1.bf16.msra.mxu0 %v266
    %285 = vmatprep.subr.bf16.mxu0 0
    %286 = vmatpush1.bf16.msra.mxu0 %v267
    %287 = vmatprep.subr.bf16.mxu0 0
    %288 = vmatpush1.bf16.msra.mxu0 0
    %289 = vmatprep.subr.bf16.mxu0 0
    %290 = vmatpush1.bf16.msra.mxu0 0
    %291 = vmatprep.subr.bf16.mxu0 0
    %292 = vmatpush1.bf16.msra.mxu0 0
    %293 = vmatprep.subr.bf16.mxu0 0
    %294 = vmatpush1.bf16.msra.mxu0 0
    %295 = vmatprep.subr.bf16.mxu0 0
    %296 = vmatpush1.bf16.msra.mxu0 0
    %297 = vmatprep.subr.bf16.mxu0 0
    %298 = vmatpush1.bf16.msra.mxu0 0
    %299 = vmatprep.subr.bf16.mxu0 0
    %300 = vmatpush1.bf16.msra.mxu0 0
    %301 = vmatprep.subr.bf16.mxu0 0
    %302 = vmatpush1.bf16.msra.mxu0 0
    %303 = vmatprep.subr.bf16.mxu0 0
    %304 = vmatpush1.bf16.msra.mxu0 0
    %305 = vmatprep.subr.bf16.mxu0 0
    %306 = vmatpush1.bf16.msra.mxu0 0
    %307 = vmatprep.subr.bf16.mxu0 0
    %308 = vmatpush1.bf16.msra.mxu0 0
    %309 = vmatprep.subr.bf16.mxu0 0
    %310 = vmatpush1.bf16.msra.mxu0 0
    %311 = vmatprep.subr.bf16.mxu0 0
    %312 = vmatpush1.bf16.msra.mxu0 0
    %313 = vmatprep.subr.bf16.mxu0 0
    %314 = vmatpush1.bf16.msra.mxu0 0
    %315 = vmatprep.mubr.bf16.mxu0 0
    %316 = vmatmul.mubr.bf16.gmra.mrb[0].mxu0 %v272
    %v317 = vpop.f32.mrb[0].mxu0
    %v318 = vadd.f32 0.0, %v317
    %v319 = vpop.f32.mrb[0].mxu0
    %v320 = vpop.f32.mrb[0].mxu0
    %v321 = vadd.f32 0.0, %v320
    %v322 = vpop.f32.mrb[0].mxu0
    %323 = vmatprep.mubr.bf16.mxu0 0
    %324 = vmatmul.mubr.bf16.gmra.mrb[0].mxu0 %v275
    %v325 = vpop.f32.mrb[0].mxu0
    %v326 = vadd.f32 0.0, %v325
    %v327 = vpop.f32.mrb[0].mxu0
    %v328 = vpop.f32.mrb[0].mxu0
    %v329 = vadd.f32 0.0, %v328
    %v330 = vpop.f32.mrb[0].mxu0
    %331 = vmatprep.mubr.bf16.mxu0 0
    %332 = vmatmul.mubr.bf16.gmra.mrb[0].mxu0 %v278
    %v333 = vpop.f32.mrb[0].mxu0
    %v334 = vadd.f32 0.0, %v333
    %v335 = vpop.f32.mrb[0].mxu0
    %v336 = vpop.f32.mrb[0].mxu0
    %v337 = vadd.f32 0.0, %v336
    %v338 = vpop.f32.mrb[0].mxu0
    %339 = vmatprep.mubr.bf16.mxu0 0
    %340 = vmatmul.mubr.bf16.gmra.mrb[0].mxu0 %v281
    %v341 = vpop.f32.mrb[0].mxu0
    %v342 = vadd.f32 0.0, %v341
    %v343 = vpop.f32.mrb[0].mxu0
    %v344 = vpop.f32.mrb[0].mxu0
    %v345 = vadd.f32 0.0, %v344
    %v346 = vpop.f32.mrb[0].mxu0
    %347 = vdwg.mxu0
    %vm348 = vcmp.lt.s32.totalorder %v68, 2
    %vm349 = vcmp.lt.s32.totalorder %v69, 2
    %vm350 = vcmp.lt.s32.totalorder %v70, 2
    %vm351 = vcmp.lt.s32.totalorder %v71, 2
    %vm352 = vcmp.lt.s32.totalorder %v72, 2
    %vm353 = vcmp.lt.s32.totalorder %v73, 2
    %vm354 = vcmp.lt.s32.totalorder %v74, 2
    %vm355 = vcmp.lt.s32.totalorder %v75, 2
    %v356 = vrot.slane %v318, 6
    %v357 = vrot.slane %v321, 6
    %v358 = vrot.slane %v326, 6
    %v359 = vrot.slane %v329, 6
    %v360 = vrot.slane %v334, 6
    %v361 = vrot.slane %v337, 6
    %v362 = vrot.slane %v342, 6
    %v363 = vrot.slane %v345, 6
    %v364 = vsel %vm348, %v362, %v363
    %v365 = vsel %vm348, %v361, %v362
    %v366 = vsel %vm348, %v360, %v361
    %v367 = vsel %vm348, %v359, %v360
    %v368 = vsel %vm348, %v358, %v359
    %v369 = vsel %vm348, %v357, %v358
    %v370 = vsel %vm348, %v356, %v357
    %v371 = vsel %vm348, %v363, %v356
    %v372 = vsel %vm348, 1, 0
    %v373 = vsel %vm349, 1, 0
    %v374 = vsel %vm350, 1, 0
    %v375 = vsel %vm351, 1, 0
    %v376 = vsel %vm352, 1, 0
    %v377 = vsel %vm353, 1, 0
    %v378 = vsel %vm354, 1, 0
    %v379 = vsel %vm355, 1, 0
    %vm380 = vcmp.eq.s32.totalorder %v372, 1
    %vm381 = vcmp.eq.s32.totalorder %v373, 1
    %vm382 = vcmp.eq.s32.totalorder %v374, 1
    %vm383 = vcmp.eq.s32.totalorder %v375, 1
    %vm384 = vcmp.eq.s32.totalorder %v376, 1
    %vm385 = vcmp.eq.s32.totalorder %v377, 1
    %vm386 = vcmp.eq.s32.totalorder %v378, 1
    %vm387 = vcmp.eq.s32.totalorder %v379, 1
    %v388 = vlaneseq
    %v389 = vshrl.u32 %v388, 7
    %v390 = vsub.s32 0, %v389
    %v391 = vrot.slane %v318, %v390
    %v392 = vsel %vm380, %v391, %v371
    %v393 = vsel %vm381, %v391, %v370
    %v394 = vsel %vm382, %v391, %v369
    %v395 = vsel %vm383, %v391, %v368
    %v396 = vsel %vm384, %v391, %v367
    %v397 = vsel %vm385, %v391, %v366
    %v398 = vsel %vm386, %v391, %v365
    %v399 = vsel %vm387, %v391, %v364
    %vm400 = vcmp.lt.s32.totalorder %v68, 1
    %vm401 = vcmp.lt.s32.totalorder %v69, 1
    %vm402 = vcmp.lt.s32.totalorder %v70, 1
    %vm403 = vcmp.lt.s32.totalorder %v71, 1
    %vm404 = vcmp.lt.s32.totalorder %v72, 1
    %vm405 = vcmp.lt.s32.totalorder %v73, 1
    %vm406 = vcmp.lt.s32.totalorder %v74, 1
    %vm407 = vcmp.lt.s32.totalorder %v75, 1
    %416 = vrot.lane.b32.xlu0 %v318, 96
    %v417 = vpop.permute.xlu0 %416
    %418 = vrot.lane.b32.xlu0 %v321, 96
    %v419 = vpop.permute.xlu0 %418
    %420 = vrot.lane.b32.xlu0 %v326, 96
    %v421 = vpop.permute.xlu0 %420
    %422 = vrot.lane.b32.xlu0 %v329, 96
    %v423 = vpop.permute.xlu0 %422
    %424 = vrot.lane.b32.xlu0 %v334, 96
    %v425 = vpop.permute.xlu0 %424
    %426 = vrot.lane.b32.xlu0 %v337, 96
    %v427 = vpop.permute.xlu0 %426
    %428 = vrot.lane.b32.xlu0 %v342, 96
    %v429 = vpop.permute.xlu0 %428
    %430 = vrot.lane.b32.xlu0 %v345, 96
    %v431 = vpop.permute.xlu0 %430
    %v440 = vrot.slane %v417, 7
    %v441 = vrot.slane %v419, 7
    %v442 = vrot.slane %v421, 7
    %v443 = vrot.slane %v423, 7
    %v444 = vrot.slane %v425, 7
    %v445 = vrot.slane %v427, 7
    %v446 = vrot.slane %v429, 7
    %v447 = vrot.slane %v431, 7
    %v448 = vsel %vm400, %v446, %v447
    %v449 = vsel %vm400, %v445, %v446
    %v450 = vsel %vm400, %v444, %v445
    %v451 = vsel %vm400, %v443, %v444
    %v452 = vsel %vm400, %v442, %v443
    %v453 = vsel %vm400, %v441, %v442
    %v454 = vsel %vm400, %v440, %v441
    %v455 = vsel %vm400, %v447, %v440
    %v456 = vsel %vm400, 1, 0
    %v457 = vsel %vm401, 1, 0
    %v458 = vsel %vm402, 1, 0
    %v459 = vsel %vm403, 1, 0
    %v460 = vsel %vm404, 1, 0
    %v461 = vsel %vm405, 1, 0
    %v462 = vsel %vm406, 1, 0
    %v463 = vsel %vm407, 1, 0
    %vm464 = vcmp.eq.s32.totalorder %v456, 1
    %vm465 = vcmp.eq.s32.totalorder %v457, 1
    %vm466 = vcmp.eq.s32.totalorder %v458, 1
    %vm467 = vcmp.eq.s32.totalorder %v459, 1
    %vm468 = vcmp.eq.s32.totalorder %v460, 1
    %vm469 = vcmp.eq.s32.totalorder %v461, 1
    %vm470 = vcmp.eq.s32.totalorder %v462, 1
    %vm471 = vcmp.eq.s32.totalorder %v463, 1
    %480 = vrot.lane.b32.xlu0 %v455, 32
    %v481 = vpop.permute.xlu0 %480
    %482 = vrot.lane.b32.xlu0 %v454, 32
    %v483 = vpop.permute.xlu0 %482
    %484 = vrot.lane.b32.xlu0 %v453, 32
    %v485 = vpop.permute.xlu0 %484
    %486 = vrot.lane.b32.xlu0 %v452, 32
    %v487 = vpop.permute.xlu0 %486
    %488 = vrot.lane.b32.xlu0 %v451, 32
    %v489 = vpop.permute.xlu0 %488
    %490 = vrot.lane.b32.xlu0 %v450, 32
    %v491 = vpop.permute.xlu0 %490
    %492 = vrot.lane.b32.xlu0 %v449, 32
    %v493 = vpop.permute.xlu0 %492
    %494 = vrot.lane.b32.xlu0 %v448, 32
    %v495 = vpop.permute.xlu0 %494
    %v504 = vsel %vm464, %v391, %v481
    %v505 = vsel %vm465, %v391, %v483
    %v506 = vsel %vm466, %v391, %v485
    %v507 = vsel %vm467, %v391, %v487
    %v508 = vsel %vm468, %v391, %v489
    %v509 = vsel %vm469, %v391, %v491
    %v510 = vsel %vm470, %v391, %v493
    %v511 = vsel %vm471, %v391, %v495
    %520 = vrot.lane.b32.xlu0 %v504, 96
    %v521 = vpop.permute.xlu0 %520
    %522 = vrot.lane.b32.xlu0 %v505, 96
    %v523 = vpop.permute.xlu0 %522
    %524 = vrot.lane.b32.xlu0 %v506, 96
    %v525 = vpop.permute.xlu0 %524
    %526 = vrot.lane.b32.xlu0 %v507, 96
    %v527 = vpop.permute.xlu0 %526
    %528 = vrot.lane.b32.xlu0 %v508, 96
    %v529 = vpop.permute.xlu0 %528
    %530 = vrot.lane.b32.xlu0 %v509, 96
    %v531 = vpop.permute.xlu0 %530
    %532 = vrot.lane.b32.xlu0 %v510, 96
    %v533 = vpop.permute.xlu0 %532
    %534 = vrot.lane.b32.xlu0 %v511, 96
    %v535 = vpop.permute.xlu0 %534
    %v544 = vadd.f32 %v392, %v521
    %v545 = vadd.f32 %v393, %v523
    %v546 = vadd.f32 %v394, %v525
    %v547 = vadd.f32 %v395, %v527
    %v548 = vadd.f32 %v396, %v529
    %v549 = vadd.f32 %v397, %v531
    %v550 = vadd.f32 %v398, %v533
    %v551 = vadd.f32 %v399, %v535
    %552 = vrot.lane.b32.xlu0 %v318, 64
    %v553 = vpop.permute.xlu0 %552
    %554 = vrot.lane.b32.xlu0 %v321, 64
    %v555 = vpop.permute.xlu0 %554
    %556 = vrot.lane.b32.xlu0 %v326, 64
    %v557 = vpop.permute.xlu0 %556
    %558 = vrot.lane.b32.xlu0 %v329, 64
    %v559 = vpop.permute.xlu0 %558
    %560 = vrot.lane.b32.xlu0 %v334, 64
    %v561 = vpop.permute.xlu0 %560
    %562 = vrot.lane.b32.xlu0 %v337, 64
    %v563 = vpop.permute.xlu0 %562
    %564 = vrot.lane.b32.xlu0 %v342, 64
    %v565 = vpop.permute.xlu0 %564
    %566 = vrot.lane.b32.xlu0 %v345, 64
    %v567 = vpop.permute.xlu0 %566
    %v576 = vadd.f32 %v544, %v553
    %v577 = vadd.f32 %v545, %v555
    %v578 = vadd.f32 %v546, %v557
    %v579 = vadd.f32 %v547, %v559
    %v580 = vadd.f32 %v548, %v561
    %v581 = vadd.f32 %v549, %v563
    %v582 = vadd.f32 %v550, %v565
    %v583 = vadd.f32 %v551, %v567
    %v584 = vld [vmem:[%s5] sm:$0x1]
    %v586 = vlaneseq
    %v587 = vshrl.u32 %v586, 7
    %v588 = vsub.s32 0, %v587
    %v589 = vrot.slane %v584, %v588
    %v591 = vadd.f32 %v576, %v589
    %v592 = vadd.f32 %v577, %v589
    %v593 = vadd.f32 %v578, %v589
    %v594 = vadd.f32 %v579, %v589
    %v595 = vadd.f32 %v580, %v589
    %v596 = vadd.f32 %v581, %v589
    %v597 = vadd.f32 %v582, %v589
    %v598 = vadd.f32 %v583, %v589
    %v599 = vmax.f32 %v591, 0.0
    %v600 = vmax.f32 %v592, 0.0
    %v601 = vmax.f32 %v593, 0.0
    %v602 = vmax.f32 %v594, 0.0
    %v603 = vmax.f32 %v595, 0.0
    %v604 = vmax.f32 %v596, 0.0
    %v605 = vmax.f32 %v597, 0.0
    %v606 = vmax.f32 %v598, 0.0
    %v607 = vpack.c.bf16 %v600, %v599
    %v608 = vpack.c.bf16 %v602, %v601
    %v609 = vpack.c.bf16 %v604, %v603
    %v610 = vpack.c.bf16 %v606, %v605
    %v611 = vld [vmem:[%s6] sm:$0xf]
    %v612 = vld [vmem:[%s6 + $0x4] sm:$0xf]
    %v613 = vld [vmem:[%s6 + $0x8] sm:$0xf]
    %v614 = vld [vmem:[%s6 + $0xc] sm:$0xf]
    %v615 = vld [vmem:[%s7] sm:$0x1]
    %v617 = vlaneseq
    %v618 = vshrl.u32 %v617, 7
    %v619 = vsub.s32 0, %v618
    %v620 = vrot.slane %v615, %v619
    %v626 = vunpack.c.l.b16 %v611
    %v627 = vunpack.c.l.b16 %v612
    %v628 = vunpack.c.l.b16 %v613
    %v629 = vunpack.c.l.b16 %v614
    %v630 = vpack.c.b16 %v627, %v626
    %v631 = vpack.c.b16 %v629, %v628
    %v635 = vsel %vm270, %v607, 0
    %v638 = vsel %vm270, %v608, 0
    %v641 = vsel %vm270, %v609, 0
    %v644 = vsel %vm270, %v610, 0
    %646 = vmatprep.subr.bf16.mxu0 0
    %647 = vmatpush1.bf16.msra.mxu0 %v630
    %648 = vmatprep.subr.bf16.mxu0 0
    %649 = vmatpush1.bf16.msra.mxu0 %v631
    %650 = vmatprep.subr.bf16.mxu0 0
    %651 = vmatpush1.bf16.msra.mxu0 0
    %652 = vmatprep.subr.bf16.mxu0 0
    %653 = vmatpush1.bf16.msra.mxu0 0
    %654 = vmatprep.subr.bf16.mxu0 0
    %655 = vmatpush1.bf16.msra.mxu0 0
    %656 = vmatprep.subr.bf16.mxu0 0
    %657 = vmatpush1.bf16.msra.mxu0 0
    %658 = vmatprep.subr.bf16.mxu0 0
    %659 = vmatpush1.bf16.msra.mxu0 0
    %660 = vmatprep.subr.bf16.mxu0 0
    %661 = vmatpush1.bf16.msra.mxu0 0
    %662 = vmatprep.subr.bf16.mxu0 0
    %663 = vmatpush1.bf16.msra.mxu0 0
    %664 = vmatprep.subr.bf16.mxu0 0
    %665 = vmatpush1.bf16.msra.mxu0 0
    %666 = vmatprep.subr.bf16.mxu0 0
    %667 = vmatpush1.bf16.msra.mxu0 0
    %668 = vmatprep.subr.bf16.mxu0 0
    %669 = vmatpush1.bf16.msra.mxu0 0
    %670 = vmatprep.subr.bf16.mxu0 0
    %671 = vmatpush1.bf16.msra.mxu0 0
    %672 = vmatprep.subr.bf16.mxu0 0
    %673 = vmatpush1.bf16.msra.mxu0 0
    %674 = vmatprep.subr.bf16.mxu0 0
    %675 = vmatpush1.bf16.msra.mxu0 0
    %676 = vmatprep.subr.bf16.mxu0 0
    %677 = vmatpush1.bf16.msra.mxu0 0
    %678 = vmatprep.mubr.bf16.mxu0 0
    %679 = vmatmul.mubr.bf16.gmra.mrb[0].mxu0 %v635
    %v680 = vpop.f32.mrb[0].mxu0
    %v681 = vadd.f32 %v620, %v680
    %v682 = vpop.f32.mrb[0].mxu0
    %v683 = vpop.f32.mrb[0].mxu0
    %v684 = vadd.f32 %v620, %v683
    %v685 = vpop.f32.mrb[0].mxu0
    %686 = vmatprep.mubr.bf16.mxu0 0
    %687 = vmatmul.mubr.bf16.gmra.mrb[0].mxu0 %v638
    %v688 = vpop.f32.mrb[0].mxu0
    %v689 = vadd.f32 %v620, %v688
    %v690 = vpop.f32.mrb[0].mxu0
    %v691 = vpop.f32.mrb[0].mxu0
    %v692 = vadd.f32 %v620, %v691
    %v693 = vpop.f32.mrb[0].mxu0
    %694 = vmatprep.mubr.bf16.mxu0 0
    %695 = vmatmul.mubr.bf16.gmra.mrb[0].mxu0 %v641
    %v696 = vpop.f32.mrb[0].mxu0
    %v697 = vadd.f32 %v620, %v696
    %v698 = vpop.f32.mrb[0].mxu0
    %v699 = vpop.f32.mrb[0].mxu0
    %v700 = vadd.f32 %v620, %v699
    %v701 = vpop.f32.mrb[0].mxu0
    %702 = vmatprep.mubr.bf16.mxu0 0
    %703 = vmatmul.mubr.bf16.gmra.mrb[0].mxu0 %v644
    %v704 = vpop.f32.mrb[0].mxu0
    %v705 = vadd.f32 %v620, %v704
    %v706 = vpop.f32.mrb[0].mxu0
    %v707 = vpop.f32.mrb[0].mxu0
    %v708 = vadd.f32 %v620, %v707
    %v709 = vpop.f32.mrb[0].mxu0
    %710 = vdwg.mxu0
    %v711 = vadd.f32 %v220, %v681
    %v712 = vadd.f32 %v223, %v684
    %v713 = vadd.f32 %v228, %v689
    %v714 = vadd.f32 %v231, %v692
    %v715 = vadd.f32 %v236, %v697
    %v716 = vadd.f32 %v239, %v700
    %v717 = vadd.f32 %v244, %v705
    %v718 = vadd.f32 %v247, %v708
    %v719 = vmul.f32 %v711, %v95
    %v720 = vmul.f32 %v712, %v100
    %v721 = vmul.f32 %v713, %v105
    %v722 = vmul.f32 %v714, %v110
    %v723 = vmul.f32 %v715, %v115
    %v724 = vmul.f32 %v716, %v120
    %v725 = vmul.f32 %v717, %v125
    %v726 = vmul.f32 %v718, %v130
    %v727 = vpack.c.bf16 %v720, %v719
    %v728 = vpack.c.bf16 %v722, %v721
    %v729 = vpack.c.bf16 %v724, %v723
    %v730 = vpack.c.bf16 %v726, %v725
    %s731 = scalar_lea.vmem %s4, 16
    %v732 = vld [vmem:[%s731] sm:$0xf]
    %v733 = vld [vmem:[%s731 + $0x4] sm:$0xf]
    %v734 = vld [vmem:[%s731 + $0x8] sm:$0xf]
    %v735 = vld [vmem:[%s731 + $0xc] sm:$0xf]
    %v740 = vunpack.c.l.b16 %v732
    %v741 = vunpack.c.l.b16 %v733
    %v742 = vunpack.c.l.b16 %v734
    %v743 = vunpack.c.l.b16 %v735
    %v744 = vpack.c.b16 %v741, %v740
    %v745 = vpack.c.b16 %v743, %v742
    %v749 = vsel %vm270, %v727, 0
    %v752 = vsel %vm270, %v728, 0
    %v755 = vsel %vm270, %v729, 0
    %v758 = vsel %vm270, %v730, 0
    %760 = vmatprep.subr.bf16.mxu0 0
    %761 = vmatpush1.bf16.msra.mxu0 %v744
    %762 = vmatprep.subr.bf16.mxu0 0
    %763 = vmatpush1.bf16.msra.mxu0 %v745
    %764 = vmatprep.subr.bf16.mxu0 0
    %765 = vmatpush1.bf16.msra.mxu0 0
    %766 = vmatprep.subr.bf16.mxu0 0
    %767 = vmatpush1.bf16.msra.mxu0 0
    %768 = vmatprep.subr.bf16.mxu0 0
    %769 = vmatpush1.bf16.msra.mxu0 0
    %770 = vmatprep.subr.bf16.mxu0 0
    %771 = vmatpush1.bf16.msra.mxu0 0
    %772 = vmatprep.subr.bf16.mxu0 0
    %773 = vmatpush1.bf16.msra.mxu0 0
    %774 = vmatprep.subr.bf16.mxu0 0
    %775 = vmatpush1.bf16.msra.mxu0 0
    %776 = vmatprep.subr.bf16.mxu0 0
    %777 = vmatpush1.bf16.msra.mxu0 0
    %778 = vmatprep.subr.bf16.mxu0 0
    %779 = vmatpush1.bf16.msra.mxu0 0
    %780 = vmatprep.subr.bf16.mxu0 0
    %781 = vmatpush1.bf16.msra.mxu0 0
    %782 = vmatprep.subr.bf16.mxu0 0
    %783 = vmatpush1.bf16.msra.mxu0 0
    %784 = vmatprep.subr.bf16.mxu0 0
    %785 = vmatpush1.bf16.msra.mxu0 0
    %786 = vmatprep.subr.bf16.mxu0 0
    %787 = vmatpush1.bf16.msra.mxu0 0
    %788 = vmatprep.subr.bf16.mxu0 0
    %789 = vmatpush1.bf16.msra.mxu0 0
    %790 = vmatprep.subr.bf16.mxu0 0
    %791 = vmatpush1.bf16.msra.mxu0 0
    %792 = vmatprep.mubr.bf16.mxu0 0
    %793 = vmatmul.mubr.bf16.gmra.mrb[0].mxu0 %v749
    %v794 = vpop.f32.mrb[0].mxu0
    %v795 = vadd.f32 0.0, %v794
    %v796 = vpop.f32.mrb[0].mxu0
    %v797 = vpop.f32.mrb[0].mxu0
    %v798 = vadd.f32 0.0, %v797
    %v799 = vpop.f32.mrb[0].mxu0
    %800 = vmatprep.mubr.bf16.mxu0 0
    %801 = vmatmul.mubr.bf16.gmra.mrb[0].mxu0 %v752
    %v802 = vpop.f32.mrb[0].mxu0
    %v803 = vadd.f32 0.0, %v802
    %v804 = vpop.f32.mrb[0].mxu0
    %v805 = vpop.f32.mrb[0].mxu0
    %v806 = vadd.f32 0.0, %v805
    %v807 = vpop.f32.mrb[0].mxu0
    %808 = vmatprep.mubr.bf16.mxu0 0
    %809 = vmatmul.mubr.bf16.gmra.mrb[0].mxu0 %v755
    %v810 = vpop.f32.mrb[0].mxu0
    %v811 = vadd.f32 0.0, %v810
    %v812 = vpop.f32.mrb[0].mxu0
    %v813 = vpop.f32.mrb[0].mxu0
    %v814 = vadd.f32 0.0, %v813
    %v815 = vpop.f32.mrb[0].mxu0
    %816 = vmatprep.mubr.bf16.mxu0 0
    %817 = vmatmul.mubr.bf16.gmra.mrb[0].mxu0 %v758
    %v818 = vpop.f32.mrb[0].mxu0
    %v819 = vadd.f32 0.0, %v818
    %v820 = vpop.f32.mrb[0].mxu0
    %v821 = vpop.f32.mrb[0].mxu0
    %v822 = vadd.f32 0.0, %v821
    %v823 = vpop.f32.mrb[0].mxu0
    %824 = vdwg.mxu0
    %vm825 = vcmp.lt.s32.totalorder %v68, 4
    %vm826 = vcmp.lt.s32.totalorder %v69, 4
    %vm827 = vcmp.lt.s32.totalorder %v70, 4
    %vm828 = vcmp.lt.s32.totalorder %v71, 4
    %vm829 = vcmp.lt.s32.totalorder %v72, 4
    %vm830 = vcmp.lt.s32.totalorder %v73, 4
    %vm831 = vcmp.lt.s32.totalorder %v74, 4
    %vm832 = vcmp.lt.s32.totalorder %v75, 4
    %v833 = vrot.slane %v795, 4
    %v834 = vrot.slane %v798, 4
    %v835 = vrot.slane %v803, 4
    %v836 = vrot.slane %v806, 4
    %v837 = vrot.slane %v811, 4
    %v838 = vrot.slane %v814, 4
    %v839 = vrot.slane %v819, 4
    %v840 = vrot.slane %v822, 4
    %v841 = vsel %vm825, %v839, %v840
    %v842 = vsel %vm825, %v838, %v839
    %v843 = vsel %vm825, %v837, %v838
    %v844 = vsel %vm825, %v836, %v837
    %v845 = vsel %vm825, %v835, %v836
    %v846 = vsel %vm825, %v834, %v835
    %v847 = vsel %vm825, %v833, %v834
    %v848 = vsel %vm825, %v840, %v833
    %v849 = vsel %vm825, 1, 0
    %v850 = vsel %vm826, 1, 0
    %v851 = vsel %vm827, 1, 0
    %v852 = vsel %vm828, 1, 0
    %v853 = vsel %vm829, 1, 0
    %v854 = vsel %vm830, 1, 0
    %v855 = vsel %vm831, 1, 0
    %v856 = vsel %vm832, 1, 0
    %vm857 = vcmp.eq.s32.totalorder %v849, 1
    %vm858 = vcmp.eq.s32.totalorder %v850, 1
    %vm859 = vcmp.eq.s32.totalorder %v851, 1
    %vm860 = vcmp.eq.s32.totalorder %v852, 1
    %vm861 = vcmp.eq.s32.totalorder %v853, 1
    %vm862 = vcmp.eq.s32.totalorder %v854, 1
    %vm863 = vcmp.eq.s32.totalorder %v855, 1
    %vm864 = vcmp.eq.s32.totalorder %v856, 1
    %v865 = vlaneseq
    %v866 = vshrl.u32 %v865, 7
    %v867 = vsub.s32 0, %v866
    %v868 = vrot.slane %v795, %v867
    %v869 = vsel %vm857, %v868, %v848
    %v870 = vsel %vm858, %v868, %v847
    %v871 = vsel %vm859, %v868, %v846
    %v872 = vsel %vm860, %v868, %v845
    %v873 = vsel %vm861, %v868, %v844
    %v874 = vsel %vm862, %v868, %v843
    %v875 = vsel %vm863, %v868, %v842
    %v876 = vsel %vm864, %v868, %v841
    %885 = vrot.lane.b32.xlu0 %v795, 96
    %v886 = vpop.permute.xlu0 %885
    %887 = vrot.lane.b32.xlu0 %v798, 96
    %v888 = vpop.permute.xlu0 %887
    %889 = vrot.lane.b32.xlu0 %v803, 96
    %v890 = vpop.permute.xlu0 %889
    %891 = vrot.lane.b32.xlu0 %v806, 96
    %v892 = vpop.permute.xlu0 %891
    %893 = vrot.lane.b32.xlu0 %v811, 96
    %v894 = vpop.permute.xlu0 %893
    %895 = vrot.lane.b32.xlu0 %v814, 96
    %v896 = vpop.permute.xlu0 %895
    %897 = vrot.lane.b32.xlu0 %v819, 96
    %v898 = vpop.permute.xlu0 %897
    %899 = vrot.lane.b32.xlu0 %v822, 96
    %v900 = vpop.permute.xlu0 %899
    %v909 = vrot.slane %v886, 6
    %v910 = vrot.slane %v888, 6
    %v911 = vrot.slane %v890, 6
    %v912 = vrot.slane %v892, 6
    %v913 = vrot.slane %v894, 6
    %v914 = vrot.slane %v896, 6
    %v915 = vrot.slane %v898, 6
    %v916 = vrot.slane %v900, 6
    %v917 = vsel %vm348, %v915, %v916
    %v918 = vsel %vm348, %v914, %v915
    %v919 = vsel %vm348, %v913, %v914
    %v920 = vsel %vm348, %v912, %v913
    %v921 = vsel %vm348, %v911, %v912
    %v922 = vsel %vm348, %v910, %v911
    %v923 = vsel %vm348, %v909, %v910
    %v924 = vsel %vm348, %v916, %v909
    %933 = vrot.lane.b32.xlu0 %v924, 32
    %v934 = vpop.permute.xlu0 %933
    %935 = vrot.lane.b32.xlu0 %v923, 32
    %v936 = vpop.permute.xlu0 %935
    %937 = vrot.lane.b32.xlu0 %v922, 32
    %v938 = vpop.permute.xlu0 %937
    %939 = vrot.lane.b32.xlu0 %v921, 32
    %v940 = vpop.permute.xlu0 %939
    %941 = vrot.lane.b32.xlu0 %v920, 32
    %v942 = vpop.permute.xlu0 %941
    %943 = vrot.lane.b32.xlu0 %v919, 32
    %v944 = vpop.permute.xlu0 %943
    %945 = vrot.lane.b32.xlu0 %v918, 32
    %v946 = vpop.permute.xlu0 %945
    %947 = vrot.lane.b32.xlu0 %v917, 32
    %v948 = vpop.permute.xlu0 %947
    %v957 = vsel %vm380, %v868, %v934
    %v958 = vsel %vm381, %v868, %v936
    %v959 = vsel %vm382, %v868, %v938
    %v960 = vsel %vm383, %v868, %v940
    %v961 = vsel %vm384, %v868, %v942
    %v962 = vsel %vm385, %v868, %v944
    %v963 = vsel %vm386, %v868, %v946
    %v964 = vsel %vm387, %v868, %v948
    %973 = vrot.lane.b32.xlu0 %v957, 96
    %v974 = vpop.permute.xlu0 %973
    %975 = vrot.lane.b32.xlu0 %v958, 96
    %v976 = vpop.permute.xlu0 %975
    %977 = vrot.lane.b32.xlu0 %v959, 96
    %v978 = vpop.permute.xlu0 %977
    %979 = vrot.lane.b32.xlu0 %v960, 96
    %v980 = vpop.permute.xlu0 %979
    %981 = vrot.lane.b32.xlu0 %v961, 96
    %v982 = vpop.permute.xlu0 %981
    %983 = vrot.lane.b32.xlu0 %v962, 96
    %v984 = vpop.permute.xlu0 %983
    %985 = vrot.lane.b32.xlu0 %v963, 96
    %v986 = vpop.permute.xlu0 %985
    %987 = vrot.lane.b32.xlu0 %v964, 96
    %v988 = vpop.permute.xlu0 %987
    %v997 = vadd.f32 %v869, %v974
    %v998 = vadd.f32 %v870, %v976
    %v999 = vadd.f32 %v871, %v978
    %v1000 = vadd.f32 %v872, %v980
    %v1001 = vadd.f32 %v873, %v982
    %v1002 = vadd.f32 %v874, %v984
    %v1003 = vadd.f32 %v875, %v986
    %v1004 = vadd.f32 %v876, %v988
    %1005 = vrot.lane.b32.xlu0 %v795, 64
    %v1006 = vpop.permute.xlu0 %1005
    %1007 = vrot.lane.b32.xlu0 %v798, 64
    %v1008 = vpop.permute.xlu0 %1007
    %1009 = vrot.lane.b32.xlu0 %v803, 64
    %v1010 = vpop.permute.xlu0 %1009
    %1011 = vrot.lane.b32.xlu0 %v806, 64
    %v1012 = vpop.permute.xlu0 %1011
    %1013 = vrot.lane.b32.xlu0 %v811, 64
    %v1014 = vpop.permute.xlu0 %1013
    %1015 = vrot.lane.b32.xlu0 %v814, 64
    %v1016 = vpop.permute.xlu0 %1015
    %1017 = vrot.lane.b32.xlu0 %v819, 64
    %v1018 = vpop.permute.xlu0 %1017
    %1019 = vrot.lane.b32.xlu0 %v822, 64
    %v1020 = vpop.permute.xlu0 %1019
    %v1029 = vadd.f32 %v997, %v1006
    %v1030 = vadd.f32 %v998, %v1008
    %v1031 = vadd.f32 %v999, %v1010
    %v1032 = vadd.f32 %v1000, %v1012
    %v1033 = vadd.f32 %v1001, %v1014
    %v1034 = vadd.f32 %v1002, %v1016
    %v1035 = vadd.f32 %v1003, %v1018
    %v1036 = vadd.f32 %v1004, %v1020
    %s1037 = scalar_lea.vmem %s5, 1
    %v1038 = vld [vmem:[%s1037] sm:$0x1]
    %v1040 = vlaneseq
    %v1041 = vshrl.u32 %v1040, 7
    %v1042 = vsub.s32 0, %v1041
    %v1043 = vrot.slane %v1038, %v1042
    %v1045 = vadd.f32 %v1029, %v1043
    %v1046 = vadd.f32 %v1030, %v1043
    %v1047 = vadd.f32 %v1031, %v1043
    %v1048 = vadd.f32 %v1032, %v1043
    %v1049 = vadd.f32 %v1033, %v1043
    %v1050 = vadd.f32 %v1034, %v1043
    %v1051 = vadd.f32 %v1035, %v1043
    %v1052 = vadd.f32 %v1036, %v1043
    %v1053 = vmax.f32 %v1045, 0.0
    %v1054 = vmax.f32 %v1046, 0.0
    %v1055 = vmax.f32 %v1047, 0.0
    %v1056 = vmax.f32 %v1048, 0.0
    %v1057 = vmax.f32 %v1049, 0.0
    %v1058 = vmax.f32 %v1050, 0.0
    %v1059 = vmax.f32 %v1051, 0.0
    %v1060 = vmax.f32 %v1052, 0.0
    %v1061 = vpack.c.bf16 %v1054, %v1053
    %v1062 = vpack.c.bf16 %v1056, %v1055
    %v1063 = vpack.c.bf16 %v1058, %v1057
    %v1064 = vpack.c.bf16 %v1060, %v1059
    %s1065 = scalar_lea.vmem %s6, 16
    %v1066 = vld [vmem:[%s1065] sm:$0xf]
    %v1067 = vld [vmem:[%s1065 + $0x4] sm:$0xf]
    %v1068 = vld [vmem:[%s1065 + $0x8] sm:$0xf]
    %v1069 = vld [vmem:[%s1065 + $0xc] sm:$0xf]
    %s1070 = scalar_lea.vmem %s7, 1
    %v1071 = vld [vmem:[%s1070] sm:$0x1]
    %v1073 = vlaneseq
    %v1074 = vshrl.u32 %v1073, 7
    %v1075 = vsub.s32 0, %v1074
    %v1076 = vrot.slane %v1071, %v1075
    %v1082 = vunpack.c.l.b16 %v1066
    %v1083 = vunpack.c.l.b16 %v1067
    %v1084 = vunpack.c.l.b16 %v1068
    %v1085 = vunpack.c.l.b16 %v1069
    %v1086 = vpack.c.b16 %v1083, %v1082
    %v1087 = vpack.c.b16 %v1085, %v1084
    %v1091 = vsel %vm270, %v1061, 0
    %v1094 = vsel %vm270, %v1062, 0
    %v1097 = vsel %vm270, %v1063, 0
    %v1100 = vsel %vm270, %v1064, 0
    %1102 = vmatprep.subr.bf16.mxu0 0
    %1103 = vmatpush1.bf16.msra.mxu0 %v1086
    %1104 = vmatprep.subr.bf16.mxu0 0
    %1105 = vmatpush1.bf16.msra.mxu0 %v1087
    %1106 = vmatprep.subr.bf16.mxu0 0
    %1107 = vmatpush1.bf16.msra.mxu0 0
    %1108 = vmatprep.subr.bf16.mxu0 0
    %1109 = vmatpush1.bf16.msra.mxu0 0
    %1110 = vmatprep.subr.bf16.mxu0 0
    %1111 = vmatpush1.bf16.msra.mxu0 0
    %1112 = vmatprep.subr.bf16.mxu0 0
    %1113 = vmatpush1.bf16.msra.mxu0 0
    %1114 = vmatprep.subr.bf16.mxu0 0
    %1115 = vmatpush1.bf16.msra.mxu0 0
    %1116 = vmatprep.subr.bf16.mxu0 0
    %1117 = vmatpush1.bf16.msra.mxu0 0
    %1118 = vmatprep.subr.bf16.mxu0 0
    %1119 = vmatpush1.bf16.msra.mxu0 0
    %1120 = vmatprep.subr.bf16.mxu0 0
    %1121 = vmatpush1.bf16.msra.mxu0 0
    %1122 = vmatprep.subr.bf16.mxu0 0
    %1123 = vmatpush1.bf16.msra.mxu0 0
    %1124 = vmatprep.subr.bf16.mxu0 0
    %1125 = vmatpush1.bf16.msra.mxu0 0
    %1126 = vmatprep.subr.bf16.mxu0 0
    %1127 = vmatpush1.bf16.msra.mxu0 0
    %1128 = vmatprep.subr.bf16.mxu0 0
    %1129 = vmatpush1.bf16.msra.mxu0 0
    %1130 = vmatprep.subr.bf16.mxu0 0
    %1131 = vmatpush1.bf16.msra.mxu0 0
    %1132 = vmatprep.subr.bf16.mxu0 0
    %1133 = vmatpush1.bf16.msra.mxu0 0
    %1134 = vmatprep.mubr.bf16.mxu0 0
    %1135 = vmatmul.mubr.bf16.gmra.mrb[0].mxu0 %v1091
    %v1136 = vpop.f32.mrb[0].mxu0
    %v1137 = vadd.f32 %v1076, %v1136
    %v1138 = vpop.f32.mrb[0].mxu0
    %v1139 = vpop.f32.mrb[0].mxu0
    %v1140 = vadd.f32 %v1076, %v1139
    %v1141 = vpop.f32.mrb[0].mxu0
    %1142 = vmatprep.mubr.bf16.mxu0 0
    %1143 = vmatmul.mubr.bf16.gmra.mrb[0].mxu0 %v1094
    %v1144 = vpop.f32.mrb[0].mxu0
    %v1145 = vadd.f32 %v1076, %v1144
    %v1146 = vpop.f32.mrb[0].mxu0
    %v1147 = vpop.f32.mrb[0].mxu0
    %v1148 = vadd.f32 %v1076, %v1147
    %v1149 = vpop.f32.mrb[0].mxu0
    %1150 = vmatprep.mubr.bf16.mxu0 0
    %1151 = vmatmul.mubr.bf16.gmra.mrb[0].mxu0 %v1097
    %v1152 = vpop.f32.mrb[0].mxu0
    %v1153 = vadd.f32 %v1076, %v1152
    %v1154 = vpop.f32.mrb[0].mxu0
    %v1155 = vpop.f32.mrb[0].mxu0
    %v1156 = vadd.f32 %v1076, %v1155
    %v1157 = vpop.f32.mrb[0].mxu0
    %1158 = vmatprep.mubr.bf16.mxu0 0
    %1159 = vmatmul.mubr.bf16.gmra.mrb[0].mxu0 %v1100
    %v1160 = vpop.f32.mrb[0].mxu0
    %v1161 = vadd.f32 %v1076, %v1160
    %v1162 = vpop.f32.mrb[0].mxu0
    %v1163 = vpop.f32.mrb[0].mxu0
    %v1164 = vadd.f32 %v1076, %v1163
    %v1165 = vpop.f32.mrb[0].mxu0
    %1166 = vdwg.mxu0
    %v1167 = vadd.f32 %v719, %v1137
    %v1168 = vadd.f32 %v720, %v1140
    %v1169 = vadd.f32 %v721, %v1145
    %v1170 = vadd.f32 %v722, %v1148
    %v1171 = vadd.f32 %v723, %v1153
    %v1172 = vadd.f32 %v724, %v1156
    %v1173 = vadd.f32 %v725, %v1161
    %v1174 = vadd.f32 %v726, %v1164
    %v1175 = vmul.f32 %v1167, %v95
    %v1176 = vmul.f32 %v1168, %v100
    %v1177 = vmul.f32 %v1169, %v105
    %v1178 = vmul.f32 %v1170, %v110
    %v1179 = vmul.f32 %v1171, %v115
    %v1180 = vmul.f32 %v1172, %v120
    %v1181 = vmul.f32 %v1173, %v125
    %v1182 = vmul.f32 %v1174, %v130
    %v1183 = vpack.c.bf16 %v1176, %v1175
    %v1184 = vpack.c.bf16 %v1178, %v1177
    %v1185 = vpack.c.bf16 %v1180, %v1179
    %v1186 = vpack.c.bf16 %v1182, %v1181
    %s1187 = scalar_lea.vmem %s4, 32
    %v1188 = vld [vmem:[%s1187] sm:$0xf]
    %v1189 = vld [vmem:[%s1187 + $0x4] sm:$0xf]
    %v1190 = vld [vmem:[%s1187 + $0x8] sm:$0xf]
    %v1191 = vld [vmem:[%s1187 + $0xc] sm:$0xf]
    %v1196 = vunpack.c.l.b16 %v1188
    %v1197 = vunpack.c.l.b16 %v1189
    %v1198 = vunpack.c.l.b16 %v1190
    %v1199 = vunpack.c.l.b16 %v1191
    %v1200 = vpack.c.b16 %v1197, %v1196
    %v1201 = vpack.c.b16 %v1199, %v1198
    %v1205 = vsel %vm270, %v1183, 0
    %v1208 = vsel %vm270, %v1184, 0
    %v1211 = vsel %vm270, %v1185, 0
    %v1214 = vsel %vm270, %v1186, 0
    %1216 = vmatprep.subr.bf16.mxu0 0
    %1217 = vmatpush1.bf16.msra.mxu0 %v1200
    %1218 = vmatprep.subr.bf16.mxu0 0
    %1219 = vmatpush1.bf16.msra.mxu0 %v1201
    %1220 = vmatprep.subr.bf16.mxu0 0
    %1221 = vmatpush1.bf16.msra.mxu0 0
    %1222 = vmatprep.subr.bf16.mxu0 0
    %1223 = vmatpush1.bf16.msra.mxu0 0
    %1224 = vmatprep.subr.bf16.mxu0 0
    %1225 = vmatpush1.bf16.msra.mxu0 0
    %1226 = vmatprep.subr.bf16.mxu0 0
    %1227 = vmatpush1.bf16.msra.mxu0 0
    %1228 = vmatprep.subr.bf16.mxu0 0
    %1229 = vmatpush1.bf16.msra.mxu0 0
    %1230 = vmatprep.subr.bf16.mxu0 0
    %1231 = vmatpush1.bf16.msra.mxu0 0
    %1232 = vmatprep.subr.bf16.mxu0 0
    %1233 = vmatpush1.bf16.msra.mxu0 0
    %1234 = vmatprep.subr.bf16.mxu0 0
    %1235 = vmatpush1.bf16.msra.mxu0 0
    %1236 = vmatprep.subr.bf16.mxu0 0
    %1237 = vmatpush1.bf16.msra.mxu0 0
    %1238 = vmatprep.subr.bf16.mxu0 0
    %1239 = vmatpush1.bf16.msra.mxu0 0
    %1240 = vmatprep.subr.bf16.mxu0 0
    %1241 = vmatpush1.bf16.msra.mxu0 0
    %1242 = vmatprep.subr.bf16.mxu0 0
    %1243 = vmatpush1.bf16.msra.mxu0 0
    %1244 = vmatprep.subr.bf16.mxu0 0
    %1245 = vmatpush1.bf16.msra.mxu0 0
    %1246 = vmatprep.subr.bf16.mxu0 0
    %1247 = vmatpush1.bf16.msra.mxu0 0
    %1248 = vmatprep.mubr.bf16.mxu0 0
    %1249 = vmatmul.mubr.bf16.gmra.mrb[0].mxu0 %v1205
    %v1250 = vpop.f32.mrb[0].mxu0
    %v1251 = vadd.f32 0.0, %v1250
    %v1252 = vpop.f32.mrb[0].mxu0
    %v1253 = vpop.f32.mrb[0].mxu0
    %v1254 = vadd.f32 0.0, %v1253
    %v1255 = vpop.f32.mrb[0].mxu0
    %1256 = vmatprep.mubr.bf16.mxu0 0
    %1257 = vmatmul.mubr.bf16.gmra.mrb[0].mxu0 %v1208
    %v1258 = vpop.f32.mrb[0].mxu0
    %v1259 = vadd.f32 0.0, %v1258
    %v1260 = vpop.f32.mrb[0].mxu0
    %v1261 = vpop.f32.mrb[0].mxu0
    %v1262 = vadd.f32 0.0, %v1261
    %v1263 = vpop.f32.mrb[0].mxu0
    %1264 = vmatprep.mubr.bf16.mxu0 0
    %1265 = vmatmul.mubr.bf16.gmra.mrb[0].mxu0 %v1211
    %v1266 = vpop.f32.mrb[0].mxu0
    %v1267 = vadd.f32 0.0, %v1266
    %v1268 = vpop.f32.mrb[0].mxu0
    %v1269 = vpop.f32.mrb[0].mxu0
    %v1270 = vadd.f32 0.0, %v1269
    %v1271 = vpop.f32.mrb[0].mxu0
    %1272 = vmatprep.mubr.bf16.mxu0 0
    %1273 = vmatmul.mubr.bf16.gmra.mrb[0].mxu0 %v1214
    %v1274 = vpop.f32.mrb[0].mxu0
    %v1275 = vadd.f32 0.0, %v1274
    %v1276 = vpop.f32.mrb[0].mxu0
    %v1277 = vpop.f32.mrb[0].mxu0
    %v1278 = vadd.f32 0.0, %v1277
    %v1279 = vpop.f32.mrb[0].mxu0
    %1280 = vdwg.mxu0
    %vm1281 = vcmp.lt.s32.totalorder %v68, 8
    %vm1282 = vcmp.lt.s32.totalorder %v69, 8
    %vm1283 = vcmp.lt.s32.totalorder %v70, 8
    %vm1284 = vcmp.lt.s32.totalorder %v71, 8
    %vm1285 = vcmp.lt.s32.totalorder %v72, 8
    %vm1286 = vcmp.lt.s32.totalorder %v73, 8
    %vm1287 = vcmp.lt.s32.totalorder %v74, 8
    %vm1288 = vcmp.lt.s32.totalorder %v75, 8
    %v1289 = vsel %vm1281, 1, 0
    %v1290 = vsel %vm1282, 1, 0
    %v1291 = vsel %vm1283, 1, 0
    %v1292 = vsel %vm1284, 1, 0
    %v1293 = vsel %vm1285, 1, 0
    %v1294 = vsel %vm1286, 1, 0
    %v1295 = vsel %vm1287, 1, 0
    %v1296 = vsel %vm1288, 1, 0
    %vm1297 = vcmp.eq.s32.totalorder %v1289, 1
    %vm1298 = vcmp.eq.s32.totalorder %v1290, 1
    %vm1299 = vcmp.eq.s32.totalorder %v1291, 1
    %vm1300 = vcmp.eq.s32.totalorder %v1292, 1
    %vm1301 = vcmp.eq.s32.totalorder %v1293, 1
    %vm1302 = vcmp.eq.s32.totalorder %v1294, 1
    %vm1303 = vcmp.eq.s32.totalorder %v1295, 1
    %vm1304 = vcmp.eq.s32.totalorder %v1296, 1
    %v1305 = vlaneseq
    %v1306 = vshrl.u32 %v1305, 7
    %v1307 = vsub.s32 0, %v1306
    %v1308 = vrot.slane %v1251, %v1307
    %v1309 = vsel %vm1297, %v1308, %v1278
    %v1310 = vsel %vm1298, %v1308, %v1251
    %v1311 = vsel %vm1299, %v1308, %v1254
    %v1312 = vsel %vm1300, %v1308, %v1259
    %v1313 = vsel %vm1301, %v1308, %v1262
    %v1314 = vsel %vm1302, %v1308, %v1267
    %v1315 = vsel %vm1303, %v1308, %v1270
    %v1316 = vsel %vm1304, %v1308, %v1275
    %1325 = vrot.lane.b32.xlu0 %v1251, 96
    %v1326 = vpop.permute.xlu0 %1325
    %1327 = vrot.lane.b32.xlu0 %v1254, 96
    %v1328 = vpop.permute.xlu0 %1327
    %1329 = vrot.lane.b32.xlu0 %v1259, 96
    %v1330 = vpop.permute.xlu0 %1329
    %1331 = vrot.lane.b32.xlu0 %v1262, 96
    %v1332 = vpop.permute.xlu0 %1331
    %1333 = vrot.lane.b32.xlu0 %v1267, 96
    %v1334 = vpop.permute.xlu0 %1333
    %1335 = vrot.lane.b32.xlu0 %v1270, 96
    %v1336 = vpop.permute.xlu0 %1335
    %1337 = vrot.lane.b32.xlu0 %v1275, 96
    %v1338 = vpop.permute.xlu0 %1337
    %1339 = vrot.lane.b32.xlu0 %v1278, 96
    %v1340 = vpop.permute.xlu0 %1339
    %v1349 = vrot.slane %v1326, 4
    %v1350 = vrot.slane %v1328, 4
    %v1351 = vrot.slane %v1330, 4
    %v1352 = vrot.slane %v1332, 4
    %v1353 = vrot.slane %v1334, 4
    %v1354 = vrot.slane %v1336, 4
    %v1355 = vrot.slane %v1338, 4
    %v1356 = vrot.slane %v1340, 4
    %v1357 = vsel %vm825, %v1355, %v1356
    %v1358 = vsel %vm825, %v1354, %v1355
    %v1359 = vsel %vm825, %v1353, %v1354
    %v1360 = vsel %vm825, %v1352, %v1353
    %v1361 = vsel %vm825, %v1351, %v1352
    %v1362 = vsel %vm825, %v1350, %v1351
    %v1363 = vsel %vm825, %v1349, %v1350
    %v1364 = vsel %vm825, %v1356, %v1349
    %1373 = vrot.lane.b32.xlu0 %v1364, 32
    %v1374 = vpop.permute.xlu0 %1373
    %1375 = vrot.lane.b32.xlu0 %v1363, 32
    %v1376 = vpop.permute.xlu0 %1375
    %1377 = vrot.lane.b32.xlu0 %v1362, 32
    %v1378 = vpop.permute.xlu0 %1377
    %1379 = vrot.lane.b32.xlu0 %v1361, 32
    %v1380 = vpop.permute.xlu0 %1379
    %1381 = vrot.lane.b32.xlu0 %v1360, 32
    %v1382 = vpop.permute.xlu0 %1381
    %1383 = vrot.lane.b32.xlu0 %v1359, 32
    %v1384 = vpop.permute.xlu0 %1383
    %1385 = vrot.lane.b32.xlu0 %v1358, 32
    %v1386 = vpop.permute.xlu0 %1385
    %1387 = vrot.lane.b32.xlu0 %v1357, 32
    %v1388 = vpop.permute.xlu0 %1387
    %v1397 = vsel %vm857, %v1308, %v1374
    %v1398 = vsel %vm858, %v1308, %v1376
    %v1399 = vsel %vm859, %v1308, %v1378
    %v1400 = vsel %vm860, %v1308, %v1380
    %v1401 = vsel %vm861, %v1308, %v1382
    %v1402 = vsel %vm862, %v1308, %v1384
    %v1403 = vsel %vm863, %v1308, %v1386
    %v1404 = vsel %vm864, %v1308, %v1388
    %1413 = vrot.lane.b32.xlu0 %v1397, 96
    %v1414 = vpop.permute.xlu0 %1413
    %1415 = vrot.lane.b32.xlu0 %v1398, 96
    %v1416 = vpop.permute.xlu0 %1415
    %1417 = vrot.lane.b32.xlu0 %v1399, 96
    %v1418 = vpop.permute.xlu0 %1417
    %1419 = vrot.lane.b32.xlu0 %v1400, 96
    %v1420 = vpop.permute.xlu0 %1419
    %1421 = vrot.lane.b32.xlu0 %v1401, 96
    %v1422 = vpop.permute.xlu0 %1421
    %1423 = vrot.lane.b32.xlu0 %v1402, 96
    %v1424 = vpop.permute.xlu0 %1423
    %1425 = vrot.lane.b32.xlu0 %v1403, 96
    %v1426 = vpop.permute.xlu0 %1425
    %1427 = vrot.lane.b32.xlu0 %v1404, 96
    %v1428 = vpop.permute.xlu0 %1427
    %v1437 = vadd.f32 %v1309, %v1414
    %v1438 = vadd.f32 %v1310, %v1416
    %v1439 = vadd.f32 %v1311, %v1418
    %v1440 = vadd.f32 %v1312, %v1420
    %v1441 = vadd.f32 %v1313, %v1422
    %v1442 = vadd.f32 %v1314, %v1424
    %v1443 = vadd.f32 %v1315, %v1426
    %v1444 = vadd.f32 %v1316, %v1428
    %1445 = vrot.lane.b32.xlu0 %v1251, 64
    %v1446 = vpop.permute.xlu0 %1445
    %1447 = vrot.lane.b32.xlu0 %v1254, 64
    %v1448 = vpop.permute.xlu0 %1447
    %1449 = vrot.lane.b32.xlu0 %v1259, 64
    %v1450 = vpop.permute.xlu0 %1449
    %1451 = vrot.lane.b32.xlu0 %v1262, 64
    %v1452 = vpop.permute.xlu0 %1451
    %1453 = vrot.lane.b32.xlu0 %v1267, 64
    %v1454 = vpop.permute.xlu0 %1453
    %1455 = vrot.lane.b32.xlu0 %v1270, 64
    %v1456 = vpop.permute.xlu0 %1455
    %1457 = vrot.lane.b32.xlu0 %v1275, 64
    %v1458 = vpop.permute.xlu0 %1457
    %1459 = vrot.lane.b32.xlu0 %v1278, 64
    %v1460 = vpop.permute.xlu0 %1459
    %v1469 = vadd.f32 %v1437, %v1446
    %v1470 = vadd.f32 %v1438, %v1448
    %v1471 = vadd.f32 %v1439, %v1450
    %v1472 = vadd.f32 %v1440, %v1452
    %v1473 = vadd.f32 %v1441, %v1454
    %v1474 = vadd.f32 %v1442, %v1456
    %v1475 = vadd.f32 %v1443, %v1458
    %v1476 = vadd.f32 %v1444, %v1460
    %s1477 = scalar_lea.vmem %s5, 2
    %v1478 = vld [vmem:[%s1477] sm:$0x1]
    %v1480 = vlaneseq
    %v1481 = vshrl.u32 %v1480, 7
    %v1482 = vsub.s32 0, %v1481
    %v1483 = vrot.slane %v1478, %v1482
    %v1485 = vadd.f32 %v1469, %v1483
    %v1486 = vadd.f32 %v1470, %v1483
    %v1487 = vadd.f32 %v1471, %v1483
    %v1488 = vadd.f32 %v1472, %v1483
    %v1489 = vadd.f32 %v1473, %v1483
    %v1490 = vadd.f32 %v1474, %v1483
    %v1491 = vadd.f32 %v1475, %v1483
    %v1492 = vadd.f32 %v1476, %v1483
    %v1493 = vmax.f32 %v1485, 0.0
    %v1494 = vmax.f32 %v1486, 0.0
    %v1495 = vmax.f32 %v1487, 0.0
    %v1496 = vmax.f32 %v1488, 0.0
    %v1497 = vmax.f32 %v1489, 0.0
    %v1498 = vmax.f32 %v1490, 0.0
    %v1499 = vmax.f32 %v1491, 0.0
    %v1500 = vmax.f32 %v1492, 0.0
    %v1501 = vpack.c.bf16 %v1494, %v1493
    %v1502 = vpack.c.bf16 %v1496, %v1495
    %v1503 = vpack.c.bf16 %v1498, %v1497
    %v1504 = vpack.c.bf16 %v1500, %v1499
    %s1505 = scalar_lea.vmem %s6, 32
    %v1506 = vld [vmem:[%s1505] sm:$0xf]
    %v1507 = vld [vmem:[%s1505 + $0x4] sm:$0xf]
    %v1508 = vld [vmem:[%s1505 + $0x8] sm:$0xf]
    %v1509 = vld [vmem:[%s1505 + $0xc] sm:$0xf]
    %s1510 = scalar_lea.vmem %s7, 2
    %v1511 = vld [vmem:[%s1510] sm:$0x1]
    %v1513 = vlaneseq
    %v1514 = vshrl.u32 %v1513, 7
    %v1515 = vsub.s32 0, %v1514
    %v1516 = vrot.slane %v1511, %v1515
    %v1522 = vunpack.c.l.b16 %v1506
    %v1523 = vunpack.c.l.b16 %v1507
    %v1524 = vunpack.c.l.b16 %v1508
    %v1525 = vunpack.c.l.b16 %v1509
    %v1526 = vpack.c.b16 %v1523, %v1522
    %v1527 = vpack.c.b16 %v1525, %v1524
    %v1531 = vsel %vm270, %v1501, 0
    %v1534 = vsel %vm270, %v1502, 0
    %v1537 = vsel %vm270, %v1503, 0
    %v1540 = vsel %vm270, %v1504, 0
    %1542 = vmatprep.subr.bf16.mxu0 0
    %1543 = vmatpush1.bf16.msra.mxu0 %v1526
    %1544 = vmatprep.subr.bf16.mxu0 0
    %1545 = vmatpush1.bf16.msra.mxu0 %v1527
    %1546 = vmatprep.subr.bf16.mxu0 0
    %1547 = vmatpush1.bf16.msra.mxu0 0
    %1548 = vmatprep.subr.bf16.mxu0 0
    %1549 = vmatpush1.bf16.msra.mxu0 0
    %1550 = vmatprep.subr.bf16.mxu0 0
    %1551 = vmatpush1.bf16.msra.mxu0 0
    %1552 = vmatprep.subr.bf16.mxu0 0
    %1553 = vmatpush1.bf16.msra.mxu0 0
    %1554 = vmatprep.subr.bf16.mxu0 0
    %1555 = vmatpush1.bf16.msra.mxu0 0
    %1556 = vmatprep.subr.bf16.mxu0 0
    %1557 = vmatpush1.bf16.msra.mxu0 0
    %1558 = vmatprep.subr.bf16.mxu0 0
    %1559 = vmatpush1.bf16.msra.mxu0 0
    %1560 = vmatprep.subr.bf16.mxu0 0
    %1561 = vmatpush1.bf16.msra.mxu0 0
    %1562 = vmatprep.subr.bf16.mxu0 0
    %1563 = vmatpush1.bf16.msra.mxu0 0
    %1564 = vmatprep.subr.bf16.mxu0 0
    %1565 = vmatpush1.bf16.msra.mxu0 0
    %1566 = vmatprep.subr.bf16.mxu0 0
    %1567 = vmatpush1.bf16.msra.mxu0 0
    %1568 = vmatprep.subr.bf16.mxu0 0
    %1569 = vmatpush1.bf16.msra.mxu0 0
    %1570 = vmatprep.subr.bf16.mxu0 0
    %1571 = vmatpush1.bf16.msra.mxu0 0
    %1572 = vmatprep.subr.bf16.mxu0 0
    %1573 = vmatpush1.bf16.msra.mxu0 0
    %1574 = vmatprep.mubr.bf16.mxu0 0
    %1575 = vmatmul.mubr.bf16.gmra.mrb[0].mxu0 %v1531
    %v1576 = vpop.f32.mrb[0].mxu0
    %v1577 = vadd.f32 %v1516, %v1576
    %v1578 = vpop.f32.mrb[0].mxu0
    %v1579 = vpop.f32.mrb[0].mxu0
    %v1580 = vadd.f32 %v1516, %v1579
    %v1581 = vpop.f32.mrb[0].mxu0
    %1582 = vmatprep.mubr.bf16.mxu0 0
    %1583 = vmatmul.mubr.bf16.gmra.mrb[0].mxu0 %v1534
    %v1584 = vpop.f32.mrb[0].mxu0
    %v1585 = vadd.f32 %v1516, %v1584
    %v1586 = vpop.f32.mrb[0].mxu0
    %v1587 = vpop.f32.mrb[0].mxu0
    %v1588 = vadd.f32 %v1516, %v1587
    %v1589 = vpop.f32.mrb[0].mxu0
    %1590 = vmatprep.mubr.bf16.mxu0 0
    %1591 = vmatmul.mubr.bf16.gmra.mrb[0].mxu0 %v1537
    %v1592 = vpop.f32.mrb[0].mxu0
    %v1593 = vadd.f32 %v1516, %v1592
    %v1594 = vpop.f32.mrb[0].mxu0
    %v1595 = vpop.f32.mrb[0].mxu0
    %v1596 = vadd.f32 %v1516, %v1595
    %v1597 = vpop.f32.mrb[0].mxu0
    %1598 = vmatprep.mubr.bf16.mxu0 0
    %1599 = vmatmul.mubr.bf16.gmra.mrb[0].mxu0 %v1540
    %v1600 = vpop.f32.mrb[0].mxu0
    %v1601 = vadd.f32 %v1516, %v1600
    %v1602 = vpop.f32.mrb[0].mxu0
    %v1603 = vpop.f32.mrb[0].mxu0
    %v1604 = vadd.f32 %v1516, %v1603
    %v1605 = vpop.f32.mrb[0].mxu0
    %1606 = vdwg.mxu0
    %v1607 = vadd.f32 %v1175, %v1577
    %v1608 = vadd.f32 %v1176, %v1580
    %v1609 = vadd.f32 %v1177, %v1585
    %v1610 = vadd.f32 %v1178, %v1588
    %v1611 = vadd.f32 %v1179, %v1593
    %v1612 = vadd.f32 %v1180, %v1596
    %v1613 = vadd.f32 %v1181, %v1601
    %v1614 = vadd.f32 %v1182, %v1604
    %v1615 = vmul.f32 %v1607, %v95
    %v1616 = vmul.f32 %v1608, %v100
    %v1617 = vmul.f32 %v1609, %v105
    %v1618 = vmul.f32 %v1610, %v110
    %v1619 = vmul.f32 %v1611, %v115
    %v1620 = vmul.f32 %v1612, %v120
    %v1621 = vmul.f32 %v1613, %v125
    %v1622 = vmul.f32 %v1614, %v130
    %v1623 = vpack.c.bf16 %v1616, %v1615
    %v1624 = vpack.c.bf16 %v1618, %v1617
    %v1625 = vpack.c.bf16 %v1620, %v1619
    %v1626 = vpack.c.bf16 %v1622, %v1621
    %v1628 = vlaneseq
    %v1629 = vshrl.u32 %v1628, 7
    %v1630 = vsub.s32 0, %v1629
    %v1631 = vrot.slane %v83, %v1630
    %v1637 = vunpack.c.l.b16 %v79
    %v1638 = vunpack.c.l.b16 %v80
    %v1639 = vunpack.c.l.b16 %v81
    %v1640 = vunpack.c.l.b16 %v82
    %v1641 = vpack.c.b16 %v1638, %v1637
    %v1642 = vpack.c.b16 %v1640, %v1639
    %v1646 = vsel %vm270, %v1623, 0
    %v1649 = vsel %vm270, %v1624, 0
    %v1652 = vsel %vm270, %v1625, 0
    %v1655 = vsel %vm270, %v1626, 0
    %1657 = vmatprep.subr.bf16.mxu0 0
    %1658 = vmatpush1.bf16.msra.mxu0 %v1641
    %1659 = vmatprep.subr.bf16.mxu0 0
    %1660 = vmatpush1.bf16.msra.mxu0 %v1642
    %1661 = vmatprep.subr.bf16.mxu0 0
    %1662 = vmatpush1.bf16.msra.mxu0 0
    %1663 = vmatprep.subr.bf16.mxu0 0
    %1664 = vmatpush1.bf16.msra.mxu0 0
    %1665 = vmatprep.subr.bf16.mxu0 0
    %1666 = vmatpush1.bf16.msra.mxu0 0
    %1667 = vmatprep.subr.bf16.mxu0 0
    %1668 = vmatpush1.bf16.msra.mxu0 0
    %1669 = vmatprep.subr.bf16.mxu0 0
    %1670 = vmatpush1.bf16.msra.mxu0 0
    %1671 = vmatprep.subr.bf16.mxu0 0
    %1672 = vmatpush1.bf16.msra.mxu0 0
    %1673 = vmatprep.subr.bf16.mxu0 0
    %1674 = vmatpush1.bf16.msra.mxu0 0
    %1675 = vmatprep.subr.bf16.mxu0 0
    %1676 = vmatpush1.bf16.msra.mxu0 0
    %1677 = vmatprep.subr.bf16.mxu0 0
    %1678 = vmatpush1.bf16.msra.mxu0 0
    %1679 = vmatprep.subr.bf16.mxu0 0
    %1680 = vmatpush1.bf16.msra.mxu0 0
    %1681 = vmatprep.subr.bf16.mxu0 0
    %1682 = vmatpush1.bf16.msra.mxu0 0
    %1683 = vmatprep.subr.bf16.mxu0 0
    %1684 = vmatpush1.bf16.msra.mxu0 0
    %1685 = vmatprep.subr.bf16.mxu0 0
    %1686 = vmatpush1.bf16.msra.mxu0 0
    %1687 = vmatprep.subr.bf16.mxu0 0
    %1688 = vmatpush1.bf16.msra.mxu0 0
    %1689 = vmatprep.mubr.bf16.mxu0 0
    %1690 = vmatmul.mubr.bf16.gmra.mrb[0].mxu0 %v1646
    %v1691 = vpop.f32.mrb[0].mxu0
    %v1692 = vadd.f32 %v1631, %v1691
    %v1693 = vpop.f32.mrb[0].mxu0
    %v1694 = vpop.f32.mrb[0].mxu0
    %v1695 = vadd.f32 %v1631, %v1694
    %v1696 = vpop.f32.mrb[0].mxu0
    %1697 = vmatprep.mubr.bf16.mxu0 0
    %1698 = vmatmul.mubr.bf16.gmra.mrb[0].mxu0 %v1649
    %v1699 = vpop.f32.mrb[0].mxu0
    %v1700 = vadd.f32 %v1631, %v1699
    %v1701 = vpop.f32.mrb[0].mxu0
    %v1702 = vpop.f32.mrb[0].mxu0
    %v1703 = vadd.f32 %v1631, %v1702
    %v1704 = vpop.f32.mrb[0].mxu0
    %1705 = vmatprep.mubr.bf16.mxu0 0
    %1706 = vmatmul.mubr.bf16.gmra.mrb[0].mxu0 %v1652
    %v1707 = vpop.f32.mrb[0].mxu0
    %v1708 = vadd.f32 %v1631, %v1707
    %v1709 = vpop.f32.mrb[0].mxu0
    %v1710 = vpop.f32.mrb[0].mxu0
    %v1711 = vadd.f32 %v1631, %v1710
    %v1712 = vpop.f32.mrb[0].mxu0
    %1713 = vmatprep.mubr.bf16.mxu0 0
    %1714 = vmatmul.mubr.bf16.gmra.mrb[0].mxu0 %v1655
    %v1715 = vpop.f32.mrb[0].mxu0
    %v1716 = vadd.f32 %v1631, %v1715
    %v1717 = vpop.f32.mrb[0].mxu0
    %v1718 = vpop.f32.mrb[0].mxu0
    %v1719 = vadd.f32 %v1631, %v1718
    %v1720 = vpop.f32.mrb[0].mxu0
    %1721 = vdwg.mxu0
    %1722 = vst [vmem:[#allocation2] sm:$0xff] %v1692
    %1723 = vst [vmem:[#allocation2 + $0x8] sm:$0xff] %v1695
    %1724 = vst [vmem:[#allocation2 + $0x10] sm:$0xff] %v1700
    %1725 = vst [vmem:[#allocation2 + $0x18] sm:$0xff] %v1703
    %1726 = vst [vmem:[#allocation2 + $0x20] sm:$0xff] %v1708
    %1727 = vst [vmem:[#allocation2 + $0x28] sm:$0xff] %v1711
    %1728 = vst [vmem:[#allocation2 + $0x30] sm:$0xff] %v1716
    %1729 = vst [vmem:[#allocation2 + $0x38] sm:$0xff] %v1719
    %s1730 = scalar_lea.vmem %s1, 64
    %v1731 = vld [vmem:[%s1730] sm:$0xff]
    %v1732 = vld [vmem:[%s1730 + $0x8] sm:$0xff]
    %v1733 = vld [vmem:[%s1730 + $0x10] sm:$0xff]
    %v1734 = vld [vmem:[%s1730 + $0x18] sm:$0xff]
    %v1735 = vld [vmem:[%s1730 + $0x20] sm:$0xff]
    %v1736 = vld [vmem:[%s1730 + $0x28] sm:$0xff]
    %v1737 = vld [vmem:[%s1730 + $0x30] sm:$0xff]
    %v1738 = vld [vmem:[%s1730 + $0x38] sm:$0xff]
    %1740 = vset.pattern.permute.xlu0 0
    %1741 = vperm.xlu0 %1740, %v1731
    %v1742 = vpop.permute.xlu0 %1741
    %1745 = vset.pattern.permute.xlu0 0
    %1746 = vperm.xlu0 %1745, %v1732
    %v1747 = vpop.permute.xlu0 %1746
    %1750 = vset.pattern.permute.xlu0 0
    %1751 = vperm.xlu0 %1750, %v1733
    %v1752 = vpop.permute.xlu0 %1751
    %1755 = vset.pattern.permute.xlu0 0
    %1756 = vperm.xlu0 %1755, %v1734
    %v1757 = vpop.permute.xlu0 %1756
    %1760 = vset.pattern.permute.xlu0 0
    %1761 = vperm.xlu0 %1760, %v1735
    %v1762 = vpop.permute.xlu0 %1761
    %1765 = vset.pattern.permute.xlu0 0
    %1766 = vperm.xlu0 %1765, %v1736
    %v1767 = vpop.permute.xlu0 %1766
    %1770 = vset.pattern.permute.xlu0 0
    %1771 = vperm.xlu0 %1770, %v1737
    %v1772 = vpop.permute.xlu0 %1771
    %1775 = vset.pattern.permute.xlu0 0
    %1776 = vperm.xlu0 %1775, %v1738
    %v1777 = vpop.permute.xlu0 %1776
    %s1779 = scalar_lea.vmem %s0, 32
    %v1780 = vld [vmem:[%s1779] sm:$0xf]
    %v1781 = vld [vmem:[%s1779 + $0x4] sm:$0xf]
    %v1782 = vld [vmem:[%s1779 + $0x8] sm:$0xf]
    %v1783 = vld [vmem:[%s1779 + $0xc] sm:$0xf]
    %v1784 = vld [vmem:[%s1779 + $0x10] sm:$0xf]
    %v1785 = vld [vmem:[%s1779 + $0x14] sm:$0xf]
    %v1786 = vld [vmem:[%s1779 + $0x18] sm:$0xf]
    %v1787 = vld [vmem:[%s1779 + $0x1c] sm:$0xf]
    %v1796 = vunpack.c.l.b16 %v1780
    %v1797 = vunpack.c.l.b16 %v1781
    %v1798 = vunpack.c.l.b16 %v1782
    %v1799 = vunpack.c.l.b16 %v1783
    %v1800 = vunpack.c.l.b16 %v1784
    %v1801 = vunpack.c.l.b16 %v1785
    %v1802 = vunpack.c.l.b16 %v1786
    %v1803 = vunpack.c.l.b16 %v1787
    %v1804 = vpack.c.b16 %v1797, %v1796
    %v1805 = vpack.c.b16 %v1799, %v1798
    %v1806 = vpack.c.b16 %v1801, %v1800
    %v1807 = vpack.c.b16 %v1803, %v1802
    %v1809 = vsel %vm172, %v1804, 0
    %v1812 = vsel %vm172, %v1805, 0
    %v1815 = vsel %vm172, %v1806, 0
    %v1818 = vsel %vm172, %v1807, 0
    %1820 = vmatprep.subr.bf16.mxu0 0
    %1821 = vmatpush1.bf16.msra.mxu0 %v170
    %1822 = vmatprep.subr.bf16.mxu0 0
    %1823 = vmatpush1.bf16.msra.mxu0 0
    %1824 = vmatprep.subr.bf16.mxu0 0
    %1825 = vmatpush1.bf16.msra.mxu0 0
    %1826 = vmatprep.subr.bf16.mxu0 0
    %1827 = vmatpush1.bf16.msra.mxu0 0
    %1828 = vmatprep.subr.bf16.mxu0 0
    %1829 = vmatpush1.bf16.msra.mxu0 0
    %1830 = vmatprep.subr.bf16.mxu0 0
    %1831 = vmatpush1.bf16.msra.mxu0 0
    %1832 = vmatprep.subr.bf16.mxu0 0
    %1833 = vmatpush1.bf16.msra.mxu0 0
    %1834 = vmatprep.subr.bf16.mxu0 0
    %1835 = vmatpush1.bf16.msra.mxu0 0
    %1836 = vmatprep.subr.bf16.mxu0 0
    %1837 = vmatpush1.bf16.msra.mxu0 0
    %1838 = vmatprep.subr.bf16.mxu0 0
    %1839 = vmatpush1.bf16.msra.mxu0 0
    %1840 = vmatprep.subr.bf16.mxu0 0
    %1841 = vmatpush1.bf16.msra.mxu0 0
    %1842 = vmatprep.subr.bf16.mxu0 0
    %1843 = vmatpush1.bf16.msra.mxu0 0
    %1844 = vmatprep.subr.bf16.mxu0 0
    %1845 = vmatpush1.bf16.msra.mxu0 0
    %1846 = vmatprep.subr.bf16.mxu0 0
    %1847 = vmatpush1.bf16.msra.mxu0 0
    %1848 = vmatprep.subr.bf16.mxu0 0
    %1849 = vmatpush1.bf16.msra.mxu0 0
    %1850 = vmatprep.subr.bf16.mxu0 0
    %1851 = vmatpush1.bf16.msra.mxu0 0
    %1852 = vmatprep.mubr.bf16.mxu0 0
    %1853 = vmatmul.mubr.bf16.gmra.mrb[0].mxu0 %v1809
    %v1854 = vpop.f32.mrb[0].mxu0
    %v1855 = vadd.f32 %v144, %v1854
    %v1856 = vpop.f32.mrb[0].mxu0
    %v1857 = vpop.f32.mrb[0].mxu0
    %v1858 = vadd.f32 %v144, %v1857
    %v1859 = vpop.f32.mrb[0].mxu0
    %1860 = vmatprep.mubr.bf16.mxu0 0
    %1861 = vmatmul.mubr.bf16.gmra.mrb[0].mxu0 %v1812
    %v1862 = vpop.f32.mrb[0].mxu0
    %v1863 = vadd.f32 %v144, %v1862
    %v1864 = vpop.f32.mrb[0].mxu0
    %v1865 = vpop.f32.mrb[0].mxu0
    %v1866 = vadd.f32 %v144, %v1865
    %v1867 = vpop.f32.mrb[0].mxu0
    %1868 = vmatprep.mubr.bf16.mxu0 0
    %1869 = vmatmul.mubr.bf16.gmra.mrb[0].mxu0 %v1815
    %v1870 = vpop.f32.mrb[0].mxu0
    %v1871 = vadd.f32 %v144, %v1870
    %v1872 = vpop.f32.mrb[0].mxu0
    %v1873 = vpop.f32.mrb[0].mxu0
    %v1874 = vadd.f32 %v144, %v1873
    %v1875 = vpop.f32.mrb[0].mxu0
    %1876 = vmatprep.mubr.bf16.mxu0 0
    %1877 = vmatmul.mubr.bf16.gmra.mrb[0].mxu0 %v1818
    %v1878 = vpop.f32.mrb[0].mxu0
    %v1879 = vadd.f32 %v144, %v1878
    %v1880 = vpop.f32.mrb[0].mxu0
    %v1881 = vpop.f32.mrb[0].mxu0
    %v1882 = vadd.f32 %v144, %v1881
    %v1883 = vpop.f32.mrb[0].mxu0
    %1884 = vdwg.mxu0
    %v1885 = vpack.c.bf16 %v1858, %v1855
    %v1886 = vpack.c.bf16 %v1866, %v1863
    %v1887 = vpack.c.bf16 %v1874, %v1871
    %v1888 = vpack.c.bf16 %v1882, %v1879
    %v1889 = vld [vmem:[%s4] sm:$0xf]
    %v1890 = vld [vmem:[%s4 + $0x4] sm:$0xf]
    %v1891 = vld [vmem:[%s4 + $0x8] sm:$0xf]
    %v1892 = vld [vmem:[%s4 + $0xc] sm:$0xf]
    %v1897 = vunpack.c.l.b16 %v1889
    %v1898 = vunpack.c.l.b16 %v1890
    %v1899 = vunpack.c.l.b16 %v1891
    %v1900 = vunpack.c.l.b16 %v1892
    %v1901 = vpack.c.b16 %v1898, %v1897
    %v1902 = vpack.c.b16 %v1900, %v1899
    %v1906 = vsel %vm270, %v1885, 0
    %v1909 = vsel %vm270, %v1886, 0
    %v1912 = vsel %vm270, %v1887, 0
    %v1915 = vsel %vm270, %v1888, 0
    %1917 = vmatprep.subr.bf16.mxu0 0
    %1918 = vmatpush1.bf16.msra.mxu0 %v1901
    %1919 = vmatprep.subr.bf16.mxu0 0
    %1920 = vmatpush1.bf16.msra.mxu0 %v1902
    %1921 = vmatprep.subr.bf16.mxu0 0
    %1922 = vmatpush1.bf16.msra.mxu0 0
    %1923 = vmatprep.subr.bf16.mxu0 0
    %1924 = vmatpush1.bf16.msra.mxu0 0
    %1925 = vmatprep.subr.bf16.mxu0 0
    %1926 = vmatpush1.bf16.msra.mxu0 0
    %1927 = vmatprep.subr.bf16.mxu0 0
    %1928 = vmatpush1.bf16.msra.mxu0 0
    %1929 = vmatprep.subr.bf16.mxu0 0
    %1930 = vmatpush1.bf16.msra.mxu0 0
    %1931 = vmatprep.subr.bf16.mxu0 0
    %1932 = vmatpush1.bf16.msra.mxu0 0
    %1933 = vmatprep.subr.bf16.mxu0 0
    %1934 = vmatpush1.bf16.msra.mxu0 0
    %1935 = vmatprep.subr.bf16.mxu0 0
    %1936 = vmatpush1.bf16.msra.mxu0 0
    %1937 = vmatprep.subr.bf16.mxu0 0
    %1938 = vmatpush1.bf16.msra.mxu0 0
    %1939 = vmatprep.subr.bf16.mxu0 0
    %1940 = vmatpush1.bf16.msra.mxu0 0
    %1941 = vmatprep.subr.bf16.mxu0 0
    %1942 = vmatpush1.bf16.msra.mxu0 0
    %1943 = vmatprep.subr.bf16.mxu0 0
    %1944 = vmatpush1.bf16.msra.mxu0 0
    %1945 = vmatprep.subr.bf16.mxu0 0
    %1946 = vmatpush1.bf16.msra.mxu0 0
    %1947 = vmatprep.subr.bf16.mxu0 0
    %1948 = vmatpush1.bf16.msra.mxu0 0
    %1949 = vmatprep.mubr.bf16.mxu0 0
    %1950 = vmatmul.mubr.bf16.gmra.mrb[0].mxu0 %v1906
    %v1951 = vpop.f32.mrb[0].mxu0
    %v1952 = vadd.f32 0.0, %v1951
    %v1953 = vpop.f32.mrb[0].mxu0
    %v1954 = vpop.f32.mrb[0].mxu0
    %v1955 = vadd.f32 0.0, %v1954
    %v1956 = vpop.f32.mrb[0].mxu0
    %1957 = vmatprep.mubr.bf16.mxu0 0
    %1958 = vmatmul.mubr.bf16.gmra.mrb[0].mxu0 %v1909
    %v1959 = vpop.f32.mrb[0].mxu0
    %v1960 = vadd.f32 0.0, %v1959
    %v1961 = vpop.f32.mrb[0].mxu0
    %v1962 = vpop.f32.mrb[0].mxu0
    %v1963 = vadd.f32 0.0, %v1962
    %v1964 = vpop.f32.mrb[0].mxu0
    %1965 = vmatprep.mubr.bf16.mxu0 0
    %1966 = vmatmul.mubr.bf16.gmra.mrb[0].mxu0 %v1912
    %v1967 = vpop.f32.mrb[0].mxu0
    %v1968 = vadd.f32 0.0, %v1967
    %v1969 = vpop.f32.mrb[0].mxu0
    %v1970 = vpop.f32.mrb[0].mxu0
    %v1971 = vadd.f32 0.0, %v1970
    %v1972 = vpop.f32.mrb[0].mxu0
    %1973 = vmatprep.mubr.bf16.mxu0 0
    %1974 = vmatmul.mubr.bf16.gmra.mrb[0].mxu0 %v1915
    %v1975 = vpop.f32.mrb[0].mxu0
    %v1976 = vadd.f32 0.0, %v1975
    %v1977 = vpop.f32.mrb[0].mxu0
    %v1978 = vpop.f32.mrb[0].mxu0
    %v1979 = vadd.f32 0.0, %v1978
    %v1980 = vpop.f32.mrb[0].mxu0
    %1981 = vdwg.mxu0
    %v1982 = vrot.slane %v1952, 6
    %v1983 = vrot.slane %v1955, 6
    %v1984 = vrot.slane %v1960, 6
    %v1985 = vrot.slane %v1963, 6
    %v1986 = vrot.slane %v1968, 6
    %v1987 = vrot.slane %v1971, 6
    %v1988 = vrot.slane %v1976, 6
    %v1989 = vrot.slane %v1979, 6
    %v1990 = vsel %vm348, %v1988, %v1989
    %v1991 = vsel %vm348, %v1987, %v1988
    %v1992 = vsel %vm348, %v1986, %v1987
    %v1993 = vsel %vm348, %v1985, %v1986
    %v1994 = vsel %vm348, %v1984, %v1985
    %v1995 = vsel %vm348, %v1983, %v1984
    %v1996 = vsel %vm348, %v1982, %v1983
    %v1997 = vsel %vm348, %v1989, %v1982
    %v1998 = vlaneseq
    %v1999 = vshrl.u32 %v1998, 7
    %v2000 = vsub.s32 0, %v1999
    %v2001 = vrot.slane %v1952, %v2000
    %v2002 = vsel %vm380, %v2001, %v1997
    %v2003 = vsel %vm381, %v2001, %v1996
    %v2004 = vsel %vm382, %v2001, %v1995
    %v2005 = vsel %vm383, %v2001, %v1994
    %v2006 = vsel %vm384, %v2001, %v1993
    %v2007 = vsel %vm385, %v2001, %v1992
    %v2008 = vsel %vm386, %v2001, %v1991
    %v2009 = vsel %vm387, %v2001, %v1990
    %2018 = vrot.lane.b32.xlu0 %v1952, 96
    %v2019 = vpop.permute.xlu0 %2018
    %2020 = vrot.lane.b32.xlu0 %v1955, 96
    %v2021 = vpop.permute.xlu0 %2020
    %2022 = vrot.lane.b32.xlu0 %v1960, 96
    %v2023 = vpop.permute.xlu0 %2022
    %2024 = vrot.lane.b32.xlu0 %v1963, 96
    %v2025 = vpop.permute.xlu0 %2024
    %2026 = vrot.lane.b32.xlu0 %v1968, 96
    %v2027 = vpop.permute.xlu0 %2026
    %2028 = vrot.lane.b32.xlu0 %v1971, 96
    %v2029 = vpop.permute.xlu0 %2028
    %2030 = vrot.lane.b32.xlu0 %v1976, 96
    %v2031 = vpop.permute.xlu0 %2030
    %2032 = vrot.lane.b32.xlu0 %v1979, 96
    %v2033 = vpop.permute.xlu0 %2032
    %v2042 = vrot.slane %v2019, 7
    %v2043 = vrot.slane %v2021, 7
    %v2044 = vrot.slane %v2023, 7
    %v2045 = vrot.slane %v2025, 7
    %v2046 = vrot.slane %v2027, 7
    %v2047 = vrot.slane %v2029, 7
    %v2048 = vrot.slane %v2031, 7
    %v2049 = vrot.slane %v2033, 7
    %v2050 = vsel %vm400, %v2048, %v2049
    %v2051 = vsel %vm400, %v2047, %v2048
    %v2052 = vsel %vm400, %v2046, %v2047
    %v2053 = vsel %vm400, %v2045, %v2046
    %v2054 = vsel %vm400, %v2044, %v2045
    %v2055 = vsel %vm400, %v2043, %v2044
    %v2056 = vsel %vm400, %v2042, %v2043
    %v2057 = vsel %vm400, %v2049, %v2042
    %2066 = vrot.lane.b32.xlu0 %v2057, 32
    %v2067 = vpop.permute.xlu0 %2066
    %2068 = vrot.lane.b32.xlu0 %v2056, 32
    %v2069 = vpop.permute.xlu0 %2068
    %2070 = vrot.lane.b32.xlu0 %v2055, 32
    %v2071 = vpop.permute.xlu0 %2070
    %2072 = vrot.lane.b32.xlu0 %v2054, 32
    %v2073 = vpop.permute.xlu0 %2072
    %2074 = vrot.lane.b32.xlu0 %v2053, 32
    %v2075 = vpop.permute.xlu0 %2074
    %2076 = vrot.lane.b32.xlu0 %v2052, 32
    %v2077 = vpop.permute.xlu0 %2076
    %2078 = vrot.lane.b32.xlu0 %v2051, 32
    %v2079 = vpop.permute.xlu0 %2078
    %2080 = vrot.lane.b32.xlu0 %v2050, 32
    %v2081 = vpop.permute.xlu0 %2080
    %v2090 = vsel %vm464, %v2001, %v2067
    %v2091 = vsel %vm465, %v2001, %v2069
    %v2092 = vsel %vm466, %v2001, %v2071
    %v2093 = vsel %vm467, %v2001, %v2073
    %v2094 = vsel %vm468, %v2001, %v2075
    %v2095 = vsel %vm469, %v2001, %v2077
    %v2096 = vsel %vm470, %v2001, %v2079
    %v2097 = vsel %vm471, %v2001, %v2081
    %2106 = vrot.lane.b32.xlu0 %v2090, 96
    %v2107 = vpop.permute.xlu0 %2106
    %2108 = vrot.lane.b32.xlu0 %v2091, 96
    %v2109 = vpop.permute.xlu0 %2108
    %2110 = vrot.lane.b32.xlu0 %v2092, 96
    %v2111 = vpop.permute.xlu0 %2110
    %2112 = vrot.lane.b32.xlu0 %v2093, 96
    %v2113 = vpop.permute.xlu0 %2112
    %2114 = vrot.lane.b32.xlu0 %v2094, 96
    %v2115 = vpop.permute.xlu0 %2114
    %2116 = vrot.lane.b32.xlu0 %v2095, 96
    %v2117 = vpop.permute.xlu0 %2116
    %2118 = vrot.lane.b32.xlu0 %v2096, 96
    %v2119 = vpop.permute.xlu0 %2118
    %2120 = vrot.lane.b32.xlu0 %v2097, 96
    %v2121 = vpop.permute.xlu0 %2120
    %v2130 = vadd.f32 %v2002, %v2107
    %v2131 = vadd.f32 %v2003, %v2109
    %v2132 = vadd.f32 %v2004, %v2111
    %v2133 = vadd.f32 %v2005, %v2113
    %v2134 = vadd.f32 %v2006, %v2115
    %v2135 = vadd.f32 %v2007, %v2117
    %v2136 = vadd.f32 %v2008, %v2119
    %v2137 = vadd.f32 %v2009, %v2121
    %2138 = vrot.lane.b32.xlu0 %v1952, 64
    %v2139 = vpop.permute.xlu0 %2138
    %2140 = vrot.lane.b32.xlu0 %v1955, 64
    %v2141 = vpop.permute.xlu0 %2140
    %2142 = vrot.lane.b32.xlu0 %v1960, 64
    %v2143 = vpop.permute.xlu0 %2142
    %2144 = vrot.lane.b32.xlu0 %v1963, 64
    %v2145 = vpop.permute.xlu0 %2144
    %2146 = vrot.lane.b32.xlu0 %v1968, 64
    %v2147 = vpop.permute.xlu0 %2146
    %2148 = vrot.lane.b32.xlu0 %v1971, 64
    %v2149 = vpop.permute.xlu0 %2148
    %2150 = vrot.lane.b32.xlu0 %v1976, 64
    %v2151 = vpop.permute.xlu0 %2150
    %2152 = vrot.lane.b32.xlu0 %v1979, 64
    %v2153 = vpop.permute.xlu0 %2152
    %v2162 = vadd.f32 %v2130, %v2139
    %v2163 = vadd.f32 %v2131, %v2141
    %v2164 = vadd.f32 %v2132, %v2143
    %v2165 = vadd.f32 %v2133, %v2145
    %v2166 = vadd.f32 %v2134, %v2147
    %v2167 = vadd.f32 %v2135, %v2149
    %v2168 = vadd.f32 %v2136, %v2151
    %v2169 = vadd.f32 %v2137, %v2153
    %v2170 = vld [vmem:[%s5] sm:$0x1]
    %v2172 = vlaneseq
    %v2173 = vshrl.u32 %v2172, 7
    %v2174 = vsub.s32 0, %v2173
    %v2175 = vrot.slane %v2170, %v2174
    %v2177 = vadd.f32 %v2162, %v2175
    %v2178 = vadd.f32 %v2163, %v2175
    %v2179 = vadd.f32 %v2164, %v2175
    %v2180 = vadd.f32 %v2165, %v2175
    %v2181 = vadd.f32 %v2166, %v2175
    %v2182 = vadd.f32 %v2167, %v2175
    %v2183 = vadd.f32 %v2168, %v2175
    %v2184 = vadd.f32 %v2169, %v2175
    %v2185 = vmax.f32 %v2177, 0.0
    %v2186 = vmax.f32 %v2178, 0.0
    %v2187 = vmax.f32 %v2179, 0.0
    %v2188 = vmax.f32 %v2180, 0.0
    %v2189 = vmax.f32 %v2181, 0.0
    %v2190 = vmax.f32 %v2182, 0.0
    %v2191 = vmax.f32 %v2183, 0.0
    %v2192 = vmax.f32 %v2184, 0.0
    %v2193 = vpack.c.bf16 %v2186, %v2185
    %v2194 = vpack.c.bf16 %v2188, %v2187
    %v2195 = vpack.c.bf16 %v2190, %v2189
    %v2196 = vpack.c.bf16 %v2192, %v2191
    %v2197 = vld [vmem:[%s6] sm:$0xf]
    %v2198 = vld [vmem:[%s6 + $0x4] sm:$0xf]
    %v2199 = vld [vmem:[%s6 + $0x8] sm:$0xf]
    %v2200 = vld [vmem:[%s6 + $0xc] sm:$0xf]
    %v2201 = vld [vmem:[%s7] sm:$0x1]
    %v2203 = vlaneseq
    %v2204 = vshrl.u32 %v2203, 7
    %v2205 = vsub.s32 0, %v2204
    %v2206 = vrot.slane %v2201, %v2205
    %v2212 = vunpack.c.l.b16 %v2197
    %v2213 = vunpack.c.l.b16 %v2198
    %v2214 = vunpack.c.l.b16 %v2199
    %v2215 = vunpack.c.l.b16 %v2200
    %v2216 = vpack.c.b16 %v2213, %v2212
    %v2217 = vpack.c.b16 %v2215, %v2214
    %v2221 = vsel %vm270, %v2193, 0
    %v2224 = vsel %vm270, %v2194, 0
    %v2227 = vsel %vm270, %v2195, 0
    %v2230 = vsel %vm270, %v2196, 0
    %2232 = vmatprep.subr.bf16.mxu0 0
    %2233 = vmatpush1.bf16.msra.mxu0 %v2216
    %2234 = vmatprep.subr.bf16.mxu0 0
    %2235 = vmatpush1.bf16.msra.mxu0 %v2217
    %2236 = vmatprep.subr.bf16.mxu0 0
    %2237 = vmatpush1.bf16.msra.mxu0 0
    %2238 = vmatprep.subr.bf16.mxu0 0
    %2239 = vmatpush1.bf16.msra.mxu0 0
    %2240 = vmatprep.subr.bf16.mxu0 0
    %2241 = vmatpush1.bf16.msra.mxu0 0
    %2242 = vmatprep.subr.bf16.mxu0 0
    %2243 = vmatpush1.bf16.msra.mxu0 0
    %2244 = vmatprep.subr.bf16.mxu0 0
    %2245 = vmatpush1.bf16.msra.mxu0 0
    %2246 = vmatprep.subr.bf16.mxu0 0
    %2247 = vmatpush1.bf16.msra.mxu0 0
    %2248 = vmatprep.subr.bf16.mxu0 0
    %2249 = vmatpush1.bf16.msra.mxu0 0
    %2250 = vmatprep.subr.bf16.mxu0 0
    %2251 = vmatpush1.bf16.msra.mxu0 0
    %2252 = vmatprep.subr.bf16.mxu0 0
    %2253 = vmatpush1.bf16.msra.mxu0 0
    %2254 = vmatprep.subr.bf16.mxu0 0
    %2255 = vmatpush1.bf16.msra.mxu0 0
    %2256 = vmatprep.subr.bf16.mxu0 0
    %2257 = vmatpush1.bf16.msra.mxu0 0
    %2258 = vmatprep.subr.bf16.mxu0 0
    %2259 = vmatpush1.bf16.msra.mxu0 0
    %2260 = vmatprep.subr.bf16.mxu0 0
    %2261 = vmatpush1.bf16.msra.mxu0 0
    %2262 = vmatprep.subr.bf16.mxu0 0
    %2263 = vmatpush1.bf16.msra.mxu0 0
    %2264 = vmatprep.mubr.bf16.mxu0 0
    %2265 = vmatmul.mubr.bf16.gmra.mrb[0].mxu0 %v2221
    %v2266 = vpop.f32.mrb[0].mxu0
    %v2267 = vadd.f32 %v2206, %v2266
    %v2268 = vpop.f32.mrb[0].mxu0
    %v2269 = vpop.f32.mrb[0].mxu0
    %v2270 = vadd.f32 %v2206, %v2269
    %v2271 = vpop.f32.mrb[0].mxu0
    %2272 = vmatprep.mubr.bf16.mxu0 0
    %2273 = vmatmul.mubr.bf16.gmra.mrb[0].mxu0 %v2224
    %v2274 = vpop.f32.mrb[0].mxu0
    %v2275 = vadd.f32 %v2206, %v2274
    %v2276 = vpop.f32.mrb[0].mxu0
    %v2277 = vpop.f32.mrb[0].mxu0
    %v2278 = vadd.f32 %v2206, %v2277
    %v2279 = vpop.f32.mrb[0].mxu0
    %2280 = vmatprep.mubr.bf16.mxu0 0
    %2281 = vmatmul.mubr.bf16.gmra.mrb[0].mxu0 %v2227
    %v2282 = vpop.f32.mrb[0].mxu0
    %v2283 = vadd.f32 %v2206, %v2282
    %v2284 = vpop.f32.mrb[0].mxu0
    %v2285 = vpop.f32.mrb[0].mxu0
    %v2286 = vadd.f32 %v2206, %v2285
    %v2287 = vpop.f32.mrb[0].mxu0
    %2288 = vmatprep.mubr.bf16.mxu0 0
    %2289 = vmatmul.mubr.bf16.gmra.mrb[0].mxu0 %v2230
    %v2290 = vpop.f32.mrb[0].mxu0
    %v2291 = vadd.f32 %v2206, %v2290
    %v2292 = vpop.f32.mrb[0].mxu0
    %v2293 = vpop.f32.mrb[0].mxu0
    %v2294 = vadd.f32 %v2206, %v2293
    %v2295 = vpop.f32.mrb[0].mxu0
    %2296 = vdwg.mxu0
    %v2297 = vadd.f32 %v1855, %v2267
    %v2298 = vadd.f32 %v1858, %v2270
    %v2299 = vadd.f32 %v1863, %v2275
    %v2300 = vadd.f32 %v1866, %v2278
    %v2301 = vadd.f32 %v1871, %v2283
    %v2302 = vadd.f32 %v1874, %v2286
    %v2303 = vadd.f32 %v1879, %v2291
    %v2304 = vadd.f32 %v1882, %v2294
    %v2305 = vmul.f32 %v2297, %v1742
    %v2306 = vmul.f32 %v2298, %v1747
    %v2307 = vmul.f32 %v2299, %v1752
    %v2308 = vmul.f32 %v2300, %v1757
    %v2309 = vmul.f32 %v2301, %v1762
    %v2310 = vmul.f32 %v2302, %v1767
    %v2311 = vmul.f32 %v2303, %v1772
    %v2312 = vmul.f32 %v2304, %v1777
    %v2313 = vpack.c.bf16 %v2306, %v2305
    %v2314 = vpack.c.bf16 %v2308, %v2307
    %v2315 = vpack.c.bf16 %v2310, %v2309
    %v2316 = vpack.c.bf16 %v2312, %v2311
    %v2317 = vld [vmem:[%s731] sm:$0xf]
    %v2318 = vld [vmem:[%s731 + $0x4] sm:$0xf]
    %v2319 = vld [vmem:[%s731 + $0x8] sm:$0xf]
    %v2320 = vld [vmem:[%s731 + $0xc] sm:$0xf]
    %v2325 = vunpack.c.l.b16 %v2317
    %v2326 = vunpack.c.l.b16 %v2318
    %v2327 = vunpack.c.l.b16 %v2319
    %v2328 = vunpack.c.l.b16 %v2320
    %v2329 = vpack.c.b16 %v2326, %v2325
    %v2330 = vpack.c.b16 %v2328, %v2327
    %v2334 = vsel %vm270, %v2313, 0
    %v2337 = vsel %vm270, %v2314, 0
    %v2340 = vsel %vm270, %v2315, 0
    %v2343 = vsel %vm270, %v2316, 0
    %2345 = vmatprep.subr.bf16.mxu0 0
    %2346 = vmatpush1.bf16.msra.mxu0 %v2329
    %2347 = vmatprep.subr.bf16.mxu0 0
    %2348 = vmatpush1.bf16.msra.mxu0 %v2330
    %2349 = vmatprep.subr.bf16.mxu0 0
    %2350 = vmatpush1.bf16.msra.mxu0 0
    %2351 = vmatprep.subr.bf16.mxu0 0
    %2352 = vmatpush1.bf16.msra.mxu0 0
    %2353 = vmatprep.subr.bf16.mxu0 0
    %2354 = vmatpush1.bf16.msra.mxu0 0
    %2355 = vmatprep.subr.bf16.mxu0 0
    %2356 = vmatpush1.bf16.msra.mxu0 0
    %2357 = vmatprep.subr.bf16.mxu0 0
    %2358 = vmatpush1.bf16.msra.mxu0 0
    %2359 = vmatprep.subr.bf16.mxu0 0
    %2360 = vmatpush1.bf16.msra.mxu0 0
    %2361 = vmatprep.subr.bf16.mxu0 0
    %2362 = vmatpush1.bf16.msra.mxu0 0
    %2363 = vmatprep.subr.bf16.mxu0 0
    %2364 = vmatpush1.bf16.msra.mxu0 0
    %2365 = vmatprep.subr.bf16.mxu0 0
    %2366 = vmatpush1.bf16.msra.mxu0 0
    %2367 = vmatprep.subr.bf16.mxu0 0
    %2368 = vmatpush1.bf16.msra.mxu0 0
    %2369 = vmatprep.subr.bf16.mxu0 0
    %2370 = vmatpush1.bf16.msra.mxu0 0
    %2371 = vmatprep.subr.bf16.mxu0 0
    %2372 = vmatpush1.bf16.msra.mxu0 0
    %2373 = vmatprep.subr.bf16.mxu0 0
    %2374 = vmatpush1.bf16.msra.mxu0 0
    %2375 = vmatprep.subr.bf16.mxu0 0
    %2376 = vmatpush1.bf16.msra.mxu0 0
    %2377 = vmatprep.mubr.bf16.mxu0 0
    %2378 = vmatmul.mubr.bf16.gmra.mrb[0].mxu0 %v2334
    %v2379 = vpop.f32.mrb[0].mxu0
    %v2380 = vadd.f32 0.0, %v2379
    %v2381 = vpop.f32.mrb[0].mxu0
    %v2382 = vpop.f32.mrb[0].mxu0
    %v2383 = vadd.f32 0.0, %v2382
    %v2384 = vpop.f32.mrb[0].mxu0
    %2385 = vmatprep.mubr.bf16.mxu0 0
    %2386 = vmatmul.mubr.bf16.gmra.mrb[0].mxu0 %v2337
    %v2387 = vpop.f32.mrb[0].mxu0
    %v2388 = vadd.f32 0.0, %v2387
    %v2389 = vpop.f32.mrb[0].mxu0
    %v2390 = vpop.f32.mrb[0].mxu0
    %v2391 = vadd.f32 0.0, %v2390
    %v2392 = vpop.f32.mrb[0].mxu0
    %2393 = vmatprep.mubr.bf16.mxu0 0
    %2394 = vmatmul.mubr.bf16.gmra.mrb[0].mxu0 %v2340
    %v2395 = vpop.f32.mrb[0].mxu0
    %v2396 = vadd.f32 0.0, %v2395
    %v2397 = vpop.f32.mrb[0].mxu0
    %v2398 = vpop.f32.mrb[0].mxu0
    %v2399 = vadd.f32 0.0, %v2398
    %v2400 = vpop.f32.mrb[0].mxu0
    %2401 = vmatprep.mubr.bf16.mxu0 0
    %2402 = vmatmul.mubr.bf16.gmra.mrb[0].mxu0 %v2343
    %v2403 = vpop.f32.mrb[0].mxu0
    %v2404 = vadd.f32 0.0, %v2403
    %v2405 = vpop.f32.mrb[0].mxu0
    %v2406 = vpop.f32.mrb[0].mxu0
    %v2407 = vadd.f32 0.0, %v2406
    %v2408 = vpop.f32.mrb[0].mxu0
    %2409 = vdwg.mxu0
    %v2410 = vrot.slane %v2380, 4
    %v2411 = vrot.slane %v2383, 4
    %v2412 = vrot.slane %v2388, 4
    %v2413 = vrot.slane %v2391, 4
    %v2414 = vrot.slane %v2396, 4
    %v2415 = vrot.slane %v2399, 4
    %v2416 = vrot.slane %v2404, 4
    %v2417 = vrot.slane %v2407, 4
    %v2418 = vsel %vm825, %v2416, %v2417
    %v2419 = vsel %vm825, %v2415, %v2416
    %v2420 = vsel %vm825, %v2414, %v2415
    %v2421 = vsel %vm825, %v2413, %v2414
    %v2422 = vsel %vm825, %v2412, %v2413
    %v2423 = vsel %vm825, %v2411, %v2412
    %v2424 = vsel %vm825, %v2410, %v2411
    %v2425 = vsel %vm825, %v2417, %v2410
    %v2426 = vlaneseq
    %v2427 = vshrl.u32 %v2426, 7
    %v2428 = vsub.s32 0, %v2427
    %v2429 = vrot.slane %v2380, %v2428
    %v2430 = vsel %vm857, %v2429, %v2425
    %v2431 = vsel %vm858, %v2429, %v2424
    %v2432 = vsel %vm859, %v2429, %v2423
    %v2433 = vsel %vm860, %v2429, %v2422
    %v2434 = vsel %vm861, %v2429, %v2421
    %v2435 = vsel %vm862, %v2429, %v2420
    %v2436 = vsel %vm863, %v2429, %v2419
    %v2437 = vsel %vm864, %v2429, %v2418
    %2446 = vrot.lane.b32.xlu0 %v2380, 96
    %v2447 = vpop.permute.xlu0 %2446
    %2448 = vrot.lane.b32.xlu0 %v2383, 96
    %v2449 = vpop.permute.xlu0 %2448
    %2450 = vrot.lane.b32.xlu0 %v2388, 96
    %v2451 = vpop.permute.xlu0 %2450
    %2452 = vrot.lane.b32.xlu0 %v2391, 96
    %v2453 = vpop.permute.xlu0 %2452
    %2454 = vrot.lane.b32.xlu0 %v2396, 96
    %v2455 = vpop.permute.xlu0 %2454
    %2456 = vrot.lane.b32.xlu0 %v2399, 96
    %v2457 = vpop.permute.xlu0 %2456
    %2458 = vrot.lane.b32.xlu0 %v2404, 96
    %v2459 = vpop.permute.xlu0 %2458
    %2460 = vrot.lane.b32.xlu0 %v2407, 96
    %v2461 = vpop.permute.xlu0 %2460
    %v2470 = vrot.slane %v2447, 6
    %v2471 = vrot.slane %v2449, 6
    %v2472 = vrot.slane %v2451, 6
    %v2473 = vrot.slane %v2453, 6
    %v2474 = vrot.slane %v2455, 6
    %v2475 = vrot.slane %v2457, 6
    %v2476 = vrot.slane %v2459, 6
    %v2477 = vrot.slane %v2461, 6
    %v2478 = vsel %vm348, %v2476, %v2477
    %v2479 = vsel %vm348, %v2475, %v2476
    %v2480 = vsel %vm348, %v2474, %v2475
    %v2481 = vsel %vm348, %v2473, %v2474
    %v2482 = vsel %vm348, %v2472, %v2473
    %v2483 = vsel %vm348, %v2471, %v2472
    %v2484 = vsel %vm348, %v2470, %v2471
    %v2485 = vsel %vm348, %v2477, %v2470
    %2494 = vrot.lane.b32.xlu0 %v2485, 32
    %v2495 = vpop.permute.xlu0 %2494
    %2496 = vrot.lane.b32.xlu0 %v2484, 32
    %v2497 = vpop.permute.xlu0 %2496
    %2498 = vrot.lane.b32.xlu0 %v2483, 32
    %v2499 = vpop.permute.xlu0 %2498
    %2500 = vrot.lane.b32.xlu0 %v2482, 32
    %v2501 = vpop.permute.xlu0 %2500
    %2502 = vrot.lane.b32.xlu0 %v2481, 32
    %v2503 = vpop.permute.xlu0 %2502
    %2504 = vrot.lane.b32.xlu0 %v2480, 32
    %v2505 = vpop.permute.xlu0 %2504
    %2506 = vrot.lane.b32.xlu0 %v2479, 32
    %v2507 = vpop.permute.xlu0 %2506
    %2508 = vrot.lane.b32.xlu0 %v2478, 32
    %v2509 = vpop.permute.xlu0 %2508
    %v2518 = vsel %vm380, %v2429, %v2495
    %v2519 = vsel %vm381, %v2429, %v2497
    %v2520 = vsel %vm382, %v2429, %v2499
    %v2521 = vsel %vm383, %v2429, %v2501
    %v2522 = vsel %vm384, %v2429, %v2503
    %v2523 = vsel %vm385, %v2429, %v2505
    %v2524 = vsel %vm386, %v2429, %v2507
    %v2525 = vsel %vm387, %v2429, %v2509
    %2534 = vrot.lane.b32.xlu0 %v2518, 96
    %v2535 = vpop.permute.xlu0 %2534
    %2536 = vrot.lane.b32.xlu0 %v2519, 96
    %v2537 = vpop.permute.xlu0 %2536
    %2538 = vrot.lane.b32.xlu0 %v2520, 96
    %v2539 = vpop.permute.xlu0 %2538
    %2540 = vrot.lane.b32.xlu0 %v2521, 96
    %v2541 = vpop.permute.xlu0 %2540
    %2542 = vrot.lane.b32.xlu0 %v2522, 96
    %v2543 = vpop.permute.xlu0 %2542
    %2544 = vrot.lane.b32.xlu0 %v2523, 96
    %v2545 = vpop.permute.xlu0 %2544
    %2546 = vrot.lane.b32.xlu0 %v2524, 96
    %v2547 = vpop.permute.xlu0 %2546
    %2548 = vrot.lane.b32.xlu0 %v2525, 96
    %v2549 = vpop.permute.xlu0 %2548
    %v2558 = vadd.f32 %v2430, %v2535
    %v2559 = vadd.f32 %v2431, %v2537
    %v2560 = vadd.f32 %v2432, %v2539
    %v2561 = vadd.f32 %v2433, %v2541
    %v2562 = vadd.f32 %v2434, %v2543
    %v2563 = vadd.f32 %v2435, %v2545
    %v2564 = vadd.f32 %v2436, %v2547
    %v2565 = vadd.f32 %v2437, %v2549
    %2566 = vrot.lane.b32.xlu0 %v2380, 64
    %v2567 = vpop.permute.xlu0 %2566
    %2568 = vrot.lane.b32.xlu0 %v2383, 64
    %v2569 = vpop.permute.xlu0 %2568
    %2570 = vrot.lane.b32.xlu0 %v2388, 64
    %v2571 = vpop.permute.xlu0 %2570
    %2572 = vrot.lane.b32.xlu0 %v2391, 64
    %v2573 = vpop.permute.xlu0 %2572
    %2574 = vrot.lane.b32.xlu0 %v2396, 64
    %v2575 = vpop.permute.xlu0 %2574
    %2576 = vrot.lane.b32.xlu0 %v2399, 64
    %v2577 = vpop.permute.xlu0 %2576
    %2578 = vrot.lane.b32.xlu0 %v2404, 64
    %v2579 = vpop.permute.xlu0 %2578
    %2580 = vrot.lane.b32.xlu0 %v2407, 64
    %v2581 = vpop.permute.xlu0 %2580
    %v2590 = vadd.f32 %v2558, %v2567
    %v2591 = vadd.f32 %v2559, %v2569
    %v2592 = vadd.f32 %v2560, %v2571
    %v2593 = vadd.f32 %v2561, %v2573
    %v2594 = vadd.f32 %v2562, %v2575
    %v2595 = vadd.f32 %v2563, %v2577
    %v2596 = vadd.f32 %v2564, %v2579
    %v2597 = vadd.f32 %v2565, %v2581
    %v2598 = vld [vmem:[%s1037] sm:$0x1]
    %v2600 = vlaneseq
    %v2601 = vshrl.u32 %v2600, 7
    %v2602 = vsub.s32 0, %v2601
    %v2603 = vrot.slane %v2598, %v2602
    %v2605 = vadd.f32 %v2590, %v2603
    %v2606 = vadd.f32 %v2591, %v2603
    %v2607 = vadd.f32 %v2592, %v2603
    %v2608 = vadd.f32 %v2593, %v2603
    %v2609 = vadd.f32 %v2594, %v2603
    %v2610 = vadd.f32 %v2595, %v2603
    %v2611 = vadd.f32 %v2596, %v2603
    %v2612 = vadd.f32 %v2597, %v2603
    %v2613 = vmax.f32 %v2605, 0.0
    %v2614 = vmax.f32 %v2606, 0.0
    %v2615 = vmax.f32 %v2607, 0.0
    %v2616 = vmax.f32 %v2608, 0.0
    %v2617 = vmax.f32 %v2609, 0.0
    %v2618 = vmax.f32 %v2610, 0.0
    %v2619 = vmax.f32 %v2611, 0.0
    %v2620 = vmax.f32 %v2612, 0.0
    %v2621 = vpack.c.bf16 %v2614, %v2613
    %v2622 = vpack.c.bf16 %v2616, %v2615
    %v2623 = vpack.c.bf16 %v2618, %v2617
    %v2624 = vpack.c.bf16 %v2620, %v2619
    %v2625 = vld [vmem:[%s1065] sm:$0xf]
    %v2626 = vld [vmem:[%s1065 + $0x4] sm:$0xf]
    %v2627 = vld [vmem:[%s1065 + $0x8] sm:$0xf]
    %v2628 = vld [vmem:[%s1065 + $0xc] sm:$0xf]
    %v2629 = vld [vmem:[%s1070] sm:$0x1]
    %v2631 = vlaneseq
    %v2632 = vshrl.u32 %v2631, 7
    %v2633 = vsub.s32 0, %v2632
    %v2634 = vrot.slane %v2629, %v2633
    %v2640 = vunpack.c.l.b16 %v2625
    %v2641 = vunpack.c.l.b16 %v2626
    %v2642 = vunpack.c.l.b16 %v2627
    %v2643 = vunpack.c.l.b16 %v2628
    %v2644 = vpack.c.b16 %v2641, %v2640
    %v2645 = vpack.c.b16 %v2643, %v2642
    %v2649 = vsel %vm270, %v2621, 0
    %v2652 = vsel %vm270, %v2622, 0
    %v2655 = vsel %vm270, %v2623, 0
    %v2658 = vsel %vm270, %v2624, 0
    %2660 = vmatprep.subr.bf16.mxu0 0
    %2661 = vmatpush1.bf16.msra.mxu0 %v2644
    %2662 = vmatprep.subr.bf16.mxu0 0
    %2663 = vmatpush1.bf16.msra.mxu0 %v2645
    %2664 = vmatprep.subr.bf16.mxu0 0
    %2665 = vmatpush1.bf16.msra.mxu0 0
    %2666 = vmatprep.subr.bf16.mxu0 0
    %2667 = vmatpush1.bf16.msra.mxu0 0
    %2668 = vmatprep.subr.bf16.mxu0 0
    %2669 = vmatpush1.bf16.msra.mxu0 0
    %2670 = vmatprep.subr.bf16.mxu0 0
    %2671 = vmatpush1.bf16.msra.mxu0 0
    %2672 = vmatprep.subr.bf16.mxu0 0
    %2673 = vmatpush1.bf16.msra.mxu0 0
    %2674 = vmatprep.subr.bf16.mxu0 0
    %2675 = vmatpush1.bf16.msra.mxu0 0
    %2676 = vmatprep.subr.bf16.mxu0 0
    %2677 = vmatpush1.bf16.msra.mxu0 0
    %2678 = vmatprep.subr.bf16.mxu0 0
    %2679 = vmatpush1.bf16.msra.mxu0 0
    %2680 = vmatprep.subr.bf16.mxu0 0
    %2681 = vmatpush1.bf16.msra.mxu0 0
    %2682 = vmatprep.subr.bf16.mxu0 0
    %2683 = vmatpush1.bf16.msra.mxu0 0
    %2684 = vmatprep.subr.bf16.mxu0 0
    %2685 = vmatpush1.bf16.msra.mxu0 0
    %2686 = vmatprep.subr.bf16.mxu0 0
    %2687 = vmatpush1.bf16.msra.mxu0 0
    %2688 = vmatprep.subr.bf16.mxu0 0
    %2689 = vmatpush1.bf16.msra.mxu0 0
    %2690 = vmatprep.subr.bf16.mxu0 0
    %2691 = vmatpush1.bf16.msra.mxu0 0
    %2692 = vmatprep.mubr.bf16.mxu0 0
    %2693 = vmatmul.mubr.bf16.gmra.mrb[0].mxu0 %v2649
    %v2694 = vpop.f32.mrb[0].mxu0
    %v2695 = vadd.f32 %v2634, %v2694
    %v2696 = vpop.f32.mrb[0].mxu0
    %v2697 = vpop.f32.mrb[0].mxu0
    %v2698 = vadd.f32 %v2634, %v2697
    %v2699 = vpop.f32.mrb[0].mxu0
    %2700 = vmatprep.mubr.bf16.mxu0 0
    %2701 = vmatmul.mubr.bf16.gmra.mrb[0].mxu0 %v2652
    %v2702 = vpop.f32.mrb[0].mxu0
    %v2703 = vadd.f32 %v2634, %v2702
    %v2704 = vpop.f32.mrb[0].mxu0
    %v2705 = vpop.f32.mrb[0].mxu0
    %v2706 = vadd.f32 %v2634, %v2705
    %v2707 = vpop.f32.mrb[0].mxu0
    %2708 = vmatprep.mubr.bf16.mxu0 0
    %2709 = vmatmul.mubr.bf16.gmra.mrb[0].mxu0 %v2655
    %v2710 = vpop.f32.mrb[0].mxu0
    %v2711 = vadd.f32 %v2634, %v2710
    %v2712 = vpop.f32.mrb[0].mxu0
    %v2713 = vpop.f32.mrb[0].mxu0
    %v2714 = vadd.f32 %v2634, %v2713
    %v2715 = vpop.f32.mrb[0].mxu0
    %2716 = vmatprep.mubr.bf16.mxu0 0
    %2717 = vmatmul.mubr.bf16.gmra.mrb[0].mxu0 %v2658
    %v2718 = vpop.f32.mrb[0].mxu0
    %v2719 = vadd.f32 %v2634, %v2718
    %v2720 = vpop.f32.mrb[0].mxu0
    %v2721 = vpop.f32.mrb[0].mxu0
    %v2722 = vadd.f32 %v2634, %v2721
    %v2723 = vpop.f32.mrb[0].mxu0
    %2724 = vdwg.mxu0
    %v2725 = vadd.f32 %v2305, %v2695
    %v2726 = vadd.f32 %v2306, %v2698
    %v2727 = vadd.f32 %v2307, %v2703
    %v2728 = vadd.f32 %v2308, %v2706
    %v2729 = vadd.f32 %v2309, %v2711
    %v2730 = vadd.f32 %v2310, %v2714
    %v2731 = vadd.f32 %v2311, %v2719
    %v2732 = vadd.f32 %v2312, %v2722
    %v2733 = vmul.f32 %v2725, %v1742
    %v2734 = vmul.f32 %v2726, %v1747
    %v2735 = vmul.f32 %v2727, %v1752
    %v2736 = vmul.f32 %v2728, %v1757
    %v2737 = vmul.f32 %v2729, %v1762
    %v2738 = vmul.f32 %v2730, %v1767
    %v2739 = vmul.f32 %v2731, %v1772
    %v2740 = vmul.f32 %v2732, %v1777
    %v2741 = vpack.c.bf16 %v2734, %v2733
    %v2742 = vpack.c.bf16 %v2736, %v2735
    %v2743 = vpack.c.bf16 %v2738, %v2737
    %v2744 = vpack.c.bf16 %v2740, %v2739
    %v2745 = vld [vmem:[%s1187] sm:$0xf]
    %v2746 = vld [vmem:[%s1187 + $0x4] sm:$0xf]
    %v2747 = vld [vmem:[%s1187 + $0x8] sm:$0xf]
    %v2748 = vld [vmem:[%s1187 + $0xc] sm:$0xf]
    %v2753 = vunpack.c.l.b16 %v2745
    %v2754 = vunpack.c.l.b16 %v2746
    %v2755 = vunpack.c.l.b16 %v2747
    %v2756 = vunpack.c.l.b16 %v2748
    %v2757 = vpack.c.b16 %v2754, %v2753
    %v2758 = vpack.c.b16 %v2756, %v2755
    %v2762 = vsel %vm270, %v2741, 0
    %v2765 = vsel %vm270, %v2742, 0
    %v2768 = vsel %vm270, %v2743, 0
    %v2771 = vsel %vm270, %v2744, 0
    %2773 = vmatprep.subr.bf16.mxu0 0
    %2774 = vmatpush1.bf16.msra.mxu0 %v2757
    %2775 = vmatprep.subr.bf16.mxu0 0
    %2776 = vmatpush1.bf16.msra.mxu0 %v2758
    %2777 = vmatprep.subr.bf16.mxu0 0
    %2778 = vmatpush1.bf16.msra.mxu0 0
    %2779 = vmatprep.subr.bf16.mxu0 0
    %2780 = vmatpush1.bf16.msra.mxu0 0
    %2781 = vmatprep.subr.bf16.mxu0 0
    %2782 = vmatpush1.bf16.msra.mxu0 0
    %2783 = vmatprep.subr.bf16.mxu0 0
    %2784 = vmatpush1.bf16.msra.mxu0 0
    %2785 = vmatprep.subr.bf16.mxu0 0
    %2786 = vmatpush1.bf16.msra.mxu0 0
    %2787 = vmatprep.subr.bf16.mxu0 0
    %2788 = vmatpush1.bf16.msra.mxu0 0
    %2789 = vmatprep.subr.bf16.mxu0 0
    %2790 = vmatpush1.bf16.msra.mxu0 0
    %2791 = vmatprep.subr.bf16.mxu0 0
    %2792 = vmatpush1.bf16.msra.mxu0 0
    %2793 = vmatprep.subr.bf16.mxu0 0
    %2794 = vmatpush1.bf16.msra.mxu0 0
    %2795 = vmatprep.subr.bf16.mxu0 0
    %2796 = vmatpush1.bf16.msra.mxu0 0
    %2797 = vmatprep.subr.bf16.mxu0 0
    %2798 = vmatpush1.bf16.msra.mxu0 0
    %2799 = vmatprep.subr.bf16.mxu0 0
    %2800 = vmatpush1.bf16.msra.mxu0 0
    %2801 = vmatprep.subr.bf16.mxu0 0
    %2802 = vmatpush1.bf16.msra.mxu0 0
    %2803 = vmatprep.subr.bf16.mxu0 0
    %2804 = vmatpush1.bf16.msra.mxu0 0
    %2805 = vmatprep.mubr.bf16.mxu0 0
    %2806 = vmatmul.mubr.bf16.gmra.mrb[0].mxu0 %v2762
    %v2807 = vpop.f32.mrb[0].mxu0
    %v2808 = vadd.f32 0.0, %v2807
    %v2809 = vpop.f32.mrb[0].mxu0
    %v2810 = vpop.f32.mrb[0].mxu0
    %v2811 = vadd.f32 0.0, %v2810
    %v2812 = vpop.f32.mrb[0].mxu0
    %2813 = vmatprep.mubr.bf16.mxu0 0
    %2814 = vmatmul.mubr.bf16.gmra.mrb[0].mxu0 %v2765
    %v2815 = vpop.f32.mrb[0].mxu0
    %v2816 = vadd.f32 0.0, %v2815
    %v2817 = vpop.f32.mrb[0].mxu0
    %v2818 = vpop.f32.mrb[0].mxu0
    %v2819 = vadd.f32 0.0, %v2818
    %v2820 = vpop.f32.mrb[0].mxu0
    %2821 = vmatprep.mubr.bf16.mxu0 0
    %2822 = vmatmul.mubr.bf16.gmra.mrb[0].mxu0 %v2768
    %v2823 = vpop.f32.mrb[0].mxu0
    %v2824 = vadd.f32 0.0, %v2823
    %v2825 = vpop.f32.mrb[0].mxu0
    %v2826 = vpop.f32.mrb[0].mxu0
    %v2827 = vadd.f32 0.0, %v2826
    %v2828 = vpop.f32.mrb[0].mxu0
    %2829 = vmatprep.mubr.bf16.mxu0 0
    %2830 = vmatmul.mubr.bf16.gmra.mrb[0].mxu0 %v2771
    %v2831 = vpop.f32.mrb[0].mxu0
    %v2832 = vadd.f32 0.0, %v2831
    %v2833 = vpop.f32.mrb[0].mxu0
    %v2834 = vpop.f32.mrb[0].mxu0
    %v2835 = vadd.f32 0.0, %v2834
    %v2836 = vpop.f32.mrb[0].mxu0
    %2837 = vdwg.mxu0
    %v2838 = vlaneseq
    %v2839 = vshrl.u32 %v2838, 7
    %v2840 = vsub.s32 0, %v2839
    %v2841 = vrot.slane %v2808, %v2840
    %v2842 = vsel %vm1297, %v2841, %v2835
    %v2843 = vsel %vm1298, %v2841, %v2808
    %v2844 = vsel %vm1299, %v2841, %v2811
    %v2845 = vsel %vm1300, %v2841, %v2816
    %v2846 = vsel %vm1301, %v2841, %v2819
    %v2847 = vsel %vm1302, %v2841, %v2824
    %v2848 = vsel %vm1303, %v2841, %v2827
    %v2849 = vsel %vm1304, %v2841, %v2832
    %2858 = vrot.lane.b32.xlu0 %v2808, 96
    %v2859 = vpop.permute.xlu0 %2858
    %2860 = vrot.lane.b32.xlu0 %v2811, 96
    %v2861 = vpop.permute.xlu0 %2860
    %2862 = vrot.lane.b32.xlu0 %v2816, 96
    %v2863 = vpop.permute.xlu0 %2862
    %2864 = vrot.lane.b32.xlu0 %v2819, 96
    %v2865 = vpop.permute.xlu0 %2864
    %2866 = vrot.lane.b32.xlu0 %v2824, 96
    %v2867 = vpop.permute.xlu0 %2866
    %2868 = vrot.lane.b32.xlu0 %v2827, 96
    %v2869 = vpop.permute.xlu0 %2868
    %2870 = vrot.lane.b32.xlu0 %v2832, 96
    %v2871 = vpop.permute.xlu0 %2870
    %2872 = vrot.lane.b32.xlu0 %v2835, 96
    %v2873 = vpop.permute.xlu0 %2872
    %v2882 = vrot.slane %v2859, 4
    %v2883 = vrot.slane %v2861, 4
    %v2884 = vrot.slane %v2863, 4
    %v2885 = vrot.slane %v2865, 4
    %v2886 = vrot.slane %v2867, 4
    %v2887 = vrot.slane %v2869, 4
    %v2888 = vrot.slane %v2871, 4
    %v2889 = vrot.slane %v2873, 4
    %v2890 = vsel %vm825, %v2888, %v2889
    %v2891 = vsel %vm825, %v2887, %v2888
    %v2892 = vsel %vm825, %v2886, %v2887
    %v2893 = vsel %vm825, %v2885, %v2886
    %v2894 = vsel %vm825, %v2884, %v2885
    %v2895 = vsel %vm825, %v2883, %v2884
    %v2896 = vsel %vm825, %v2882, %v2883
    %v2897 = vsel %vm825, %v2889, %v2882
    %2906 = vrot.lane.b32.xlu0 %v2897, 32
    %v2907 = vpop.permute.xlu0 %2906
    %2908 = vrot.lane.b32.xlu0 %v2896, 32
    %v2909 = vpop.permute.xlu0 %2908
    %2910 = vrot.lane.b32.xlu0 %v2895, 32
    %v2911 = vpop.permute.xlu0 %2910
    %2912 = vrot.lane.b32.xlu0 %v2894, 32
    %v2913 = vpop.permute.xlu0 %2912
    %2914 = vrot.lane.b32.xlu0 %v2893, 32
    %v2915 = vpop.permute.xlu0 %2914
    %2916 = vrot.lane.b32.xlu0 %v2892, 32
    %v2917 = vpop.permute.xlu0 %2916
    %2918 = vrot.lane.b32.xlu0 %v2891, 32
    %v2919 = vpop.permute.xlu0 %2918
    %2920 = vrot.lane.b32.xlu0 %v2890, 32
    %v2921 = vpop.permute.xlu0 %2920
    %v2930 = vsel %vm857, %v2841, %v2907
    %v2931 = vsel %vm858, %v2841, %v2909
    %v2932 = vsel %vm859, %v2841, %v2911
    %v2933 = vsel %vm860, %v2841, %v2913
    %v2934 = vsel %vm861, %v2841, %v2915
    %v2935 = vsel %vm862, %v2841, %v2917
    %v2936 = vsel %vm863, %v2841, %v2919
    %v2937 = vsel %vm864, %v2841, %v2921
    %2946 = vrot.lane.b32.xlu0 %v2930, 96
    %v2947 = vpop.permute.xlu0 %2946
    %2948 = vrot.lane.b32.xlu0 %v2931, 96
    %v2949 = vpop.permute.xlu0 %2948
    %2950 = vrot.lane.b32.xlu0 %v2932, 96
    %v2951 = vpop.permute.xlu0 %2950
    %2952 = vrot.lane.b32.xlu0 %v2933, 96
    %v2953 = vpop.permute.xlu0 %2952
    %2954 = vrot.lane.b32.xlu0 %v2934, 96
    %v2955 = vpop.permute.xlu0 %2954
    %2956 = vrot.lane.b32.xlu0 %v2935, 96
    %v2957 = vpop.permute.xlu0 %2956
    %2958 = vrot.lane.b32.xlu0 %v2936, 96
    %v2959 = vpop.permute.xlu0 %2958
    %2960 = vrot.lane.b32.xlu0 %v2937, 96
    %v2961 = vpop.permute.xlu0 %2960
    %v2970 = vadd.f32 %v2842, %v2947
    %v2971 = vadd.f32 %v2843, %v2949
    %v2972 = vadd.f32 %v2844, %v2951
    %v2973 = vadd.f32 %v2845, %v2953
    %v2974 = vadd.f32 %v2846, %v2955
    %v2975 = vadd.f32 %v2847, %v2957
    %v2976 = vadd.f32 %v2848, %v2959
    %v2977 = vadd.f32 %v2849, %v2961
    %2978 = vrot.lane.b32.xlu0 %v2808, 64
    %v2979 = vpop.permute.xlu0 %2978
    %2980 = vrot.lane.b32.xlu0 %v2811, 64
    %v2981 = vpop.permute.xlu0 %2980
    %2982 = vrot.lane.b32.xlu0 %v2816, 64
    %v2983 = vpop.permute.xlu0 %2982
    %2984 = vrot.lane.b32.xlu0 %v2819, 64
    %v2985 = vpop.permute.xlu0 %2984
    %2986 = vrot.lane.b32.xlu0 %v2824, 64
    %v2987 = vpop.permute.xlu0 %2986
    %2988 = vrot.lane.b32.xlu0 %v2827, 64
    %v2989 = vpop.permute.xlu0 %2988
    %2990 = vrot.lane.b32.xlu0 %v2832, 64
    %v2991 = vpop.permute.xlu0 %2990
    %2992 = vrot.lane.b32.xlu0 %v2835, 64
    %v2993 = vpop.permute.xlu0 %2992
    %v3002 = vadd.f32 %v2970, %v2979
    %v3003 = vadd.f32 %v2971, %v2981
    %v3004 = vadd.f32 %v2972, %v2983
    %v3005 = vadd.f32 %v2973, %v2985
    %v3006 = vadd.f32 %v2974, %v2987
    %v3007 = vadd.f32 %v2975, %v2989
    %v3008 = vadd.f32 %v2976, %v2991
    %v3009 = vadd.f32 %v2977, %v2993
    %v3010 = vld [vmem:[%s1477] sm:$0x1]
    %v3012 = vlaneseq
    %v3013 = vshrl.u32 %v3012, 7
    %v3014 = vsub.s32 0, %v3013
    %v3015 = vrot.slane %v3010, %v3014
    %v3017 = vadd.f32 %v3002, %v3015
    %v3018 = vadd.f32 %v3003, %v3015
    %v3019 = vadd.f32 %v3004, %v3015
    %v3020 = vadd.f32 %v3005, %v3015
    %v3021 = vadd.f32 %v3006, %v3015
    %v3022 = vadd.f32 %v3007, %v3015
    %v3023 = vadd.f32 %v3008, %v3015
    %v3024 = vadd.f32 %v3009, %v3015
    %v3025 = vmax.f32 %v3017, 0.0
    %v3026 = vmax.f32 %v3018, 0.0
    %v3027 = vmax.f32 %v3019, 0.0
    %v3028 = vmax.f32 %v3020, 0.0
    %v3029 = vmax.f32 %v3021, 0.0
    %v3030 = vmax.f32 %v3022, 0.0
    %v3031 = vmax.f32 %v3023, 0.0
    %v3032 = vmax.f32 %v3024, 0.0
    %v3033 = vpack.c.bf16 %v3026, %v3025
    %v3034 = vpack.c.bf16 %v3028, %v3027
    %v3035 = vpack.c.bf16 %v3030, %v3029
    %v3036 = vpack.c.bf16 %v3032, %v3031
    %v3037 = vld [vmem:[%s1505] sm:$0xf]
    %v3038 = vld [vmem:[%s1505 + $0x4] sm:$0xf]
    %v3039 = vld [vmem:[%s1505 + $0x8] sm:$0xf]
    %v3040 = vld [vmem:[%s1505 + $0xc] sm:$0xf]
    %v3041 = vld [vmem:[%s1510] sm:$0x1]
    %v3043 = vlaneseq
    %v3044 = vshrl.u32 %v3043, 7
    %v3045 = vsub.s32 0, %v3044
    %v3046 = vrot.slane %v3041, %v3045
    %v3052 = vunpack.c.l.b16 %v3037
    %v3053 = vunpack.c.l.b16 %v3038
    %v3054 = vunpack.c.l.b16 %v3039
    %v3055 = vunpack.c.l.b16 %v3040
    %v3056 = vpack.c.b16 %v3053, %v3052
    %v3057 = vpack.c.b16 %v3055, %v3054
    %v3061 = vsel %vm270, %v3033, 0
    %v3064 = vsel %vm270, %v3034, 0
    %v3067 = vsel %vm270, %v3035, 0
    %v3070 = vsel %vm270, %v3036, 0
    %3072 = vmatprep.subr.bf16.mxu0 0
    %3073 = vmatpush1.bf16.msra.mxu0 %v3056
    %3074 = vmatprep.subr.bf16.mxu0 0
    %3075 = vmatpush1.bf16.msra.mxu0 %v3057
    %3076 = vmatprep.subr.bf16.mxu0 0
    %3077 = vmatpush1.bf16.msra.mxu0 0
    %3078 = vmatprep.subr.bf16.mxu0 0
    %3079 = vmatpush1.bf16.msra.mxu0 0
    %3080 = vmatprep.subr.bf16.mxu0 0
    %3081 = vmatpush1.bf16.msra.mxu0 0
    %3082 = vmatprep.subr.bf16.mxu0 0
    %3083 = vmatpush1.bf16.msra.mxu0 0
    %3084 = vmatprep.subr.bf16.mxu0 0
    %3085 = vmatpush1.bf16.msra.mxu0 0
    %3086 = vmatprep.subr.bf16.mxu0 0
    %3087 = vmatpush1.bf16.msra.mxu0 0
    %3088 = vmatprep.subr.bf16.mxu0 0
    %3089 = vmatpush1.bf16.msra.mxu0 0
    %3090 = vmatprep.subr.bf16.mxu0 0
    %3091 = vmatpush1.bf16.msra.mxu0 0
    %3092 = vmatprep.subr.bf16.mxu0 0
    %3093 = vmatpush1.bf16.msra.mxu0 0
    %3094 = vmatprep.subr.bf16.mxu0 0
    %3095 = vmatpush1.bf16.msra.mxu0 0
    %3096 = vmatprep.subr.bf16.mxu0 0
    %3097 = vmatpush1.bf16.msra.mxu0 0
    %3098 = vmatprep.subr.bf16.mxu0 0
    %3099 = vmatpush1.bf16.msra.mxu0 0
    %3100 = vmatprep.subr.bf16.mxu0 0
    %3101 = vmatpush1.bf16.msra.mxu0 0
    %3102 = vmatprep.subr.bf16.mxu0 0
    %3103 = vmatpush1.bf16.msra.mxu0 0
    %3104 = vmatprep.mubr.bf16.mxu0 0
    %3105 = vmatmul.mubr.bf16.gmra.mrb[0].mxu0 %v3061
    %v3106 = vpop.f32.mrb[0].mxu0
    %v3107 = vadd.f32 %v3046, %v3106
    %v3108 = vpop.f32.mrb[0].mxu0
    %v3109 = vpop.f32.mrb[0].mxu0
    %v3110 = vadd.f32 %v3046, %v3109
    %v3111 = vpop.f32.mrb[0].mxu0
    %3112 = vmatprep.mubr.bf16.mxu0 0
    %3113 = vmatmul.mubr.bf16.gmra.mrb[0].mxu0 %v3064
    %v3114 = vpop.f32.mrb[0].mxu0
    %v3115 = vadd.f32 %v3046, %v3114
    %v3116 = vpop.f32.mrb[0].mxu0
    %v3117 = vpop.f32.mrb[0].mxu0
    %v3118 = vadd.f32 %v3046, %v3117
    %v3119 = vpop.f32.mrb[0].mxu0
    %3120 = vmatprep.mubr.bf16.mxu0 0
    %3121 = vmatmul.mubr.bf16.gmra.mrb[0].mxu0 %v3067
    %v3122 = vpop.f32.mrb[0].mxu0
    %v3123 = vadd.f32 %v3046, %v3122
    %v3124 = vpop.f32.mrb[0].mxu0
    %v3125 = vpop.f32.mrb[0].mxu0
    %v3126 = vadd.f32 %v3046, %v3125
    %v3127 = vpop.f32.mrb[0].mxu0
    %3128 = vmatprep.mubr.bf16.mxu0 0
    %3129 = vmatmul.mubr.bf16.gmra.mrb[0].mxu0 %v3070
    %v3130 = vpop.f32.mrb[0].mxu0
    %v3131 = vadd.f32 %v3046, %v3130
    %v3132 = vpop.f32.mrb[0].mxu0
    %v3133 = vpop.f32.mrb[0].mxu0
    %v3134 = vadd.f32 %v3046, %v3133
    %v3135 = vpop.f32.mrb[0].mxu0
    %3136 = vdwg.mxu0
    %v3137 = vadd.f32 %v2733, %v3107
    %v3138 = vadd.f32 %v2734, %v3110
    %v3139 = vadd.f32 %v2735, %v3115
    %v3140 = vadd.f32 %v2736, %v3118
    %v3141 = vadd.f32 %v2737, %v3123
    %v3142 = vadd.f32 %v2738, %v3126
    %v3143 = vadd.f32 %v2739, %v3131
    %v3144 = vadd.f32 %v2740, %v3134
    %v3145 = vmul.f32 %v3137, %v1742
    %v3146 = vmul.f32 %v3138, %v1747
    %v3147 = vmul.f32 %v3139, %v1752
    %v3148 = vmul.f32 %v3140, %v1757
    %v3149 = vmul.f32 %v3141, %v1762
    %v3150 = vmul.f32 %v3142, %v1767
    %v3151 = vmul.f32 %v3143, %v1772
    %v3152 = vmul.f32 %v3144, %v1777
    %v3153 = vpack.c.bf16 %v3146, %v3145
    %v3154 = vpack.c.bf16 %v3148, %v3147
    %v3155 = vpack.c.bf16 %v3150, %v3149
    %v3156 = vpack.c.bf16 %v3152, %v3151
    %v3158 = vsel %vm270, %v3153, 0
    %v3161 = vsel %vm270, %v3154, 0
    %v3164 = vsel %vm270, %v3155, 0
    %v3167 = vsel %vm270, %v3156, 0
    %3169 = vmatprep.subr.bf16.mxu0 0
    %3170 = vmatpush1.bf16.msra.mxu0 %v1641
    %3171 = vmatprep.subr.bf16.mxu0 0
    %3172 = vmatpush1.bf16.msra.mxu0 %v1642
    %3173 = vmatprep.subr.bf16.mxu0 0
    %3174 = vmatpush1.bf16.msra.mxu0 0
    %3175 = vmatprep.subr.bf16.mxu0 0
    %3176 = vmatpush1.bf16.msra.mxu0 0
    %3177 = vmatprep.subr.bf16.mxu0 0
    %3178 = vmatpush1.bf16.msra.mxu0 0
    %3179 = vmatprep.subr.bf16.mxu0 0
    %3180 = vmatpush1.bf16.msra.mxu0 0
    %3181 = vmatprep.subr.bf16.mxu0 0
    %3182 = vmatpush1.bf16.msra.mxu0 0
    %3183 = vmatprep.subr.bf16.mxu0 0
    %3184 = vmatpush1.bf16.msra.mxu0 0
    %3185 = vmatprep.subr.bf16.mxu0 0
    %3186 = vmatpush1.bf16.msra.mxu0 0
    %3187 = vmatprep.subr.bf16.mxu0 0
    %3188 = vmatpush1.bf16.msra.mxu0 0
    %3189 = vmatprep.subr.bf16.mxu0 0
    %3190 = vmatpush1.bf16.msra.mxu0 0
    %3191 = vmatprep.subr.bf16.mxu0 0
    %3192 = vmatpush1.bf16.msra.mxu0 0
    %3193 = vmatprep.subr.bf16.mxu0 0
    %3194 = vmatpush1.bf16.msra.mxu0 0
    %3195 = vmatprep.subr.bf16.mxu0 0
    %3196 = vmatpush1.bf16.msra.mxu0 0
    %3197 = vmatprep.subr.bf16.mxu0 0
    %3198 = vmatpush1.bf16.msra.mxu0 0
    %3199 = vmatprep.subr.bf16.mxu0 0
    %3200 = vmatpush1.bf16.msra.mxu0 0
    %3201 = vmatprep.mubr.bf16.mxu0 0
    %3202 = vmatmul.mubr.bf16.gmra.mrb[0].mxu0 %v3158
    %v3203 = vpop.f32.mrb[0].mxu0
    %v3204 = vadd.f32 %v1631, %v3203
    %v3205 = vpop.f32.mrb[0].mxu0
    %v3206 = vpop.f32.mrb[0].mxu0
    %v3207 = vadd.f32 %v1631, %v3206
    %v3208 = vpop.f32.mrb[0].mxu0
    %3209 = vmatprep.mubr.bf16.mxu0 0
    %3210 = vmatmul.mubr.bf16.gmra.mrb[0].mxu0 %v3161
    %v3211 = vpop.f32.mrb[0].mxu0
    %v3212 = vadd.f32 %v1631, %v3211
    %v3213 = vpop.f32.mrb[0].mxu0
    %v3214 = vpop.f32.mrb[0].mxu0
    %v3215 = vadd.f32 %v1631, %v3214
    %v3216 = vpop.f32.mrb[0].mxu0
    %3217 = vmatprep.mubr.bf16.mxu0 0
    %3218 = vmatmul.mubr.bf16.gmra.mrb[0].mxu0 %v3164
    %v3219 = vpop.f32.mrb[0].mxu0
    %v3220 = vadd.f32 %v1631, %v3219
    %v3221 = vpop.f32.mrb[0].mxu0
    %v3222 = vpop.f32.mrb[0].mxu0
    %v3223 = vadd.f32 %v1631, %v3222
    %v3224 = vpop.f32.mrb[0].mxu0
    %3225 = vmatprep.mubr.bf16.mxu0 0
    %3226 = vmatmul.mubr.bf16.gmra.mrb[0].mxu0 %v3167
    %v3227 = vpop.f32.mrb[0].mxu0
    %v3228 = vadd.f32 %v1631, %v3227
    %v3229 = vpop.f32.mrb[0].mxu0
    %v3230 = vpop.f32.mrb[0].mxu0
    %v3231 = vadd.f32 %v1631, %v3230
    %v3232 = vpop.f32.mrb[0].mxu0
    %3233 = vdwg.mxu0
    %s3234 = scalar_lea.vmem [#allocation2], 64
    %3235 = vst [vmem:[%s3234] sm:$0xff] %v3204
    %3236 = vst [vmem:[%s3234 + $0x8] sm:$0xff] %v3207
    %3237 = vst [vmem:[%s3234 + $0x10] sm:$0xff] %v3212
    %3238 = vst [vmem:[%s3234 + $0x18] sm:$0xff] %v3215
    %3239 = vst [vmem:[%s3234 + $0x20] sm:$0xff] %v3220
    %3240 = vst [vmem:[%s3234 + $0x28] sm:$0xff] %v3223
    %3241 = vst [vmem:[%s3234 + $0x30] sm:$0xff] %v3228
    %3242 = vst [vmem:[%s3234 + $0x38] sm:$0xff] %v3231
    %v3243 = vld [vmem:[%s10] sm:$0xf]
    %v3244 = vld [vmem:[%s10 + $0x4] sm:$0xf]
    %v3245 = vld [vmem:[%s10 + $0x8] sm:$0xf]
    %v3246 = vld [vmem:[%s10 + $0xc] sm:$0xf]
    %v3247 = vld [vmem:[%s11] sm:$0x1]
    loop: start=0, step=1, limit=4
    $region82: #{tpu_custom_call.1} parent=1 // loop_pre_header
      _
    $region83: #{tpu_custom_call.1} parent=1 // loop_header
      %s3249 = sphi 0, %s3253
      %p3250 = scmp.ge.s32.totalorder %s3249, 4
      %v3254 = vphi 0.0, %v5127
      %v3255 = vphi 0.0, %v5128
    $region84: #{tpu_custom_call.1} parent=1 // loop_header_branch
      %3252 = sbr.rel (%p3250) target = $region88
    $region85: #{tpu_custom_call.1} parent=1 // loop_body
      %s3256 = smul.u32 %s3249, 16
      %s3257 = scalar_lea.vmem [#allocation2], %s3256
      %v3258 = vld [vmem:[%s3257] sm:$0xff]
      %v3259 = vld [vmem:[%s3257 + $0x8] sm:$0xff]
      %v3260 = vld [vmem:[%s3257 + $0x40] sm:$0xff]
      %v3261 = vld [vmem:[%s3257 + $0x48] sm:$0xff]
      %v3262 = vpack.c.bf16 %v3254, %v3254
      %v3263 = vpack.c.bf16 %v3255, %v3255
      %v3265 = vlaneseq
      %v3266 = vshrl.u32 %v3265, 7
      %v3267 = vsub.s32 0, %v3266
      %v3268 = vrot.slane %v3247, %v3267
      %v3272 = vunpack.c.l.b16 %v3262
      %v3273 = vunpack.c.l.b16 %v3263
      %v3274 = vrot.slane %v3272, 7
      %v3275 = vrot.slane %v3273, 6
      %vm3276 = vcmask 1041409
      %v3277 = vsel %vm3276, %v3275, %v3274
      %v3278 = vpack.c.b16 %v3277, %v3277
      %3279 = vrot.lane.b32.xlu0 %v3278, 96
      %v3280 = vpop.permute.xlu0 %3279
      %v3285 = vunpack.c.l.b16 %v3243
      %v3286 = vunpack.c.l.b16 %v3244
      %v3287 = vunpack.c.l.b16 %v3245
      %v3288 = vunpack.c.l.b16 %v3246
      %v3289 = vpack.c.b16 %v3286, %v3285
      %v3290 = vpack.c.b16 %v3288, %v3287
      %v3294 = vsel %vm270, %v3280, 0
      %3296 = vmatprep.subr.bf16.mxu0 0
      %3297 = vmatpush1.bf16.msra.mxu0 %v3289
      %3298 = vmatprep.subr.bf16.mxu0 0
      %3299 = vmatpush1.bf16.msra.mxu0 %v3290
      %3300 = vmatprep.subr.bf16.mxu0 0
      %3301 = vmatpush1.bf16.msra.mxu0 0
      %3302 = vmatprep.subr.bf16.mxu0 0
      %3303 = vmatpush1.bf16.msra.mxu0 0
      %3304 = vmatprep.subr.bf16.mxu0 0
      %3305 = vmatpush1.bf16.msra.mxu0 0
      %3306 = vmatprep.subr.bf16.mxu0 0
      %3307 = vmatpush1.bf16.msra.mxu0 0
      %3308 = vmatprep.subr.bf16.mxu0 0
      %3309 = vmatpush1.bf16.msra.mxu0 0
      %3310 = vmatprep.subr.bf16.mxu0 0
      %3311 = vmatpush1.bf16.msra.mxu0 0
      %3312 = vmatprep.subr.bf16.mxu0 0
      %3313 = vmatpush1.bf16.msra.mxu0 0
      %3314 = vmatprep.subr.bf16.mxu0 0
      %3315 = vmatpush1.bf16.msra.mxu0 0
      %3316 = vmatprep.subr.bf16.mxu0 0
      %3317 = vmatpush1.bf16.msra.mxu0 0
      %3318 = vmatprep.subr.bf16.mxu0 0
      %3319 = vmatpush1.bf16.msra.mxu0 0
      %3320 = vmatprep.subr.bf16.mxu0 0
      %3321 = vmatpush1.bf16.msra.mxu0 0
      %3322 = vmatprep.subr.bf16.mxu0 0
      %3323 = vmatpush1.bf16.msra.mxu0 0
      %3324 = vmatprep.subr.bf16.mxu0 0
      %3325 = vmatpush1.bf16.msra.mxu0 0
      %3326 = vmatprep.subr.bf16.mxu0 0
      %3327 = vmatpush1.bf16.msra.mxu0 0
      %3328 = vmatprep.mubr.bf16.mxu0 0
      %3329 = vmatmul.mubr.bf16.gmra.mrb[0].mxu0 %v3294
      %v3330 = vpop.f32.mrb[0].mxu0
      %v3331 = vadd.f32 %v3268, %v3330
      %v3332 = vpop.f32.mrb[0].mxu0
      %v3333 = vpop.f32.mrb[0].mxu0
      %v3334 = vpop.f32.mrb[0].mxu0
      %3335 = vdwg.mxu0
      %v3337 = vrot.slane %v3331, 1
      %v3340 = vadd.f32 %v3258, %v3331
      %v3341 = vadd.f32 %v3260, %v3337
      %v3342 = vxor.u32 %v3340, 2147483648
      %v3343 = vxor.u32 %v3341, 2147483648
      %v3344 = vmul.f32 %v3342, 1.442695
      %v3345 = vpow.pop %v3344
      %v3346 = vmul.f32 %v3343, 1.442695
      %v3347 = vpow.pop %v3346
      %v3348 = vadd.f32 %v3345, 1.0
      %v3349 = vadd.f32 %v3347, 1.0
      %v3350 = vrcp.pop %v3348
      %v3351 = vmul.f32 1.0, %v3350
      %v3352 = vrcp.pop %v3349
      %v3353 = vmul.f32 1.0, %v3352
      %3354 = vrot.lane.b32.xlu0 %v3331, 64
      %v3355 = vpop.permute.xlu0 %3354
      %3356 = vrot.lane.b32.xlu0 %v3337, 64
      %v3357 = vpop.permute.xlu0 %3356
      %v3360 = vmul.f32 %v3351, %v3355
      %v3361 = vmul.f32 %v3353, %v3357
      %3364 = vrot.lane.b32.xlu0 %v3360, 64
      %v3365 = vpop.permute.xlu0 %3364
      %3366 = vrot.lane.b32.xlu0 %v3361, 64
      %v3367 = vpop.permute.xlu0 %3366
      %v3370 = vadd.f32 %v3258, %v3365
      %v3371 = vadd.f32 %v3260, %v3367
      %v3372 = vtanh.pop %v3370
      %v3373 = vtanh.pop %v3371
      %v3374 = vsub.f32 1.0, %v3351
      %v3375 = vsub.f32 1.0, %v3353
      %3378 = vrot.lane.b32.xlu0 %v3372, 96
      %v3379 = vpop.permute.xlu0 %3378
      %3380 = vrot.lane.b32.xlu0 %v3373, 96
      %v3381 = vpop.permute.xlu0 %3380
      %v3384 = vmul.f32 %v3374, %v3379
      %v3385 = vmul.f32 %v3375, %v3381
      %v3388 = vrot.slane %v3254, 7
      %v3389 = vrot.slane %v3255, 7
      %v3392 = vmul.f32 %v3351, %v3388
      %v3393 = vmul.f32 %v3353, %v3389
      %v3394 = vadd.f32 %v3384, %v3392
      %v3395 = vadd.f32 %v3385, %v3393
      %v3396 = vpack.c.bf16 %v3394, %v3394
      %v3397 = vpack.c.bf16 %v3395, %v3395
      %v3400 = vunpack.c.l.b16 %v3396
      %v3401 = vunpack.c.l.b16 %v3397
      %v3402 = vrot.slane %v3401, 7
      %v3403 = vsel %vm3276, %v3402, %v3400
      %v3404 = vpack.c.b16 %v3403, %v3403
      %3405 = vrot.lane.b32.xlu0 %v3404, 96
      %v3406 = vpop.permute.xlu0 %3405
      %v3408 = vsel %vm270, %v3406, 0
      %3410 = vmatprep.subr.bf16.mxu0 0
      %3411 = vmatpush1.bf16.msra.mxu0 %v3289
      %3412 = vmatprep.subr.bf16.mxu0 0
      %3413 = vmatpush1.bf16.msra.mxu0 %v3290
      %3414 = vmatprep.subr.bf16.mxu0 0
      %3415 = vmatpush1.bf16.msra.mxu0 0
      %3416 = vmatprep.subr.bf16.mxu0 0
      %3417 = vmatpush1.bf16.msra.mxu0 0
      %3418 = vmatprep.subr.bf16.mxu0 0
      %3419 = vmatpush1.bf16.msra.mxu0 0
      %3420 = vmatprep.subr.bf16.mxu0 0
      %3421 = vmatpush1.bf16.msra.mxu0 0
      %3422 = vmatprep.subr.bf16.mxu0 0
      %3423 = vmatpush1.bf16.msra.mxu0 0
      %3424 = vmatprep.subr.bf16.mxu0 0
      %3425 = vmatpush1.bf16.msra.mxu0 0
      %3426 = vmatprep.subr.bf16.mxu0 0
      %3427 = vmatpush1.bf16.msra.mxu0 0
      %3428 = vmatprep.subr.bf16.mxu0 0
      %3429 = vmatpush1.bf16.msra.mxu0 0
      %3430 = vmatprep.subr.bf16.mxu0 0
      %3431 = vmatpush1.bf16.msra.mxu0 0
      %3432 = vmatprep.subr.bf16.mxu0 0
      %3433 = vmatpush1.bf16.msra.mxu0 0
      %3434 = vmatprep.subr.bf16.mxu0 0
      %3435 = vmatpush1.bf16.msra.mxu0 0
      %3436 = vmatprep.subr.bf16.mxu0 0
      %3437 = vmatpush1.bf16.msra.mxu0 0
      %3438 = vmatprep.subr.bf16.mxu0 0
      %3439 = vmatpush1.bf16.msra.mxu0 0
      %3440 = vmatprep.subr.bf16.mxu0 0
      %3441 = vmatpush1.bf16.msra.mxu0 0
      %3442 = vmatprep.mubr.bf16.mxu0 0
      %3443 = vmatmul.mubr.bf16.gmra.mrb[0].mxu0 %v3408
      %v3444 = vpop.f32.mrb[0].mxu0
      %v3445 = vadd.f32 %v3268, %v3444
      %v3446 = vpop.f32.mrb[0].mxu0
      %v3447 = vpop.f32.mrb[0].mxu0
      %v3448 = vpop.f32.mrb[0].mxu0
      %3449 = vdwg.mxu0
      %v3451 = vrot.slane %v3445, 7
      %v3454 = vadd.f32 %v3258, %v3451
      %v3455 = vadd.f32 %v3260, %v3445
      %v3456 = vxor.u32 %v3454, 2147483648
      %v3457 = vxor.u32 %v3455, 2147483648
      %v3458 = vmul.f32 %v3456, 1.442695
      %v3459 = vpow.pop %v3458
      %v3460 = vmul.f32 %v3457, 1.442695
      %v3461 = vpow.pop %v3460
      %v3462 = vadd.f32 %v3459, 1.0
      %v3463 = vadd.f32 %v3461, 1.0
      %v3464 = vrcp.pop %v3462
      %v3465 = vmul.f32 1.0, %v3464
      %v3466 = vrcp.pop %v3463
      %v3467 = vmul.f32 1.0, %v3466
      %3468 = vrot.lane.b32.xlu0 %v3451, 64
      %v3469 = vpop.permute.xlu0 %3468
      %3470 = vrot.lane.b32.xlu0 %v3445, 64
      %v3471 = vpop.permute.xlu0 %3470
      %v3474 = vmul.f32 %v3465, %v3469
      %v3475 = vmul.f32 %v3467, %v3471
      %3478 = vrot.lane.b32.xlu0 %v3474, 64
      %v3479 = vpop.permute.xlu0 %3478
      %3480 = vrot.lane.b32.xlu0 %v3475, 64
      %v3481 = vpop.permute.xlu0 %3480
      %v3484 = vadd.f32 %v3258, %v3479
      %v3485 = vadd.f32 %v3260, %v3481
      %v3486 = vtanh.pop %v3484
      %v3487 = vtanh.pop %v3485
      %v3488 = vsub.f32 1.0, %v3465
      %v3489 = vsub.f32 1.0, %v3467
      %3492 = vrot.lane.b32.xlu0 %v3486, 96
      %v3493 = vpop.permute.xlu0 %3492
      %3494 = vrot.lane.b32.xlu0 %v3487, 96
      %v3495 = vpop.permute.xlu0 %3494
      %v3498 = vmul.f32 %v3488, %v3493
      %v3499 = vmul.f32 %v3489, %v3495
      %v3502 = vrot.slane %v3394, 7
      %v3503 = vrot.slane %v3395, 7
      %v3506 = vmul.f32 %v3465, %v3502
      %v3507 = vmul.f32 %v3467, %v3503
      %v3508 = vadd.f32 %v3498, %v3506
      %v3509 = vadd.f32 %v3499, %v3507
      %v3510 = vpack.c.bf16 %v3508, %v3508
      %v3511 = vpack.c.bf16 %v3509, %v3509
      %v3514 = vunpack.c.l.b16 %v3510
      %v3515 = vunpack.c.l.b16 %v3511
      %v3516 = vrot.slane %v3514, 1
      %v3517 = vsel %vm3276, %v3515, %v3516
      %v3518 = vpack.c.b16 %v3517, %v3517
      %3519 = vrot.lane.b32.xlu0 %v3518, 96
      %v3520 = vpop.permute.xlu0 %3519
      %v3522 = vsel %vm270, %v3520, 0
      %3524 = vmatprep.subr.bf16.mxu0 0
      %3525 = vmatpush1.bf16.msra.mxu0 %v3289
      %3526 = vmatprep.subr.bf16.mxu0 0
      %3527 = vmatpush1.bf16.msra.mxu0 %v3290
      %3528 = vmatprep.subr.bf16.mxu0 0
      %3529 = vmatpush1.bf16.msra.mxu0 0
      %3530 = vmatprep.subr.bf16.mxu0 0
      %3531 = vmatpush1.bf16.msra.mxu0 0
      %3532 = vmatprep.subr.bf16.mxu0 0
      %3533 = vmatpush1.bf16.msra.mxu0 0
      %3534 = vmatprep.subr.bf16.mxu0 0
      %3535 = vmatpush1.bf16.msra.mxu0 0
      %3536 = vmatprep.subr.bf16.mxu0 0
      %3537 = vmatpush1.bf16.msra.mxu0 0
      %3538 = vmatprep.subr.bf16.mxu0 0
      %3539 = vmatpush1.bf16.msra.mxu0 0
      %3540 = vmatprep.subr.bf16.mxu0 0
      %3541 = vmatpush1.bf16.msra.mxu0 0
      %3542 = vmatprep.subr.bf16.mxu0 0
      %3543 = vmatpush1.bf16.msra.mxu0 0
      %3544 = vmatprep.subr.bf16.mxu0 0
      %3545 = vmatpush1.bf16.msra.mxu0 0
      %3546 = vmatprep.subr.bf16.mxu0 0
      %3547 = vmatpush1.bf16.msra.mxu0 0
      %3548 = vmatprep.subr.bf16.mxu0 0
      %3549 = vmatpush1.bf16.msra.mxu0 0
      %3550 = vmatprep.subr.bf16.mxu0 0
      %3551 = vmatpush1.bf16.msra.mxu0 0
      %3552 = vmatprep.subr.bf16.mxu0 0
      %3553 = vmatpush1.bf16.msra.mxu0 0
      %3554 = vmatprep.subr.bf16.mxu0 0
      %3555 = vmatpush1.bf16.msra.mxu0 0
      %3556 = vmatprep.mubr.bf16.mxu0 0
      %3557 = vmatmul.mubr.bf16.gmra.mrb[0].mxu0 %v3522
      %v3558 = vpop.f32.mrb[0].mxu0
      %v3559 = vadd.f32 %v3268, %v3558
      %v3560 = vpop.f32.mrb[0].mxu0
      %v3561 = vpop.f32.mrb[0].mxu0
      %v3562 = vpop.f32.mrb[0].mxu0
      %3563 = vdwg.mxu0
      %v3565 = vrot.slane %v3559, 6
      %v3566 = vrot.slane %v3559, 7
      %v3569 = vadd.f32 %v3258, %v3565
      %v3570 = vadd.f32 %v3260, %v3566
      %v3571 = vxor.u32 %v3569, 2147483648
      %v3572 = vxor.u32 %v3570, 2147483648
      %v3573 = vmul.f32 %v3571, 1.442695
      %v3574 = vpow.pop %v3573
      %v3575 = vmul.f32 %v3572, 1.442695
      %v3576 = vpow.pop %v3575
      %v3577 = vadd.f32 %v3574, 1.0
      %v3578 = vadd.f32 %v3576, 1.0
      %v3579 = vrcp.pop %v3577
      %v3580 = vmul.f32 1.0, %v3579
      %v3581 = vrcp.pop %v3578
      %v3582 = vmul.f32 1.0, %v3581
      %3583 = vrot.lane.b32.xlu0 %v3565, 64
      %v3584 = vpop.permute.xlu0 %3583
      %3585 = vrot.lane.b32.xlu0 %v3566, 64
      %v3586 = vpop.permute.xlu0 %3585
      %v3589 = vmul.f32 %v3580, %v3584
      %v3590 = vmul.f32 %v3582, %v3586
      %3593 = vrot.lane.b32.xlu0 %v3589, 64
      %v3594 = vpop.permute.xlu0 %3593
      %3595 = vrot.lane.b32.xlu0 %v3590, 64
      %v3596 = vpop.permute.xlu0 %3595
      %v3599 = vadd.f32 %v3258, %v3594
      %v3600 = vadd.f32 %v3260, %v3596
      %v3601 = vtanh.pop %v3599
      %v3602 = vtanh.pop %v3600
      %v3603 = vsub.f32 1.0, %v3580
      %v3604 = vsub.f32 1.0, %v3582
      %3607 = vrot.lane.b32.xlu0 %v3601, 96
      %v3608 = vpop.permute.xlu0 %3607
      %3609 = vrot.lane.b32.xlu0 %v3602, 96
      %v3610 = vpop.permute.xlu0 %3609
      %v3613 = vmul.f32 %v3603, %v3608
      %v3614 = vmul.f32 %v3604, %v3610
      %v3617 = vrot.slane %v3508, 7
      %v3618 = vrot.slane %v3509, 7
      %v3621 = vmul.f32 %v3580, %v3617
      %v3622 = vmul.f32 %v3582, %v3618
      %v3623 = vadd.f32 %v3613, %v3621
      %v3624 = vadd.f32 %v3614, %v3622
      %v3625 = vpack.c.bf16 %v3623, %v3623
      %v3626 = vpack.c.bf16 %v3624, %v3624
      %v3629 = vunpack.c.l.b16 %v3625
      %v3630 = vunpack.c.l.b16 %v3626
      %v3631 = vrot.slane %v3629, 2
      %v3632 = vrot.slane %v3630, 1
      %v3633 = vsel %vm3276, %v3632, %v3631
      %v3634 = vpack.c.b16 %v3633, %v3633
      %3635 = vrot.lane.b32.xlu0 %v3634, 96
      %v3636 = vpop.permute.xlu0 %3635
      %v3638 = vsel %vm270, %v3636, 0
      %3640 = vmatprep.subr.bf16.mxu0 0
      %3641 = vmatpush1.bf16.msra.mxu0 %v3289
      %3642 = vmatprep.subr.bf16.mxu0 0
      %3643 = vmatpush1.bf16.msra.mxu0 %v3290
      %3644 = vmatprep.subr.bf16.mxu0 0
      %3645 = vmatpush1.bf16.msra.mxu0 0
      %3646 = vmatprep.subr.bf16.mxu0 0
      %3647 = vmatpush1.bf16.msra.mxu0 0
      %3648 = vmatprep.subr.bf16.mxu0 0
      %3649 = vmatpush1.bf16.msra.mxu0 0
      %3650 = vmatprep.subr.bf16.mxu0 0
      %3651 = vmatpush1.bf16.msra.mxu0 0
      %3652 = vmatprep.subr.bf16.mxu0 0
      %3653 = vmatpush1.bf16.msra.mxu0 0
      %3654 = vmatprep.subr.bf16.mxu0 0
      %3655 = vmatpush1.bf16.msra.mxu0 0
      %3656 = vmatprep.subr.bf16.mxu0 0
      %3657 = vmatpush1.bf16.msra.mxu0 0
      %3658 = vmatprep.subr.bf16.mxu0 0
      %3659 = vmatpush1.bf16.msra.mxu0 0
      %3660 = vmatprep.subr.bf16.mxu0 0
      %3661 = vmatpush1.bf16.msra.mxu0 0
      %3662 = vmatprep.subr.bf16.mxu0 0
      %3663 = vmatpush1.bf16.msra.mxu0 0
      %3664 = vmatprep.subr.bf16.mxu0 0
      %3665 = vmatpush1.bf16.msra.mxu0 0
      %3666 = vmatprep.subr.bf16.mxu0 0
      %3667 = vmatpush1.bf16.msra.mxu0 0
      %3668 = vmatprep.subr.bf16.mxu0 0
      %3669 = vmatpush1.bf16.msra.mxu0 0
      %3670 = vmatprep.subr.bf16.mxu0 0
      %3671 = vmatpush1.bf16.msra.mxu0 0
      %3672 = vmatprep.mubr.bf16.mxu0 0
      %3673 = vmatmul.mubr.bf16.gmra.mrb[0].mxu0 %v3638
      %v3674 = vpop.f32.mrb[0].mxu0
      %v3675 = vadd.f32 %v3268, %v3674
      %v3676 = vpop.f32.mrb[0].mxu0
      %v3677 = vpop.f32.mrb[0].mxu0
      %v3678 = vpop.f32.mrb[0].mxu0
      %3679 = vdwg.mxu0
      %v3681 = vrot.slane %v3675, 5
      %v3682 = vrot.slane %v3675, 6
      %v3685 = vadd.f32 %v3258, %v3681
      %v3686 = vadd.f32 %v3260, %v3682
      %v3687 = vxor.u32 %v3685, 2147483648
      %v3688 = vxor.u32 %v3686, 2147483648
      %v3689 = vmul.f32 %v3687, 1.442695
      %v3690 = vpow.pop %v3689
      %v3691 = vmul.f32 %v3688, 1.442695
      %v3692 = vpow.pop %v3691
      %v3693 = vadd.f32 %v3690, 1.0
      %v3694 = vadd.f32 %v3692, 1.0
      %v3695 = vrcp.pop %v3693
      %v3696 = vmul.f32 1.0, %v3695
      %v3697 = vrcp.pop %v3694
      %v3698 = vmul.f32 1.0, %v3697
      %3699 = vrot.lane.b32.xlu0 %v3681, 64
      %v3700 = vpop.permute.xlu0 %3699
      %3701 = vrot.lane.b32.xlu0 %v3682, 64
      %v3702 = vpop.permute.xlu0 %3701
      %v3705 = vmul.f32 %v3696, %v3700
      %v3706 = vmul.f32 %v3698, %v3702
      %3709 = vrot.lane.b32.xlu0 %v3705, 64
      %v3710 = vpop.permute.xlu0 %3709
      %3711 = vrot.lane.b32.xlu0 %v3706, 64
      %v3712 = vpop.permute.xlu0 %3711
      %v3715 = vadd.f32 %v3258, %v3710
      %v3716 = vadd.f32 %v3260, %v3712
      %v3717 = vtanh.pop %v3715
      %v3718 = vtanh.pop %v3716
      %v3719 = vsub.f32 1.0, %v3696
      %v3720 = vsub.f32 1.0, %v3698
      %3723 = vrot.lane.b32.xlu0 %v3717, 96
      %v3724 = vpop.permute.xlu0 %3723
      %3725 = vrot.lane.b32.xlu0 %v3718, 96
      %v3726 = vpop.permute.xlu0 %3725
      %v3729 = vmul.f32 %v3719, %v3724
      %v3730 = vmul.f32 %v3720, %v3726
      %v3733 = vrot.slane %v3623, 7
      %v3734 = vrot.slane %v3624, 7
      %v3737 = vmul.f32 %v3696, %v3733
      %v3738 = vmul.f32 %v3698, %v3734
      %v3739 = vadd.f32 %v3729, %v3737
      %v3740 = vadd.f32 %v3730, %v3738
      %v3741 = vpack.c.bf16 %v3739, %v3739
      %v3742 = vpack.c.bf16 %v3740, %v3740
      %v3745 = vunpack.c.l.b16 %v3741
      %v3746 = vunpack.c.l.b16 %v3742
      %v3747 = vrot.slane %v3745, 3
      %v3748 = vrot.slane %v3746, 2
      %v3749 = vsel %vm3276, %v3748, %v3747
      %v3750 = vpack.c.b16 %v3749, %v3749
      %3751 = vrot.lane.b32.xlu0 %v3750, 96
      %v3752 = vpop.permute.xlu0 %3751
      %v3754 = vsel %vm270, %v3752, 0
      %3756 = vmatprep.subr.bf16.mxu0 0
      %3757 = vmatpush1.bf16.msra.mxu0 %v3289
      %3758 = vmatprep.subr.bf16.mxu0 0
      %3759 = vmatpush1.bf16.msra.mxu0 %v3290
      %3760 = vmatprep.subr.bf16.mxu0 0
      %3761 = vmatpush1.bf16.msra.mxu0 0
      %3762 = vmatprep.subr.bf16.mxu0 0
      %3763 = vmatpush1.bf16.msra.mxu0 0
      %3764 = vmatprep.subr.bf16.mxu0 0
      %3765 = vmatpush1.bf16.msra.mxu0 0
      %3766 = vmatprep.subr.bf16.mxu0 0
      %3767 = vmatpush1.bf16.msra.mxu0 0
      %3768 = vmatprep.subr.bf16.mxu0 0
      %3769 = vmatpush1.bf16.msra.mxu0 0
      %3770 = vmatprep.subr.bf16.mxu0 0
      %3771 = vmatpush1.bf16.msra.mxu0 0
      %3772 = vmatprep.subr.bf16.mxu0 0
      %3773 = vmatpush1.bf16.msra.mxu0 0
      %3774 = vmatprep.subr.bf16.mxu0 0
      %3775 = vmatpush1.bf16.msra.mxu0 0
      %3776 = vmatprep.subr.bf16.mxu0 0
      %3777 = vmatpush1.bf16.msra.mxu0 0
      %3778 = vmatprep.subr.bf16.mxu0 0
      %3779 = vmatpush1.bf16.msra.mxu0 0
      %3780 = vmatprep.subr.bf16.mxu0 0
      %3781 = vmatpush1.bf16.msra.mxu0 0
      %3782 = vmatprep.subr.bf16.mxu0 0
      %3783 = vmatpush1.bf16.msra.mxu0 0
      %3784 = vmatprep.subr.bf16.mxu0 0
      %3785 = vmatpush1.bf16.msra.mxu0 0
      %3786 = vmatprep.subr.bf16.mxu0 0
      %3787 = vmatpush1.bf16.msra.mxu0 0
      %3788 = vmatprep.mubr.bf16.mxu0 0
      %3789 = vmatmul.mubr.bf16.gmra.mrb[0].mxu0 %v3754
      %v3790 = vpop.f32.mrb[0].mxu0
      %v3791 = vadd.f32 %v3268, %v3790
      %v3792 = vpop.f32.mrb[0].mxu0
      %v3793 = vpop.f32.mrb[0].mxu0
      %v3794 = vpop.f32.mrb[0].mxu0
      %3795 = vdwg.mxu0
      %v3797 = vrot.slane %v3791, 4
      %v3798 = vrot.slane %v3791, 5
      %v3801 = vadd.f32 %v3258, %v3797
      %v3802 = vadd.f32 %v3260, %v3798
      %v3803 = vxor.u32 %v3801, 2147483648
      %v3804 = vxor.u32 %v3802, 2147483648
      %v3805 = vmul.f32 %v3803, 1.442695
      %v3806 = vpow.pop %v3805
      %v3807 = vmul.f32 %v3804, 1.442695
      %v3808 = vpow.pop %v3807
      %v3809 = vadd.f32 %v3806, 1.0
      %v3810 = vadd.f32 %v3808, 1.0
      %v3811 = vrcp.pop %v3809
      %v3812 = vmul.f32 1.0, %v3811
      %v3813 = vrcp.pop %v3810
      %v3814 = vmul.f32 1.0, %v3813
      %3815 = vrot.lane.b32.xlu0 %v3797, 64
      %v3816 = vpop.permute.xlu0 %3815
      %3817 = vrot.lane.b32.xlu0 %v3798, 64
      %v3818 = vpop.permute.xlu0 %3817
      %v3821 = vmul.f32 %v3812, %v3816
      %v3822 = vmul.f32 %v3814, %v3818
      %3825 = vrot.lane.b32.xlu0 %v3821, 64
      %v3826 = vpop.permute.xlu0 %3825
      %3827 = vrot.lane.b32.xlu0 %v3822, 64
      %v3828 = vpop.permute.xlu0 %3827
      %v3831 = vadd.f32 %v3258, %v3826
      %v3832 = vadd.f32 %v3260, %v3828
      %v3833 = vtanh.pop %v3831
      %v3834 = vtanh.pop %v3832
      %v3835 = vsub.f32 1.0, %v3812
      %v3836 = vsub.f32 1.0, %v3814
      %3839 = vrot.lane.b32.xlu0 %v3833, 96
      %v3840 = vpop.permute.xlu0 %3839
      %3841 = vrot.lane.b32.xlu0 %v3834, 96
      %v3842 = vpop.permute.xlu0 %3841
      %v3845 = vmul.f32 %v3835, %v3840
      %v3846 = vmul.f32 %v3836, %v3842
      %v3849 = vrot.slane %v3739, 7
      %v3850 = vrot.slane %v3740, 7
      %v3853 = vmul.f32 %v3812, %v3849
      %v3854 = vmul.f32 %v3814, %v3850
      %v3855 = vadd.f32 %v3845, %v3853
      %v3856 = vadd.f32 %v3846, %v3854
      %v3857 = vpack.c.bf16 %v3855, %v3855
      %v3858 = vpack.c.bf16 %v3856, %v3856
      %v3861 = vunpack.c.l.b16 %v3857
      %v3862 = vunpack.c.l.b16 %v3858
      %v3863 = vrot.slane %v3861, 4
      %v3864 = vrot.slane %v3862, 3
      %v3865 = vsel %vm3276, %v3864, %v3863
      %v3866 = vpack.c.b16 %v3865, %v3865
      %3867 = vrot.lane.b32.xlu0 %v3866, 96
      %v3868 = vpop.permute.xlu0 %3867
      %v3870 = vsel %vm270, %v3868, 0
      %3872 = vmatprep.subr.bf16.mxu0 0
      %3873 = vmatpush1.bf16.msra.mxu0 %v3289
      %3874 = vmatprep.subr.bf16.mxu0 0
      %3875 = vmatpush1.bf16.msra.mxu0 %v3290
      %3876 = vmatprep.subr.bf16.mxu0 0
      %3877 = vmatpush1.bf16.msra.mxu0 0
      %3878 = vmatprep.subr.bf16.mxu0 0
      %3879 = vmatpush1.bf16.msra.mxu0 0
      %3880 = vmatprep.subr.bf16.mxu0 0
      %3881 = vmatpush1.bf16.msra.mxu0 0
      %3882 = vmatprep.subr.bf16.mxu0 0
      %3883 = vmatpush1.bf16.msra.mxu0 0
      %3884 = vmatprep.subr.bf16.mxu0 0
      %3885 = vmatpush1.bf16.msra.mxu0 0
      %3886 = vmatprep.subr.bf16.mxu0 0
      %3887 = vmatpush1.bf16.msra.mxu0 0
      %3888 = vmatprep.subr.bf16.mxu0 0
      %3889 = vmatpush1.bf16.msra.mxu0 0
      %3890 = vmatprep.subr.bf16.mxu0 0
      %3891 = vmatpush1.bf16.msra.mxu0 0
      %3892 = vmatprep.subr.bf16.mxu0 0
      %3893 = vmatpush1.bf16.msra.mxu0 0
      %3894 = vmatprep.subr.bf16.mxu0 0
      %3895 = vmatpush1.bf16.msra.mxu0 0
      %3896 = vmatprep.subr.bf16.mxu0 0
      %3897 = vmatpush1.bf16.msra.mxu0 0
      %3898 = vmatprep.subr.bf16.mxu0 0
      %3899 = vmatpush1.bf16.msra.mxu0 0
      %3900 = vmatprep.subr.bf16.mxu0 0
      %3901 = vmatpush1.bf16.msra.mxu0 0
      %3902 = vmatprep.subr.bf16.mxu0 0
      %3903 = vmatpush1.bf16.msra.mxu0 0
      %3904 = vmatprep.mubr.bf16.mxu0 0
      %3905 = vmatmul.mubr.bf16.gmra.mrb[0].mxu0 %v3870
      %v3906 = vpop.f32.mrb[0].mxu0
      %v3907 = vadd.f32 %v3268, %v3906
      %v3908 = vpop.f32.mrb[0].mxu0
      %v3909 = vpop.f32.mrb[0].mxu0
      %v3910 = vpop.f32.mrb[0].mxu0
      %3911 = vdwg.mxu0
      %v3913 = vrot.slane %v3907, 3
      %v3914 = vrot.slane %v3907, 4
      %v3917 = vadd.f32 %v3258, %v3913
      %v3918 = vadd.f32 %v3260, %v3914
      %v3919 = vxor.u32 %v3917, 2147483648
      %v3920 = vxor.u32 %v3918, 2147483648
      %v3921 = vmul.f32 %v3919, 1.442695
      %v3922 = vpow.pop %v3921
      %v3923 = vmul.f32 %v3920, 1.442695
      %v3924 = vpow.pop %v3923
      %v3925 = vadd.f32 %v3922, 1.0
      %v3926 = vadd.f32 %v3924, 1.0
      %v3927 = vrcp.pop %v3925
      %v3928 = vmul.f32 1.0, %v3927
      %v3929 = vrcp.pop %v3926
      %v3930 = vmul.f32 1.0, %v3929
      %3931 = vrot.lane.b32.xlu0 %v3913, 64
      %v3932 = vpop.permute.xlu0 %3931
      %3933 = vrot.lane.b32.xlu0 %v3914, 64
      %v3934 = vpop.permute.xlu0 %3933
      %v3937 = vmul.f32 %v3928, %v3932
      %v3938 = vmul.f32 %v3930, %v3934
      %3941 = vrot.lane.b32.xlu0 %v3937, 64
      %v3942 = vpop.permute.xlu0 %3941
      %3943 = vrot.lane.b32.xlu0 %v3938, 64
      %v3944 = vpop.permute.xlu0 %3943
      %v3947 = vadd.f32 %v3258, %v3942
      %v3948 = vadd.f32 %v3260, %v3944
      %v3949 = vtanh.pop %v3947
      %v3950 = vtanh.pop %v3948
      %v3951 = vsub.f32 1.0, %v3928
      %v3952 = vsub.f32 1.0, %v3930
      %3955 = vrot.lane.b32.xlu0 %v3949, 96
      %v3956 = vpop.permute.xlu0 %3955
      %3957 = vrot.lane.b32.xlu0 %v3950, 96
      %v3958 = vpop.permute.xlu0 %3957
      %v3961 = vmul.f32 %v3951, %v3956
      %v3962 = vmul.f32 %v3952, %v3958
      %v3965 = vrot.slane %v3855, 7
      %v3966 = vrot.slane %v3856, 7
      %v3969 = vmul.f32 %v3928, %v3965
      %v3970 = vmul.f32 %v3930, %v3966
      %v3971 = vadd.f32 %v3961, %v3969
      %v3972 = vadd.f32 %v3962, %v3970
      %v3973 = vpack.c.bf16 %v3971, %v3971
      %v3974 = vpack.c.bf16 %v3972, %v3972
      %v3977 = vunpack.c.l.b16 %v3973
      %v3978 = vunpack.c.l.b16 %v3974
      %v3979 = vrot.slane %v3977, 5
      %v3980 = vrot.slane %v3978, 4
      %v3981 = vsel %vm3276, %v3980, %v3979
      %v3982 = vpack.c.b16 %v3981, %v3981
      %3983 = vrot.lane.b32.xlu0 %v3982, 96
      %v3984 = vpop.permute.xlu0 %3983
      %v3986 = vsel %vm270, %v3984, 0
      %3988 = vmatprep.subr.bf16.mxu0 0
      %3989 = vmatpush1.bf16.msra.mxu0 %v3289
      %3990 = vmatprep.subr.bf16.mxu0 0
      %3991 = vmatpush1.bf16.msra.mxu0 %v3290
      %3992 = vmatprep.subr.bf16.mxu0 0
      %3993 = vmatpush1.bf16.msra.mxu0 0
      %3994 = vmatprep.subr.bf16.mxu0 0
      %3995 = vmatpush1.bf16.msra.mxu0 0
      %3996 = vmatprep.subr.bf16.mxu0 0
      %3997 = vmatpush1.bf16.msra.mxu0 0
      %3998 = vmatprep.subr.bf16.mxu0 0
      %3999 = vmatpush1.bf16.msra.mxu0 0
      %4000 = vmatprep.subr.bf16.mxu0 0
      %4001 = vmatpush1.bf16.msra.mxu0 0
      %4002 = vmatprep.subr.bf16.mxu0 0
      %4003 = vmatpush1.bf16.msra.mxu0 0
      %4004 = vmatprep.subr.bf16.mxu0 0
      %4005 = vmatpush1.bf16.msra.mxu0 0
      %4006 = vmatprep.subr.bf16.mxu0 0
      %4007 = vmatpush1.bf16.msra.mxu0 0
      %4008 = vmatprep.subr.bf16.mxu0 0
      %4009 = vmatpush1.bf16.msra.mxu0 0
      %4010 = vmatprep.subr.bf16.mxu0 0
      %4011 = vmatpush1.bf16.msra.mxu0 0
      %4012 = vmatprep.subr.bf16.mxu0 0
      %4013 = vmatpush1.bf16.msra.mxu0 0
      %4014 = vmatprep.subr.bf16.mxu0 0
      %4015 = vmatpush1.bf16.msra.mxu0 0
      %4016 = vmatprep.subr.bf16.mxu0 0
      %4017 = vmatpush1.bf16.msra.mxu0 0
      %4018 = vmatprep.subr.bf16.mxu0 0
      %4019 = vmatpush1.bf16.msra.mxu0 0
      %4020 = vmatprep.mubr.bf16.mxu0 0
      %4021 = vmatmul.mubr.bf16.gmra.mrb[0].mxu0 %v3986
      %v4022 = vpop.f32.mrb[0].mxu0
      %v4023 = vadd.f32 %v3268, %v4022
      %v4024 = vpop.f32.mrb[0].mxu0
      %v4025 = vpop.f32.mrb[0].mxu0
      %v4026 = vpop.f32.mrb[0].mxu0
      %4027 = vdwg.mxu0
      %v4029 = vrot.slane %v4023, 2
      %v4030 = vrot.slane %v4023, 3
      %v4033 = vadd.f32 %v3258, %v4029
      %v4034 = vadd.f32 %v3260, %v4030
      %v4035 = vxor.u32 %v4033, 2147483648
      %v4036 = vxor.u32 %v4034, 2147483648
      %v4037 = vmul.f32 %v4035, 1.442695
      %v4038 = vpow.pop %v4037
      %v4039 = vmul.f32 %v4036, 1.442695
      %v4040 = vpow.pop %v4039
      %v4041 = vadd.f32 %v4038, 1.0
      %v4042 = vadd.f32 %v4040, 1.0
      %v4043 = vrcp.pop %v4041
      %v4044 = vmul.f32 1.0, %v4043
      %v4045 = vrcp.pop %v4042
      %v4046 = vmul.f32 1.0, %v4045
      %4047 = vrot.lane.b32.xlu0 %v4029, 64
      %v4048 = vpop.permute.xlu0 %4047
      %4049 = vrot.lane.b32.xlu0 %v4030, 64
      %v4050 = vpop.permute.xlu0 %4049
      %v4053 = vmul.f32 %v4044, %v4048
      %v4054 = vmul.f32 %v4046, %v4050
      %4057 = vrot.lane.b32.xlu0 %v4053, 64
      %v4058 = vpop.permute.xlu0 %4057
      %4059 = vrot.lane.b32.xlu0 %v4054, 64
      %v4060 = vpop.permute.xlu0 %4059
      %v4063 = vadd.f32 %v3258, %v4058
      %v4064 = vadd.f32 %v3260, %v4060
      %v4065 = vtanh.pop %v4063
      %v4066 = vtanh.pop %v4064
      %v4067 = vsub.f32 1.0, %v4044
      %v4068 = vsub.f32 1.0, %v4046
      %4071 = vrot.lane.b32.xlu0 %v4065, 96
      %v4072 = vpop.permute.xlu0 %4071
      %4073 = vrot.lane.b32.xlu0 %v4066, 96
      %v4074 = vpop.permute.xlu0 %4073
      %v4077 = vmul.f32 %v4067, %v4072
      %v4078 = vmul.f32 %v4068, %v4074
      %v4081 = vrot.slane %v3971, 7
      %v4082 = vrot.slane %v3972, 7
      %v4085 = vmul.f32 %v4044, %v4081
      %v4086 = vmul.f32 %v4046, %v4082
      %v4087 = vadd.f32 %v4077, %v4085
      %v4088 = vadd.f32 %v4078, %v4086
      %v4089 = vpack.c.bf16 %v4087, %v4087
      %v4090 = vpack.c.bf16 %v4088, %v4088
      %v4093 = vunpack.c.l.b16 %v4089
      %v4094 = vunpack.c.l.b16 %v4090
      %v4095 = vrot.slane %v4093, 6
      %v4096 = vrot.slane %v4094, 5
      %v4097 = vsel %vm3276, %v4096, %v4095
      %v4098 = vpack.c.b16 %v4097, %v4097
      %4099 = vrot.lane.b32.xlu0 %v4098, 96
      %v4100 = vpop.permute.xlu0 %4099
      %v4102 = vsel %vm270, %v4100, 0
      %4104 = vmatprep.subr.bf16.mxu0 0
      %4105 = vmatpush1.bf16.msra.mxu0 %v3289
      %4106 = vmatprep.subr.bf16.mxu0 0
      %4107 = vmatpush1.bf16.msra.mxu0 %v3290
      %4108 = vmatprep.subr.bf16.mxu0 0
      %4109 = vmatpush1.bf16.msra.mxu0 0
      %4110 = vmatprep.subr.bf16.mxu0 0
      %4111 = vmatpush1.bf16.msra.mxu0 0
      %4112 = vmatprep.subr.bf16.mxu0 0
      %4113 = vmatpush1.bf16.msra.mxu0 0
      %4114 = vmatprep.subr.bf16.mxu0 0
      %4115 = vmatpush1.bf16.msra.mxu0 0
      %4116 = vmatprep.subr.bf16.mxu0 0
      %4117 = vmatpush1.bf16.msra.mxu0 0
      %4118 = vmatprep.subr.bf16.mxu0 0
      %4119 = vmatpush1.bf16.msra.mxu0 0
      %4120 = vmatprep.subr.bf16.mxu0 0
      %4121 = vmatpush1.bf16.msra.mxu0 0
      %4122 = vmatprep.subr.bf16.mxu0 0
      %4123 = vmatpush1.bf16.msra.mxu0 0
      %4124 = vmatprep.subr.bf16.mxu0 0
      %4125 = vmatpush1.bf16.msra.mxu0 0
      %4126 = vmatprep.subr.bf16.mxu0 0
      %4127 = vmatpush1.bf16.msra.mxu0 0
      %4128 = vmatprep.subr.bf16.mxu0 0
      %4129 = vmatpush1.bf16.msra.mxu0 0
      %4130 = vmatprep.subr.bf16.mxu0 0
      %4131 = vmatpush1.bf16.msra.mxu0 0
      %4132 = vmatprep.subr.bf16.mxu0 0
      %4133 = vmatpush1.bf16.msra.mxu0 0
      %4134 = vmatprep.subr.bf16.mxu0 0
      %4135 = vmatpush1.bf16.msra.mxu0 0
      %4136 = vmatprep.mubr.bf16.mxu0 0
      %4137 = vmatmul.mubr.bf16.gmra.mrb[0].mxu0 %v4102
      %v4138 = vpop.f32.mrb[0].mxu0
      %v4139 = vadd.f32 %v3268, %v4138
      %v4140 = vpop.f32.mrb[0].mxu0
      %v4141 = vpop.f32.mrb[0].mxu0
      %v4142 = vpop.f32.mrb[0].mxu0
      %4143 = vdwg.mxu0
      %v4145 = vrot.slane %v4139, 1
      %v4146 = vrot.slane %v4139, 2
      %v4149 = vadd.f32 %v3258, %v4145
      %v4150 = vadd.f32 %v3260, %v4146
      %v4151 = vxor.u32 %v4149, 2147483648
      %v4152 = vxor.u32 %v4150, 2147483648
      %v4153 = vmul.f32 %v4151, 1.442695
      %v4154 = vpow.pop %v4153
      %v4155 = vmul.f32 %v4152, 1.442695
      %v4156 = vpow.pop %v4155
      %v4157 = vadd.f32 %v4154, 1.0
      %v4158 = vadd.f32 %v4156, 1.0
      %v4159 = vrcp.pop %v4157
      %v4160 = vmul.f32 1.0, %v4159
      %v4161 = vrcp.pop %v4158
      %v4162 = vmul.f32 1.0, %v4161
      %4163 = vrot.lane.b32.xlu0 %v4145, 64
      %v4164 = vpop.permute.xlu0 %4163
      %4165 = vrot.lane.b32.xlu0 %v4146, 64
      %v4166 = vpop.permute.xlu0 %4165
      %v4169 = vmul.f32 %v4160, %v4164
      %v4170 = vmul.f32 %v4162, %v4166
      %4173 = vrot.lane.b32.xlu0 %v4169, 64
      %v4174 = vpop.permute.xlu0 %4173
      %4175 = vrot.lane.b32.xlu0 %v4170, 64
      %v4176 = vpop.permute.xlu0 %4175
      %v4179 = vadd.f32 %v3258, %v4174
      %v4180 = vadd.f32 %v3260, %v4176
      %v4181 = vtanh.pop %v4179
      %v4182 = vtanh.pop %v4180
      %v4183 = vsub.f32 1.0, %v4160
      %v4184 = vsub.f32 1.0, %v4162
      %4187 = vrot.lane.b32.xlu0 %v4181, 96
      %v4188 = vpop.permute.xlu0 %4187
      %4189 = vrot.lane.b32.xlu0 %v4182, 96
      %v4190 = vpop.permute.xlu0 %4189
      %v4193 = vmul.f32 %v4183, %v4188
      %v4194 = vmul.f32 %v4184, %v4190
      %v4197 = vrot.slane %v4087, 7
      %v4198 = vrot.slane %v4088, 7
      %v4201 = vmul.f32 %v4160, %v4197
      %v4202 = vmul.f32 %v4162, %v4198
      %v4203 = vadd.f32 %v4193, %v4201
      %v4204 = vadd.f32 %v4194, %v4202
      %v4205 = vpack.c.bf16 %v4203, %v4203
      %v4206 = vpack.c.bf16 %v4204, %v4204
      %v4209 = vunpack.c.l.b16 %v4205
      %v4210 = vunpack.c.l.b16 %v4206
      %v4211 = vrot.slane %v4209, 7
      %v4212 = vrot.slane %v4210, 6
      %v4213 = vsel %vm3276, %v4212, %v4211
      %v4214 = vpack.c.b16 %v4213, %v4213
      %4215 = vrot.lane.b32.xlu0 %v4214, 96
      %v4216 = vpop.permute.xlu0 %4215
      %v4218 = vsel %vm270, %v4216, 0
      %4220 = vmatprep.subr.bf16.mxu0 0
      %4221 = vmatpush1.bf16.msra.mxu0 %v3289
      %4222 = vmatprep.subr.bf16.mxu0 0
      %4223 = vmatpush1.bf16.msra.mxu0 %v3290
      %4224 = vmatprep.subr.bf16.mxu0 0
      %4225 = vmatpush1.bf16.msra.mxu0 0
      %4226 = vmatprep.subr.bf16.mxu0 0
      %4227 = vmatpush1.bf16.msra.mxu0 0
      %4228 = vmatprep.subr.bf16.mxu0 0
      %4229 = vmatpush1.bf16.msra.mxu0 0
      %4230 = vmatprep.subr.bf16.mxu0 0
      %4231 = vmatpush1.bf16.msra.mxu0 0
      %4232 = vmatprep.subr.bf16.mxu0 0
      %4233 = vmatpush1.bf16.msra.mxu0 0
      %4234 = vmatprep.subr.bf16.mxu0 0
      %4235 = vmatpush1.bf16.msra.mxu0 0
      %4236 = vmatprep.subr.bf16.mxu0 0
      %4237 = vmatpush1.bf16.msra.mxu0 0
      %4238 = vmatprep.subr.bf16.mxu0 0
      %4239 = vmatpush1.bf16.msra.mxu0 0
      %4240 = vmatprep.subr.bf16.mxu0 0
      %4241 = vmatpush1.bf16.msra.mxu0 0
      %4242 = vmatprep.subr.bf16.mxu0 0
      %4243 = vmatpush1.bf16.msra.mxu0 0
      %4244 = vmatprep.subr.bf16.mxu0 0
      %4245 = vmatpush1.bf16.msra.mxu0 0
      %4246 = vmatprep.subr.bf16.mxu0 0
      %4247 = vmatpush1.bf16.msra.mxu0 0
      %4248 = vmatprep.subr.bf16.mxu0 0
      %4249 = vmatpush1.bf16.msra.mxu0 0
      %4250 = vmatprep.subr.bf16.mxu0 0
      %4251 = vmatpush1.bf16.msra.mxu0 0
      %4252 = vmatprep.mubr.bf16.mxu0 0
      %4253 = vmatmul.mubr.bf16.gmra.mrb[0].mxu0 %v4218
      %v4254 = vpop.f32.mrb[0].mxu0
      %v4255 = vadd.f32 %v3268, %v4254
      %v4256 = vpop.f32.mrb[0].mxu0
      %v4257 = vpop.f32.mrb[0].mxu0
      %v4258 = vpop.f32.mrb[0].mxu0
      %4259 = vdwg.mxu0
      %v4261 = vrot.slane %v4255, 1
      %v4264 = vadd.f32 %v3259, %v4255
      %v4265 = vadd.f32 %v3261, %v4261
      %v4266 = vxor.u32 %v4264, 2147483648
      %v4267 = vxor.u32 %v4265, 2147483648
      %v4268 = vmul.f32 %v4266, 1.442695
      %v4269 = vpow.pop %v4268
      %v4270 = vmul.f32 %v4267, 1.442695
      %v4271 = vpow.pop %v4270
      %v4272 = vadd.f32 %v4269, 1.0
      %v4273 = vadd.f32 %v4271, 1.0
      %v4274 = vrcp.pop %v4272
      %v4275 = vmul.f32 1.0, %v4274
      %v4276 = vrcp.pop %v4273
      %v4277 = vmul.f32 1.0, %v4276
      %4278 = vrot.lane.b32.xlu0 %v4255, 64
      %v4279 = vpop.permute.xlu0 %4278
      %4280 = vrot.lane.b32.xlu0 %v4261, 64
      %v4281 = vpop.permute.xlu0 %4280
      %v4284 = vmul.f32 %v4275, %v4279
      %v4285 = vmul.f32 %v4277, %v4281
      %4288 = vrot.lane.b32.xlu0 %v4284, 64
      %v4289 = vpop.permute.xlu0 %4288
      %4290 = vrot.lane.b32.xlu0 %v4285, 64
      %v4291 = vpop.permute.xlu0 %4290
      %v4294 = vadd.f32 %v3259, %v4289
      %v4295 = vadd.f32 %v3261, %v4291
      %v4296 = vtanh.pop %v4294
      %v4297 = vtanh.pop %v4295
      %v4298 = vsub.f32 1.0, %v4275
      %v4299 = vsub.f32 1.0, %v4277
      %4302 = vrot.lane.b32.xlu0 %v4296, 96
      %v4303 = vpop.permute.xlu0 %4302
      %4304 = vrot.lane.b32.xlu0 %v4297, 96
      %v4305 = vpop.permute.xlu0 %4304
      %v4308 = vmul.f32 %v4298, %v4303
      %v4309 = vmul.f32 %v4299, %v4305
      %v4312 = vrot.slane %v4203, 7
      %v4313 = vrot.slane %v4204, 7
      %v4316 = vmul.f32 %v4275, %v4312
      %v4317 = vmul.f32 %v4277, %v4313
      %v4318 = vadd.f32 %v4308, %v4316
      %v4319 = vadd.f32 %v4309, %v4317
      %v4320 = vpack.c.bf16 %v4318, %v4318
      %v4321 = vpack.c.bf16 %v4319, %v4319
      %v4324 = vunpack.c.l.b16 %v4320
      %v4325 = vunpack.c.l.b16 %v4321
      %v4326 = vrot.slane %v4325, 7
      %v4327 = vsel %vm3276, %v4326, %v4324
      %v4328 = vpack.c.b16 %v4327, %v4327
      %4329 = vrot.lane.b32.xlu0 %v4328, 96
      %v4330 = vpop.permute.xlu0 %4329
      %v4332 = vsel %vm270, %v4330, 0
      %4334 = vmatprep.subr.bf16.mxu0 0
      %4335 = vmatpush1.bf16.msra.mxu0 %v3289
      %4336 = vmatprep.subr.bf16.mxu0 0
      %4337 = vmatpush1.bf16.msra.mxu0 %v3290
      %4338 = vmatprep.subr.bf16.mxu0 0
      %4339 = vmatpush1.bf16.msra.mxu0 0
      %4340 = vmatprep.subr.bf16.mxu0 0
      %4341 = vmatpush1.bf16.msra.mxu0 0
      %4342 = vmatprep.subr.bf16.mxu0 0
      %4343 = vmatpush1.bf16.msra.mxu0 0
      %4344 = vmatprep.subr.bf16.mxu0 0
      %4345 = vmatpush1.bf16.msra.mxu0 0
      %4346 = vmatprep.subr.bf16.mxu0 0
      %4347 = vmatpush1.bf16.msra.mxu0 0
      %4348 = vmatprep.subr.bf16.mxu0 0
      %4349 = vmatpush1.bf16.msra.mxu0 0
      %4350 = vmatprep.subr.bf16.mxu0 0
      %4351 = vmatpush1.bf16.msra.mxu0 0
      %4352 = vmatprep.subr.bf16.mxu0 0
      %4353 = vmatpush1.bf16.msra.mxu0 0
      %4354 = vmatprep.subr.bf16.mxu0 0
      %4355 = vmatpush1.bf16.msra.mxu0 0
      %4356 = vmatprep.subr.bf16.mxu0 0
      %4357 = vmatpush1.bf16.msra.mxu0 0
      %4358 = vmatprep.subr.bf16.mxu0 0
      %4359 = vmatpush1.bf16.msra.mxu0 0
      %4360 = vmatprep.subr.bf16.mxu0 0
      %4361 = vmatpush1.bf16.msra.mxu0 0
      %4362 = vmatprep.subr.bf16.mxu0 0
      %4363 = vmatpush1.bf16.msra.mxu0 0
      %4364 = vmatprep.subr.bf16.mxu0 0
      %4365 = vmatpush1.bf16.msra.mxu0 0
      %4366 = vmatprep.mubr.bf16.mxu0 0
      %4367 = vmatmul.mubr.bf16.gmra.mrb[0].mxu0 %v4332
      %v4368 = vpop.f32.mrb[0].mxu0
      %v4369 = vadd.f32 %v3268, %v4368
      %v4370 = vpop.f32.mrb[0].mxu0
      %v4371 = vpop.f32.mrb[0].mxu0
      %v4372 = vpop.f32.mrb[0].mxu0
      %4373 = vdwg.mxu0
      %v4375 = vrot.slane %v4369, 7
      %v4378 = vadd.f32 %v3259, %v4375
      %v4379 = vadd.f32 %v3261, %v4369
      %v4380 = vxor.u32 %v4378, 2147483648
      %v4381 = vxor.u32 %v4379, 2147483648
      %v4382 = vmul.f32 %v4380, 1.442695
      %v4383 = vpow.pop %v4382
      %v4384 = vmul.f32 %v4381, 1.442695
      %v4385 = vpow.pop %v4384
      %v4386 = vadd.f32 %v4383, 1.0
      %v4387 = vadd.f32 %v4385, 1.0
      %v4388 = vrcp.pop %v4386
      %v4389 = vmul.f32 1.0, %v4388
      %v4390 = vrcp.pop %v4387
      %v4391 = vmul.f32 1.0, %v4390
      %4392 = vrot.lane.b32.xlu0 %v4375, 64
      %v4393 = vpop.permute.xlu0 %4392
      %4394 = vrot.lane.b32.xlu0 %v4369, 64
      %v4395 = vpop.permute.xlu0 %4394
      %v4398 = vmul.f32 %v4389, %v4393
      %v4399 = vmul.f32 %v4391, %v4395
      %4402 = vrot.lane.b32.xlu0 %v4398, 64
      %v4403 = vpop.permute.xlu0 %4402
      %4404 = vrot.lane.b32.xlu0 %v4399, 64
      %v4405 = vpop.permute.xlu0 %4404
      %v4408 = vadd.f32 %v3259, %v4403
      %v4409 = vadd.f32 %v3261, %v4405
      %v4410 = vtanh.pop %v4408
      %v4411 = vtanh.pop %v4409
      %v4412 = vsub.f32 1.0, %v4389
      %v4413 = vsub.f32 1.0, %v4391
      %4416 = vrot.lane.b32.xlu0 %v4410, 96
      %v4417 = vpop.permute.xlu0 %4416
      %4418 = vrot.lane.b32.xlu0 %v4411, 96
      %v4419 = vpop.permute.xlu0 %4418
      %v4422 = vmul.f32 %v4412, %v4417
      %v4423 = vmul.f32 %v4413, %v4419
      %v4426 = vrot.slane %v4318, 7
      %v4427 = vrot.slane %v4319, 7
      %v4430 = vmul.f32 %v4389, %v4426
      %v4431 = vmul.f32 %v4391, %v4427
      %v4432 = vadd.f32 %v4422, %v4430
      %v4433 = vadd.f32 %v4423, %v4431
      %v4434 = vpack.c.bf16 %v4432, %v4432
      %v4435 = vpack.c.bf16 %v4433, %v4433
      %v4438 = vunpack.c.l.b16 %v4434
      %v4439 = vunpack.c.l.b16 %v4435
      %v4440 = vrot.slane %v4438, 1
      %v4441 = vsel %vm3276, %v4439, %v4440
      %v4442 = vpack.c.b16 %v4441, %v4441
      %4443 = vrot.lane.b32.xlu0 %v4442, 96
      %v4444 = vpop.permute.xlu0 %4443
      %v4446 = vsel %vm270, %v4444, 0
      %4448 = vmatprep.subr.bf16.mxu0 0
      %4449 = vmatpush1.bf16.msra.mxu0 %v3289
      %4450 = vmatprep.subr.bf16.mxu0 0
      %4451 = vmatpush1.bf16.msra.mxu0 %v3290
      %4452 = vmatprep.subr.bf16.mxu0 0
      %4453 = vmatpush1.bf16.msra.mxu0 0
      %4454 = vmatprep.subr.bf16.mxu0 0
      %4455 = vmatpush1.bf16.msra.mxu0 0
      %4456 = vmatprep.subr.bf16.mxu0 0
      %4457 = vmatpush1.bf16.msra.mxu0 0
      %4458 = vmatprep.subr.bf16.mxu0 0
      %4459 = vmatpush1.bf16.msra.mxu0 0
      %4460 = vmatprep.subr.bf16.mxu0 0
      %4461 = vmatpush1.bf16.msra.mxu0 0
      %4462 = vmatprep.subr.bf16.mxu0 0
      %4463 = vmatpush1.bf16.msra.mxu0 0
      %4464 = vmatprep.subr.bf16.mxu0 0
      %4465 = vmatpush1.bf16.msra.mxu0 0
      %4466 = vmatprep.subr.bf16.mxu0 0
      %4467 = vmatpush1.bf16.msra.mxu0 0
      %4468 = vmatprep.subr.bf16.mxu0 0
      %4469 = vmatpush1.bf16.msra.mxu0 0
      %4470 = vmatprep.subr.bf16.mxu0 0
      %4471 = vmatpush1.bf16.msra.mxu0 0
      %4472 = vmatprep.subr.bf16.mxu0 0
      %4473 = vmatpush1.bf16.msra.mxu0 0
      %4474 = vmatprep.subr.bf16.mxu0 0
      %4475 = vmatpush1.bf16.msra.mxu0 0
      %4476 = vmatprep.subr.bf16.mxu0 0
      %4477 = vmatpush1.bf16.msra.mxu0 0
      %4478 = vmatprep.subr.bf16.mxu0 0
      %4479 = vmatpush1.bf16.msra.mxu0 0
      %4480 = vmatprep.mubr.bf16.mxu0 0
      %4481 = vmatmul.mubr.bf16.gmra.mrb[0].mxu0 %v4446
      %v4482 = vpop.f32.mrb[0].mxu0
      %v4483 = vadd.f32 %v3268, %v4482
      %v4484 = vpop.f32.mrb[0].mxu0
      %v4485 = vpop.f32.mrb[0].mxu0
      %v4486 = vpop.f32.mrb[0].mxu0
      %4487 = vdwg.mxu0
      %v4489 = vrot.slane %v4483, 6
      %v4490 = vrot.slane %v4483, 7
      %v4493 = vadd.f32 %v3259, %v4489
      %v4494 = vadd.f32 %v3261, %v4490
      %v4495 = vxor.u32 %v4493, 2147483648
      %v4496 = vxor.u32 %v4494, 2147483648
      %v4497 = vmul.f32 %v4495, 1.442695
      %v4498 = vpow.pop %v4497
      %v4499 = vmul.f32 %v4496, 1.442695
      %v4500 = vpow.pop %v4499
      %v4501 = vadd.f32 %v4498, 1.0
      %v4502 = vadd.f32 %v4500, 1.0
      %v4503 = vrcp.pop %v4501
      %v4504 = vmul.f32 1.0, %v4503
      %v4505 = vrcp.pop %v4502
      %v4506 = vmul.f32 1.0, %v4505
      %4507 = vrot.lane.b32.xlu0 %v4489, 64
      %v4508 = vpop.permute.xlu0 %4507
      %4509 = vrot.lane.b32.xlu0 %v4490, 64
      %v4510 = vpop.permute.xlu0 %4509
      %v4513 = vmul.f32 %v4504, %v4508
      %v4514 = vmul.f32 %v4506, %v4510
      %4517 = vrot.lane.b32.xlu0 %v4513, 64
      %v4518 = vpop.permute.xlu0 %4517
      %4519 = vrot.lane.b32.xlu0 %v4514, 64
      %v4520 = vpop.permute.xlu0 %4519
      %v4523 = vadd.f32 %v3259, %v4518
      %v4524 = vadd.f32 %v3261, %v4520
      %v4525 = vtanh.pop %v4523
      %v4526 = vtanh.pop %v4524
      %v4527 = vsub.f32 1.0, %v4504
      %v4528 = vsub.f32 1.0, %v4506
      %4531 = vrot.lane.b32.xlu0 %v4525, 96
      %v4532 = vpop.permute.xlu0 %4531
      %4533 = vrot.lane.b32.xlu0 %v4526, 96
      %v4534 = vpop.permute.xlu0 %4533
      %v4537 = vmul.f32 %v4527, %v4532
      %v4538 = vmul.f32 %v4528, %v4534
      %v4541 = vrot.slane %v4432, 7
      %v4542 = vrot.slane %v4433, 7
      %v4545 = vmul.f32 %v4504, %v4541
      %v4546 = vmul.f32 %v4506, %v4542
      %v4547 = vadd.f32 %v4537, %v4545
      %v4548 = vadd.f32 %v4538, %v4546
      %v4549 = vpack.c.bf16 %v4547, %v4547
      %v4550 = vpack.c.bf16 %v4548, %v4548
      %v4553 = vunpack.c.l.b16 %v4549
      %v4554 = vunpack.c.l.b16 %v4550
      %v4555 = vrot.slane %v4553, 2
      %v4556 = vrot.slane %v4554, 1
      %v4557 = vsel %vm3276, %v4556, %v4555
      %v4558 = vpack.c.b16 %v4557, %v4557
      %4559 = vrot.lane.b32.xlu0 %v4558, 96
      %v4560 = vpop.permute.xlu0 %4559
      %v4562 = vsel %vm270, %v4560, 0
      %4564 = vmatprep.subr.bf16.mxu0 0
      %4565 = vmatpush1.bf16.msra.mxu0 %v3289
      %4566 = vmatprep.subr.bf16.mxu0 0
      %4567 = vmatpush1.bf16.msra.mxu0 %v3290
      %4568 = vmatprep.subr.bf16.mxu0 0
      %4569 = vmatpush1.bf16.msra.mxu0 0
      %4570 = vmatprep.subr.bf16.mxu0 0
      %4571 = vmatpush1.bf16.msra.mxu0 0
      %4572 = vmatprep.subr.bf16.mxu0 0
      %4573 = vmatpush1.bf16.msra.mxu0 0
      %4574 = vmatprep.subr.bf16.mxu0 0
      %4575 = vmatpush1.bf16.msra.mxu0 0
      %4576 = vmatprep.subr.bf16.mxu0 0
      %4577 = vmatpush1.bf16.msra.mxu0 0
      %4578 = vmatprep.subr.bf16.mxu0 0
      %4579 = vmatpush1.bf16.msra.mxu0 0
      %4580 = vmatprep.subr.bf16.mxu0 0
      %4581 = vmatpush1.bf16.msra.mxu0 0
      %4582 = vmatprep.subr.bf16.mxu0 0
      %4583 = vmatpush1.bf16.msra.mxu0 0
      %4584 = vmatprep.subr.bf16.mxu0 0
      %4585 = vmatpush1.bf16.msra.mxu0 0
      %4586 = vmatprep.subr.bf16.mxu0 0
      %4587 = vmatpush1.bf16.msra.mxu0 0
      %4588 = vmatprep.subr.bf16.mxu0 0
      %4589 = vmatpush1.bf16.msra.mxu0 0
      %4590 = vmatprep.subr.bf16.mxu0 0
      %4591 = vmatpush1.bf16.msra.mxu0 0
      %4592 = vmatprep.subr.bf16.mxu0 0
      %4593 = vmatpush1.bf16.msra.mxu0 0
      %4594 = vmatprep.subr.bf16.mxu0 0
      %4595 = vmatpush1.bf16.msra.mxu0 0
      %4596 = vmatprep.mubr.bf16.mxu0 0
      %4597 = vmatmul.mubr.bf16.gmra.mrb[0].mxu0 %v4562
      %v4598 = vpop.f32.mrb[0].mxu0
      %v4599 = vadd.f32 %v3268, %v4598
      %v4600 = vpop.f32.mrb[0].mxu0
      %v4601 = vpop.f32.mrb[0].mxu0
      %v4602 = vpop.f32.mrb[0].mxu0
      %4603 = vdwg.mxu0
      %v4605 = vrot.slane %v4599, 5
      %v4606 = vrot.slane %v4599, 6
      %v4609 = vadd.f32 %v3259, %v4605
      %v4610 = vadd.f32 %v3261, %v4606
      %v4611 = vxor.u32 %v4609, 2147483648
      %v4612 = vxor.u32 %v4610, 2147483648
      %v4613 = vmul.f32 %v4611, 1.442695
      %v4614 = vpow.pop %v4613
      %v4615 = vmul.f32 %v4612, 1.442695
      %v4616 = vpow.pop %v4615
      %v4617 = vadd.f32 %v4614, 1.0
      %v4618 = vadd.f32 %v4616, 1.0
      %v4619 = vrcp.pop %v4617
      %v4620 = vmul.f32 1.0, %v4619
      %v4621 = vrcp.pop %v4618
      %v4622 = vmul.f32 1.0, %v4621
      %4623 = vrot.lane.b32.xlu0 %v4605, 64
      %v4624 = vpop.permute.xlu0 %4623
      %4625 = vrot.lane.b32.xlu0 %v4606, 64
      %v4626 = vpop.permute.xlu0 %4625
      %v4629 = vmul.f32 %v4620, %v4624
      %v4630 = vmul.f32 %v4622, %v4626
      %4633 = vrot.lane.b32.xlu0 %v4629, 64
      %v4634 = vpop.permute.xlu0 %4633
      %4635 = vrot.lane.b32.xlu0 %v4630, 64
      %v4636 = vpop.permute.xlu0 %4635
      %v4639 = vadd.f32 %v3259, %v4634
      %v4640 = vadd.f32 %v3261, %v4636
      %v4641 = vtanh.pop %v4639
      %v4642 = vtanh.pop %v4640
      %v4643 = vsub.f32 1.0, %v4620
      %v4644 = vsub.f32 1.0, %v4622
      %4647 = vrot.lane.b32.xlu0 %v4641, 96
      %v4648 = vpop.permute.xlu0 %4647
      %4649 = vrot.lane.b32.xlu0 %v4642, 96
      %v4650 = vpop.permute.xlu0 %4649
      %v4653 = vmul.f32 %v4643, %v4648
      %v4654 = vmul.f32 %v4644, %v4650
      %v4657 = vrot.slane %v4547, 7
      %v4658 = vrot.slane %v4548, 7
      %v4661 = vmul.f32 %v4620, %v4657
      %v4662 = vmul.f32 %v4622, %v4658
      %v4663 = vadd.f32 %v4653, %v4661
      %v4664 = vadd.f32 %v4654, %v4662
      %v4665 = vpack.c.bf16 %v4663, %v4663
      %v4666 = vpack.c.bf16 %v4664, %v4664
      %v4669 = vunpack.c.l.b16 %v4665
      %v4670 = vunpack.c.l.b16 %v4666
      %v4671 = vrot.slane %v4669, 3
      %v4672 = vrot.slane %v4670, 2
      %v4673 = vsel %vm3276, %v4672, %v4671
      %v4674 = vpack.c.b16 %v4673, %v4673
      %4675 = vrot.lane.b32.xlu0 %v4674, 96
      %v4676 = vpop.permute.xlu0 %4675
      %v4678 = vsel %vm270, %v4676, 0
      %4680 = vmatprep.subr.bf16.mxu0 0
      %4681 = vmatpush1.bf16.msra.mxu0 %v3289
      %4682 = vmatprep.subr.bf16.mxu0 0
      %4683 = vmatpush1.bf16.msra.mxu0 %v3290
      %4684 = vmatprep.subr.bf16.mxu0 0
      %4685 = vmatpush1.bf16.msra.mxu0 0
      %4686 = vmatprep.subr.bf16.mxu0 0
      %4687 = vmatpush1.bf16.msra.mxu0 0
      %4688 = vmatprep.subr.bf16.mxu0 0
      %4689 = vmatpush1.bf16.msra.mxu0 0
      %4690 = vmatprep.subr.bf16.mxu0 0
      %4691 = vmatpush1.bf16.msra.mxu0 0
      %4692 = vmatprep.subr.bf16.mxu0 0
      %4693 = vmatpush1.bf16.msra.mxu0 0
      %4694 = vmatprep.subr.bf16.mxu0 0
      %4695 = vmatpush1.bf16.msra.mxu0 0
      %4696 = vmatprep.subr.bf16.mxu0 0
      %4697 = vmatpush1.bf16.msra.mxu0 0
      %4698 = vmatprep.subr.bf16.mxu0 0
      %4699 = vmatpush1.bf16.msra.mxu0 0
      %4700 = vmatprep.subr.bf16.mxu0 0
      %4701 = vmatpush1.bf16.msra.mxu0 0
      %4702 = vmatprep.subr.bf16.mxu0 0
      %4703 = vmatpush1.bf16.msra.mxu0 0
      %4704 = vmatprep.subr.bf16.mxu0 0
      %4705 = vmatpush1.bf16.msra.mxu0 0
      %4706 = vmatprep.subr.bf16.mxu0 0
      %4707 = vmatpush1.bf16.msra.mxu0 0
      %4708 = vmatprep.subr.bf16.mxu0 0
      %4709 = vmatpush1.bf16.msra.mxu0 0
      %4710 = vmatprep.subr.bf16.mxu0 0
      %4711 = vmatpush1.bf16.msra.mxu0 0
      %4712 = vmatprep.mubr.bf16.mxu0 0
      %4713 = vmatmul.mubr.bf16.gmra.mrb[0].mxu0 %v4678
      %v4714 = vpop.f32.mrb[0].mxu0
      %v4715 = vadd.f32 %v3268, %v4714
      %v4716 = vpop.f32.mrb[0].mxu0
      %v4717 = vpop.f32.mrb[0].mxu0
      %v4718 = vpop.f32.mrb[0].mxu0
      %4719 = vdwg.mxu0
      %v4721 = vrot.slane %v4715, 4
      %v4722 = vrot.slane %v4715, 5
      %v4725 = vadd.f32 %v3259, %v4721
      %v4726 = vadd.f32 %v3261, %v4722
      %v4727 = vxor.u32 %v4725, 2147483648
      %v4728 = vxor.u32 %v4726, 2147483648
      %v4729 = vmul.f32 %v4727, 1.442695
      %v4730 = vpow.pop %v4729
      %v4731 = vmul.f32 %v4728, 1.442695
      %v4732 = vpow.pop %v4731
      %v4733 = vadd.f32 %v4730, 1.0
      %v4734 = vadd.f32 %v4732, 1.0
      %v4735 = vrcp.pop %v4733
      %v4736 = vmul.f32 1.0, %v4735
      %v4737 = vrcp.pop %v4734
      %v4738 = vmul.f32 1.0, %v4737
      %4739 = vrot.lane.b32.xlu0 %v4721, 64
      %v4740 = vpop.permute.xlu0 %4739
      %4741 = vrot.lane.b32.xlu0 %v4722, 64
      %v4742 = vpop.permute.xlu0 %4741
      %v4745 = vmul.f32 %v4736, %v4740
      %v4746 = vmul.f32 %v4738, %v4742
      %4749 = vrot.lane.b32.xlu0 %v4745, 64
      %v4750 = vpop.permute.xlu0 %4749
      %4751 = vrot.lane.b32.xlu0 %v4746, 64
      %v4752 = vpop.permute.xlu0 %4751
      %v4755 = vadd.f32 %v3259, %v4750
      %v4756 = vadd.f32 %v3261, %v4752
      %v4757 = vtanh.pop %v4755
      %v4758 = vtanh.pop %v4756
      %v4759 = vsub.f32 1.0, %v4736
      %v4760 = vsub.f32 1.0, %v4738
      %4763 = vrot.lane.b32.xlu0 %v4757, 96
      %v4764 = vpop.permute.xlu0 %4763
      %4765 = vrot.lane.b32.xlu0 %v4758, 96
      %v4766 = vpop.permute.xlu0 %4765
      %v4769 = vmul.f32 %v4759, %v4764
      %v4770 = vmul.f32 %v4760, %v4766
      %v4773 = vrot.slane %v4663, 7
      %v4774 = vrot.slane %v4664, 7
      %v4777 = vmul.f32 %v4736, %v4773
      %v4778 = vmul.f32 %v4738, %v4774
      %v4779 = vadd.f32 %v4769, %v4777
      %v4780 = vadd.f32 %v4770, %v4778
      %v4781 = vpack.c.bf16 %v4779, %v4779
      %v4782 = vpack.c.bf16 %v4780, %v4780
      %v4785 = vunpack.c.l.b16 %v4781
      %v4786 = vunpack.c.l.b16 %v4782
      %v4787 = vrot.slane %v4785, 4
      %v4788 = vrot.slane %v4786, 3
      %v4789 = vsel %vm3276, %v4788, %v4787
      %v4790 = vpack.c.b16 %v4789, %v4789
      %4791 = vrot.lane.b32.xlu0 %v4790, 96
      %v4792 = vpop.permute.xlu0 %4791
      %v4794 = vsel %vm270, %v4792, 0
      %4796 = vmatprep.subr.bf16.mxu0 0
      %4797 = vmatpush1.bf16.msra.mxu0 %v3289
      %4798 = vmatprep.subr.bf16.mxu0 0
      %4799 = vmatpush1.bf16.msra.mxu0 %v3290
      %4800 = vmatprep.subr.bf16.mxu0 0
      %4801 = vmatpush1.bf16.msra.mxu0 0
      %4802 = vmatprep.subr.bf16.mxu0 0
      %4803 = vmatpush1.bf16.msra.mxu0 0
      %4804 = vmatprep.subr.bf16.mxu0 0
      %4805 = vmatpush1.bf16.msra.mxu0 0
      %4806 = vmatprep.subr.bf16.mxu0 0
      %4807 = vmatpush1.bf16.msra.mxu0 0
      %4808 = vmatprep.subr.bf16.mxu0 0
      %4809 = vmatpush1.bf16.msra.mxu0 0
      %4810 = vmatprep.subr.bf16.mxu0 0
      %4811 = vmatpush1.bf16.msra.mxu0 0
      %4812 = vmatprep.subr.bf16.mxu0 0
      %4813 = vmatpush1.bf16.msra.mxu0 0
      %4814 = vmatprep.subr.bf16.mxu0 0
      %4815 = vmatpush1.bf16.msra.mxu0 0
      %4816 = vmatprep.subr.bf16.mxu0 0
      %4817 = vmatpush1.bf16.msra.mxu0 0
      %4818 = vmatprep.subr.bf16.mxu0 0
      %4819 = vmatpush1.bf16.msra.mxu0 0
      %4820 = vmatprep.subr.bf16.mxu0 0
      %4821 = vmatpush1.bf16.msra.mxu0 0
      %4822 = vmatprep.subr.bf16.mxu0 0
      %4823 = vmatpush1.bf16.msra.mxu0 0
      %4824 = vmatprep.subr.bf16.mxu0 0
      %4825 = vmatpush1.bf16.msra.mxu0 0
      %4826 = vmatprep.subr.bf16.mxu0 0
      %4827 = vmatpush1.bf16.msra.mxu0 0
      %4828 = vmatprep.mubr.bf16.mxu0 0
      %4829 = vmatmul.mubr.bf16.gmra.mrb[0].mxu0 %v4794
      %v4830 = vpop.f32.mrb[0].mxu0
      %v4831 = vadd.f32 %v3268, %v4830
      %v4832 = vpop.f32.mrb[0].mxu0
      %v4833 = vpop.f32.mrb[0].mxu0
      %v4834 = vpop.f32.mrb[0].mxu0
      %4835 = vdwg.mxu0
      %v4837 = vrot.slane %v4831, 3
      %v4838 = vrot.slane %v4831, 4
      %v4841 = vadd.f32 %v3259, %v4837
      %v4842 = vadd.f32 %v3261, %v4838
      %v4843 = vxor.u32 %v4841, 2147483648
      %v4844 = vxor.u32 %v4842, 2147483648
      %v4845 = vmul.f32 %v4843, 1.442695
      %v4846 = vpow.pop %v4845
      %v4847 = vmul.f32 %v4844, 1.442695
      %v4848 = vpow.pop %v4847
      %v4849 = vadd.f32 %v4846, 1.0
      %v4850 = vadd.f32 %v4848, 1.0
      %v4851 = vrcp.pop %v4849
      %v4852 = vmul.f32 1.0, %v4851
      %v4853 = vrcp.pop %v4850
      %v4854 = vmul.f32 1.0, %v4853
      %4855 = vrot.lane.b32.xlu0 %v4837, 64
      %v4856 = vpop.permute.xlu0 %4855
      %4857 = vrot.lane.b32.xlu0 %v4838, 64
      %v4858 = vpop.permute.xlu0 %4857
      %v4861 = vmul.f32 %v4852, %v4856
      %v4862 = vmul.f32 %v4854, %v4858
      %4865 = vrot.lane.b32.xlu0 %v4861, 64
      %v4866 = vpop.permute.xlu0 %4865
      %4867 = vrot.lane.b32.xlu0 %v4862, 64
      %v4868 = vpop.permute.xlu0 %4867
      %v4871 = vadd.f32 %v3259, %v4866
      %v4872 = vadd.f32 %v3261, %v4868
      %v4873 = vtanh.pop %v4871
      %v4874 = vtanh.pop %v4872
      %v4875 = vsub.f32 1.0, %v4852
      %v4876 = vsub.f32 1.0, %v4854
      %4879 = vrot.lane.b32.xlu0 %v4873, 96
      %v4880 = vpop.permute.xlu0 %4879
      %4881 = vrot.lane.b32.xlu0 %v4874, 96
      %v4882 = vpop.permute.xlu0 %4881
      %v4885 = vmul.f32 %v4875, %v4880
      %v4886 = vmul.f32 %v4876, %v4882
      %v4889 = vrot.slane %v4779, 7
      %v4890 = vrot.slane %v4780, 7
      %v4893 = vmul.f32 %v4852, %v4889
      %v4894 = vmul.f32 %v4854, %v4890
      %v4895 = vadd.f32 %v4885, %v4893
      %v4896 = vadd.f32 %v4886, %v4894
      %v4897 = vpack.c.bf16 %v4895, %v4895
      %v4898 = vpack.c.bf16 %v4896, %v4896
      %v4901 = vunpack.c.l.b16 %v4897
      %v4902 = vunpack.c.l.b16 %v4898
      %v4903 = vrot.slane %v4901, 5
      %v4904 = vrot.slane %v4902, 4
      %v4905 = vsel %vm3276, %v4904, %v4903
      %v4906 = vpack.c.b16 %v4905, %v4905
      %4907 = vrot.lane.b32.xlu0 %v4906, 96
      %v4908 = vpop.permute.xlu0 %4907
      %v4910 = vsel %vm270, %v4908, 0
      %4912 = vmatprep.subr.bf16.mxu0 0
      %4913 = vmatpush1.bf16.msra.mxu0 %v3289
      %4914 = vmatprep.subr.bf16.mxu0 0
      %4915 = vmatpush1.bf16.msra.mxu0 %v3290
      %4916 = vmatprep.subr.bf16.mxu0 0
      %4917 = vmatpush1.bf16.msra.mxu0 0
      %4918 = vmatprep.subr.bf16.mxu0 0
      %4919 = vmatpush1.bf16.msra.mxu0 0
      %4920 = vmatprep.subr.bf16.mxu0 0
      %4921 = vmatpush1.bf16.msra.mxu0 0
      %4922 = vmatprep.subr.bf16.mxu0 0
      %4923 = vmatpush1.bf16.msra.mxu0 0
      %4924 = vmatprep.subr.bf16.mxu0 0
      %4925 = vmatpush1.bf16.msra.mxu0 0
      %4926 = vmatprep.subr.bf16.mxu0 0
      %4927 = vmatpush1.bf16.msra.mxu0 0
      %4928 = vmatprep.subr.bf16.mxu0 0
      %4929 = vmatpush1.bf16.msra.mxu0 0
      %4930 = vmatprep.subr.bf16.mxu0 0
      %4931 = vmatpush1.bf16.msra.mxu0 0
      %4932 = vmatprep.subr.bf16.mxu0 0
      %4933 = vmatpush1.bf16.msra.mxu0 0
      %4934 = vmatprep.subr.bf16.mxu0 0
      %4935 = vmatpush1.bf16.msra.mxu0 0
      %4936 = vmatprep.subr.bf16.mxu0 0
      %4937 = vmatpush1.bf16.msra.mxu0 0
      %4938 = vmatprep.subr.bf16.mxu0 0
      %4939 = vmatpush1.bf16.msra.mxu0 0
      %4940 = vmatprep.subr.bf16.mxu0 0
      %4941 = vmatpush1.bf16.msra.mxu0 0
      %4942 = vmatprep.subr.bf16.mxu0 0
      %4943 = vmatpush1.bf16.msra.mxu0 0
      %4944 = vmatprep.mubr.bf16.mxu0 0
      %4945 = vmatmul.mubr.bf16.gmra.mrb[0].mxu0 %v4910
      %v4946 = vpop.f32.mrb[0].mxu0
      %v4947 = vadd.f32 %v3268, %v4946
      %v4948 = vpop.f32.mrb[0].mxu0
      %v4949 = vpop.f32.mrb[0].mxu0
      %v4950 = vpop.f32.mrb[0].mxu0
      %4951 = vdwg.mxu0
      %v4953 = vrot.slane %v4947, 2
      %v4954 = vrot.slane %v4947, 3
      %v4957 = vadd.f32 %v3259, %v4953
      %v4958 = vadd.f32 %v3261, %v4954
      %v4959 = vxor.u32 %v4957, 2147483648
      %v4960 = vxor.u32 %v4958, 2147483648
      %v4961 = vmul.f32 %v4959, 1.442695
      %v4962 = vpow.pop %v4961
      %v4963 = vmul.f32 %v4960, 1.442695
      %v4964 = vpow.pop %v4963
      %v4965 = vadd.f32 %v4962, 1.0
      %v4966 = vadd.f32 %v4964, 1.0
      %v4967 = vrcp.pop %v4965
      %v4968 = vmul.f32 1.0, %v4967
      %v4969 = vrcp.pop %v4966
      %v4970 = vmul.f32 1.0, %v4969
      %4971 = vrot.lane.b32.xlu0 %v4953, 64
      %v4972 = vpop.permute.xlu0 %4971
      %4973 = vrot.lane.b32.xlu0 %v4954, 64
      %v4974 = vpop.permute.xlu0 %4973
      %v4977 = vmul.f32 %v4968, %v4972
      %v4978 = vmul.f32 %v4970, %v4974
      %4981 = vrot.lane.b32.xlu0 %v4977, 64
      %v4982 = vpop.permute.xlu0 %4981
      %4983 = vrot.lane.b32.xlu0 %v4978, 64
      %v4984 = vpop.permute.xlu0 %4983
      %v4987 = vadd.f32 %v3259, %v4982
      %v4988 = vadd.f32 %v3261, %v4984
      %v4989 = vtanh.pop %v4987
      %v4990 = vtanh.pop %v4988
      %v4991 = vsub.f32 1.0, %v4968
      %v4992 = vsub.f32 1.0, %v4970
      %4995 = vrot.lane.b32.xlu0 %v4989, 96
      %v4996 = vpop.permute.xlu0 %4995
      %4997 = vrot.lane.b32.xlu0 %v4990, 96
      %v4998 = vpop.permute.xlu0 %4997
      %v5001 = vmul.f32 %v4991, %v4996
      %v5002 = vmul.f32 %v4992, %v4998
      %v5005 = vrot.slane %v4895, 7
      %v5006 = vrot.slane %v4896, 7
      %v5009 = vmul.f32 %v4968, %v5005
      %v5010 = vmul.f32 %v4970, %v5006
      %v5011 = vadd.f32 %v5001, %v5009
      %v5012 = vadd.f32 %v5002, %v5010
      %v5013 = vpack.c.bf16 %v5011, %v5011
      %v5014 = vpack.c.bf16 %v5012, %v5012
      %v5017 = vunpack.c.l.b16 %v5013
      %v5018 = vunpack.c.l.b16 %v5014
      %v5019 = vrot.slane %v5017, 6
      %v5020 = vrot.slane %v5018, 5
      %v5021 = vsel %vm3276, %v5020, %v5019
      %v5022 = vpack.c.b16 %v5021, %v5021
      %5023 = vrot.lane.b32.xlu0 %v5022, 96
      %v5024 = vpop.permute.xlu0 %5023
      %v5026 = vsel %vm270, %v5024, 0
      %5028 = vmatprep.subr.bf16.mxu0 0
      %5029 = vmatpush1.bf16.msra.mxu0 %v3289
      %5030 = vmatprep.subr.bf16.mxu0 0
      %5031 = vmatpush1.bf16.msra.mxu0 %v3290
      %5032 = vmatprep.subr.bf16.mxu0 0
      %5033 = vmatpush1.bf16.msra.mxu0 0
      %5034 = vmatprep.subr.bf16.mxu0 0
      %5035 = vmatpush1.bf16.msra.mxu0 0
      %5036 = vmatprep.subr.bf16.mxu0 0
      %5037 = vmatpush1.bf16.msra.mxu0 0
      %5038 = vmatprep.subr.bf16.mxu0 0
      %5039 = vmatpush1.bf16.msra.mxu0 0
      %5040 = vmatprep.subr.bf16.mxu0 0
      %5041 = vmatpush1.bf16.msra.mxu0 0
      %5042 = vmatprep.subr.bf16.mxu0 0
      %5043 = vmatpush1.bf16.msra.mxu0 0
      %5044 = vmatprep.subr.bf16.mxu0 0
      %5045 = vmatpush1.bf16.msra.mxu0 0
      %5046 = vmatprep.subr.bf16.mxu0 0
      %5047 = vmatpush1.bf16.msra.mxu0 0
      %5048 = vmatprep.subr.bf16.mxu0 0
      %5049 = vmatpush1.bf16.msra.mxu0 0
      %5050 = vmatprep.subr.bf16.mxu0 0
      %5051 = vmatpush1.bf16.msra.mxu0 0
      %5052 = vmatprep.subr.bf16.mxu0 0
      %5053 = vmatpush1.bf16.msra.mxu0 0
      %5054 = vmatprep.subr.bf16.mxu0 0
      %5055 = vmatpush1.bf16.msra.mxu0 0
      %5056 = vmatprep.subr.bf16.mxu0 0
      %5057 = vmatpush1.bf16.msra.mxu0 0
      %5058 = vmatprep.subr.bf16.mxu0 0
      %5059 = vmatpush1.bf16.msra.mxu0 0
      %5060 = vmatprep.mubr.bf16.mxu0 0
      %5061 = vmatmul.mubr.bf16.gmra.mrb[0].mxu0 %v5026
      %v5062 = vpop.f32.mrb[0].mxu0
      %v5063 = vadd.f32 %v3268, %v5062
      %v5064 = vpop.f32.mrb[0].mxu0
      %v5065 = vpop.f32.mrb[0].mxu0
      %v5066 = vpop.f32.mrb[0].mxu0
      %5067 = vdwg.mxu0
      %v5069 = vrot.slane %v5063, 1
      %v5070 = vrot.slane %v5063, 2
      %v5073 = vadd.f32 %v3259, %v5069
      %v5074 = vadd.f32 %v3261, %v5070
      %v5075 = vxor.u32 %v5073, 2147483648
      %v5076 = vxor.u32 %v5074, 2147483648
      %v5077 = vmul.f32 %v5075, 1.442695
      %v5078 = vpow.pop %v5077
      %v5079 = vmul.f32 %v5076, 1.442695
      %v5080 = vpow.pop %v5079
      %v5081 = vadd.f32 %v5078, 1.0
      %v5082 = vadd.f32 %v5080, 1.0
      %v5083 = vrcp.pop %v5081
      %v5084 = vmul.f32 1.0, %v5083
      %v5085 = vrcp.pop %v5082
      %v5086 = vmul.f32 1.0, %v5085
      %5087 = vrot.lane.b32.xlu0 %v5069, 64
      %v5088 = vpop.permute.xlu0 %5087
      %5089 = vrot.lane.b32.xlu0 %v5070, 64
      %v5090 = vpop.permute.xlu0 %5089
      %v5093 = vmul.f32 %v5084, %v5088
      %v5094 = vmul.f32 %v5086, %v5090
      %5097 = vrot.lane.b32.xlu0 %v5093, 64
      %v5098 = vpop.permute.xlu0 %5097
      %5099 = vrot.lane.b32.xlu0 %v5094, 64
      %v5100 = vpop.permute.xlu0 %5099
      %v5103 = vadd.f32 %v3259, %v5098
      %v5104 = vadd.f32 %v3261, %v5100
      %v5105 = vtanh.pop %v5103
      %v5106 = vtanh.pop %v5104
      %v5107 = vsub.f32 1.0, %v5084
      %v5108 = vsub.f32 1.0, %v5086
      %5111 = vrot.lane.b32.xlu0 %v5105, 96
      %v5112 = vpop.permute.xlu0 %5111
      %5113 = vrot.lane.b32.xlu0 %v5106, 96
      %v5114 = vpop.permute.xlu0 %5113
      %v5117 = vmul.f32 %v5107, %v5112
      %v5118 = vmul.f32 %v5108, %v5114
      %v5121 = vrot.slane %v5011, 7
      %v5122 = vrot.slane %v5012, 7
      %v5125 = vmul.f32 %v5084, %v5121
      %v5126 = vmul.f32 %v5086, %v5122
      %v5127 = vadd.f32 %v5117, %v5125
      %v5128 = vadd.f32 %v5118, %v5126
      %vm5129 = vcmask 1040384
      %v5130 = vsel %vm5129, %v3394, %v3508
      %v5131 = vsel %vm5129, %v3395, %v3509
      %vm5132 = vcmask 1041408
      %v5133 = vsel %vm5132, %v5130, %v3623
      %v5134 = vsel %vm5132, %v5131, %v3624
      %vm5135 = vcmask 1042432
      %v5136 = vsel %vm5135, %v5133, %v3739
      %v5137 = vsel %vm5135, %v5134, %v3740
      %vm5138 = vcmask 1043456
      %v5139 = vsel %vm5138, %v5136, %v3855
      %v5140 = vsel %vm5138, %v5137, %v3856
      %vm5141 = vcmask 1044480
      %v5142 = vsel %vm5141, %v5139, %v3971
      %v5143 = vsel %vm5141, %v5140, %v3972
      %vm5144 = vcmask 1045504
      %v5145 = vsel %vm5144, %v5142, %v4087
      %v5146 = vsel %vm5144, %v5143, %v4088
      %vm5147 = vcmask 1046528
      %v5148 = vsel %vm5147, %v5145, %v4203
      %v5149 = vsel %vm5147, %v5146, %v4204
      %v5150 = vsel %vm5129, %v4318, %v4432
      %v5151 = vsel %vm5129, %v4319, %v4433
      %v5152 = vsel %vm5132, %v5150, %v4547
      %v5153 = vsel %vm5132, %v5151, %v4548
      %v5154 = vsel %vm5135, %v5152, %v4663
      %v5155 = vsel %vm5135, %v5153, %v4664
      %v5156 = vsel %vm5138, %v5154, %v4779
      %v5157 = vsel %vm5138, %v5155, %v4780
      %v5158 = vsel %vm5141, %v5156, %v4895
      %v5159 = vsel %vm5141, %v5157, %v4896
      %v5160 = vsel %vm5144, %v5158, %v5011
      %v5161 = vsel %vm5144, %v5159, %v5012
      %v5162 = vsel %vm5147, %v5160, %v5127
      %v5163 = vsel %vm5147, %v5161, %v5128
      %5168 = vrot.lane.b32.xlu0 %v5148, 96
      %v5169 = vpop.permute.xlu0 %5168
      %5170 = vrot.lane.b32.xlu0 %v5162, 96
      %v5171 = vpop.permute.xlu0 %5170
      %5172 = vrot.lane.b32.xlu0 %v5149, 96
      %v5173 = vpop.permute.xlu0 %5172
      %5174 = vrot.lane.b32.xlu0 %v5163, 96
      %v5175 = vpop.permute.xlu0 %5174
      %s5180 = scalar_lea.vmem [#allocation3], %s3256
      %5181 = vst.msk [vmem:[%s5180] sm:$0xff] %vm270, %v5169
      %5182 = vst.msk [vmem:[%s5180 + $0x8] sm:$0xff] %vm270, %v5171
      %5183 = vst.msk [vmem:[%s5180 + $0x40] sm:$0xff] %vm270, %v5173
      %5184 = vst.msk [vmem:[%s5180 + $0x48] sm:$0xff] %vm270, %v5175
    $region86: #{tpu_custom_call.1} parent=1 // loop_footer
      %s3253 = sadd.s32 1, %s3249
    $region87: #{tpu_custom_call.1} parent=1 // loop_footer_branch
      %3248 = sbr.rel target = $region83
    $region88: #{tpu_custom_call.1} parent=1 // loop_exit
      _
    %v5185 = vld [vmem:[#allocation2] sm:$0xff]
    %v5186 = vld [vmem:[#allocation2 + $0x8] sm:$0xff]
    %v5187 = vld [vmem:[#allocation2 + $0x10] sm:$0xff]
    %v5188 = vld [vmem:[#allocation2 + $0x18] sm:$0xff]
    %v5189 = vld [vmem:[#allocation2 + $0x20] sm:$0xff]
    %v5190 = vld [vmem:[#allocation2 + $0x28] sm:$0xff]
    %v5191 = vld [vmem:[#allocation2 + $0x30] sm:$0xff]
    %v5192 = vld [vmem:[#allocation2 + $0x38] sm:$0xff]
    %v5193 = vld [vmem:[#allocation2 + $0x40] sm:$0xff]
    %v5194 = vld [vmem:[#allocation2 + $0x48] sm:$0xff]
    %v5195 = vld [vmem:[#allocation2 + $0x50] sm:$0xff]
    %v5196 = vld [vmem:[#allocation2 + $0x58] sm:$0xff]
    %v5197 = vld [vmem:[#allocation2 + $0x60] sm:$0xff]
    %v5198 = vld [vmem:[#allocation2 + $0x68] sm:$0xff]
    %v5199 = vld [vmem:[#allocation2 + $0x70] sm:$0xff]
    %v5200 = vld [vmem:[#allocation2 + $0x78] sm:$0xff]
    %v5201 = vld [vmem:[#allocation3] sm:$0xff]
    %v5202 = vld [vmem:[#allocation3 + $0x8] sm:$0xff]
    %v5203 = vld [vmem:[#allocation3 + $0x10] sm:$0xff]
    %v5204 = vld [vmem:[#allocation3 + $0x18] sm:$0xff]
    %v5205 = vld [vmem:[#allocation3 + $0x20] sm:$0xff]
    %v5206 = vld [vmem:[#allocation3 + $0x28] sm:$0xff]
    %v5207 = vld [vmem:[#allocation3 + $0x30] sm:$0xff]
    %v5208 = vld [vmem:[#allocation3 + $0x38] sm:$0xff]
    %v5209 = vld [vmem:[#allocation3 + $0x40] sm:$0xff]
    %v5210 = vld [vmem:[#allocation3 + $0x48] sm:$0xff]
    %v5211 = vld [vmem:[#allocation3 + $0x50] sm:$0xff]
    %v5212 = vld [vmem:[#allocation3 + $0x58] sm:$0xff]
    %v5213 = vld [vmem:[#allocation3 + $0x60] sm:$0xff]
    %v5214 = vld [vmem:[#allocation3 + $0x68] sm:$0xff]
    %v5215 = vld [vmem:[#allocation3 + $0x70] sm:$0xff]
    %v5216 = vld [vmem:[#allocation3 + $0x78] sm:$0xff]
    %v5217 = vpack.c.bf16 %v5202, %v5201
    %v5218 = vpack.c.bf16 %v5204, %v5203
    %v5219 = vpack.c.bf16 %v5206, %v5205
    %v5220 = vpack.c.bf16 %v5208, %v5207
    %v5221 = vpack.c.bf16 %v5210, %v5209
    %v5222 = vpack.c.bf16 %v5212, %v5211
    %v5223 = vpack.c.bf16 %v5214, %v5213
    %v5224 = vpack.c.bf16 %v5216, %v5215
    %v5225 = vld [vmem:[%s12] sm:$0xf]
    %v5226 = vld [vmem:[%s12 + $0x4] sm:$0xf]
    %v5227 = vld [vmem:[%s12 + $0x8] sm:$0xf]
    %v5228 = vld [vmem:[%s12 + $0xc] sm:$0xf]
    %v5229 = vld [vmem:[%s13] sm:$0x1]
    %v5231 = vlaneseq
    %v5232 = vshrl.u32 %v5231, 7
    %v5233 = vsub.s32 0, %v5232
    %v5234 = vrot.slane %v5229, %v5233
    %v5240 = vunpack.c.l.b16 %v5225
    %v5241 = vunpack.c.l.b16 %v5226
    %v5242 = vunpack.c.l.b16 %v5227
    %v5243 = vunpack.c.l.b16 %v5228
    %v5244 = vpack.c.b16 %v5241, %v5240
    %v5245 = vpack.c.b16 %v5243, %v5242
    %v5249 = vsel %vm270, %v5217, 0
    %v5252 = vsel %vm270, %v5218, 0
    %v5255 = vsel %vm270, %v5219, 0
    %v5258 = vsel %vm270, %v5220, 0
    %v5261 = vsel %vm270, %v5221, 0
    %v5264 = vsel %vm270, %v5222, 0
    %v5267 = vsel %vm270, %v5223, 0
    %v5270 = vsel %vm270, %v5224, 0
    %5272 = vmatprep.subr.bf16.mxu0 0
    %5273 = vmatpush1.bf16.msra.mxu0 %v5244
    %5274 = vmatprep.subr.bf16.mxu0 0
    %5275 = vmatpush1.bf16.msra.mxu0 %v5245
    %5276 = vmatprep.subr.bf16.mxu0 0
    %5277 = vmatpush1.bf16.msra.mxu0 0
    %5278 = vmatprep.subr.bf16.mxu0 0
    %5279 = vmatpush1.bf16.msra.mxu0 0
    %5280 = vmatprep.subr.bf16.mxu0 0
    %5281 = vmatpush1.bf16.msra.mxu0 0
    %5282 = vmatprep.subr.bf16.mxu0 0
    %5283 = vmatpush1.bf16.msra.mxu0 0
    %5284 = vmatprep.subr.bf16.mxu0 0
    %5285 = vmatpush1.bf16.msra.mxu0 0
    %5286 = vmatprep.subr.bf16.mxu0 0
    %5287 = vmatpush1.bf16.msra.mxu0 0
    %5288 = vmatprep.subr.bf16.mxu0 0
    %5289 = vmatpush1.bf16.msra.mxu0 0
    %5290 = vmatprep.subr.bf16.mxu0 0
    %5291 = vmatpush1.bf16.msra.mxu0 0
    %5292 = vmatprep.subr.bf16.mxu0 0
    %5293 = vmatpush1.bf16.msra.mxu0 0
    %5294 = vmatprep.subr.bf16.mxu0 0
    %5295 = vmatpush1.bf16.msra.mxu0 0
    %5296 = vmatprep.subr.bf16.mxu0 0
    %5297 = vmatpush1.bf16.msra.mxu0 0
    %5298 = vmatprep.subr.bf16.mxu0 0
    %5299 = vmatpush1.bf16.msra.mxu0 0
    %5300 = vmatprep.subr.bf16.mxu0 0
    %5301 = vmatpush1.bf16.msra.mxu0 0
    %5302 = vmatprep.subr.bf16.mxu0 0
    %5303 = vmatpush1.bf16.msra.mxu0 0
    %5304 = vmatprep.mubr.bf16.mxu0 0
    %5305 = vmatmul.mubr.bf16.gmra.mrb[0].mxu0 %v5249
    %v5306 = vpop.f32.mrb[0].mxu0
    %v5307 = vadd.f32 %v5234, %v5306
    %v5308 = vpop.f32.mrb[0].mxu0
    %v5309 = vpop.f32.mrb[0].mxu0
    %v5310 = vadd.f32 %v5234, %v5309
    %v5311 = vpop.f32.mrb[0].mxu0
    %5312 = vmatprep.mubr.bf16.mxu0 0
    %5313 = vmatmul.mubr.bf16.gmra.mrb[0].mxu0 %v5252
    %v5314 = vpop.f32.mrb[0].mxu0
    %v5315 = vadd.f32 %v5234, %v5314
    %v5316 = vpop.f32.mrb[0].mxu0
    %v5317 = vpop.f32.mrb[0].mxu0
    %v5318 = vadd.f32 %v5234, %v5317
    %v5319 = vpop.f32.mrb[0].mxu0
    %5320 = vmatprep.mubr.bf16.mxu0 0
    %5321 = vmatmul.mubr.bf16.gmra.mrb[0].mxu0 %v5255
    %v5322 = vpop.f32.mrb[0].mxu0
    %v5323 = vadd.f32 %v5234, %v5322
    %v5324 = vpop.f32.mrb[0].mxu0
    %v5325 = vpop.f32.mrb[0].mxu0
    %v5326 = vadd.f32 %v5234, %v5325
    %v5327 = vpop.f32.mrb[0].mxu0
    %5328 = vmatprep.mubr.bf16.mxu0 0
    %5329 = vmatmul.mubr.bf16.gmra.mrb[0].mxu0 %v5258
    %v5330 = vpop.f32.mrb[0].mxu0
    %v5331 = vadd.f32 %v5234, %v5330
    %v5332 = vpop.f32.mrb[0].mxu0
    %v5333 = vpop.f32.mrb[0].mxu0
    %v5334 = vadd.f32 %v5234, %v5333
    %v5335 = vpop.f32.mrb[0].mxu0
    %5336 = vmatprep.mubr.bf16.mxu0 0
    %5337 = vmatmul.mubr.bf16.gmra.mrb[0].mxu0 %v5261
    %v5338 = vpop.f32.mrb[0].mxu0
    %v5339 = vadd.f32 %v5234, %v5338
    %v5340 = vpop.f32.mrb[0].mxu0
    %v5341 = vpop.f32.mrb[0].mxu0
    %v5342 = vadd.f32 %v5234, %v5341
    %v5343 = vpop.f32.mrb[0].mxu0
    %5344 = vmatprep.mubr.bf16.mxu0 0
    %5345 = vmatmul.mubr.bf16.gmra.mrb[0].mxu0 %v5264
    %v5346 = vpop.f32.mrb[0].mxu0
    %v5347 = vadd.f32 %v5234, %v5346
    %v5348 = vpop.f32.mrb[0].mxu0
    %v5349 = vpop.f32.mrb[0].mxu0
    %v5350 = vadd.f32 %v5234, %v5349
    %v5351 = vpop.f32.mrb[0].mxu0
    %5352 = vmatprep.mubr.bf16.mxu0 0
    %5353 = vmatmul.mubr.bf16.gmra.mrb[0].mxu0 %v5267
    %v5354 = vpop.f32.mrb[0].mxu0
    %v5355 = vadd.f32 %v5234, %v5354
    %v5356 = vpop.f32.mrb[0].mxu0
    %v5357 = vpop.f32.mrb[0].mxu0
    %v5358 = vadd.f32 %v5234, %v5357
    %v5359 = vpop.f32.mrb[0].mxu0
    %5360 = vmatprep.mubr.bf16.mxu0 0
    %5361 = vmatmul.mubr.bf16.gmra.mrb[0].mxu0 %v5270
    %v5362 = vpop.f32.mrb[0].mxu0
    %v5363 = vadd.f32 %v5234, %v5362
    %v5364 = vpop.f32.mrb[0].mxu0
    %v5365 = vpop.f32.mrb[0].mxu0
    %v5366 = vadd.f32 %v5234, %v5365
    %v5367 = vpop.f32.mrb[0].mxu0
    %5368 = vdwg.mxu0
    %5385 = vrot.lane.b32.xlu0 %v5185, 32
    %v5386 = vpop.permute.xlu0 %5385
    %5387 = vrot.lane.b32.xlu0 %v5186, 32
    %v5388 = vpop.permute.xlu0 %5387
    %5389 = vrot.lane.b32.xlu0 %v5187, 32
    %v5390 = vpop.permute.xlu0 %5389
    %5391 = vrot.lane.b32.xlu0 %v5188, 32
    %v5392 = vpop.permute.xlu0 %5391
    %5393 = vrot.lane.b32.xlu0 %v5189, 32
    %v5394 = vpop.permute.xlu0 %5393
    %5395 = vrot.lane.b32.xlu0 %v5190, 32
    %v5396 = vpop.permute.xlu0 %5395
    %5397 = vrot.lane.b32.xlu0 %v5191, 32
    %v5398 = vpop.permute.xlu0 %5397
    %5399 = vrot.lane.b32.xlu0 %v5192, 32
    %v5400 = vpop.permute.xlu0 %5399
    %5401 = vrot.lane.b32.xlu0 %v5193, 32
    %v5402 = vpop.permute.xlu0 %5401
    %5403 = vrot.lane.b32.xlu0 %v5194, 32
    %v5404 = vpop.permute.xlu0 %5403
    %5405 = vrot.lane.b32.xlu0 %v5195, 32
    %v5406 = vpop.permute.xlu0 %5405
    %5407 = vrot.lane.b32.xlu0 %v5196, 32
    %v5408 = vpop.permute.xlu0 %5407
    %5409 = vrot.lane.b32.xlu0 %v5197, 32
    %v5410 = vpop.permute.xlu0 %5409
    %5411 = vrot.lane.b32.xlu0 %v5198, 32
    %v5412 = vpop.permute.xlu0 %5411
    %5413 = vrot.lane.b32.xlu0 %v5199, 32
    %v5414 = vpop.permute.xlu0 %5413
    %5415 = vrot.lane.b32.xlu0 %v5200, 32
    %v5416 = vpop.permute.xlu0 %5415
    %5449 = vrot.lane.b32.xlu0 %v5307, 32
    %v5450 = vpop.permute.xlu0 %5449
    %5451 = vrot.lane.b32.xlu0 %v5310, 32
    %v5452 = vpop.permute.xlu0 %5451
    %5453 = vrot.lane.b32.xlu0 %v5315, 32
    %v5454 = vpop.permute.xlu0 %5453
    %5455 = vrot.lane.b32.xlu0 %v5318, 32
    %v5456 = vpop.permute.xlu0 %5455
    %5457 = vrot.lane.b32.xlu0 %v5323, 32
    %v5458 = vpop.permute.xlu0 %5457
    %5459 = vrot.lane.b32.xlu0 %v5326, 32
    %v5460 = vpop.permute.xlu0 %5459
    %5461 = vrot.lane.b32.xlu0 %v5331, 32
    %v5462 = vpop.permute.xlu0 %5461
    %5463 = vrot.lane.b32.xlu0 %v5334, 32
    %v5464 = vpop.permute.xlu0 %5463
    %5465 = vrot.lane.b32.xlu0 %v5339, 32
    %v5466 = vpop.permute.xlu0 %5465
    %5467 = vrot.lane.b32.xlu0 %v5342, 32
    %v5468 = vpop.permute.xlu0 %5467
    %5469 = vrot.lane.b32.xlu0 %v5347, 32
    %v5470 = vpop.permute.xlu0 %5469
    %5471 = vrot.lane.b32.xlu0 %v5350, 32
    %v5472 = vpop.permute.xlu0 %5471
    %5473 = vrot.lane.b32.xlu0 %v5355, 32
    %v5474 = vpop.permute.xlu0 %5473
    %5475 = vrot.lane.b32.xlu0 %v5358, 32
    %v5476 = vpop.permute.xlu0 %5475
    %5477 = vrot.lane.b32.xlu0 %v5363, 32
    %v5478 = vpop.permute.xlu0 %5477
    %5479 = vrot.lane.b32.xlu0 %v5366, 32
    %v5480 = vpop.permute.xlu0 %5479
    %v5497 = vsel %vm270, %v5386, %v5450
    %v5498 = vsel %vm270, %v5388, %v5452
    %v5499 = vsel %vm270, %v5390, %v5454
    %v5500 = vsel %vm270, %v5392, %v5456
    %v5501 = vsel %vm270, %v5394, %v5458
    %v5502 = vsel %vm270, %v5396, %v5460
    %v5503 = vsel %vm270, %v5398, %v5462
    %v5504 = vsel %vm270, %v5400, %v5464
    %v5505 = vsel %vm270, %v5402, %v5466
    %v5506 = vsel %vm270, %v5404, %v5468
    %v5507 = vsel %vm270, %v5406, %v5470
    %v5508 = vsel %vm270, %v5408, %v5472
    %v5509 = vsel %vm270, %v5410, %v5474
    %v5510 = vsel %vm270, %v5412, %v5476
    %v5511 = vsel %vm270, %v5414, %v5478
    %v5512 = vsel %vm270, %v5416, %v5480
    %v5513 = vpack.c.bf16 %v5498, %v5497
    %v5514 = vpack.c.bf16 %v5500, %v5499
    %v5515 = vpack.c.bf16 %v5502, %v5501
    %v5516 = vpack.c.bf16 %v5504, %v5503
    %v5517 = vpack.c.bf16 %v5506, %v5505
    %v5518 = vpack.c.bf16 %v5508, %v5507
    %v5519 = vpack.c.bf16 %v5510, %v5509
    %v5520 = vpack.c.bf16 %v5512, %v5511
    %v5521 = vld [vmem:[%s14] sm:$0xf]
    %v5522 = vld [vmem:[%s14 + $0x4] sm:$0xf]
    %v5523 = vld [vmem:[%s14 + $0x8] sm:$0xf]
    %v5524 = vld [vmem:[%s14 + $0xc] sm:$0xf]
    %v5525 = vld [vmem:[%s14 + $0x10] sm:$0xf]
    %v5526 = vld [vmem:[%s14 + $0x14] sm:$0xf]
    %v5527 = vld [vmem:[%s14 + $0x18] sm:$0xf]
    %v5528 = vld [vmem:[%s14 + $0x1c] sm:$0xf]
    %v5529 = vld [vmem:[%s15] sm:$0x1]
    %v5531 = vlaneseq
    %v5532 = vshrl.u32 %v5531, 7
    %v5533 = vsub.s32 0, %v5532
    %v5534 = vrot.slane %v5529, %v5533
    %v5544 = vunpack.c.l.b16 %v5521
    %v5545 = vunpack.c.l.b16 %v5522
    %v5546 = vunpack.c.l.b16 %v5523
    %v5547 = vunpack.c.l.b16 %v5524
    %v5548 = vunpack.c.l.b16 %v5525
    %v5549 = vunpack.c.l.b16 %v5526
    %v5550 = vunpack.c.l.b16 %v5527
    %v5551 = vunpack.c.l.b16 %v5528
    %v5552 = vpack.c.b16 %v5545, %v5544
    %v5553 = vpack.c.b16 %v5547, %v5546
    %v5554 = vpack.c.b16 %v5549, %v5548
    %v5555 = vpack.c.b16 %v5551, %v5550
    %vm5560 = vcmask 523264
    %v5562 = vsel %vm5560, %v5513, 0
    %v5565 = vsel %vm5560, %v5514, 0
    %v5568 = vsel %vm5560, %v5515, 0
    %v5571 = vsel %vm5560, %v5516, 0
    %v5574 = vsel %vm5560, %v5517, 0
    %v5577 = vsel %vm5560, %v5518, 0
    %v5580 = vsel %vm5560, %v5519, 0
    %v5583 = vsel %vm5560, %v5520, 0
    %5585 = vmatprep.subr.bf16.mxu0 0
    %5586 = vmatpush1.bf16.msra.mxu0 %v5552
    %5587 = vmatprep.subr.bf16.mxu0 0
    %5588 = vmatpush1.bf16.msra.mxu0 %v5553
    %5589 = vmatprep.subr.bf16.mxu0 0
    %5590 = vmatpush1.bf16.msra.mxu0 %v5554
    %5591 = vmatprep.subr.bf16.mxu0 0
    %5592 = vmatpush1.bf16.msra.mxu0 %v5555
    %5593 = vmatprep.subr.bf16.mxu0 0
    %5594 = vmatpush1.bf16.msra.mxu0 0
    %5595 = vmatprep.subr.bf16.mxu0 0
    %5596 = vmatpush1.bf16.msra.mxu0 0
    %5597 = vmatprep.subr.bf16.mxu0 0
    %5598 = vmatpush1.bf16.msra.mxu0 0
    %5599 = vmatprep.subr.bf16.mxu0 0
    %5600 = vmatpush1.bf16.msra.mxu0 0
    %5601 = vmatprep.subr.bf16.mxu0 0
    %5602 = vmatpush1.bf16.msra.mxu0 0
    %5603 = vmatprep.subr.bf16.mxu0 0
    %5604 = vmatpush1.bf16.msra.mxu0 0
    %5605 = vmatprep.subr.bf16.mxu0 0
    %5606 = vmatpush1.bf16.msra.mxu0 0
    %5607 = vmatprep.subr.bf16.mxu0 0
    %5608 = vmatpush1.bf16.msra.mxu0 0
    %5609 = vmatprep.subr.bf16.mxu0 0
    %5610 = vmatpush1.bf16.msra.mxu0 0
    %5611 = vmatprep.subr.bf16.mxu0 0
    %5612 = vmatpush1.bf16.msra.mxu0 0
    %5613 = vmatprep.subr.bf16.mxu0 0
    %5614 = vmatpush1.bf16.msra.mxu0 0
    %5615 = vmatprep.subr.bf16.mxu0 0
    %5616 = vmatpush1.bf16.msra.mxu0 0
    %5617 = vmatprep.mubr.bf16.mxu0 0
    %5618 = vmatmul.mubr.bf16.gmra.mrb[0].mxu0 %v5562
    %v5619 = vpop.f32.mrb[0].mxu0
    %v5620 = vadd.f32 %v5534, %v5619
    %v5621 = vpop.f32.mrb[0].mxu0
    %v5622 = vpop.f32.mrb[0].mxu0
    %v5623 = vadd.f32 %v5534, %v5622
    %v5624 = vpop.f32.mrb[0].mxu0
    %5625 = vmatprep.mubr.bf16.mxu0 0
    %5626 = vmatmul.mubr.bf16.gmra.mrb[0].mxu0 %v5565
    %v5627 = vpop.f32.mrb[0].mxu0
    %v5628 = vadd.f32 %v5534, %v5627
    %v5629 = vpop.f32.mrb[0].mxu0
    %v5630 = vpop.f32.mrb[0].mxu0
    %v5631 = vadd.f32 %v5534, %v5630
    %v5632 = vpop.f32.mrb[0].mxu0
    %5633 = vmatprep.mubr.bf16.mxu0 0
    %5634 = vmatmul.mubr.bf16.gmra.mrb[0].mxu0 %v5568
    %v5635 = vpop.f32.mrb[0].mxu0
    %v5636 = vadd.f32 %v5534, %v5635
    %v5637 = vpop.f32.mrb[0].mxu0
    %v5638 = vpop.f32.mrb[0].mxu0
    %v5639 = vadd.f32 %v5534, %v5638
    %v5640 = vpop.f32.mrb[0].mxu0
    %5641 = vmatprep.mubr.bf16.mxu0 0
    %5642 = vmatmul.mubr.bf16.gmra.mrb[0].mxu0 %v5571
    %v5643 = vpop.f32.mrb[0].mxu0
    %v5644 = vadd.f32 %v5534, %v5643
    %v5645 = vpop.f32.mrb[0].mxu0
    %v5646 = vpop.f32.mrb[0].mxu0
    %v5647 = vadd.f32 %v5534, %v5646
    %v5648 = vpop.f32.mrb[0].mxu0
    %5649 = vmatprep.mubr.bf16.mxu0 0
    %5650 = vmatmul.mubr.bf16.gmra.mrb[0].mxu0 %v5574
    %v5651 = vpop.f32.mrb[0].mxu0
    %v5652 = vadd.f32 %v5534, %v5651
    %v5653 = vpop.f32.mrb[0].mxu0
    %v5654 = vpop.f32.mrb[0].mxu0
    %v5655 = vadd.f32 %v5534, %v5654
    %v5656 = vpop.f32.mrb[0].mxu0
    %5657 = vmatprep.mubr.bf16.mxu0 0
    %5658 = vmatmul.mubr.bf16.gmra.mrb[0].mxu0 %v5577
    %v5659 = vpop.f32.mrb[0].mxu0
    %v5660 = vadd.f32 %v5534, %v5659
    %v5661 = vpop.f32.mrb[0].mxu0
    %v5662 = vpop.f32.mrb[0].mxu0
    %v5663 = vadd.f32 %v5534, %v5662
    %v5664 = vpop.f32.mrb[0].mxu0
    %5665 = vmatprep.mubr.bf16.mxu0 0
    %5666 = vmatmul.mubr.bf16.gmra.mrb[0].mxu0 %v5580
    %v5667 = vpop.f32.mrb[0].mxu0
    %v5668 = vadd.f32 %v5534, %v5667
    %v5669 = vpop.f32.mrb[0].mxu0
    %v5670 = vpop.f32.mrb[0].mxu0
    %v5671 = vadd.f32 %v5534, %v5670
    %v5672 = vpop.f32.mrb[0].mxu0
    %5673 = vmatprep.mubr.bf16.mxu0 0
    %5674 = vmatmul.mubr.bf16.gmra.mrb[0].mxu0 %v5583
    %v5675 = vpop.f32.mrb[0].mxu0
    %v5676 = vadd.f32 %v5534, %v5675
    %v5677 = vpop.f32.mrb[0].mxu0
    %v5678 = vpop.f32.mrb[0].mxu0
    %v5679 = vadd.f32 %v5534, %v5678
    %v5680 = vpop.f32.mrb[0].mxu0
    %5681 = vdwg.mxu0
    %v5682 = vpack.c.bf16 %v5623, %v5620
    %v5683 = vpack.c.bf16 %v5631, %v5628
    %v5684 = vpack.c.bf16 %v5639, %v5636
    %v5685 = vpack.c.bf16 %v5647, %v5644
    %v5686 = vpack.c.bf16 %v5655, %v5652
    %v5687 = vpack.c.bf16 %v5663, %v5660
    %v5688 = vpack.c.bf16 %v5671, %v5668
    %v5689 = vpack.c.bf16 %v5679, %v5676
    %v5690 = vld [vmem:[%s16] sm:$0xf]
    %v5691 = vld [vmem:[%s16 + $0x4] sm:$0xf]
    %v5692 = vld [vmem:[%s16 + $0x8] sm:$0xf]
    %v5693 = vld [vmem:[%s16 + $0xc] sm:$0xf]
    %v5694 = vld [vmem:[%s17] sm:$0x1]
    %v5696 = vlaneseq
    %v5697 = vshrl.u32 %v5696, 7
    %v5698 = vsub.s32 0, %v5697
    %v5699 = vrot.slane %v5694, %v5698
    %v5705 = vunpack.c.l.b16 %v5690
    %v5706 = vunpack.c.l.b16 %v5691
    %v5707 = vunpack.c.l.b16 %v5692
    %v5708 = vunpack.c.l.b16 %v5693
    %v5709 = vpack.c.b16 %v5706, %v5705
    %v5710 = vpack.c.b16 %v5708, %v5707
    %v5714 = vsel %vm270, %v5682, 0
    %v5717 = vsel %vm270, %v5683, 0
    %v5720 = vsel %vm270, %v5684, 0
    %v5723 = vsel %vm270, %v5685, 0
    %v5726 = vsel %vm270, %v5686, 0
    %v5729 = vsel %vm270, %v5687, 0
    %v5732 = vsel %vm270, %v5688, 0
    %v5735 = vsel %vm270, %v5689, 0
    %5737 = vmatprep.subr.bf16.mxu0 0
    %5738 = vmatpush1.bf16.msra.mxu0 %v5709
    %5739 = vmatprep.subr.bf16.mxu0 0
    %5740 = vmatpush1.bf16.msra.mxu0 %v5710
    %5741 = vmatprep.subr.bf16.mxu0 0
    %5742 = vmatpush1.bf16.msra.mxu0 0
    %5743 = vmatprep.subr.bf16.mxu0 0
    %5744 = vmatpush1.bf16.msra.mxu0 0
    %5745 = vmatprep.subr.bf16.mxu0 0
    %5746 = vmatpush1.bf16.msra.mxu0 0
    %5747 = vmatprep.subr.bf16.mxu0 0
    %5748 = vmatpush1.bf16.msra.mxu0 0
    %5749 = vmatprep.subr.bf16.mxu0 0
    %5750 = vmatpush1.bf16.msra.mxu0 0
    %5751 = vmatprep.subr.bf16.mxu0 0
    %5752 = vmatpush1.bf16.msra.mxu0 0
    %5753 = vmatprep.subr.bf16.mxu0 0
    %5754 = vmatpush1.bf16.msra.mxu0 0
    %5755 = vmatprep.subr.bf16.mxu0 0
    %5756 = vmatpush1.bf16.msra.mxu0 0
    %5757 = vmatprep.subr.bf16.mxu0 0
    %5758 = vmatpush1.bf16.msra.mxu0 0
    %5759 = vmatprep.subr.bf16.mxu0 0
    %5760 = vmatpush1.bf16.msra.mxu0 0
    %5761 = vmatprep.subr.bf16.mxu0 0
    %5762 = vmatpush1.bf16.msra.mxu0 0
    %5763 = vmatprep.subr.bf16.mxu0 0
    %5764 = vmatpush1.bf16.msra.mxu0 0
    %5765 = vmatprep.subr.bf16.mxu0 0
    %5766 = vmatpush1.bf16.msra.mxu0 0
    %5767 = vmatprep.subr.bf16.mxu0 0
    %5768 = vmatpush1.bf16.msra.mxu0 0
    %5769 = vmatprep.mubr.bf16.mxu0 0
    %5770 = vmatmul.mubr.bf16.gmra.mrb[0].mxu0 %v5714
    %v5771 = vpop.f32.mrb[0].mxu0
    %v5772 = vadd.f32 %v5699, %v5771
    %v5773 = vpop.f32.mrb[0].mxu0
    %v5774 = vpop.f32.mrb[0].mxu0
    %v5775 = vadd.f32 %v5699, %v5774
    %v5776 = vpop.f32.mrb[0].mxu0
    %5777 = vmatprep.mubr.bf16.mxu0 0
    %5778 = vmatmul.mubr.bf16.gmra.mrb[0].mxu0 %v5717
    %v5779 = vpop.f32.mrb[0].mxu0
    %v5780 = vadd.f32 %v5699, %v5779
    %v5781 = vpop.f32.mrb[0].mxu0
    %v5782 = vpop.f32.mrb[0].mxu0
    %v5783 = vadd.f32 %v5699, %v5782
    %v5784 = vpop.f32.mrb[0].mxu0
    %5785 = vmatprep.mubr.bf16.mxu0 0
    %5786 = vmatmul.mubr.bf16.gmra.mrb[0].mxu0 %v5720
    %v5787 = vpop.f32.mrb[0].mxu0
    %v5788 = vadd.f32 %v5699, %v5787
    %v5789 = vpop.f32.mrb[0].mxu0
    %v5790 = vpop.f32.mrb[0].mxu0
    %v5791 = vadd.f32 %v5699, %v5790
    %v5792 = vpop.f32.mrb[0].mxu0
    %5793 = vmatprep.mubr.bf16.mxu0 0
    %5794 = vmatmul.mubr.bf16.gmra.mrb[0].mxu0 %v5723
    %v5795 = vpop.f32.mrb[0].mxu0
    %v5796 = vadd.f32 %v5699, %v5795
    %v5797 = vpop.f32.mrb[0].mxu0
    %v5798 = vpop.f32.mrb[0].mxu0
    %v5799 = vadd.f32 %v5699, %v5798
    %v5800 = vpop.f32.mrb[0].mxu0
    %5801 = vmatprep.mubr.bf16.mxu0 0
    %5802 = vmatmul.mubr.bf16.gmra.mrb[0].mxu0 %v5726
    %v5803 = vpop.f32.mrb[0].mxu0
    %v5804 = vadd.f32 %v5699, %v5803
    %v5805 = vpop.f32.mrb[0].mxu0
    %v5806 = vpop.f32.mrb[0].mxu0
    %v5807 = vadd.f32 %v5699, %v5806
    %v5808 = vpop.f32.mrb[0].mxu0
    %5809 = vmatprep.mubr.bf16.mxu0 0
    %5810 = vmatmul.mubr.bf16.gmra.mrb[0].mxu0 %v5729
    %v5811 = vpop.f32.mrb[0].mxu0
    %v5812 = vadd.f32 %v5699, %v5811
    %v5813 = vpop.f32.mrb[0].mxu0
    %v5814 = vpop.f32.mrb[0].mxu0
    %v5815 = vadd.f32 %v5699, %v5814
    %v5816 = vpop.f32.mrb[0].mxu0
    %5817 = vmatprep.mubr.bf16.mxu0 0
    %5818 = vmatmul.mubr.bf16.gmra.mrb[0].mxu0 %v5732
    %v5819 = vpop.f32.mrb[0].mxu0
    %v5820 = vadd.f32 %v5699, %v5819
    %v5821 = vpop.f32.mrb[0].mxu0
    %v5822 = vpop.f32.mrb[0].mxu0
    %v5823 = vadd.f32 %v5699, %v5822
    %v5824 = vpop.f32.mrb[0].mxu0
    %5825 = vmatprep.mubr.bf16.mxu0 0
    %5826 = vmatmul.mubr.bf16.gmra.mrb[0].mxu0 %v5735
    %v5827 = vpop.f32.mrb[0].mxu0
    %v5828 = vadd.f32 %v5699, %v5827
    %v5829 = vpop.f32.mrb[0].mxu0
    %v5830 = vpop.f32.mrb[0].mxu0
    %v5831 = vadd.f32 %v5699, %v5830
    %v5832 = vpop.f32.mrb[0].mxu0
    %5833 = vdwg.mxu0
    %v5834 = vmax.f32 %v5772, 0.0
    %v5835 = vmax.f32 %v5775, 0.0
    %v5836 = vmax.f32 %v5780, 0.0
    %v5837 = vmax.f32 %v5783, 0.0
    %v5838 = vmax.f32 %v5788, 0.0
    %v5839 = vmax.f32 %v5791, 0.0
    %v5840 = vmax.f32 %v5796, 0.0
    %v5841 = vmax.f32 %v5799, 0.0
    %v5842 = vmax.f32 %v5804, 0.0
    %v5843 = vmax.f32 %v5807, 0.0
    %v5844 = vmax.f32 %v5812, 0.0
    %v5845 = vmax.f32 %v5815, 0.0
    %v5846 = vmax.f32 %v5820, 0.0
    %v5847 = vmax.f32 %v5823, 0.0
    %v5848 = vmax.f32 %v5828, 0.0
    %v5849 = vmax.f32 %v5831, 0.0
    %v5850 = vpack.c.bf16 %v5835, %v5834
    %v5851 = vpack.c.bf16 %v5837, %v5836
    %v5852 = vpack.c.bf16 %v5839, %v5838
    %v5853 = vpack.c.bf16 %v5841, %v5840
    %v5854 = vpack.c.bf16 %v5843, %v5842
    %v5855 = vpack.c.bf16 %v5845, %v5844
    %v5856 = vpack.c.bf16 %v5847, %v5846
    %v5857 = vpack.c.bf16 %v5849, %v5848
    %v5858 = vld [vmem:[%s18] sm:$0xf]
    %v5859 = vld [vmem:[%s18 + $0x4] sm:$0xf]
    %v5860 = vld [vmem:[%s18 + $0x8] sm:$0xf]
    %v5861 = vld [vmem:[%s18 + $0xc] sm:$0xf]
    %v5862 = vld [vmem:[%s19] sm:$0x1]
    %v5864 = vlaneseq
    %v5865 = vshrl.u32 %v5864, 7
    %v5866 = vsub.s32 0, %v5865
    %v5867 = vrot.slane %v5862, %v5866
    %v5873 = vunpack.c.l.b16 %v5858
    %v5874 = vunpack.c.l.b16 %v5859
    %v5875 = vunpack.c.l.b16 %v5860
    %v5876 = vunpack.c.l.b16 %v5861
    %v5877 = vpack.c.b16 %v5874, %v5873
    %v5878 = vpack.c.b16 %v5876, %v5875
    %v5882 = vsel %vm270, %v5850, 0
    %v5885 = vsel %vm270, %v5851, 0
    %v5888 = vsel %vm270, %v5852, 0
    %v5891 = vsel %vm270, %v5853, 0
    %v5894 = vsel %vm270, %v5854, 0
    %v5897 = vsel %vm270, %v5855, 0
    %v5900 = vsel %vm270, %v5856, 0
    %v5903 = vsel %vm270, %v5857, 0
    %5905 = vmatprep.subr.bf16.mxu0 0
    %5906 = vmatpush1.bf16.msra.mxu0 %v5877
    %5907 = vmatprep.subr.bf16.mxu0 0
    %5908 = vmatpush1.bf16.msra.mxu0 %v5878
    %5909 = vmatprep.subr.bf16.mxu0 0
    %5910 = vmatpush1.bf16.msra.mxu0 0
    %5911 = vmatprep.subr.bf16.mxu0 0
    %5912 = vmatpush1.bf16.msra.mxu0 0
    %5913 = vmatprep.subr.bf16.mxu0 0
    %5914 = vmatpush1.bf16.msra.mxu0 0
    %5915 = vmatprep.subr.bf16.mxu0 0
    %5916 = vmatpush1.bf16.msra.mxu0 0
    %5917 = vmatprep.subr.bf16.mxu0 0
    %5918 = vmatpush1.bf16.msra.mxu0 0
    %5919 = vmatprep.subr.bf16.mxu0 0
    %5920 = vmatpush1.bf16.msra.mxu0 0
    %5921 = vmatprep.subr.bf16.mxu0 0
    %5922 = vmatpush1.bf16.msra.mxu0 0
    %5923 = vmatprep.subr.bf16.mxu0 0
    %5924 = vmatpush1.bf16.msra.mxu0 0
    %5925 = vmatprep.subr.bf16.mxu0 0
    %5926 = vmatpush1.bf16.msra.mxu0 0
    %5927 = vmatprep.subr.bf16.mxu0 0
    %5928 = vmatpush1.bf16.msra.mxu0 0
    %5929 = vmatprep.subr.bf16.mxu0 0
    %5930 = vmatpush1.bf16.msra.mxu0 0
    %5931 = vmatprep.subr.bf16.mxu0 0
    %5932 = vmatpush1.bf16.msra.mxu0 0
    %5933 = vmatprep.subr.bf16.mxu0 0
    %5934 = vmatpush1.bf16.msra.mxu0 0
    %5935 = vmatprep.subr.bf16.mxu0 0
    %5936 = vmatpush1.bf16.msra.mxu0 0
    %5937 = vmatprep.mubr.bf16.mxu0 0
    %5938 = vmatmul.mubr.bf16.gmra.mrb[0].mxu0 %v5882
    %v5939 = vpop.f32.mrb[0].mxu0
    %v5940 = vadd.f32 %v5867, %v5939
    %v5941 = vpop.f32.mrb[0].mxu0
    %v5942 = vpop.f32.mrb[0].mxu0
    %v5943 = vadd.f32 %v5867, %v5942
    %v5944 = vpop.f32.mrb[0].mxu0
    %5945 = vmatprep.mubr.bf16.mxu0 0
    %5946 = vmatmul.mubr.bf16.gmra.mrb[0].mxu0 %v5885
    %v5947 = vpop.f32.mrb[0].mxu0
    %v5948 = vadd.f32 %v5867, %v5947
    %v5949 = vpop.f32.mrb[0].mxu0
    %v5950 = vpop.f32.mrb[0].mxu0
    %v5951 = vadd.f32 %v5867, %v5950
    %v5952 = vpop.f32.mrb[0].mxu0
    %5953 = vmatprep.mubr.bf16.mxu0 0
    %5954 = vmatmul.mubr.bf16.gmra.mrb[0].mxu0 %v5888
    %v5955 = vpop.f32.mrb[0].mxu0
    %v5956 = vadd.f32 %v5867, %v5955
    %v5957 = vpop.f32.mrb[0].mxu0
    %v5958 = vpop.f32.mrb[0].mxu0
    %v5959 = vadd.f32 %v5867, %v5958
    %v5960 = vpop.f32.mrb[0].mxu0
    %5961 = vmatprep.mubr.bf16.mxu0 0
    %5962 = vmatmul.mubr.bf16.gmra.mrb[0].mxu0 %v5891
    %v5963 = vpop.f32.mrb[0].mxu0
    %v5964 = vadd.f32 %v5867, %v5963
    %v5965 = vpop.f32.mrb[0].mxu0
    %v5966 = vpop.f32.mrb[0].mxu0
    %v5967 = vadd.f32 %v5867, %v5966
    %v5968 = vpop.f32.mrb[0].mxu0
    %5969 = vmatprep.mubr.bf16.mxu0 0
    %5970 = vmatmul.mubr.bf16.gmra.mrb[0].mxu0 %v5894
    %v5971 = vpop.f32.mrb[0].mxu0
    %v5972 = vadd.f32 %v5867, %v5971
    %v5973 = vpop.f32.mrb[0].mxu0
    %v5974 = vpop.f32.mrb[0].mxu0
    %v5975 = vadd.f32 %v5867, %v5974
    %v5976 = vpop.f32.mrb[0].mxu0
    %5977 = vmatprep.mubr.bf16.mxu0 0
    %5978 = vmatmul.mubr.bf16.gmra.mrb[0].mxu0 %v5897
    %v5979 = vpop.f32.mrb[0].mxu0
    %v5980 = vadd.f32 %v5867, %v5979
    %v5981 = vpop.f32.mrb[0].mxu0
    %v5982 = vpop.f32.mrb[0].mxu0
    %v5983 = vadd.f32 %v5867, %v5982
    %v5984 = vpop.f32.mrb[0].mxu0
    %5985 = vmatprep.mubr.bf16.mxu0 0
    %5986 = vmatmul.mubr.bf16.gmra.mrb[0].mxu0 %v5900
    %v5987 = vpop.f32.mrb[0].mxu0
    %v5988 = vadd.f32 %v5867, %v5987
    %v5989 = vpop.f32.mrb[0].mxu0
    %v5990 = vpop.f32.mrb[0].mxu0
    %v5991 = vadd.f32 %v5867, %v5990
    %v5992 = vpop.f32.mrb[0].mxu0
    %5993 = vmatprep.mubr.bf16.mxu0 0
    %5994 = vmatmul.mubr.bf16.gmra.mrb[0].mxu0 %v5903
    %v5995 = vpop.f32.mrb[0].mxu0
    %v5996 = vadd.f32 %v5867, %v5995
    %v5997 = vpop.f32.mrb[0].mxu0
    %v5998 = vpop.f32.mrb[0].mxu0
    %v5999 = vadd.f32 %v5867, %v5998
    %v6000 = vpop.f32.mrb[0].mxu0
    %6001 = vdwg.mxu0
    %6018 = vrot.lane.b32.xlu0 %v5940, 64
    %v6019 = vpop.permute.xlu0 %6018
    %6020 = vrot.lane.b32.xlu0 %v5943, 64
    %v6021 = vpop.permute.xlu0 %6020
    %6022 = vrot.lane.b32.xlu0 %v5948, 64
    %v6023 = vpop.permute.xlu0 %6022
    %6024 = vrot.lane.b32.xlu0 %v5951, 64
    %v6025 = vpop.permute.xlu0 %6024
    %6026 = vrot.lane.b32.xlu0 %v5956, 64
    %v6027 = vpop.permute.xlu0 %6026
    %6028 = vrot.lane.b32.xlu0 %v5959, 64
    %v6029 = vpop.permute.xlu0 %6028
    %6030 = vrot.lane.b32.xlu0 %v5964, 64
    %v6031 = vpop.permute.xlu0 %6030
    %6032 = vrot.lane.b32.xlu0 %v5967, 64
    %v6033 = vpop.permute.xlu0 %6032
    %6034 = vrot.lane.b32.xlu0 %v5972, 64
    %v6035 = vpop.permute.xlu0 %6034
    %6036 = vrot.lane.b32.xlu0 %v5975, 64
    %v6037 = vpop.permute.xlu0 %6036
    %6038 = vrot.lane.b32.xlu0 %v5980, 64
    %v6039 = vpop.permute.xlu0 %6038
    %6040 = vrot.lane.b32.xlu0 %v5983, 64
    %v6041 = vpop.permute.xlu0 %6040
    %6042 = vrot.lane.b32.xlu0 %v5988, 64
    %v6043 = vpop.permute.xlu0 %6042
    %6044 = vrot.lane.b32.xlu0 %v5991, 64
    %v6045 = vpop.permute.xlu0 %6044
    %6046 = vrot.lane.b32.xlu0 %v5996, 64
    %v6047 = vpop.permute.xlu0 %6046
    %6048 = vrot.lane.b32.xlu0 %v5999, 64
    %v6049 = vpop.permute.xlu0 %6048
    %v6066 = vsel %vm270, %v5620, %v5450
    %v6067 = vsel %vm270, %v5623, %v5452
    %v6068 = vsel %vm270, %v5628, %v5454
    %v6069 = vsel %vm270, %v5631, %v5456
    %v6070 = vsel %vm270, %v5636, %v5458
    %v6071 = vsel %vm270, %v5639, %v5460
    %v6072 = vsel %vm270, %v5644, %v5462
    %v6073 = vsel %vm270, %v5647, %v5464
    %v6074 = vsel %vm270, %v5652, %v5466
    %v6075 = vsel %vm270, %v5655, %v5468
    %v6076 = vsel %vm270, %v5660, %v5470
    %v6077 = vsel %vm270, %v5663, %v5472
    %v6078 = vsel %vm270, %v5668, %v5474
    %v6079 = vsel %vm270, %v5671, %v5476
    %v6080 = vsel %vm270, %v5676, %v5478
    %v6081 = vsel %vm270, %v5679, %v5480
    %v6082 = vsel %vm5560, %v6066, %v6019
    %v6083 = vsel %vm5560, %v6067, %v6021
    %v6084 = vsel %vm5560, %v6068, %v6023
    %v6085 = vsel %vm5560, %v6069, %v6025
    %v6086 = vsel %vm5560, %v6070, %v6027
    %v6087 = vsel %vm5560, %v6071, %v6029
    %v6088 = vsel %vm5560, %v6072, %v6031
    %v6089 = vsel %vm5560, %v6073, %v6033
    %v6090 = vsel %vm5560, %v6074, %v6035
    %v6091 = vsel %vm5560, %v6075, %v6037
    %v6092 = vsel %vm5560, %v6076, %v6039
    %v6093 = vsel %vm5560, %v6077, %v6041
    %v6094 = vsel %vm5560, %v6078, %v6043
    %v6095 = vsel %vm5560, %v6079, %v6045
    %v6096 = vsel %vm5560, %v6080, %v6047
    %v6097 = vsel %vm5560, %v6081, %v6049
    %vm6098 = vcmask 785408
    %v6099 = vsel %vm6098, %v6082, 0.0
    %v6100 = vsel %vm6098, %v6083, 0.0
    %v6101 = vsel %vm6098, %v6084, 0.0
    %v6102 = vsel %vm6098, %v6085, 0.0
    %v6103 = vsel %vm6098, %v6086, 0.0
    %v6104 = vsel %vm6098, %v6087, 0.0
    %v6105 = vsel %vm6098, %v6088, 0.0
    %v6106 = vsel %vm6098, %v6089, 0.0
    %v6107 = vsel %vm6098, %v6090, 0.0
    %v6108 = vsel %vm6098, %v6091, 0.0
    %v6109 = vsel %vm6098, %v6092, 0.0
    %v6110 = vsel %vm6098, %v6093, 0.0
    %v6111 = vsel %vm6098, %v6094, 0.0
    %v6112 = vsel %vm6098, %v6095, 0.0
    %v6113 = vsel %vm6098, %v6096, 0.0
    %v6114 = vsel %vm6098, %v6097, 0.0
    %v6115 = vld [vmem:[%s1] sm:$0xff]
    %v6116 = vld [vmem:[%s1 + $0x8] sm:$0xff]
    %v6117 = vld [vmem:[%s1 + $0x10] sm:$0xff]
    %v6118 = vld [vmem:[%s1 + $0x18] sm:$0xff]
    %v6119 = vld [vmem:[%s1 + $0x20] sm:$0xff]
    %v6120 = vld [vmem:[%s1 + $0x28] sm:$0xff]
    %v6121 = vld [vmem:[%s1 + $0x30] sm:$0xff]
    %v6122 = vld [vmem:[%s1 + $0x38] sm:$0xff]
    %v6123 = vld [vmem:[%s1 + $0x40] sm:$0xff]
    %v6124 = vld [vmem:[%s1 + $0x48] sm:$0xff]
    %v6125 = vld [vmem:[%s1 + $0x50] sm:$0xff]
    %v6126 = vld [vmem:[%s1 + $0x58] sm:$0xff]
    %v6127 = vld [vmem:[%s1 + $0x60] sm:$0xff]
    %v6128 = vld [vmem:[%s1 + $0x68] sm:$0xff]
    %v6129 = vld [vmem:[%s1 + $0x70] sm:$0xff]
    %v6130 = vld [vmem:[%s1 + $0x78] sm:$0xff]
    %6132 = vset.pattern.permute.xlu0 0
    %6133 = vperm.xlu0 %6132, %v6115
    %v6134 = vpop.permute.xlu0 %6133
    %6137 = vset.pattern.permute.xlu0 0
    %6138 = vperm.xlu0 %6137, %v6116
    %v6139 = vpop.permute.xlu0 %6138
    %6142 = vset.pattern.permute.xlu0 0
    %6143 = vperm.xlu0 %6142, %v6117
    %v6144 = vpop.permute.xlu0 %6143
    %6147 = vset.pattern.permute.xlu0 0
    %6148 = vperm.xlu0 %6147, %v6118
    %v6149 = vpop.permute.xlu0 %6148
    %6152 = vset.pattern.permute.xlu0 0
    %6153 = vperm.xlu0 %6152, %v6119
    %v6154 = vpop.permute.xlu0 %6153
    %6157 = vset.pattern.permute.xlu0 0
    %6158 = vperm.xlu0 %6157, %v6120
    %v6159 = vpop.permute.xlu0 %6158
    %6162 = vset.pattern.permute.xlu0 0
    %6163 = vperm.xlu0 %6162, %v6121
    %v6164 = vpop.permute.xlu0 %6163
    %6167 = vset.pattern.permute.xlu0 0
    %6168 = vperm.xlu0 %6167, %v6122
    %v6169 = vpop.permute.xlu0 %6168
    %6172 = vset.pattern.permute.xlu0 0
    %6173 = vperm.xlu0 %6172, %v6123
    %v6174 = vpop.permute.xlu0 %6173
    %6177 = vset.pattern.permute.xlu0 0
    %6178 = vperm.xlu0 %6177, %v6124
    %v6179 = vpop.permute.xlu0 %6178
    %6182 = vset.pattern.permute.xlu0 0
    %6183 = vperm.xlu0 %6182, %v6125
    %v6184 = vpop.permute.xlu0 %6183
    %6187 = vset.pattern.permute.xlu0 0
    %6188 = vperm.xlu0 %6187, %v6126
    %v6189 = vpop.permute.xlu0 %6188
    %6192 = vset.pattern.permute.xlu0 0
    %6193 = vperm.xlu0 %6192, %v6127
    %v6194 = vpop.permute.xlu0 %6193
    %6197 = vset.pattern.permute.xlu0 0
    %6198 = vperm.xlu0 %6197, %v6128
    %v6199 = vpop.permute.xlu0 %6198
    %6202 = vset.pattern.permute.xlu0 0
    %6203 = vperm.xlu0 %6202, %v6129
    %v6204 = vpop.permute.xlu0 %6203
    %6207 = vset.pattern.permute.xlu0 0
    %6208 = vperm.xlu0 %6207, %v6130
    %v6209 = vpop.permute.xlu0 %6208
    %v6211 = vmul.f32 %v6099, %v6134
    %v6212 = vmul.f32 %v6100, %v6139
    %v6213 = vmul.f32 %v6101, %v6144
    %v6214 = vmul.f32 %v6102, %v6149
    %v6215 = vmul.f32 %v6103, %v6154
    %v6216 = vmul.f32 %v6104, %v6159
    %v6217 = vmul.f32 %v6105, %v6164
    %v6218 = vmul.f32 %v6106, %v6169
    %v6219 = vmul.f32 %v6107, %v6174
    %v6220 = vmul.f32 %v6108, %v6179
    %v6221 = vmul.f32 %v6109, %v6184
    %v6222 = vmul.f32 %v6110, %v6189
    %v6223 = vmul.f32 %v6111, %v6194
    %v6224 = vmul.f32 %v6112, %v6199
    %v6225 = vmul.f32 %v6113, %v6204
    %v6226 = vmul.f32 %v6114, %v6209
    %6227 = vst [vmem:[#allocation4] sm:$0xff] %v6211
    %6228 = vst [vmem:[#allocation4 + $0x8] sm:$0xff] %v6212
    %6229 = vst [vmem:[#allocation4 + $0x10] sm:$0xff] %v6213
    %6230 = vst [vmem:[#allocation4 + $0x18] sm:$0xff] %v6214
    %6231 = vst [vmem:[#allocation4 + $0x20] sm:$0xff] %v6215
    %6232 = vst [vmem:[#allocation4 + $0x28] sm:$0xff] %v6216
    %6233 = vst [vmem:[#allocation4 + $0x30] sm:$0xff] %v6217
    %6234 = vst [vmem:[#allocation4 + $0x38] sm:$0xff] %v6218
    %6235 = vst [vmem:[#allocation4 + $0x40] sm:$0xff] %v6219
    %6236 = vst [vmem:[#allocation4 + $0x48] sm:$0xff] %v6220
    %6237 = vst [vmem:[#allocation4 + $0x50] sm:$0xff] %v6221
    %6238 = vst [vmem:[#allocation4 + $0x58] sm:$0xff] %v6222
    %6239 = vst [vmem:[#allocation4 + $0x60] sm:$0xff] %v6223
    %6240 = vst [vmem:[#allocation4 + $0x68] sm:$0xff] %v6224
    %6241 = vst [vmem:[#allocation4 + $0x70] sm:$0xff] %v6225
    %6242 = vst [vmem:[#allocation4 + $0x78] sm:$0xff] %v6226
    // Predicated region
    $region89: #{tpu_custom_call.1} parent=1 // pred_check
      _
    $region90: #{tpu_custom_call.1} parent=1 // pred_check_branch
      %6244 = sbr.rel (0) target = $region92
    $region91: #{tpu_custom_call.1} parent=1 // pred_region
      %s6246 = ssub.s32 2048, 2048
      %6247 = vsyncadd [#allocation5], %s6246
      %s6248 = sshll.u32 [#allocation4], 4
      %s6249 = int_to_ptr.vmem [resolvable:$true] %s6248
      %6254 = dma.vmem_to_hbm [thread:$0]  %s6249, 2048, %s20, [#allocation5], 128, 128, 8
    $region92: #{tpu_custom_call.1} parent=1 // pred_fallthru
      _
    // Predicated region
    $region93: #{tpu_custom_call.1} parent=1 // pred_check
      _
    $region94: #{tpu_custom_call.1} parent=1 // pred_check_branch
      %6256 = sbr.rel (0) target = $region96
    $region95: #{tpu_custom_call.1} parent=1 // pred_region
      %6257 = dma.done [#allocation5], 2048
    $region96: #{tpu_custom_call.1} parent=1 // pred_fallthru
      _
    %6258 = vsyncpa [#allocation5], 1

</llo_original>
